<compile_context>
chip_gen: v5e
topology: v5e:2x2
jax: 0.10.0
libtpu: 0.0.40
codegen_flags: <defaults>
</compile_context>

<pallas_src>
import functools
import math

import jax
import jax.numpy as jnp
from jax import lax
from jax.experimental import pallas as pl
from jax.experimental.pallas import tpu as pltpu

F32 = jnp.float32
BF16 = jnp.bfloat16
TM = 512                      # matmul row tile (review: 512-1024)
TR = 512                      # affine row tile (lane-dense rows)
TL = 512                      # softmax/regression lane tile
MM_VMEM_LIMIT = 32 * 1024 * 1024   # explicit scoped-VMEM budget (safe on v5e/v6e/v7x)


def _round_up(x, m):
    return (x + m - 1) // m * m


# ----------------------------- Pallas kernels ------------------------------

def _mm_stats_kernel(a_ref, b_ref, y_ref, s1_ref, s2_ref):
    # Full-K contraction in one MXU pass; weights (b_ref) are the same block for every
    # grid step so they stay resident in VMEM.
    acc = jnp.dot(a_ref[...], b_ref[...], preferred_element_type=jnp.float32)
    y_ref[...] = acc.astype(y_ref.dtype)
    # Per-tile partial BatchNorm statistics (padded rows are zero -> contribute 0).
    s1_ref[...] = jnp.sum(acc, axis=0, keepdims=True)[None]
    s2_ref[...] = jnp.sum(acc * acc, axis=0, keepdims=True)[None]


def pallas_matmul_stats(a, b, out_dtype=BF16):
    """(M, K) @ (K, N), bf16 operands / f32 accumulation.

    Returns (y_pad, s1, s2): y_pad is (Mp, N) in out_dtype (rows >= M are zero),
    s1/s2 are per-row-tile partial sums / sums-of-squares, shape (grid_m, 1, N).
    """
    M, K = a.shape
    K2, N = b.shape
    assert K == K2
    tm = min(TM, _round_up(M, 128))
    Mp = _round_up(M, tm)
    gm = Mp // tm
    ap = jnp.pad(a.astype(BF16), ((0, Mp - M), (0, 0)))
    bp = b.astype(BF16)
    cost = pl.CostEstimate(
        flops=2 * Mp * K * N,
        transcendentals=0,
        bytes_accessed=int(ap.size * 2 + bp.size * 2
                           + Mp * N * jnp.dtype(out_dtype).itemsize))
    y, s1, s2 = pl.pallas_call(
        _mm_stats_kernel,
        out_shape=(jax.ShapeDtypeStruct((Mp, N), out_dtype),
                   jax.ShapeDtypeStruct((gm, 1, N), F32),
                   jax.ShapeDtypeStruct((gm, 1, N), F32)),
        grid_spec=pltpu.PrefetchScalarGridSpec(
            num_scalar_prefetch=0,
            grid=(gm,),
            in_specs=[pl.BlockSpec((tm, K), lambda i: (i, 0)),
                      pl.BlockSpec((K, N), lambda i: (0, 0))],  # weights resident
            out_specs=[pl.BlockSpec((tm, N), lambda i: (i, 0)),
                       pl.BlockSpec((1, 1, N), lambda i: (i, 0, 0)),
                       pl.BlockSpec((1, 1, N), lambda i: (i, 0, 0))]),
        compiler_params=pltpu.CompilerParams(
            dimension_semantics=("parallel",),
            vmem_limit_bytes=MM_VMEM_LIMIT),
        cost_estimate=cost,
    )(ap, bp)
    return y, s1, s2


def _affine_kernel(x_ref, s_ref, b_ref, o_ref, *, relu):
    y = x_ref[...].astype(jnp.float32) * s_ref[...] + b_ref[...]
    if relu:
        y = jnp.maximum(y, 0.0)
    o_ref[...] = y.astype(o_ref.dtype)


def _affine_res_kernel(x_ref, s_ref, b_ref, r_ref, o_ref, *, relu):
    y = (x_ref[...].astype(jnp.float32) * s_ref[...] + b_ref[...]
         + r_ref[...].astype(jnp.float32))
    if relu:
        y = jnp.maximum(y, 0.0)
    o_ref[...] = y.astype(o_ref.dtype)


def pallas_bn_affine(y_pad, m_true, scale, bias, residual=None, relu=False,
                     out_dtype=BF16):
    """Folded-BN affine (+residual)(+ReLU) over a padded (Mp, C) activation.

    Activations are reshaped lane-dense to (rows, 128) when C divides 128 so stores
    are unmasked.  Returns the (m_true, C) result in out_dtype.
    """
    Mp, C = y_pad.shape
    rep = 128 // C if (C < 128 and 128 % C == 0) else 1
    lane = C * rep
    rows = Mp // rep
    tr = min(TR, _round_up(rows, 8))
    rows_p = _round_up(rows, tr)

    def densify(arr):
        a2 = arr.reshape(rows, lane)
        if rows_p != rows:
            a2 = jnp.pad(a2, ((0, rows_p - rows), (0, 0)))
        return a2

    x2 = densify(y_pad)
    s2 = jnp.tile(scale.astype(F32).reshape(1, C), (1, rep))
    b2 = jnp.tile(bias.astype(F32).reshape(1, C), (1, rep))

    row_spec = pl.BlockSpec((tr, lane), lambda i: (i, 0))
    vec_spec = pl.BlockSpec((1, lane), lambda i: (0, 0))
    if residual is None:
        kernel = functools.partial(_affine_kernel, relu=relu)
        in_specs = [row_spec, vec_spec, vec_spec]
        args = (x2, s2, b2)
    else:
        r2 = densify(jnp.pad(residual, ((0, Mp - m_true), (0, 0))))
        kernel = functools.partial(_affine_res_kernel, relu=relu)
        in_specs = [row_spec, vec_spec, vec_spec, row_spec]
        args = (x2, s2, b2, r2)

    out = pl.pallas_call(
        kernel,
        out_shape=jax.ShapeDtypeStruct((rows_p, lane), out_dtype),
        grid_spec=pltpu.PrefetchScalarGridSpec(
            num_scalar_prefetch=0,
            grid=(rows_p // tr,),
            in_specs=in_specs,
            out_specs=pl.BlockSpec((tr, lane), lambda i: (i, 0))),
        compiler_params=pltpu.CompilerParams(
            dimension_semantics=("parallel",)),
    )(*args)
    return out[:rows].reshape(Mp, C)[:m_true]


def _softmax_disp_kernel(x_ref, o_ref):
    x = x_ref[...].astype(jnp.float32)                    # (D, TL): disparity x lanes
    m = jnp.max(x, axis=0, keepdims=True)
    e = jnp.exp(x - m)
    s = jnp.sum(e, axis=0, keepdims=True)
    d = lax.broadcasted_iota(jnp.int32, x.shape, 0).astype(jnp.float32)
    num = jnp.sum(e * d, axis=0, keepdims=True)
    o_ref[...] = num * pl.reciprocal(s, approx=True)      # EUP reciprocal


def pallas_softmax_disp(cols):
    """cols: (D, M) — softmax over disparity (sublanes) then sum_d d*p -> (M,)."""
    D, M = cols.shape
    tl = min(TL, _round_up(M, 128))
    Mp = _round_up(M, tl)
    cp = jnp.pad(cols.astype(F32), ((0, 0), (0, Mp - M)))
    out = pl.pallas_call(
        _softmax_disp_kernel,
        out_shape=jax.ShapeDtypeStruct((1, Mp), F32),
        grid_spec=pltpu.PrefetchScalarGridSpec(
            num_scalar_prefetch=0,
            grid=(Mp // tl,),
            in_specs=[pl.BlockSpec((D, tl), lambda i: (0, i))],
            out_specs=pl.BlockSpec((1, tl), lambda i: (0, i))),
        compiler_params=pltpu.CompilerParams(
            dimension_semantics=("parallel",)),
    )(cp)
    return out[0, :M]


# ------------------------------ conv wrappers -------------------------------

def _bn_from_stats(s1, s2, m_true, gamma, beta, eps=1e-5):
    # Training-mode BatchNorm (module default): per-channel batch statistics, computed
    # from the matmul kernel's per-tile partial sums (no extra HBM pass over y).
    total = jnp.sum(s1, axis=(0, 1))
    total_sq = jnp.sum(s2, axis=(0, 1))
    mean = total / m_true
    var = jnp.maximum(total_sq / m_true - mean * mean, 0.0)
    scale = gamma.astype(F32) * lax.rsqrt(var + eps)
    bias = beta.astype(F32) - mean * scale
    return scale, bias


def _im2col_2d(xl, k, stride, pad):
    # TODO(synk): patches are still materialized (k*k traffic blow-up); a halo-blocked
    # in-kernel tap accumulation would remove this at large resolutions.
    xl = xl.astype(BF16)
    N, H, W, C = xl.shape
    xp = jnp.pad(xl, ((0, 0), (pad, pad), (pad, pad), (0, 0)))
    Ho = (H + 2 * pad - k) // stride + 1
    Wo = (W + 2 * pad - k) // stride + 1
    cols = []
    for kh in range(k):
        for kw in range(k):
            cols.append(xp[:, kh:kh + (Ho - 1) * stride + 1:stride,
                           kw:kw + (Wo - 1) * stride + 1:stride, :])
    patches = jnp.concatenate(cols, axis=-1)
    return patches.reshape(N * Ho * Wo, k * k * C), (N, Ho, Wo)


def _im2col_3d(xl, k, stride, pad):
    # TODO(synk): 27x im2col materialization kept for clarity (bf16 halves its traffic).
    xl = xl.astype(BF16)
    N, D, H, W, C = xl.shape
    xp = jnp.pad(xl, ((0, 0), (pad, pad), (pad, pad), (pad, pad), (0, 0)))
    Do = (D + 2 * pad - k) // stride + 1
    Ho = (H + 2 * pad - k) // stride + 1
    Wo = (W + 2 * pad - k) // stride + 1
    cols = []
    for kd in range(k):
        for kh in range(k):
            for kw in range(k):
                cols.append(xp[:, kd:kd + (Do - 1) * stride + 1:stride,
                               kh:kh + (Ho - 1) * stride + 1:stride,
                               kw:kw + (Wo - 1) * stride + 1:stride, :])
    patches = jnp.concatenate(cols, axis=-1)
    return patches.reshape(N * Do * Ho * Wo, k * k * k * C), (N, Do, Ho, Wo)


def convbn2d(xl, w, gamma, beta, stride, pad, relu=True):
    # xl: (N, H, W, Cin) channels-last; w: (Cout, Cin, k, k) (PyTorch layout).
    cout, cin, k, _ = w.shape
    patches, (n, ho, wo) = _im2col_2d(xl, k, stride, pad)
    wm = jnp.transpose(w, (2, 3, 1, 0)).reshape(k * k * cin, cout)
    M = patches.shape[0]
    y_pad, s1, s2 = pallas_matmul_stats(patches, wm)
    scale, bias = _bn_from_stats(s1, s2, M, gamma, beta)
    out = pallas_bn_affine(y_pad, M, scale, bias, None, relu)
    return out.reshape(n, ho, wo, cout)


def convbn3d(xl, w, gamma, beta, stride=1, pad=1, relu=True, residual=None):
    # xl: (N, D, H, W, Cin) channels-last; w: (Cout, Cin, k, k, k); residual same layout.
    cout, cin, k = w.shape[0], w.shape[1], w.shape[2]
    patches, (n, do, ho, wo) = _im2col_3d(xl, k, stride, pad)
    wm = jnp.transpose(w, (2, 3, 4, 1, 0)).reshape(k * k * k * cin, cout)
    M = patches.shape[0]
    y_pad, s1, s2 = pallas_matmul_stats(patches, wm)
    scale, bias = _bn_from_stats(s1, s2, M, gamma, beta)
    res_flat = None if residual is None else residual.reshape(M, cout)
    out = pallas_bn_affine(y_pad, M, scale, bias, res_flat, relu)
    return out.reshape(n, do, ho, wo, cout)


def conv3d_plain(xl, w):
    # Conv3d k3 s1 p1, bias=False, no BN (classification head).  The identity affine
    # pass is skipped entirely; the matmul kernel writes the final f32 result.
    cout, cin, k = w.shape[0], w.shape[1], w.shape[2]
    patches, (n, do, ho, wo) = _im2col_3d(xl, k, 1, 1)
    wm = jnp.transpose(w, (2, 3, 4, 1, 0)).reshape(k * k * k * cin, cout)
    M = patches.shape[0]
    y_pad, _, _ = pallas_matmul_stats(patches, wm, out_dtype=F32)
    return y_pad[:M].reshape(n, do, ho, wo, cout)


def convtransbn3d(xl, w, gamma, beta, relu, residual=None,
                  stride=2, pad=1, output_padding=1):
    # ConvTranspose3d (w: (Cin, Cout, k, k, k)) as dilate + pad + correlation with the
    # flipped kernel (channels swapped), then BN(+res)(+ReLU).
    # TODO(synk): sub-pixel phase decomposition (8 stride-1 convs) would avoid the
    # im2col over the ~8x zero-dilated volume.
    N, D, H, W, C = xl.shape
    k = w.shape[2]
    xb = xl.astype(BF16)
    xd = jnp.zeros((N, (D - 1) * stride + 1, (H - 1) * stride + 1,
                    (W - 1) * stride + 1, C), BF16)
    xd = xd.at[:, ::stride, ::stride, ::stride, :].set(xb)
    pf = k - 1 - pad
    pe = k - 1 - pad + output_padding
    xd = jnp.pad(xd, ((0, 0), (pf, pe), (pf, pe), (pf, pe), (0, 0)))
    weff = jnp.transpose(jnp.flip(w, axis=(2, 3, 4)), (1, 0, 2, 3, 4))  # (Cout,Cin,k,k,k)
    cout = weff.shape[0]
    patches, (n, do, ho, wo) = _im2col_3d(xd, k, 1, 0)
    wm = jnp.transpose(weff, (2, 3, 4, 1, 0)).reshape(k * k * k * C, cout)
    M = patches.shape[0]
    y_pad, s1, s2 = pallas_matmul_stats(patches, wm)
    scale, bias = _bn_from_stats(s1, s2, M, gamma, beta)
    res_flat = None if residual is None else residual.reshape(M, cout)
    out = pallas_bn_affine(y_pad, M, scale, bias, res_flat, relu)
    return out.reshape(n, do, ho, wo, cout)


# ------------------------------ network blocks ------------------------------

def feature_extraction_fwd(xl, p):
    # TODO(synk): the full PSMNet feature_extraction (ResNet backbone + SPP) was not
    # provided in the reference; stand-in: 3 convbn2d+ReLU layers -> 32 ch @ 1/4 res.
    y = convbn2d(xl, p["f1w"], p["f1g"], p["f1b"], stride=2, pad=1, relu=True)
    y = convbn2d(y, p["f2w"], p["f2g"], p["f2b"], stride=2, pad=1, relu=True)
    y = convbn2d(y, p["f3w"], p["f3g"], p["f3b"], stride=1, pad=1, relu=True)
    return y


def build_cost_volume(lf, rf, maxdisp):
    # lf, rf: (N, H, W, C) channels-last.  Built by concatenating shifted/padded slices
    # (no sequential full-volume scatter updates).
    N, H, W, C = lf.shape
    D4 = maxdisp // 4
    slabs = []
    for i in range(D4):
        if i > 0:
            l_i = jnp.pad(lf[:, :, i:, :], ((0, 0), (0, 0), (i, 0), (0, 0)))
            r_i = jnp.pad(rf[:, :, :W - i, :], ((0, 0), (0, 0), (i, 0), (0, 0)))
        else:
            l_i, r_i = lf, rf
        slabs.append(jnp.concatenate([l_i, r_i], axis=-1))
    return jnp.stack(slabs, axis=1)            # (N, D4, H, W, 2C)


def hourglass_fwd(x, presqu, postsqu, p, extra_res=None):
    out = convbn3d(x, p["c1w"], p["c1g"], p["c1b"], stride=2, relu=True)
    pre = convbn3d(out, p["c2w"], p["c2g"], p["c2b"], stride=1, relu=True,
                   residual=postsqu)                     # relu(conv2 (+ postsqu))
    out = convbn3d(pre, p["c3w"], p["c3g"], p["c3b"], stride=2, relu=True)
    out = convbn3d(out, p["c4w"], p["c4g"], p["c4b"], stride=1, relu=True)
    res5 = presqu if presqu is not None else pre
    post = convtransbn3d(out, p["c5w"], p["c5g"], p["c5b"], relu=True,
                         residual=res5)                  # relu(conv5 + presqu/pre)
    out = convtransbn3d(post, p["c6w"], p["c6g"], p["c6b"], relu=False,
                        residual=extra_res)              # caller's "+ left_CV0" folded in
    return out, pre, post


def classif_fwd(x, p):
    y = convbn3d(x, p["w0"], p["g0"], p["b0"], stride=1, relu=True)
    return conv3d_plain(y, p["w1"])                      # (N, D, H, W, 1) f32


def _upsample_linear_axis(x, axis, out_size):
    in_size = x.shape[axis]
    scale = in_size / out_size
    o = jnp.arange(out_size, dtype=F32)
    src = jnp.maximum((o + 0.5) * scale - 0.5, 0.0)
    i0 = jnp.minimum(jnp.floor(src).astype(jnp.int32), in_size - 1)
    i1 = jnp.minimum(i0 + 1, in_size - 1)
    w1 = src - i0.astype(F32)
    w0 = 1.0 - w1
    shape = [1] * x.ndim
    shape[axis] = out_size
    x0 = jnp.take(x, i0, axis=axis)
    x1 = jnp.take(x, i1, axis=axis)
    return x0 * w0.reshape(shape) + x1 * w1.reshape(shape)


def trilinear_upsample(x, out_dhw):
    # x: (N, D, H, W); matches F.upsample(mode='trilinear', align_corners=False).
    # TODO(synk): interpolation done in plain JAX (gather + lerp), not a Pallas kernel.
    for ax, size in zip((1, 2, 3), out_dhw):
        x = _upsample_linear_axis(x, ax, size)
    return x


def softmax_disparity_regression(cost, maxdisp):
    # cost: (N, maxdisp, H, W) -> softmax over disparity, then sum_d d*p -> (N, H, W)
    N, D, H, W = cost.shape
    cols = jnp.transpose(cost, (1, 0, 2, 3)).reshape(D, N * H * W)
    pred = pallas_softmax_disp(cols)
    return pred.reshape(N, H, W)


def psmnet_forward(params, left, right, maxdisp):
    # Public interface NCHW; internal layout channels-last.
    left_l = jnp.transpose(left, (0, 2, 3, 1))
    right_l = jnp.transpose(right, (0, 2, 3, 1))
    lf = feature_extraction_fwd(left_l, params["fe"])
    rf = feature_extraction_fwd(right_l, params["fe"])
    cv = build_cost_volume(lf, rf, maxdisp)

    d0 = params["dres0"]
    c0 = convbn3d(cv, d0["w0"], d0["g0"], d0["b0"], relu=True)
    c0 = convbn3d(c0, d0["w1"], d0["g1"], d0["b1"], relu=True)
    d1 = params["dres1"]
    t = convbn3d(c0, d1["w0"], d1["g0"], d1["b0"], relu=True)
    cv0 = convbn3d(t, d1["w1"], d1["g1"], d1["b1"], relu=False, residual=c0)

    out1, pre1, post1 = hourglass_fwd(cv0, None, None, params["hg1"], extra_res=cv0)
    out2, pre2, post2 = hourglass_fwd(out1, pre1, post1, params["hg2"], extra_res=cv0)
    out3, pre3, post3 = hourglass_fwd(out2, pre1, post2, params["hg3"], extra_res=cv0)

    cost1 = classif_fwd(out1, params["cls1"])[..., 0]
    cost2 = classif_fwd(out2, params["cls2"])[..., 0] + cost1
    cost3 = classif_fwd(out3, params["cls3"])[..., 0] + cost2

    H, W = left.shape[2], left.shape[3]
    up1 = trilinear_upsample(cost1, (maxdisp, H, W))
    up2 = trilinear_upsample(cost2, (maxdisp, H, W))
    up3 = trilinear_upsample(cost3, (maxdisp, H, W))
    pred1 = softmax_disparity_regression(up1, maxdisp)
    pred2 = softmax_disparity_regression(up2, maxdisp)
    pred3 = softmax_disparity_regression(up3, maxdisp)
    return pred1, pred2, pred3


# ------------------------------ parameter init ------------------------------

def init_params(key):
    keys = iter(jax.random.split(key, 128))

    def conv3d_w(cout, cin, k=3):
        std = math.sqrt(2.0 / (k * k * k * cout))
        return jax.random.normal(next(keys), (cout, cin, k, k, k), F32) * std

    def convT3d_w(cin, cout, k=3):
        std = math.sqrt(2.0 / (k * k * k * cout))
        return jax.random.normal(next(keys), (cin, cout, k, k, k), F32) * std

    def conv2d_w(cout, cin, k=3):
        std = math.sqrt(2.0 / (k * k * cout))
        return jax.random.normal(next(keys), (cout, cin, k, k), F32) * std

    def bn(c):
        return jnp.ones((c,), F32), jnp.zeros((c,), F32)

    fe = {"f1w": conv2d_w(16, 3), "f2w": conv2d_w(32, 16), "f3w": conv2d_w(32, 32)}
    fe["f1g"], fe["f1b"] = bn(16)
    fe["f2g"], fe["f2b"] = bn(32)
    fe["f3g"], fe["f3b"] = bn(32)

    dres0 = {"w0": conv3d_w(32, 64), "w1": conv3d_w(32, 32)}
    dres0["g0"], dres0["b0"] = bn(32)
    dres0["g1"], dres0["b1"] = bn(32)

    dres1 = {"w0": conv3d_w(32, 32), "w1": conv3d_w(32, 32)}
    dres1["g0"], dres1["b0"] = bn(32)
    dres1["g1"], dres1["b1"] = bn(32)

    def hg(inplanes=32):
        p = {}
        p["c1w"] = conv3d_w(2 * inplanes, inplanes); p["c1g"], p["c1b"] = bn(2 * inplanes)
        p["c2w"] = conv3d_w(2 * inplanes, 2 * inplanes); p["c2g"], p["c2b"] = bn(2 * inplanes)
        p["c3w"] = conv3d_w(2 * inplanes, 2 * inplanes); p["c3g"], p["c3b"] = bn(2 * inplanes)
        p["c4w"] = conv3d_w(2 * inplanes, 2 * inplanes); p["c4g"], p["c4b"] = bn(2 * inplanes)
        p["c5w"] = convT3d_w(2 * inplanes, 2 * inplanes); p["c5g"], p["c5b"] = bn(2 * inplanes)
        p["c6w"] = convT3d_w(2 * inplanes, inplanes); p["c6g"], p["c6b"] = bn(inplanes)
        return p

    def cls():
        p = {"w0": conv3d_w(32, 32), "w1": conv3d_w(1, 32)}
        p["g0"], p["b0"] = bn(32)
        return p

    return {"fe": fe, "dres0": dres0, "dres1": dres1,
            "hg1": hg(), "hg2": hg(), "hg3": hg(),
            "cls1": cls(), "cls2": cls(), "cls3": cls()}


if __name__ == "__main__":
    # Small shapes: maxdisp=16 (so D/4=4 survives the two stride-2 hourglass levels),
    # left/right images (2, 3, 16, 16) NCHW.
    maxdisp = 16
    key = jax.random.PRNGKey(0)
    kp, kl, kr = jax.random.split(key, 3)
    params = init_params(kp)
    left = jax.random.normal(kl, (2, 3, 16, 16), F32)
    right = jax.random.normal(kr, (2, 3, 16, 16), F32)

    fwd = jax.jit(functools.partial(psmnet_forward, maxdisp=maxdisp))
    p1, p2, p3 = fwd(params, left, right)
    jax.block_until_ready((p1, p2, p3))
    assert p1.shape == (2, 16, 16) and p2.shape == (2, 16, 16) and p3.shape == (2, 16, 16)
    assert jnp.all(jnp.isfinite(p1)) and jnp.all(jnp.isfinite(p2)) and jnp.all(jnp.isfinite(p3))
    print("KERNEL_OK")
</pallas_src>

<mosaic_0001>
module attributes {stable_mosaic.version = 11 : i64} {
  func.func @_mm_stats_kernel(%arg0: i32, %arg1: memref<128x27xbf16, #tpu.memory_space<vmem>>, %arg2: memref<27x16xbf16, #tpu.memory_space<vmem>>, %arg3: memref<128x16xbf16, #tpu.memory_space<vmem>>, %arg4: memref<1x1x16xf32, #tpu.memory_space<vmem>>, %arg5: memref<1x1x16xf32, #tpu.memory_space<vmem>>) attributes {dimension_semantics = [#tpu.dimension_semantics<parallel>], iteration_bounds = array<i64: 1>, scalar_prefetch = 0 : i64, scratch_operands = 0 : i64, tpu.core_type = #tpu.core_type<tc>, window_params = [{transform_indices = @transform_0, window_bounds = array<i64: 128, 27>}, {pipeline_mode = #tpu.pipeline_mode<synchronous>, transform_indices = @transform_1, window_bounds = array<i64: 27, 16>}, {transform_indices = @transform_2, window_bounds = array<i64: 128, 16>}, {transform_indices = @transform_3, window_bounds = array<i64: 1, 1, 16>}, {transform_indices = @transform_4, window_bounds = array<i64: 1, 1, 16>}]} {
    %c0 = arith.constant 0 : index
    %c0_0 = arith.constant 0 : index
    %0 = vector.load %arg1[%c0, %c0_0] : memref<128x27xbf16, #tpu.memory_space<vmem>>, vector<128x27xbf16>
    %c0_1 = arith.constant 0 : index
    %c0_2 = arith.constant 0 : index
    %1 = vector.load %arg2[%c0_1, %c0_2] : memref<27x16xbf16, #tpu.memory_space<vmem>>, vector<27x16xbf16>
    %cst = arith.constant dense<0.000000e+00> : vector<128x16xf32>
    %2 = tpu.matmul %0, %1, %cst {dimension_numbers = #tpu.dot_dimension_numbers<[1], [0], [0], [1], [0, 0, 1, 1], [], []>} : vector<128x27xbf16>, vector<27x16xbf16>, vector<128x16xf32> -> vector<128x16xf32>
    %3 = arith.truncf %2 : vector<128x16xf32> to vector<128x16xbf16>
    %c0_3 = arith.constant 0 : index
    %c0_4 = arith.constant 0 : index
    %4 = vector.load %arg3[%c0_3, %c0_4] : memref<128x16xbf16, #tpu.memory_space<vmem>>, vector<128x16xbf16>
    tpu.vector_store %arg3[%c0_3, %c0_4], %3 {strides = array<i32>} : memref<128x16xbf16, #tpu.memory_space<vmem>>, vector<128x16xbf16>,
    %cst_5 = arith.constant dense<0.000000e+00> : vector<16xf32>
    %5 = vector.multi_reduction <add>, %2, %cst_5 [0] : vector<128x16xf32> to vector<16xf32>
    %6 = vector.shape_cast %5 : vector<16xf32> to vector<1x16xf32>
    %7 = vector.shape_cast %6 : vector<1x16xf32> to vector<1x1x16xf32>
    %c0_6 = arith.constant 0 : index
    %c0_7 = arith.constant 0 : index
    %c0_8 = arith.constant 0 : index
    %8 = vector.load %arg4[%c0_6, %c0_7, %c0_8] : memref<1x1x16xf32, #tpu.memory_space<vmem>>, vector<1x1x16xf32>
    tpu.vector_store %arg4[%c0_6, %c0_7, %c0_8], %7 {strides = array<i32>} : memref<1x1x16xf32, #tpu.memory_space<vmem>>, vector<1x1x16xf32>,
    %9 = arith.mulf %2, %2 : vector<128x16xf32>
    %cst_9 = arith.constant dense<0.000000e+00> : vector<16xf32>
    %10 = vector.multi_reduction <add>, %9, %cst_9 [0] : vector<128x16xf32> to vector<16xf32>
    %11 = vector.shape_cast %10 : vector<16xf32> to vector<1x16xf32>
    %12 = vector.shape_cast %11 : vector<1x16xf32> to vector<1x1x16xf32>
    %c0_10 = arith.constant 0 : index
    %c0_11 = arith.constant 0 : index
    %c0_12 = arith.constant 0 : index
    %13 = vector.load %arg5[%c0_10, %c0_11, %c0_12] : memref<1x1x16xf32, #tpu.memory_space<vmem>>, vector<1x1x16xf32>
    tpu.vector_store %arg5[%c0_10, %c0_11, %c0_12], %12 {strides = array<i32>} : memref<1x1x16xf32, #tpu.memory_space<vmem>>, vector<1x1x16xf32>,
    return
  }
  func.func @transform_0(%arg0: i32) -> (i32, i32) {
    %c0_i32 = arith.constant 0 : i32
    %c0_i32_0 = arith.constant 0 : i32
    return %arg0, %c0_i32 : i32, i32
  }
  func.func @transform_1(%arg0: i32) -> (i32, i32) {
    %c0_i32 = arith.constant 0 : i32
    %c0_i32_0 = arith.constant 0 : i32
    %c0_i32_1 = arith.constant 0 : i32
    return %c0_i32, %c0_i32_0 : i32, i32
  }
  func.func @transform_2(%arg0: i32) -> (i32, i32) {
    %c0_i32 = arith.constant 0 : i32
    %c0_i32_0 = arith.constant 0 : i32
    return %arg0, %c0_i32 : i32, i32
  }
  func.func @transform_3(%arg0: i32) -> (i32, i32, i32) {
    %c0_i32 = arith.constant 0 : i32
    %c0_i32_0 = arith.constant 0 : i32
    %c0_i32_1 = arith.constant 0 : i32
    return %arg0, %c0_i32, %c0_i32_0 : i32, i32, i32
  }
  func.func @transform_4(%arg0: i32) -> (i32, i32, i32) {
    %c0_i32 = arith.constant 0 : i32
    %c0_i32_0 = arith.constant 0 : i32
    %c0_i32_1 = arith.constant 0 : i32
    return %arg0, %c0_i32, %c0_i32_0 : i32, i32, i32
  }
}

module attributes {stable_mosaic.version = 11 : i64} {
  func.func @_affine_kernel(%arg0: i32, %arg1: memref<16x128xbf16, #tpu.memory_space<vmem>>, %arg2: memref<1x128xf32, #tpu.memory_space<vmem>>, %arg3: memref<1x128xf32, #tpu.memory_space<vmem>>, %arg4: memref<16x128xbf16, #tpu.memory_space<vmem>>) attributes {dimension_semantics = [#tpu.dimension_semantics<parallel>], iteration_bounds = array<i64: 1>, scalar_prefetch = 0 : i64, scratch_operands = 0 : i64, tpu.core_type = #tpu.core_type<tc>, window_params = [{transform_indices = @transform_0, window_bounds = array<i64: 16, 128>}, {pipeline_mode = #tpu.pipeline_mode<synchronous>, transform_indices = @transform_1, window_bounds = array<i64: 1, 128>}, {pipeline_mode = #tpu.pipeline_mode<synchronous>, transform_indices = @transform_2, window_bounds = array<i64: 1, 128>}, {transform_indices = @transform_3, window_bounds = array<i64: 16, 128>}]} {
    %c0 = arith.constant 0 : index
    %c0_0 = arith.constant 0 : index
    %0 = vector.load %arg1[%c0, %c0_0] : memref<16x128xbf16, #tpu.memory_space<vmem>>, vector<16x128xbf16>
    %1 = arith.extf %0 : vector<16x128xbf16> to vector<16x128xf32>
    %c0_1 = arith.constant 0 : index
    %c0_2 = arith.constant 0 : index
    %2 = vector.load %arg2[%c0_1, %c0_2] : memref<1x128xf32, #tpu.memory_space<vmem>>, vector<1x128xf32>
    %3 = vector.broadcast %2 : vector<1x128xf32> to vector<16x128xf32>
    %4 = arith.mulf %1, %3 : vector<16x128xf32>
    %c0_3 = arith.constant 0 : index
    %c0_4 = arith.constant 0 : index
    %5 = vector.load %arg3[%c0_3, %c0_4] : memref<1x128xf32, #tpu.memory_space<vmem>>, vector<1x128xf32>
    %6 = vector.broadcast %5 : vector<1x128xf32> to vector<16x128xf32>
    %7 = arith.addf %4, %6 : vector<16x128xf32>
    %cst = arith.constant 0.000000e+00 : f32
    %8 = vector.broadcast %cst : f32 to vector<16x128xf32>
    %9 = arith.maximumf %7, %8 : vector<16x128xf32>
    %10 = arith.truncf %9 : vector<16x128xf32> to vector<16x128xbf16>
    %c0_5 = arith.constant 0 : index
    %c0_6 = arith.constant 0 : index
    %11 = vector.load %arg4[%c0_5, %c0_6] : memref<16x128xbf16, #tpu.memory_space<vmem>>, vector<16x128xbf16>
    tpu.vector_store %arg4[%c0_5, %c0_6], %10 {strides = array<i32>} : memref<16x128xbf16, #tpu.memory_space<vmem>>, vector<16x128xbf16>,
    return
  }
  func.func @transform_0(%arg0: i32) -> (i32, i32) {
    %c0_i32 = arith.constant 0 : i32
    %c0_i32_0 = arith.constant 0 : i32
    return %arg0, %c0_i32 : i32, i32
  }
  func.func @transform_1(%arg0: i32) -> (i32, i32) {
    %c0_i32 = arith.constant 0 : i32
    %c0_i32_0 = arith.constant 0 : i32
    %c0_i32_1 = arith.constant 0 : i32
    return %c0_i32, %c0_i32_0 : i32, i32
  }
  func.func @transform_2(%arg0: i32) -> (i32, i32) {
    %c0_i32 = arith.constant 0 : i32
    %c0_i32_0 = arith.constant 0 : i32
    %c0_i32_1 = arith.constant 0 : i32
    return %c0_i32, %c0_i32_0 : i32, i32
  }
  func.func @transform_3(%arg0: i32) -> (i32, i32) {
    %c0_i32 = arith.constant 0 : i32
    %c0_i32_0 = arith.constant 0 : i32
    return %arg0, %c0_i32 : i32, i32
  }
}

module attributes {stable_mosaic.version = 11 : i64} {
  func.func @_affine_kernel(%arg0: i32, %arg1: memref<32x128xbf16, #tpu.memory_space<vmem>>, %arg2: memref<1x128xf32, #tpu.memory_space<vmem>>, %arg3: memref<1x128xf32, #tpu.memory_space<vmem>>, %arg4: memref<32x128xbf16, #tpu.memory_space<vmem>>) attributes {dimension_semantics = [#tpu.dimension_semantics<parallel>], iteration_bounds = array<i64: 1>, scalar_prefetch = 0 : i64, scratch_operands = 0 : i64, tpu.core_type = #tpu.core_type<tc>, window_params = [{transform_indices = @transform_0, window_bounds = array<i64: 32, 128>}, {pipeline_mode = #tpu.pipeline_mode<synchronous>, transform_indices = @transform_1, window_bounds = array<i64: 1, 128>}, {pipeline_mode = #tpu.pipeline_mode<synchronous>, transform_indices = @transform_2, window_bounds = array<i64: 1, 128>}, {transform_indices = @transform_3, window_bounds = array<i64: 32, 128>}]} {
    %c0 = arith.constant 0 : index
    %c0_0 = arith.constant 0 : index
    %0 = vector.load %arg1[%c0, %c0_0] : memref<32x128xbf16, #tpu.memory_space<vmem>>, vector<32x128xbf16>
    %1 = arith.extf %0 : vector<32x128xbf16> to vector<32x128xf32>
    %c0_1 = arith.constant 0 : index
    %c0_2 = arith.constant 0 : index
    %2 = vector.load %arg2[%c0_1, %c0_2] : memref<1x128xf32, #tpu.memory_space<vmem>>, vector<1x128xf32>
    %3 = vector.broadcast %2 : vector<1x128xf32> to vector<32x128xf32>
    %4 = arith.mulf %1, %3 : vector<32x128xf32>
    %c0_3 = arith.constant 0 : index
    %c0_4 = arith.constant 0 : index
    %5 = vector.load %arg3[%c0_3, %c0_4] : memref<1x128xf32, #tpu.memory_space<vmem>>, vector<1x128xf32>
    %6 = vector.broadcast %5 : vector<1x128xf32> to vector<32x128xf32>
    %7 = arith.addf %4, %6 : vector<32x128xf32>
    %cst = arith.constant 0.000000e+00 : f32
    %8 = vector.broadcast %cst : f32 to vector<32x128xf32>
    %9 = arith.maximumf %7, %8 : vector<32x128xf32>
    %10 = arith.truncf %9 : vector<32x128xf32> to vector<32x128xbf16>
    %c0_5 = arith.constant 0 : index
    %c0_6 = arith.constant 0 : index
    %11 = vector.load %arg4[%c0_5, %c0_6] : memref<32x128xbf16, #tpu.memory_space<vmem>>, vector<32x128xbf16>
    tpu.vector_store %arg4[%c0_5, %c0_6], %10 {strides = array<i32>} : memref<32x128xbf16, #tpu.memory_space<vmem>>, vector<32x128xbf16>,
    return
  }
  func.func @transform_0(%arg0: i32) -> (i32, i32) {
    %c0_i32 = arith.constant 0 : i32
    %c0_i32_0 = arith.constant 0 : i32
    return %arg0, %c0_i32 : i32, i32
  }
  func.func @transform_1(%arg0: i32) -> (i32, i32) {
    %c0_i32 = arith.constant 0 : i32
    %c0_i32_0 = arith.constant 0 : i32
    %c0_i32_1 = arith.constant 0 : i32
    return %c0_i32, %c0_i32_0 : i32, i32
  }
  func.func @transform_2(%arg0: i32) -> (i32, i32) {
    %c0_i32 = arith.constant 0 : i32
    %c0_i32_0 = arith.constant 0 : i32
    %c0_i32_1 = arith.constant 0 : i32
    return %c0_i32, %c0_i32_0 : i32, i32
  }
  func.func @transform_3(%arg0: i32) -> (i32, i32) {
    %c0_i32 = arith.constant 0 : i32
    %c0_i32_0 = arith.constant 0 : i32
    return %arg0, %c0_i32 : i32, i32
  }
}

module attributes {stable_mosaic.version = 11 : i64} {
  func.func @_mm_stats_kernel(%arg0: i32, %arg1: memref<128x144xbf16, #tpu.memory_space<vmem>>, %arg2: memref<144x32xbf16, #tpu.memory_space<vmem>>, %arg3: memref<128x32xbf16, #tpu.memory_space<vmem>>, %arg4: memref<1x1x32xf32, #tpu.memory_space<vmem>>, %arg5: memref<1x1x32xf32, #tpu.memory_space<vmem>>) attributes {dimension_semantics = [#tpu.dimension_semantics<parallel>], iteration_bounds = array<i64: 1>, scalar_prefetch = 0 : i64, scratch_operands = 0 : i64, tpu.core_type = #tpu.core_type<tc>, window_params = [{transform_indices = @transform_0, window_bounds = array<i64: 128, 144>}, {pipeline_mode = #tpu.pipeline_mode<synchronous>, transform_indices = @transform_1, window_bounds = array<i64: 144, 32>}, {transform_indices = @transform_2, window_bounds = array<i64: 128, 32>}, {transform_indices = @transform_3, window_bounds = array<i64: 1, 1, 32>}, {transform_indices = @transform_4, window_bounds = array<i64: 1, 1, 32>}]} {
    %c0 = arith.constant 0 : index
    %c0_0 = arith.constant 0 : index
    %0 = vector.load %arg1[%c0, %c0_0] : memref<128x144xbf16, #tpu.memory_space<vmem>>, vector<128x144xbf16>
    %c0_1 = arith.constant 0 : index
    %c0_2 = arith.constant 0 : index
    %1 = vector.load %arg2[%c0_1, %c0_2] : memref<144x32xbf16, #tpu.memory_space<vmem>>, vector<144x32xbf16>
    %cst = arith.constant dense<0.000000e+00> : vector<128x32xf32>
    %2 = tpu.matmul %0, %1, %cst {dimension_numbers = #tpu.dot_dimension_numbers<[1], [0], [0], [1], [0, 0, 1, 1], [], []>} : vector<128x144xbf16>, vector<144x32xbf16>, vector<128x32xf32> -> vector<128x32xf32>
    %3 = arith.truncf %2 : vector<128x32xf32> to vector<128x32xbf16>
    %c0_3 = arith.constant 0 : index
    %c0_4 = arith.constant 0 : index
    %4 = vector.load %arg3[%c0_3, %c0_4] : memref<128x32xbf16, #tpu.memory_space<vmem>>, vector<128x32xbf16>
    tpu.vector_store %arg3[%c0_3, %c0_4], %3 {strides = array<i32>} : memref<128x32xbf16, #tpu.memory_space<vmem>>, vector<128x32xbf16>,
    %cst_5 = arith.constant dense<0.000000e+00> : vector<32xf32>
    %5 = vector.multi_reduction <add>, %2, %cst_5 [0] : vector<128x32xf32> to vector<32xf32>
    %6 = vector.shape_cast %5 : vector<32xf32> to vector<1x32xf32>
    %7 = vector.shape_cast %6 : vector<1x32xf32> to vector<1x1x32xf32>
    %c0_6 = arith.constant 0 : index
    %c0_7 = arith.constant 0 : index
    %c0_8 = arith.constant 0 : index
    %8 = vector.load %arg4[%c0_6, %c0_7, %c0_8] : memref<1x1x32xf32, #tpu.memory_space<vmem>>, vector<1x1x32xf32>
    tpu.vector_store %arg4[%c0_6, %c0_7, %c0_8], %7 {strides = array<i32>} : memref<1x1x32xf32, #tpu.memory_space<vmem>>, vector<1x1x32xf32>,
    %9 = arith.mulf %2, %2 : vector<128x32xf32>
    %cst_9 = arith.constant dense<0.000000e+00> : vector<32xf32>
    %10 = vector.multi_reduction <add>, %9, %cst_9 [0] : vector<128x32xf32> to vector<32xf32>
    %11 = vector.shape_cast %10 : vector<32xf32> to vector<1x32xf32>
    %12 = vector.shape_cast %11 : vector<1x32xf32> to vector<1x1x32xf32>
    %c0_10 = arith.constant 0 : index
    %c0_11 = arith.constant 0 : index
    %c0_12 = arith.constant 0 : index
    %13 = vector.load %arg5[%c0_10, %c0_11, %c0_12] : memref<1x1x32xf32, #tpu.memory_space<vmem>>, vector<1x1x32xf32>
    tpu.vector_store %arg5[%c0_10, %c0_11, %c0_12], %12 {strides = array<i32>} : memref<1x1x32xf32, #tpu.memory_space<vmem>>, vector<1x1x32xf32>,
    return
  }
  func.func @transform_0(%arg0: i32) -> (i32, i32) {
    %c0_i32 = arith.constant 0 : i32
    %c0_i32_0 = arith.constant 0 : i32
    return %arg0, %c0_i32 : i32, i32
  }
  func.func @transform_1(%arg0: i32) -> (i32, i32) {
    %c0_i32 = arith.constant 0 : i32
    %c0_i32_0 = arith.constant 0 : i32
    %c0_i32_1 = arith.constant 0 : i32
    return %c0_i32, %c0_i32_0 : i32, i32
  }
  func.func @transform_2(%arg0: i32) -> (i32, i32) {
    %c0_i32 = arith.constant 0 : i32
    %c0_i32_0 = arith.constant 0 : i32
    return %arg0, %c0_i32 : i32, i32
  }
  func.func @transform_3(%arg0: i32) -> (i32, i32, i32) {
    %c0_i32 = arith.constant 0 : i32
    %c0_i32_0 = arith.constant 0 : i32
    %c0_i32_1 = arith.constant 0 : i32
    return %arg0, %c0_i32, %c0_i32_0 : i32, i32, i32
  }
  func.func @transform_4(%arg0: i32) -> (i32, i32, i32) {
    %c0_i32 = arith.constant 0 : i32
    %c0_i32_0 = arith.constant 0 : i32
    %c0_i32_1 = arith.constant 0 : i32
    return %arg0, %c0_i32, %c0_i32_0 : i32, i32, i32
  }
}

module attributes {stable_mosaic.version = 11 : i64} {
  func.func @_mm_stats_kernel(%arg0: i32, %arg1: memref<128x288xbf16, #tpu.memory_space<vmem>>, %arg2: memref<288x32xbf16, #tpu.memory_space<vmem>>, %arg3: memref<128x32xbf16, #tpu.memory_space<vmem>>, %arg4: memref<1x1x32xf32, #tpu.memory_space<vmem>>, %arg5: memref<1x1x32xf32, #tpu.memory_space<vmem>>) attributes {dimension_semantics = [#tpu.dimension_semantics<parallel>], iteration_bounds = array<i64: 1>, scalar_prefetch = 0 : i64, scratch_operands = 0 : i64, tpu.core_type = #tpu.core_type<tc>, window_params = [{transform_indices = @transform_0, window_bounds = array<i64: 128, 288>}, {pipeline_mode = #tpu.pipeline_mode<synchronous>, transform_indices = @transform_1, window_bounds = array<i64: 288, 32>}, {transform_indices = @transform_2, window_bounds = array<i64: 128, 32>}, {transform_indices = @transform_3, window_bounds = array<i64: 1, 1, 32>}, {transform_indices = @transform_4, window_bounds = array<i64: 1, 1, 32>}]} {
    %c0 = arith.constant 0 : index
    %c0_0 = arith.constant 0 : index
    %0 = vector.load %arg1[%c0, %c0_0] : memref<128x288xbf16, #tpu.memory_space<vmem>>, vector<128x288xbf16>
    %c0_1 = arith.constant 0 : index
    %c0_2 = arith.constant 0 : index
    %1 = vector.load %arg2[%c0_1, %c0_2] : memref<288x32xbf16, #tpu.memory_space<vmem>>, vector<288x32xbf16>
    %cst = arith.constant dense<0.000000e+00> : vector<128x32xf32>
    %2 = tpu.matmul %0, %1, %cst {dimension_numbers = #tpu.dot_dimension_numbers<[1], [0], [0], [1], [0, 0, 1, 1], [], []>} : vector<128x288xbf16>, vector<288x32xbf16>, vector<128x32xf32> -> vector<128x32xf32>
    %3 = arith.truncf %2 : vector<128x32xf32> to vector<128x32xbf16>
    %c0_3 = arith.constant 0 : index
    %c0_4 = arith.constant 0 : index
    %4 = vector.load %arg3[%c0_3, %c0_4] : memref<128x32xbf16, #tpu.memory_space<vmem>>, vector<128x32xbf16>
    tpu.vector_store %arg3[%c0_3, %c0_4], %3 {strides = array<i32>} : memref<128x32xbf16, #tpu.memory_space<vmem>>, vector<128x32xbf16>,
    %cst_5 = arith.constant dense<0.000000e+00> : vector<32xf32>
    %5 = vector.multi_reduction <add>, %2, %cst_5 [0] : vector<128x32xf32> to vector<32xf32>
    %6 = vector.shape_cast %5 : vector<32xf32> to vector<1x32xf32>
    %7 = vector.shape_cast %6 : vector<1x32xf32> to vector<1x1x32xf32>
    %c0_6 = arith.constant 0 : index
    %c0_7 = arith.constant 0 : index
    %c0_8 = arith.constant 0 : index
    %8 = vector.load %arg4[%c0_6, %c0_7, %c0_8] : memref<1x1x32xf32, #tpu.memory_space<vmem>>, vector<1x1x32xf32>
    tpu.vector_store %arg4[%c0_6, %c0_7, %c0_8], %7 {strides = array<i32>} : memref<1x1x32xf32, #tpu.memory_space<vmem>>, vector<1x1x32xf32>,
    %9 = arith.mulf %2, %2 : vector<128x32xf32>
    %cst_9 = arith.constant dense<0.000000e+00> : vector<32xf32>
    %10 = vector.multi_reduction <add>, %9, %cst_9 [0] : vector<128x32xf32> to vector<32xf32>
    %11 = vector.shape_cast %10 : vector<32xf32> to vector<1x32xf32>
    %12 = vector.shape_cast %11 : vector<1x32xf32> to vector<1x1x32xf32>
    %c0_10 = arith.constant 0 : index
    %c0_11 = arith.constant 0 : index
    %c0_12 = arith.constant 0 : index
    %13 = vector.load %arg5[%c0_10, %c0_11, %c0_12] : memref<1x1x32xf32, #tpu.memory_space<vmem>>, vector<1x1x32xf32>
    tpu.vector_store %arg5[%c0_10, %c0_11, %c0_12], %12 {strides = array<i32>} : memref<1x1x32xf32, #tpu.memory_space<vmem>>, vector<1x1x32xf32>,
    return
  }
  func.func @transform_0(%arg0: i32) -> (i32, i32) {
    %c0_i32 = arith.constant 0 : i32
    %c0_i32_0 = arith.constant 0 : i32
    return %arg0, %c0_i32 : i32, i32
  }
  func.func @transform_1(%arg0: i32) -> (i32, i32) {
    %c0_i32 = arith.constant 0 : i32
    %c0_i32_0 = arith.constant 0 : i32
    %c0_i32_1 = arith.constant 0 : i32
    return %c0_i32, %c0_i32_0 : i32, i32
  }
  func.func @transform_2(%arg0: i32) -> (i32, i32) {
    %c0_i32 = arith.constant 0 : i32
    %c0_i32_0 = arith.constant 0 : i32
    return %arg0, %c0_i32 : i32, i32
  }
  func.func @transform_3(%arg0: i32) -> (i32, i32, i32) {
    %c0_i32 = arith.constant 0 : i32
    %c0_i32_0 = arith.constant 0 : i32
    %c0_i32_1 = arith.constant 0 : i32
    return %arg0, %c0_i32, %c0_i32_0 : i32, i32, i32
  }
  func.func @transform_4(%arg0: i32) -> (i32, i32, i32) {
    %c0_i32 = arith.constant 0 : i32
    %c0_i32_0 = arith.constant 0 : i32
    %c0_i32_1 = arith.constant 0 : i32
    return %arg0, %c0_i32, %c0_i32_0 : i32, i32, i32
  }
}

module attributes {stable_mosaic.version = 11 : i64} {
  func.func @_mm_stats_kernel(%arg0: i32, %arg1: memref<128x1728xbf16, #tpu.memory_space<vmem>>, %arg2: memref<1728x32xbf16, #tpu.memory_space<vmem>>, %arg3: memref<128x32xbf16, #tpu.memory_space<vmem>>, %arg4: memref<1x1x32xf32, #tpu.memory_space<vmem>>, %arg5: memref<1x1x32xf32, #tpu.memory_space<vmem>>) attributes {dimension_semantics = [#tpu.dimension_semantics<parallel>], iteration_bounds = array<i64: 1>, scalar_prefetch = 0 : i64, scratch_operands = 0 : i64, tpu.core_type = #tpu.core_type<tc>, window_params = [{transform_indices = @transform_0, window_bounds = array<i64: 128, 1728>}, {pipeline_mode = #tpu.pipeline_mode<synchronous>, transform_indices = @transform_1, window_bounds = array<i64: 1728, 32>}, {transform_indices = @transform_2, window_bounds = array<i64: 128, 32>}, {transform_indices = @transform_3, window_bounds = array<i64: 1, 1, 32>}, {transform_indices = @transform_4, window_bounds = array<i64: 1, 1, 32>}]} {
    %c0 = arith.constant 0 : index
    %c0_0 = arith.constant 0 : index
    %0 = vector.load %arg1[%c0, %c0_0] : memref<128x1728xbf16, #tpu.memory_space<vmem>>, vector<128x1728xbf16>
    %c0_1 = arith.constant 0 : index
    %c0_2 = arith.constant 0 : index
    %1 = vector.load %arg2[%c0_1, %c0_2] : memref<1728x32xbf16, #tpu.memory_space<vmem>>, vector<1728x32xbf16>
    %cst = arith.constant dense<0.000000e+00> : vector<128x32xf32>
    %2 = tpu.matmul %0, %1, %cst {dimension_numbers = #tpu.dot_dimension_numbers<[1], [0], [0], [1], [0, 0, 1, 1], [], []>} : vector<128x1728xbf16>, vector<1728x32xbf16>, vector<128x32xf32> -> vector<128x32xf32>
    %3 = arith.truncf %2 : vector<128x32xf32> to vector<128x32xbf16>
    %c0_3 = arith.constant 0 : index
    %c0_4 = arith.constant 0 : index
    %4 = vector.load %arg3[%c0_3, %c0_4] : memref<128x32xbf16, #tpu.memory_space<vmem>>, vector<128x32xbf16>
    tpu.vector_store %arg3[%c0_3, %c0_4], %3 {strides = array<i32>} : memref<128x32xbf16, #tpu.memory_space<vmem>>, vector<128x32xbf16>,
    %cst_5 = arith.constant dense<0.000000e+00> : vector<32xf32>
    %5 = vector.multi_reduction <add>, %2, %cst_5 [0] : vector<128x32xf32> to vector<32xf32>
    %6 = vector.shape_cast %5 : vector<32xf32> to vector<1x32xf32>
    %7 = vector.shape_cast %6 : vector<1x32xf32> to vector<1x1x32xf32>
    %c0_6 = arith.constant 0 : index
    %c0_7 = arith.constant 0 : index
    %c0_8 = arith.constant 0 : index
    %8 = vector.load %arg4[%c0_6, %c0_7, %c0_8] : memref<1x1x32xf32, #tpu.memory_space<vmem>>, vector<1x1x32xf32>
    tpu.vector_store %arg4[%c0_6, %c0_7, %c0_8], %7 {strides = array<i32>} : memref<1x1x32xf32, #tpu.memory_space<vmem>>, vector<1x1x32xf32>,
    %9 = arith.mulf %2, %2 : vector<128x32xf32>
    %cst_9 = arith.constant dense<0.000000e+00> : vector<32xf32>
    %10 = vector.multi_reduction <add>, %9, %cst_9 [0] : vector<128x32xf32> to vector<32xf32>
    %11 = vector.shape_cast %10 : vector<32xf32> to vector<1x32xf32>
    %12 = vector.shape_cast %11 : vector<1x32xf32> to vector<1x1x32xf32>
    %c0_10 = arith.constant 0 : index
    %c0_11 = arith.constant 0 : index
    %c0_12 = arith.constant 0 : index
    %13 = vector.load %arg5[%c0_10, %c0_11, %c0_12] : memref<1x1x32xf32, #tpu.memory_space<vmem>>, vector<1x1x32xf32>
    tpu.vector_store %arg5[%c0_10, %c0_11, %c0_12], %12 {strides = array<i32>} : memref<1x1x32xf32, #tpu.memory_space<vmem>>, vector<1x1x32xf32>,
    return
  }
  func.func @transform_0(%arg0: i32) -> (i32, i32) {
    %c0_i32 = arith.constant 0 : i32
    %c0_i32_0 = arith.constant 0 : i32
    return %arg0, %c0_i32 : i32, i32
  }
  func.func @transform_1(%arg0: i32) -> (i32, i32) {
    %c0_i32 = arith.constant 0 : i32
    %c0_i32_0 = arith.constant 0 : i32
    %c0_i32_1 = arith.constant 0 : i32
    return %c0_i32, %c0_i32_0 : i32, i32
  }
  func.func @transform_2(%arg0: i32) -> (i32, i32) {
    %c0_i32 = arith.constant 0 : i32
    %c0_i32_0 = arith.constant 0 : i32
    return %arg0, %c0_i32 : i32, i32
  }
  func.func @transform_3(%arg0: i32) -> (i32, i32, i32) {
    %c0_i32 = arith.constant 0 : i32
    %c0_i32_0 = arith.constant 0 : i32
    %c0_i32_1 = arith.constant 0 : i32
    return %arg0, %c0_i32, %c0_i32_0 : i32, i32, i32
  }
  func.func @transform_4(%arg0: i32) -> (i32, i32, i32) {
    %c0_i32 = arith.constant 0 : i32
    %c0_i32_0 = arith.constant 0 : i32
    %c0_i32_1 = arith.constant 0 : i32
    return %arg0, %c0_i32, %c0_i32_0 : i32, i32, i32
  }
}

module attributes {stable_mosaic.version = 11 : i64} {
  func.func @_mm_stats_kernel(%arg0: i32, %arg1: memref<128x864xbf16, #tpu.memory_space<vmem>>, %arg2: memref<864x32xbf16, #tpu.memory_space<vmem>>, %arg3: memref<128x32xbf16, #tpu.memory_space<vmem>>, %arg4: memref<1x1x32xf32, #tpu.memory_space<vmem>>, %arg5: memref<1x1x32xf32, #tpu.memory_space<vmem>>) attributes {dimension_semantics = [#tpu.dimension_semantics<parallel>], iteration_bounds = array<i64: 1>, scalar_prefetch = 0 : i64, scratch_operands = 0 : i64, tpu.core_type = #tpu.core_type<tc>, window_params = [{transform_indices = @transform_0, window_bounds = array<i64: 128, 864>}, {pipeline_mode = #tpu.pipeline_mode<synchronous>, transform_indices = @transform_1, window_bounds = array<i64: 864, 32>}, {transform_indices = @transform_2, window_bounds = array<i64: 128, 32>}, {transform_indices = @transform_3, window_bounds = array<i64: 1, 1, 32>}, {transform_indices = @transform_4, window_bounds = array<i64: 1, 1, 32>}]} {
    %c0 = arith.constant 0 : index
    %c0_0 = arith.constant 0 : index
    %0 = vector.load %arg1[%c0, %c0_0] : memref<128x864xbf16, #tpu.memory_space<vmem>>, vector<128x864xbf16>
    %c0_1 = arith.constant 0 : index
    %c0_2 = arith.constant 0 : index
    %1 = vector.load %arg2[%c0_1, %c0_2] : memref<864x32xbf16, #tpu.memory_space<vmem>>, vector<864x32xbf16>
    %cst = arith.constant dense<0.000000e+00> : vector<128x32xf32>
    %2 = tpu.matmul %0, %1, %cst {dimension_numbers = #tpu.dot_dimension_numbers<[1], [0], [0], [1], [0, 0, 1, 1], [], []>} : vector<128x864xbf16>, vector<864x32xbf16>, vector<128x32xf32> -> vector<128x32xf32>
    %3 = arith.truncf %2 : vector<128x32xf32> to vector<128x32xbf16>
    %c0_3 = arith.constant 0 : index
    %c0_4 = arith.constant 0 : index
    %4 = vector.load %arg3[%c0_3, %c0_4] : memref<128x32xbf16, #tpu.memory_space<vmem>>, vector<128x32xbf16>
    tpu.vector_store %arg3[%c0_3, %c0_4], %3 {strides = array<i32>} : memref<128x32xbf16, #tpu.memory_space<vmem>>, vector<128x32xbf16>,
    %cst_5 = arith.constant dense<0.000000e+00> : vector<32xf32>
    %5 = vector.multi_reduction <add>, %2, %cst_5 [0] : vector<128x32xf32> to vector<32xf32>
    %6 = vector.shape_cast %5 : vector<32xf32> to vector<1x32xf32>
    %7 = vector.shape_cast %6 : vector<1x32xf32> to vector<1x1x32xf32>
    %c0_6 = arith.constant 0 : index
    %c0_7 = arith.constant 0 : index
    %c0_8 = arith.constant 0 : index
    %8 = vector.load %arg4[%c0_6, %c0_7, %c0_8] : memref<1x1x32xf32, #tpu.memory_space<vmem>>, vector<1x1x32xf32>
    tpu.vector_store %arg4[%c0_6, %c0_7, %c0_8], %7 {strides = array<i32>} : memref<1x1x32xf32, #tpu.memory_space<vmem>>, vector<1x1x32xf32>,
    %9 = arith.mulf %2, %2 : vector<128x32xf32>
    %cst_9 = arith.constant dense<0.000000e+00> : vector<32xf32>
    %10 = vector.multi_reduction <add>, %9, %cst_9 [0] : vector<128x32xf32> to vector<32xf32>
    %11 = vector.shape_cast %10 : vector<32xf32> to vector<1x32xf32>
    %12 = vector.shape_cast %11 : vector<1x32xf32> to vector<1x1x32xf32>
    %c0_10 = arith.constant 0 : index
    %c0_11 = arith.constant 0 : index
    %c0_12 = arith.constant 0 : index
    %13 = vector.load %arg5[%c0_10, %c0_11, %c0_12] : memref<1x1x32xf32, #tpu.memory_space<vmem>>, vector<1x1x32xf32>
    tpu.vector_store %arg5[%c0_10, %c0_11, %c0_12], %12 {strides = array<i32>} : memref<1x1x32xf32, #tpu.memory_space<vmem>>, vector<1x1x32xf32>,
    return
  }
  func.func @transform_0(%arg0: i32) -> (i32, i32) {
    %c0_i32 = arith.constant 0 : i32
    %c0_i32_0 = arith.constant 0 : i32
    return %arg0, %c0_i32 : i32, i32
  }
  func.func @transform_1(%arg0: i32) -> (i32, i32) {
    %c0_i32 = arith.constant 0 : i32
    %c0_i32_0 = arith.constant 0 : i32
    %c0_i32_1 = arith.constant 0 : i32
    return %c0_i32, %c0_i32_0 : i32, i32
  }
  func.func @transform_2(%arg0: i32) -> (i32, i32) {
    %c0_i32 = arith.constant 0 : i32
    %c0_i32_0 = arith.constant 0 : i32
    return %arg0, %c0_i32 : i32, i32
  }
  func.func @transform_3(%arg0: i32) -> (i32, i32, i32) {
    %c0_i32 = arith.constant 0 : i32
    %c0_i32_0 = arith.constant 0 : i32
    %c0_i32_1 = arith.constant 0 : i32
    return %arg0, %c0_i32, %c0_i32_0 : i32, i32, i32
  }
  func.func @transform_4(%arg0: i32) -> (i32, i32, i32) {
    %c0_i32 = arith.constant 0 : i32
    %c0_i32_0 = arith.constant 0 : i32
    %c0_i32_1 = arith.constant 0 : i32
    return %arg0, %c0_i32, %c0_i32_0 : i32, i32, i32
  }
}

module attributes {stable_mosaic.version = 11 : i64} {
  func.func @_affine_res_kernel(%arg0: i32, %arg1: memref<32x128xbf16, #tpu.memory_space<vmem>>, %arg2: memref<1x128xf32, #tpu.memory_space<vmem>>, %arg3: memref<1x128xf32, #tpu.memory_space<vmem>>, %arg4: memref<32x128xbf16, #tpu.memory_space<vmem>>, %arg5: memref<32x128xbf16, #tpu.memory_space<vmem>>) attributes {dimension_semantics = [#tpu.dimension_semantics<parallel>], iteration_bounds = array<i64: 1>, scalar_prefetch = 0 : i64, scratch_operands = 0 : i64, tpu.core_type = #tpu.core_type<tc>, window_params = [{transform_indices = @transform_0, window_bounds = array<i64: 32, 128>}, {pipeline_mode = #tpu.pipeline_mode<synchronous>, transform_indices = @transform_1, window_bounds = array<i64: 1, 128>}, {pipeline_mode = #tpu.pipeline_mode<synchronous>, transform_indices = @transform_2, window_bounds = array<i64: 1, 128>}, {transform_indices = @transform_3, window_bounds = array<i64: 32, 128>}, {transform_indices = @transform_4, window_bounds = array<i64: 32, 128>}]} {
    %c0 = arith.constant 0 : index
    %c0_0 = arith.constant 0 : index
    %0 = vector.load %arg1[%c0, %c0_0] : memref<32x128xbf16, #tpu.memory_space<vmem>>, vector<32x128xbf16>
    %1 = arith.extf %0 : vector<32x128xbf16> to vector<32x128xf32>
    %c0_1 = arith.constant 0 : index
    %c0_2 = arith.constant 0 : index
    %2 = vector.load %arg2[%c0_1, %c0_2] : memref<1x128xf32, #tpu.memory_space<vmem>>, vector<1x128xf32>
    %3 = vector.broadcast %2 : vector<1x128xf32> to vector<32x128xf32>
    %4 = arith.mulf %1, %3 : vector<32x128xf32>
    %c0_3 = arith.constant 0 : index
    %c0_4 = arith.constant 0 : index
    %5 = vector.load %arg3[%c0_3, %c0_4] : memref<1x128xf32, #tpu.memory_space<vmem>>, vector<1x128xf32>
    %6 = vector.broadcast %5 : vector<1x128xf32> to vector<32x128xf32>
    %7 = arith.addf %4, %6 : vector<32x128xf32>
    %c0_5 = arith.constant 0 : index
    %c0_6 = arith.constant 0 : index
    %8 = vector.load %arg4[%c0_5, %c0_6] : memref<32x128xbf16, #tpu.memory_space<vmem>>, vector<32x128xbf16>
    %9 = arith.extf %8 : vector<32x128xbf16> to vector<32x128xf32>
    %10 = arith.addf %7, %9 : vector<32x128xf32>
    %11 = arith.truncf %10 : vector<32x128xf32> to vector<32x128xbf16>
    %c0_7 = arith.constant 0 : index
    %c0_8 = arith.constant 0 : index
    %12 = vector.load %arg5[%c0_7, %c0_8] : memref<32x128xbf16, #tpu.memory_space<vmem>>, vector<32x128xbf16>
    tpu.vector_store %arg5[%c0_7, %c0_8], %11 {strides = array<i32>} : memref<32x128xbf16, #tpu.memory_space<vmem>>, vector<32x128xbf16>,
    return
  }
  func.func @transform_0(%arg0: i32) -> (i32, i32) {
    %c0_i32 = arith.constant 0 : i32
    %c0_i32_0 = arith.constant 0 : i32
    return %arg0, %c0_i32 : i32, i32
  }
  func.func @transform_1(%arg0: i32) -> (i32, i32) {
    %c0_i32 = arith.constant 0 : i32
    %c0_i32_0 = arith.constant 0 : i32
    %c0_i32_1 = arith.constant 0 : i32
    return %c0_i32, %c0_i32_0 : i32, i32
  }
  func.func @transform_2(%arg0: i32) -> (i32, i32) {
    %c0_i32 = arith.constant 0 : i32
    %c0_i32_0 = arith.constant 0 : i32
    %c0_i32_1 = arith.constant 0 : i32
    return %c0_i32, %c0_i32_0 : i32, i32
  }
  func.func @transform_3(%arg0: i32) -> (i32, i32) {
    %c0_i32 = arith.constant 0 : i32
    %c0_i32_0 = arith.constant 0 : i32
    return %arg0, %c0_i32 : i32, i32
  }
  func.func @transform_4(%arg0: i32) -> (i32, i32) {
    %c0_i32 = arith.constant 0 : i32
    %c0_i32_0 = arith.constant 0 : i32
    return %arg0, %c0_i32 : i32, i32
  }
}

module attributes {stable_mosaic.version = 11 : i64} {
  func.func @_mm_stats_kernel(%arg0: i32, %arg1: memref<128x864xbf16, #tpu.memory_space<vmem>>, %arg2: memref<864x64xbf16, #tpu.memory_space<vmem>>, %arg3: memref<128x64xbf16, #tpu.memory_space<vmem>>, %arg4: memref<1x1x64xf32, #tpu.memory_space<vmem>>, %arg5: memref<1x1x64xf32, #tpu.memory_space<vmem>>) attributes {dimension_semantics = [#tpu.dimension_semantics<parallel>], iteration_bounds = array<i64: 1>, scalar_prefetch = 0 : i64, scratch_operands = 0 : i64, tpu.core_type = #tpu.core_type<tc>, window_params = [{transform_indices = @transform_0, window_bounds = array<i64: 128, 864>}, {pipeline_mode = #tpu.pipeline_mode<synchronous>, transform_indices = @transform_1, window_bounds = array<i64: 864, 64>}, {transform_indices = @transform_2, window_bounds = array<i64: 128, 64>}, {transform_indices = @transform_3, window_bounds = array<i64: 1, 1, 64>}, {transform_indices = @transform_4, window_bounds = array<i64: 1, 1, 64>}]} {
    %c0 = arith.constant 0 : index
    %c0_0 = arith.constant 0 : index
    %0 = vector.load %arg1[%c0, %c0_0] : memref<128x864xbf16, #tpu.memory_space<vmem>>, vector<128x864xbf16>
    %c0_1 = arith.constant 0 : index
    %c0_2 = arith.constant 0 : index
    %1 = vector.load %arg2[%c0_1, %c0_2] : memref<864x64xbf16, #tpu.memory_space<vmem>>, vector<864x64xbf16>
    %cst = arith.constant dense<0.000000e+00> : vector<128x64xf32>
    %2 = tpu.matmul %0, %1, %cst {dimension_numbers = #tpu.dot_dimension_numbers<[1], [0], [0], [1], [0, 0, 1, 1], [], []>} : vector<128x864xbf16>, vector<864x64xbf16>, vector<128x64xf32> -> vector<128x64xf32>
    %3 = arith.truncf %2 : vector<128x64xf32> to vector<128x64xbf16>
    %c0_3 = arith.constant 0 : index
    %c0_4 = arith.constant 0 : index
    %4 = vector.load %arg3[%c0_3, %c0_4] : memref<128x64xbf16, #tpu.memory_space<vmem>>, vector<128x64xbf16>
    tpu.vector_store %arg3[%c0_3, %c0_4], %3 {strides = array<i32>} : memref<128x64xbf16, #tpu.memory_space<vmem>>, vector<128x64xbf16>,
    %cst_5 = arith.constant dense<0.000000e+00> : vector<64xf32>
    %5 = vector.multi_reduction <add>, %2, %cst_5 [0] : vector<128x64xf32> to vector<64xf32>
    %6 = vector.shape_cast %5 : vector<64xf32> to vector<1x64xf32>
    %7 = vector.shape_cast %6 : vector<1x64xf32> to vector<1x1x64xf32>
    %c0_6 = arith.constant 0 : index
    %c0_7 = arith.constant 0 : index
    %c0_8 = arith.constant 0 : index
    %8 = vector.load %arg4[%c0_6, %c0_7, %c0_8] : memref<1x1x64xf32, #tpu.memory_space<vmem>>, vector<1x1x64xf32>
    tpu.vector_store %arg4[%c0_6, %c0_7, %c0_8], %7 {strides = array<i32>} : memref<1x1x64xf32, #tpu.memory_space<vmem>>, vector<1x1x64xf32>,
    %9 = arith.mulf %2, %2 : vector<128x64xf32>
    %cst_9 = arith.constant dense<0.000000e+00> : vector<64xf32>
    %10 = vector.multi_reduction <add>, %9, %cst_9 [0] : vector<128x64xf32> to vector<64xf32>
    %11 = vector.shape_cast %10 : vector<64xf32> to vector<1x64xf32>
    %12 = vector.shape_cast %11 : vector<1x64xf32> to vector<1x1x64xf32>
    %c0_10 = arith.constant 0 : index
    %c0_11 = arith.constant 0 : index
    %c0_12 = arith.constant 0 : index
    %13 = vector.load %arg5[%c0_10, %c0_11, %c0_12] : memref<1x1x64xf32, #tpu.memory_space<vmem>>, vector<1x1x64xf32>
    tpu.vector_store %arg5[%c0_10, %c0_11, %c0_12], %12 {strides = array<i32>} : memref<1x1x64xf32, #tpu.memory_space<vmem>>, vector<1x1x64xf32>,
    return
  }
  func.func @transform_0(%arg0: i32) -> (i32, i32) {
    %c0_i32 = arith.constant 0 : i32
    %c0_i32_0 = arith.constant 0 : i32
    return %arg0, %c0_i32 : i32, i32
  }
  func.func @transform_1(%arg0: i32) -> (i32, i32) {
    %c0_i32 = arith.constant 0 : i32
    %c0_i32_0 = arith.constant 0 : i32
    %c0_i32_1 = arith.constant 0 : i32
    return %c0_i32, %c0_i32_0 : i32, i32
  }
  func.func @transform_2(%arg0: i32) -> (i32, i32) {
    %c0_i32 = arith.constant 0 : i32
    %c0_i32_0 = arith.constant 0 : i32
    return %arg0, %c0_i32 : i32, i32
  }
  func.func @transform_3(%arg0: i32) -> (i32, i32, i32) {
    %c0_i32 = arith.constant 0 : i32
    %c0_i32_0 = arith.constant 0 : i32
    %c0_i32_1 = arith.constant 0 : i32
    return %arg0, %c0_i32, %c0_i32_0 : i32, i32, i32
  }
  func.func @transform_4(%arg0: i32) -> (i32, i32, i32) {
    %c0_i32 = arith.constant 0 : i32
    %c0_i32_0 = arith.constant 0 : i32
    %c0_i32_1 = arith.constant 0 : i32
    return %arg0, %c0_i32, %c0_i32_0 : i32, i32, i32
  }
}

module attributes {stable_mosaic.version = 11 : i64} {
  func.func @_affine_kernel(%arg0: i32, %arg1: memref<64x128xbf16, #tpu.memory_space<vmem>>, %arg2: memref<1x128xf32, #tpu.memory_space<vmem>>, %arg3: memref<1x128xf32, #tpu.memory_space<vmem>>, %arg4: memref<64x128xbf16, #tpu.memory_space<vmem>>) attributes {dimension_semantics = [#tpu.dimension_semantics<parallel>], iteration_bounds = array<i64: 1>, scalar_prefetch = 0 : i64, scratch_operands = 0 : i64, tpu.core_type = #tpu.core_type<tc>, window_params = [{transform_indices = @transform_0, window_bounds = array<i64: 64, 128>}, {pipeline_mode = #tpu.pipeline_mode<synchronous>, transform_indices = @transform_1, window_bounds = array<i64: 1, 128>}, {pipeline_mode = #tpu.pipeline_mode<synchronous>, transform_indices = @transform_2, window_bounds = array<i64: 1, 128>}, {transform_indices = @transform_3, window_bounds = array<i64: 64, 128>}]} {
    %c0 = arith.constant 0 : index
    %c0_0 = arith.constant 0 : index
    %0 = vector.load %arg1[%c0, %c0_0] : memref<64x128xbf16, #tpu.memory_space<vmem>>, vector<64x128xbf16>
    %1 = arith.extf %0 : vector<64x128xbf16> to vector<64x128xf32>
    %c0_1 = arith.constant 0 : index
    %c0_2 = arith.constant 0 : index
    %2 = vector.load %arg2[%c0_1, %c0_2] : memref<1x128xf32, #tpu.memory_space<vmem>>, vector<1x128xf32>
    %3 = vector.broadcast %2 : vector<1x128xf32> to vector<64x128xf32>
    %4 = arith.mulf %1, %3 : vector<64x128xf32>
    %c0_3 = arith.constant 0 : index
    %c0_4 = arith.constant 0 : index
    %5 = vector.load %arg3[%c0_3, %c0_4] : memref<1x128xf32, #tpu.memory_space<vmem>>, vector<1x128xf32>
    %6 = vector.broadcast %5 : vector<1x128xf32> to vector<64x128xf32>
    %7 = arith.addf %4, %6 : vector<64x128xf32>
    %cst = arith.constant 0.000000e+00 : f32
    %8 = vector.broadcast %cst : f32 to vector<64x128xf32>
    %9 = arith.maximumf %7, %8 : vector<64x128xf32>
    %10 = arith.truncf %9 : vector<64x128xf32> to vector<64x128xbf16>
    %c0_5 = arith.constant 0 : index
    %c0_6 = arith.constant 0 : index
    %11 = vector.load %arg4[%c0_5, %c0_6] : memref<64x128xbf16, #tpu.memory_space<vmem>>, vector<64x128xbf16>
    tpu.vector_store %arg4[%c0_5, %c0_6], %10 {strides = array<i32>} : memref<64x128xbf16, #tpu.memory_space<vmem>>, vector<64x128xbf16>,
    return
  }
  func.func @transform_0(%arg0: i32) -> (i32, i32) {
    %c0_i32 = arith.constant 0 : i32
    %c0_i32_0 = arith.constant 0 : i32
    return %arg0, %c0_i32 : i32, i32
  }
  func.func @transform_1(%arg0: i32) -> (i32, i32) {
    %c0_i32 = arith.constant 0 : i32
    %c0_i32_0 = arith.constant 0 : i32
    %c0_i32_1 = arith.constant 0 : i32
    return %c0_i32, %c0_i32_0 : i32, i32
  }
  func.func @transform_2(%arg0: i32) -> (i32, i32) {
    %c0_i32 = arith.constant 0 : i32
    %c0_i32_0 = arith.constant 0 : i32
    %c0_i32_1 = arith.constant 0 : i32
    return %c0_i32, %c0_i32_0 : i32, i32
  }
  func.func @transform_3(%arg0: i32) -> (i32, i32) {
    %c0_i32 = arith.constant 0 : i32
    %c0_i32_0 = arith.constant 0 : i32
    return %arg0, %c0_i32 : i32, i32
  }
}

module attributes {stable_mosaic.version = 11 : i64} {
  func.func @_mm_stats_kernel(%arg0: i32, %arg1: memref<128x1728xbf16, #tpu.memory_space<vmem>>, %arg2: memref<1728x64xbf16, #tpu.memory_space<vmem>>, %arg3: memref<128x64xbf16, #tpu.memory_space<vmem>>, %arg4: memref<1x1x64xf32, #tpu.memory_space<vmem>>, %arg5: memref<1x1x64xf32, #tpu.memory_space<vmem>>) attributes {dimension_semantics = [#tpu.dimension_semantics<parallel>], iteration_bounds = array<i64: 1>, scalar_prefetch = 0 : i64, scratch_operands = 0 : i64, tpu.core_type = #tpu.core_type<tc>, window_params = [{transform_indices = @transform_0, window_bounds = array<i64: 128, 1728>}, {pipeline_mode = #tpu.pipeline_mode<synchronous>, transform_indices = @transform_1, window_bounds = array<i64: 1728, 64>}, {transform_indices = @transform_2, window_bounds = array<i64: 128, 64>}, {transform_indices = @transform_3, window_bounds = array<i64: 1, 1, 64>}, {transform_indices = @transform_4, window_bounds = array<i64: 1, 1, 64>}]} {
    %c0 = arith.constant 0 : index
    %c0_0 = arith.constant 0 : index
    %0 = vector.load %arg1[%c0, %c0_0] : memref<128x1728xbf16, #tpu.memory_space<vmem>>, vector<128x1728xbf16>
    %c0_1 = arith.constant 0 : index
    %c0_2 = arith.constant 0 : index
    %1 = vector.load %arg2[%c0_1, %c0_2] : memref<1728x64xbf16, #tpu.memory_space<vmem>>, vector<1728x64xbf16>
    %cst = arith.constant dense<0.000000e+00> : vector<128x64xf32>
    %2 = tpu.matmul %0, %1, %cst {dimension_numbers = #tpu.dot_dimension_numbers<[1], [0], [0], [1], [0, 0, 1, 1], [], []>} : vector<128x1728xbf16>, vector<1728x64xbf16>, vector<128x64xf32> -> vector<128x64xf32>
    %3 = arith.truncf %2 : vector<128x64xf32> to vector<128x64xbf16>
    %c0_3 = arith.constant 0 : index
    %c0_4 = arith.constant 0 : index
    %4 = vector.load %arg3[%c0_3, %c0_4] : memref<128x64xbf16, #tpu.memory_space<vmem>>, vector<128x64xbf16>
    tpu.vector_store %arg3[%c0_3, %c0_4], %3 {strides = array<i32>} : memref<128x64xbf16, #tpu.memory_space<vmem>>, vector<128x64xbf16>,
    %cst_5 = arith.constant dense<0.000000e+00> : vector<64xf32>
    %5 = vector.multi_reduction <add>, %2, %cst_5 [0] : vector<128x64xf32> to vector<64xf32>
    %6 = vector.shape_cast %5 : vector<64xf32> to vector<1x64xf32>
    %7 = vector.shape_cast %6 : vector<1x64xf32> to vector<1x1x64xf32>
    %c0_6 = arith.constant 0 : index
    %c0_7 = arith.constant 0 : index
    %c0_8 = arith.constant 0 : index
    %8 = vector.load %arg4[%c0_6, %c0_7, %c0_8] : memref<1x1x64xf32, #tpu.memory_space<vmem>>, vector<1x1x64xf32>
    tpu.vector_store %arg4[%c0_6, %c0_7, %c0_8], %7 {strides = array<i32>} : memref<1x1x64xf32, #tpu.memory_space<vmem>>, vector<1x1x64xf32>,
    %9 = arith.mulf %2, %2 : vector<128x64xf32>
    %cst_9 = arith.constant dense<0.000000e+00> : vector<64xf32>
    %10 = vector.multi_reduction <add>, %9, %cst_9 [0] : vector<128x64xf32> to vector<64xf32>
    %11 = vector.shape_cast %10 : vector<64xf32> to vector<1x64xf32>
    %12 = vector.shape_cast %11 : vector<1x64xf32> to vector<1x1x64xf32>
    %c0_10 = arith.constant 0 : index
    %c0_11 = arith.constant 0 : index
    %c0_12 = arith.constant 0 : index
    %13 = vector.load %arg5[%c0_10, %c0_11, %c0_12] : memref<1x1x64xf32, #tpu.memory_space<vmem>>, vector<1x1x64xf32>
    tpu.vector_store %arg5[%c0_10, %c0_11, %c0_12], %12 {strides = array<i32>} : memref<1x1x64xf32, #tpu.memory_space<vmem>>, vector<1x1x64xf32>,
    return
  }
  func.func @transform_0(%arg0: i32) -> (i32, i32) {
    %c0_i32 = arith.constant 0 : i32
    %c0_i32_0 = arith.constant 0 : i32
    return %arg0, %c0_i32 : i32, i32
  }
  func.func @transform_1(%arg0: i32) -> (i32, i32) {
    %c0_i32 = arith.constant 0 : i32
    %c0_i32_0 = arith.constant 0 : i32
    %c0_i32_1 = arith.constant 0 : i32
    return %c0_i32, %c0_i32_0 : i32, i32
  }
  func.func @transform_2(%arg0: i32) -> (i32, i32) {
    %c0_i32 = arith.constant 0 : i32
    %c0_i32_0 = arith.constant 0 : i32
    return %arg0, %c0_i32 : i32, i32
  }
  func.func @transform_3(%arg0: i32) -> (i32, i32, i32) {
    %c0_i32 = arith.constant 0 : i32
    %c0_i32_0 = arith.constant 0 : i32
    %c0_i32_1 = arith.constant 0 : i32
    return %arg0, %c0_i32, %c0_i32_0 : i32, i32, i32
  }
  func.func @transform_4(%arg0: i32) -> (i32, i32, i32) {
    %c0_i32 = arith.constant 0 : i32
    %c0_i32_0 = arith.constant 0 : i32
    %c0_i32_1 = arith.constant 0 : i32
    return %arg0, %c0_i32, %c0_i32_0 : i32, i32, i32
  }
}

module attributes {stable_mosaic.version = 11 : i64} {
  func.func @_affine_res_kernel(%arg0: i32, %arg1: memref<64x128xbf16, #tpu.memory_space<vmem>>, %arg2: memref<1x128xf32, #tpu.memory_space<vmem>>, %arg3: memref<1x128xf32, #tpu.memory_space<vmem>>, %arg4: memref<64x128xbf16, #tpu.memory_space<vmem>>, %arg5: memref<64x128xbf16, #tpu.memory_space<vmem>>) attributes {dimension_semantics = [#tpu.dimension_semantics<parallel>], iteration_bounds = array<i64: 1>, scalar_prefetch = 0 : i64, scratch_operands = 0 : i64, tpu.core_type = #tpu.core_type<tc>, window_params = [{transform_indices = @transform_0, window_bounds = array<i64: 64, 128>}, {pipeline_mode = #tpu.pipeline_mode<synchronous>, transform_indices = @transform_1, window_bounds = array<i64: 1, 128>}, {pipeline_mode = #tpu.pipeline_mode<synchronous>, transform_indices = @transform_2, window_bounds = array<i64: 1, 128>}, {transform_indices = @transform_3, window_bounds = array<i64: 64, 128>}, {transform_indices = @transform_4, window_bounds = array<i64: 64, 128>}]} {
    %c0 = arith.constant 0 : index
    %c0_0 = arith.constant 0 : index
    %0 = vector.load %arg1[%c0, %c0_0] : memref<64x128xbf16, #tpu.memory_space<vmem>>, vector<64x128xbf16>
    %1 = arith.extf %0 : vector<64x128xbf16> to vector<64x128xf32>
    %c0_1 = arith.constant 0 : index
    %c0_2 = arith.constant 0 : index
    %2 = vector.load %arg2[%c0_1, %c0_2] : memref<1x128xf32, #tpu.memory_space<vmem>>, vector<1x128xf32>
    %3 = vector.broadcast %2 : vector<1x128xf32> to vector<64x128xf32>
    %4 = arith.mulf %1, %3 : vector<64x128xf32>
    %c0_3 = arith.constant 0 : index
    %c0_4 = arith.constant 0 : index
    %5 = vector.load %arg3[%c0_3, %c0_4] : memref<1x128xf32, #tpu.memory_space<vmem>>, vector<1x128xf32>
    %6 = vector.broadcast %5 : vector<1x128xf32> to vector<64x128xf32>
    %7 = arith.addf %4, %6 : vector<64x128xf32>
    %c0_5 = arith.constant 0 : index
    %c0_6 = arith.constant 0 : index
    %8 = vector.load %arg4[%c0_5, %c0_6] : memref<64x128xbf16, #tpu.memory_space<vmem>>, vector<64x128xbf16>
    %9 = arith.extf %8 : vector<64x128xbf16> to vector<64x128xf32>
    %10 = arith.addf %7, %9 : vector<64x128xf32>
    %cst = arith.constant 0.000000e+00 : f32
    %11 = vector.broadcast %cst : f32 to vector<64x128xf32>
    %12 = arith.maximumf %10, %11 : vector<64x128xf32>
    %13 = arith.truncf %12 : vector<64x128xf32> to vector<64x128xbf16>
    %c0_7 = arith.constant 0 : index
    %c0_8 = arith.constant 0 : index
    %14 = vector.load %arg5[%c0_7, %c0_8] : memref<64x128xbf16, #tpu.memory_space<vmem>>, vector<64x128xbf16>
    tpu.vector_store %arg5[%c0_7, %c0_8], %13 {strides = array<i32>} : memref<64x128xbf16, #tpu.memory_space<vmem>>, vector<64x128xbf16>,
    return
  }
  func.func @transform_0(%arg0: i32) -> (i32, i32) {
    %c0_i32 = arith.constant 0 : i32
    %c0_i32_0 = arith.constant 0 : i32
    return %arg0, %c0_i32 : i32, i32
  }
  func.func @transform_1(%arg0: i32) -> (i32, i32) {
    %c0_i32 = arith.constant 0 : i32
    %c0_i32_0 = arith.constant 0 : i32
    %c0_i32_1 = arith.constant 0 : i32
    return %c0_i32, %c0_i32_0 : i32, i32
  }
  func.func @transform_2(%arg0: i32) -> (i32, i32) {
    %c0_i32 = arith.constant 0 : i32
    %c0_i32_0 = arith.constant 0 : i32
    %c0_i32_1 = arith.constant 0 : i32
    return %c0_i32, %c0_i32_0 : i32, i32
  }
  func.func @transform_3(%arg0: i32) -> (i32, i32) {
    %c0_i32 = arith.constant 0 : i32
    %c0_i32_0 = arith.constant 0 : i32
    return %arg0, %c0_i32 : i32, i32
  }
  func.func @transform_4(%arg0: i32) -> (i32, i32) {
    %c0_i32 = arith.constant 0 : i32
    %c0_i32_0 = arith.constant 0 : i32
    return %arg0, %c0_i32 : i32, i32
  }
}

module attributes {stable_mosaic.version = 11 : i64} {
  func.func @_mm_stats_kernel(%arg0: i32, %arg1: memref<128x864xbf16, #tpu.memory_space<vmem>>, %arg2: memref<864x1xbf16, #tpu.memory_space<vmem>>, %arg3: memref<128x1xf32, #tpu.memory_space<vmem>>, %arg4: memref<1x1x1xf32, #tpu.memory_space<vmem>>, %arg5: memref<1x1x1xf32, #tpu.memory_space<vmem>>) attributes {dimension_semantics = [#tpu.dimension_semantics<parallel>], iteration_bounds = array<i64: 1>, scalar_prefetch = 0 : i64, scratch_operands = 0 : i64, tpu.core_type = #tpu.core_type<tc>, window_params = [{transform_indices = @transform_0, window_bounds = array<i64: 128, 864>}, {pipeline_mode = #tpu.pipeline_mode<synchronous>, transform_indices = @transform_1, window_bounds = array<i64: 864, 1>}, {transform_indices = @transform_2, window_bounds = array<i64: 128, 1>}, {transform_indices = @transform_3, window_bounds = array<i64: 1, 1, 1>}, {transform_indices = @transform_4, window_bounds = array<i64: 1, 1, 1>}]} {
    %c0 = arith.constant 0 : index
    %c0_0 = arith.constant 0 : index
    %0 = vector.load %arg1[%c0, %c0_0] : memref<128x864xbf16, #tpu.memory_space<vmem>>, vector<128x864xbf16>
    %c0_1 = arith.constant 0 : index
    %c0_2 = arith.constant 0 : index
    %1 = vector.load %arg2[%c0_1, %c0_2] : memref<864x1xbf16, #tpu.memory_space<vmem>>, vector<864x1xbf16>
    %cst = arith.constant dense<0.000000e+00> : vector<128x1xf32>
    %2 = tpu.matmul %0, %1, %cst {dimension_numbers = #tpu.dot_dimension_numbers<[1], [0], [0], [1], [0, 0, 1, 1], [], []>} : vector<128x864xbf16>, vector<864x1xbf16>, vector<128x1xf32> -> vector<128x1xf32>
    %c0_3 = arith.constant 0 : index
    %c0_4 = arith.constant 0 : index
    %3 = vector.load %arg3[%c0_3, %c0_4] : memref<128x1xf32, #tpu.memory_space<vmem>>, vector<128x1xf32>
    tpu.vector_store %arg3[%c0_3, %c0_4], %2 {strides = array<i32>} : memref<128x1xf32, #tpu.memory_space<vmem>>, vector<128x1xf32>,
    %cst_5 = arith.constant dense<0.000000e+00> : vector<1xf32>
    %4 = vector.multi_reduction <add>, %2, %cst_5 [0] : vector<128x1xf32> to vector<1xf32>
    %5 = vector.shape_cast %4 : vector<1xf32> to vector<1x1xf32>
    %6 = vector.shape_cast %5 : vector<1x1xf32> to vector<1x1x1xf32>
    %c0_6 = arith.constant 0 : index
    %c0_7 = arith.constant 0 : index
    %c0_8 = arith.constant 0 : index
    %7 = vector.load %arg4[%c0_6, %c0_7, %c0_8] : memref<1x1x1xf32, #tpu.memory_space<vmem>>, vector<1x1x1xf32>
    tpu.vector_store %arg4[%c0_6, %c0_7, %c0_8], %6 {strides = array<i32>} : memref<1x1x1xf32, #tpu.memory_space<vmem>>, vector<1x1x1xf32>,
    %8 = arith.mulf %2, %2 : vector<128x1xf32>
    %cst_9 = arith.constant dense<0.000000e+00> : vector<1xf32>
    %9 = vector.multi_reduction <add>, %8, %cst_9 [0] : vector<128x1xf32> to vector<1xf32>
    %10 = vector.shape_cast %9 : vector<1xf32> to vector<1x1xf32>
    %11 = vector.shape_cast %10 : vector<1x1xf32> to vector<1x1x1xf32>
    %c0_10 = arith.constant 0 : index
    %c0_11 = arith.constant 0 : index
    %c0_12 = arith.constant 0 : index
    %12 = vector.load %arg5[%c0_10, %c0_11, %c0_12] : memref<1x1x1xf32, #tpu.memory_space<vmem>>, vector<1x1x1xf32>
    tpu.vector_store %arg5[%c0_10, %c0_11, %c0_12], %11 {strides = array<i32>} : memref<1x1x1xf32, #tpu.memory_space<vmem>>, vector<1x1x1xf32>,
    return
  }
  func.func @transform_0(%arg0: i32) -> (i32, i32) {
    %c0_i32 = arith.constant 0 : i32
    %c0_i32_0 = arith.constant 0 : i32
    return %arg0, %c0_i32 : i32, i32
  }
  func.func @transform_1(%arg0: i32) -> (i32, i32) {
    %c0_i32 = arith.constant 0 : i32
    %c0_i32_0 = arith.constant 0 : i32
    %c0_i32_1 = arith.constant 0 : i32
    return %c0_i32, %c0_i32_0 : i32, i32
  }
  func.func @transform_2(%arg0: i32) -> (i32, i32) {
    %c0_i32 = arith.constant 0 : i32
    %c0_i32_0 = arith.constant 0 : i32
    return %arg0, %c0_i32 : i32, i32
  }
  func.func @transform_3(%arg0: i32) -> (i32, i32, i32) {
    %c0_i32 = arith.constant 0 : i32
    %c0_i32_0 = arith.constant 0 : i32
    %c0_i32_1 = arith.constant 0 : i32
    return %arg0, %c0_i32, %c0_i32_0 : i32, i32, i32
  }
  func.func @transform_4(%arg0: i32) -> (i32, i32, i32) {
    %c0_i32 = arith.constant 0 : i32
    %c0_i32_0 = arith.constant 0 : i32
    %c0_i32_1 = arith.constant 0 : i32
    return %arg0, %c0_i32, %c0_i32_0 : i32, i32, i32
  }
}

module attributes {stable_mosaic.version = 11 : i64} {
  func.func @_softmax_disp_kernel(%arg0: i32, %arg1: memref<16x512xf32, #tpu.memory_space<vmem>>, %arg2: memref<1x512xf32, #tpu.memory_space<vmem>>) attributes {dimension_semantics = [#tpu.dimension_semantics<parallel>], iteration_bounds = array<i64: 1>, scalar_prefetch = 0 : i64, scratch_operands = 0 : i64, tpu.core_type = #tpu.core_type<tc>, window_params = [{transform_indices = @transform_0, window_bounds = array<i64: 16, 512>}, {transform_indices = @transform_1, window_bounds = array<i64: 1, 512>}]} {
    %c0 = arith.constant 0 : index
    %c0_0 = arith.constant 0 : index
    %0 = vector.load %arg1[%c0, %c0_0] : memref<16x512xf32, #tpu.memory_space<vmem>>, vector<16x512xf32>
    %cst = arith.constant dense<0xFF800000> : vector<512xf32>
    %1 = vector.multi_reduction <maximumf>, %0, %cst [0] : vector<16x512xf32> to vector<512xf32>
    %2 = vector.shape_cast %1 : vector<512xf32> to vector<1x512xf32>
    %3 = vector.broadcast %2 : vector<1x512xf32> to vector<16x512xf32>
    %4 = arith.subf %0, %3 : vector<16x512xf32>
    %5 = math.exp %4 : vector<16x512xf32>
    %cst_1 = arith.constant dense<0.000000e+00> : vector<512xf32>
    %6 = vector.multi_reduction <add>, %5, %cst_1 [0] : vector<16x512xf32> to vector<512xf32>
    %7 = vector.shape_cast %6 : vector<512xf32> to vector<1x512xf32>
    %8 = tpu.iota {dimensions = array<i32: 0>} : vector<16x512xi32>
    %9 = arith.sitofp %8 : vector<16x512xi32> to vector<16x512xf32>
    %10 = arith.mulf %5, %9 : vector<16x512xf32>
    %cst_2 = arith.constant dense<0.000000e+00> : vector<512xf32>
    %11 = vector.multi_reduction <add>, %10, %cst_2 [0] : vector<16x512xf32> to vector<512xf32>
    %12 = vector.shape_cast %11 : vector<512xf32> to vector<1x512xf32>
    %13 = tpu.reciprocal %7 {approx = true} : vector<1x512xf32> -> vector<1x512xf32>
    %14 = arith.mulf %12, %13 : vector<1x512xf32>
    %c0_3 = arith.constant 0 : index
    %c0_4 = arith.constant 0 : index
    %15 = vector.load %arg2[%c0_3, %c0_4] : memref<1x512xf32, #tpu.memory_space<vmem>>, vector<1x512xf32>
    tpu.vector_store %arg2[%c0_3, %c0_4], %14 {strides = array<i32>} : memref<1x512xf32, #tpu.memory_space<vmem>>, vector<1x512xf32>,
    return
  }
  func.func @transform_0(%arg0: i32) -> (i32, i32) {
    %c0_i32 = arith.constant 0 : i32
    %c0_i32_0 = arith.constant 0 : i32
    return %c0_i32, %arg0 : i32, i32
  }
  func.func @transform_1(%arg0: i32) -> (i32, i32) {
    %c0_i32 = arith.constant 0 : i32
    %c0_i32_0 = arith.constant 0 : i32
    return %c0_i32, %arg0 : i32, i32
  }
}

</mosaic_0001>

<llo_original>
// kernel: psmnet_forward.69
$region0: #{psmnet_forward.69}
  #allocation0 [shape = 'u32[]', space=smem, size = 0x4, offset = 0x4, fixed_abs, tag = 'smem constant byte address 0x4 - core index']
  #allocation1 [shape = 'u32[72,128]{1,0:T(1,128)}', space=vmem, size = 0x9000, scoped, tag = 'internal scratch']
  %s0 = inlined_call_operand.vmem [shape: bf16[16,128], index: 0, kind: input, shape index: {}]
  %s1 = inlined_call_operand.vmem [shape: f32[1,128], index: 1, kind: input, shape index: {}]
  %s2 = inlined_call_operand.vmem [shape: f32[1,128], index: 2, kind: input, shape index: {}]
  %s3 = inlined_call_operand.vmem [shape: bf16[16,128], index: 3, kind: output, shape index: {}]
  %s4 = sld [smem:[#allocation0]]
  $region22: #{psmnet_forward.69} parent=0
    _
  %s6 = ssub.s32 1, %s4
  %s7 = scalar_select 0, %s6, %s4
  // Predicated region
  $region2: #{psmnet_forward.69} parent=0 // pred_check
    _
  $region3: #{psmnet_forward.69} parent=0 // pred_check_branch
    %9 = sbr.rel (0) target = $region5
  $region4: #{psmnet_forward.69} parent=0 // pred_region
    _
  $region5: #{psmnet_forward.69} parent=0 // pred_fallthru
    _
  // Predicated region
  $region6: #{psmnet_forward.69} parent=0 // pred_check
    _
  $region7: #{psmnet_forward.69} parent=0 // pred_check_branch
    %11 = sbr.rel (0) target = $region9
  $region8: #{psmnet_forward.69} parent=0 // pred_region
    _
  $region9: #{psmnet_forward.69} parent=0 // pred_fallthru
    _
  // Predicated region
  $region10: #{psmnet_forward.69} parent=0 // pred_check
    _
  $region11: #{psmnet_forward.69} parent=0 // pred_check_branch
    %13 = sbr.rel (0) target = $region13
  $region12: #{psmnet_forward.69} parent=0 // pred_region
    _
  $region13: #{psmnet_forward.69} parent=0 // pred_fallthru
    _
  %v14 = vld [vmem:[%s0] sm:$0xf]
  %v15 = vld [vmem:[%s0 + $0x4] sm:$0xf]
  %v16 = vunpack.c.l.bf16 %v14
  %v17 = vunpack.c.l.bf16 %v15
  %v18 = vld [vmem:[%s1] sm:$0x1]
  %v20 = vperm.slane %v18, 0
  %v22 = vmul.f32 %v16, %v20
  %v23 = vmul.f32 %v17, %v20
  %v24 = vld [vmem:[%s2] sm:$0x1]
  %v26 = vperm.slane %v24, 0
  %v28 = vadd.f32 %v22, %v26
  %v29 = vadd.f32 %v23, %v26
  %v30 = vmax.f32 %v28, 0.0
  %v31 = vmax.f32 %v29, 0.0
  %v32 = vpack.c.bf16 %v30, %v30
  %v33 = vpack.c.bf16 %v31, %v31
  %34 = vst [vmem:[%s3] sm:$0xf] %v32
  %35 = vst [vmem:[%s3 + $0x4] sm:$0xf] %v33
  // Predicated region
  $region14: #{psmnet_forward.69} parent=0 // pred_check
    _
  $region15: #{psmnet_forward.69} parent=0 // pred_check_branch
    %37 = sbr.rel (0) target = $region17
  $region16: #{psmnet_forward.69} parent=0 // pred_region
    _
  $region17: #{psmnet_forward.69} parent=0 // pred_fallthru
    _
  // Predicated region
  $region18: #{psmnet_forward.69} parent=0 // pred_check
    _
  $region19: #{psmnet_forward.69} parent=0 // pred_check_branch
    %39 = sbr.rel (0) target = $region21
  $region20: #{psmnet_forward.69} parent=0 // pred_region
    _
  $region21: #{psmnet_forward.69} parent=0 // pred_fallthru
    _

// kernel: psmnet_forward.68
$region0: #{psmnet_forward.68}
  #allocation0 [shape = 'u32[]', space=smem, size = 0x4, offset = 0x4, fixed_abs, tag = 'smem constant byte address 0x4 - core index']
  #allocation1 [shape = 'u32[72,128]{1,0:T(1,128)}', space=vmem, size = 0x9000, scoped, tag = 'internal scratch']
  %s0 = inlined_call_operand.vmem [shape: bf16[128,27], index: 0, kind: input, shape index: {}]
  %s1 = inlined_call_operand.vmem [shape: bf16[27,16], index: 1, kind: input, shape index: {}]
  %s2 = inlined_call_operand.vmem [shape: bf16[128,16], index: 2, kind: output, shape index: {0}]
  %s3 = inlined_call_operand.vmem [shape: f32[1,1,16], index: 3, kind: output, shape index: {1}]
  %s4 = inlined_call_operand.vmem [shape: f32[1,1,16], index: 4, kind: output, shape index: {2}]
  %5 = xla_tuple %s2, %s3, %s4
  %s6 = sld [smem:[#allocation0]]
  $region34: #{psmnet_forward.68} parent=0
    _
  %s8 = ssub.s32 1, %s6
  %s9 = scalar_select 0, %s8, %s6
  // Predicated region
  $region2: #{psmnet_forward.68} parent=0 // pred_check
    _
  $region3: #{psmnet_forward.68} parent=0 // pred_check_branch
    %11 = sbr.rel (0) target = $region5
  $region4: #{psmnet_forward.68} parent=0 // pred_region
    _
  $region5: #{psmnet_forward.68} parent=0 // pred_fallthru
    _
  // Predicated region
  $region6: #{psmnet_forward.68} parent=0 // pred_check
    _
  $region7: #{psmnet_forward.68} parent=0 // pred_check_branch
    %13 = sbr.rel (0) target = $region9
  $region8: #{psmnet_forward.68} parent=0 // pred_region
    _
  $region9: #{psmnet_forward.68} parent=0 // pred_fallthru
    _
  %v15 = vld [vmem:[%s0] sm:$0xf]
  %v16 = vld [vmem:[%s0 + $0x4] sm:$0xf]
  %v17 = vld [vmem:[%s0 + $0x8] sm:$0xf]
  %v18 = vld [vmem:[%s0 + $0xc] sm:$0xf]
  %v19 = vld [vmem:[%s0 + $0x10] sm:$0xf]
  %v20 = vld [vmem:[%s0 + $0x14] sm:$0xf]
  %v21 = vld [vmem:[%s0 + $0x18] sm:$0xf]
  %v22 = vld [vmem:[%s0 + $0x1c] sm:$0xf]
  %v23 = vld [vmem:[%s0 + $0x20] sm:$0xf]
  %v24 = vld [vmem:[%s0 + $0x24] sm:$0xf]
  %v25 = vld [vmem:[%s0 + $0x28] sm:$0xf]
  %v26 = vld [vmem:[%s0 + $0x2c] sm:$0xf]
  %v27 = vld [vmem:[%s0 + $0x30] sm:$0xf]
  %v28 = vld [vmem:[%s0 + $0x34] sm:$0xf]
  %v29 = vld [vmem:[%s0 + $0x38] sm:$0xf]
  %v30 = vld [vmem:[%s0 + $0x3c] sm:$0xf]
  %v31 = vld [vmem:[%s1] sm:$0xf]
  %v32 = vld [vmem:[%s1 + $0x4] sm:$0xf]
  %v33 = vld [vmem:[%s1 + $0x8] sm:$0xf]
  %v34 = vld [vmem:[%s1 + $0xc] sm:$0x3]
  %v51 = vunpack.c.l.b16 %v15
  %v52 = vunpack.c.l.b16 %v16
  %v53 = vunpack.c.l.b16 %v17
  %v54 = vunpack.c.l.b16 %v18
  %v55 = vunpack.c.l.b16 %v19
  %v56 = vunpack.c.l.b16 %v20
  %v57 = vunpack.c.l.b16 %v21
  %v58 = vunpack.c.l.b16 %v22
  %v59 = vunpack.c.l.b16 %v23
  %v60 = vunpack.c.l.b16 %v24
  %v61 = vunpack.c.l.b16 %v25
  %v62 = vunpack.c.l.b16 %v26
  %v63 = vunpack.c.l.b16 %v27
  %v64 = vunpack.c.l.b16 %v28
  %v65 = vunpack.c.l.b16 %v29
  %v66 = vunpack.c.l.b16 %v30
  %v67 = vpack.c.b16 %v52, %v51
  %v68 = vpack.c.b16 %v54, %v53
  %v69 = vpack.c.b16 %v56, %v55
  %v70 = vpack.c.b16 %v58, %v57
  %v71 = vpack.c.b16 %v60, %v59
  %v72 = vpack.c.b16 %v62, %v61
  %v73 = vpack.c.b16 %v64, %v63
  %v74 = vpack.c.b16 %v66, %v65
  %v79 = vunpack.c.l.b16 %v31
  %v80 = vunpack.c.l.b16 %v32
  %v81 = vunpack.c.l.b16 %v33
  %v82 = vunpack.c.l.b16 %v34
  %v83 = vpack.c.b16 %v80, %v79
  %v84 = vpack.c.b16 %v82, %v81
  %vm86 = vcmask 220160
  %v88 = vsel %vm86, %v67, 0
  %v91 = vsel %vm86, %v68, 0
  %v94 = vsel %vm86, %v69, 0
  %v97 = vsel %vm86, %v70, 0
  %v100 = vsel %vm86, %v71, 0
  %v103 = vsel %vm86, %v72, 0
  %v106 = vsel %vm86, %v73, 0
  %v109 = vsel %vm86, %v74, 0
  %vm111 = vcmask 1044480
  %vm112 = vcmask 1045504
  %v113 = vsel %vm111, 4294967295, 65535
  %v114 = vsel %vm112, %v113, 0
  %v116 = vand.u32 %v84, %v114
  %118 = vmatpush.bf16.msra.mxu0 0
  %119 = vmatpush.bf16.msra.mxu0 0
  %120 = vmatpush.bf16.msra.mxu0 0
  %121 = vmatpush.bf16.msra.mxu0 0
  %122 = vmatpush.bf16.msra.mxu0 0
  %123 = vmatpush.bf16.msra.mxu0 0
  %124 = vmatpush.bf16.msra.mxu0 %v116
  %125 = vmatpush.bf16.msra.mxu0 %v83
  %126 = vmatmul.bf16.gmra.mxu0 %v88
  %v127 = vpop.f32.mrf.mxu0
  %v128 = vadd.f32 0.0, %v127
  %v129 = vpop.f32.mrf.mxu0
  %v130 = vadd.f32 0.0, %v129
  %131 = vmatmul.bf16.gmra.mxu0 %v91
  %v132 = vpop.f32.mrf.mxu0
  %v133 = vadd.f32 0.0, %v132
  %v134 = vpop.f32.mrf.mxu0
  %v135 = vadd.f32 0.0, %v134
  %136 = vmatmul.bf16.gmra.mxu0 %v94
  %v137 = vpop.f32.mrf.mxu0
  %v138 = vadd.f32 0.0, %v137
  %v139 = vpop.f32.mrf.mxu0
  %v140 = vadd.f32 0.0, %v139
  %141 = vmatmul.bf16.gmra.mxu0 %v97
  %v142 = vpop.f32.mrf.mxu0
  %v143 = vadd.f32 0.0, %v142
  %v144 = vpop.f32.mrf.mxu0
  %v145 = vadd.f32 0.0, %v144
  %146 = vmatmul.bf16.gmra.mxu0 %v100
  %v147 = vpop.f32.mrf.mxu0
  %v148 = vadd.f32 0.0, %v147
  %v149 = vpop.f32.mrf.mxu0
  %v150 = vadd.f32 0.0, %v149
  %151 = vmatmul.bf16.gmra.mxu0 %v103
  %v152 = vpop.f32.mrf.mxu0
  %v153 = vadd.f32 0.0, %v152
  %v154 = vpop.f32.mrf.mxu0
  %v155 = vadd.f32 0.0, %v154
  %156 = vmatmul.bf16.gmra.mxu0 %v106
  %v157 = vpop.f32.mrf.mxu0
  %v158 = vadd.f32 0.0, %v157
  %v159 = vpop.f32.mrf.mxu0
  %v160 = vadd.f32 0.0, %v159
  %161 = vmatmul.bf16.gmra.mxu0 %v109
  %v162 = vpop.f32.mrf.mxu0
  %v163 = vadd.f32 0.0, %v162
  %v164 = vpop.f32.mrf.mxu0
  %v165 = vadd.f32 0.0, %v164
  %166 = vdwg.mxu0
  %v167 = vpack.c.bf16 %v128, %v128
  %v168 = vpack.c.bf16 %v130, %v130
  %v169 = vpack.c.bf16 %v133, %v133
  %v170 = vpack.c.bf16 %v135, %v135
  %v171 = vpack.c.bf16 %v138, %v138
  %v172 = vpack.c.bf16 %v140, %v140
  %v173 = vpack.c.bf16 %v143, %v143
  %v174 = vpack.c.bf16 %v145, %v145
  %v175 = vpack.c.bf16 %v148, %v148
  %v176 = vpack.c.bf16 %v150, %v150
  %v177 = vpack.c.bf16 %v153, %v153
  %v178 = vpack.c.bf16 %v155, %v155
  %v179 = vpack.c.bf16 %v158, %v158
  %v180 = vpack.c.bf16 %v160, %v160
  %v181 = vpack.c.bf16 %v163, %v163
  %v182 = vpack.c.bf16 %v165, %v165
  %vm183 = vcmask 125952
  %184 = vst.msk [vmem:[%s2] sm:$0xf] %vm183, %v167
  %185 = vst.msk [vmem:[%s2 + $0x4] sm:$0xf] %vm183, %v168
  %186 = vst.msk [vmem:[%s2 + $0x8] sm:$0xf] %vm183, %v169
  %187 = vst.msk [vmem:[%s2 + $0xc] sm:$0xf] %vm183, %v170
  %188 = vst.msk [vmem:[%s2 + $0x10] sm:$0xf] %vm183, %v171
  %189 = vst.msk [vmem:[%s2 + $0x14] sm:$0xf] %vm183, %v172
  %190 = vst.msk [vmem:[%s2 + $0x18] sm:$0xf] %vm183, %v173
  %191 = vst.msk [vmem:[%s2 + $0x1c] sm:$0xf] %vm183, %v174
  %192 = vst.msk [vmem:[%s2 + $0x20] sm:$0xf] %vm183, %v175
  %193 = vst.msk [vmem:[%s2 + $0x24] sm:$0xf] %vm183, %v176
  %194 = vst.msk [vmem:[%s2 + $0x28] sm:$0xf] %vm183, %v177
  %195 = vst.msk [vmem:[%s2 + $0x2c] sm:$0xf] %vm183, %v178
  %196 = vst.msk [vmem:[%s2 + $0x30] sm:$0xf] %vm183, %v179
  %197 = vst.msk [vmem:[%s2 + $0x34] sm:$0xf] %vm183, %v180
  %198 = vst.msk [vmem:[%s2 + $0x38] sm:$0xf] %vm183, %v181
  %199 = vst.msk [vmem:[%s2 + $0x3c] sm:$0xf] %vm183, %v182
  %vm200 = vcmask 130048
  %v201 = vsel %vm200, %v128, 0.0
  %v202 = vsel %vm200, %v130, 0.0
  %v203 = vadd.f32 %v201, %v202
  %v204 = vsel %vm200, %v133, 0.0
  %v205 = vadd.f32 %v203, %v204
  %v206 = vsel %vm200, %v135, 0.0
  %v207 = vadd.f32 %v205, %v206
  %v208 = vsel %vm200, %v138, 0.0
  %v209 = vadd.f32 %v207, %v208
  %v210 = vsel %vm200, %v140, 0.0
  %v211 = vadd.f32 %v209, %v210
  %v212 = vsel %vm200, %v143, 0.0
  %v213 = vadd.f32 %v211, %v212
  %v214 = vsel %vm200, %v145, 0.0
  %v215 = vadd.f32 %v213, %v214
  %v216 = vsel %vm200, %v148, 0.0
  %v217 = vadd.f32 %v215, %v216
  %v218 = vsel %vm200, %v150, 0.0
  %v219 = vadd.f32 %v217, %v218
  %v220 = vsel %vm200, %v153, 0.0
  %v221 = vadd.f32 %v219, %v220
  %v222 = vsel %vm200, %v155, 0.0
  %v223 = vadd.f32 %v221, %v222
  %v224 = vsel %vm200, %v158, 0.0
  %v225 = vadd.f32 %v223, %v224
  %v226 = vsel %vm200, %v160, 0.0
  %v227 = vadd.f32 %v225, %v226
  %v228 = vsel %vm200, %v163, 0.0
  %v229 = vadd.f32 %v227, %v228
  %v230 = vsel %vm200, %v165, 0.0
  %v231 = vadd.f32 %v229, %v230
  %v232 = vrot.slane %v231, 4
  %v233 = vadd.f32 %v231, %v232
  %v234 = vrot.slane %v233, 2
  %v235 = vadd.f32 %v233, %v234
  %v236 = vrot.slane %v235, 1
  %v237 = vadd.f32 %v235, %v236
  %vm238 = vcmask 122880
  %239 = vst.msk [vmem:[%s3] sm:$0x1] %vm238, %v237
  %v240 = vmul.f32 %v128, %v128
  %v241 = vmul.f32 %v130, %v130
  %v242 = vmul.f32 %v133, %v133
  %v243 = vmul.f32 %v135, %v135
  %v244 = vmul.f32 %v138, %v138
  %v245 = vmul.f32 %v140, %v140
  %v246 = vmul.f32 %v143, %v143
  %v247 = vmul.f32 %v145, %v145
  %v248 = vmul.f32 %v148, %v148
  %v249 = vmul.f32 %v150, %v150
  %v250 = vmul.f32 %v153, %v153
  %v251 = vmul.f32 %v155, %v155
  %v252 = vmul.f32 %v158, %v158
  %v253 = vmul.f32 %v160, %v160
  %v254 = vmul.f32 %v163, %v163
  %v255 = vmul.f32 %v165, %v165
  %v256 = vsel %vm200, %v240, 0.0
  %v257 = vsel %vm200, %v241, 0.0
  %v258 = vadd.f32 %v256, %v257
  %v259 = vsel %vm200, %v242, 0.0
  %v260 = vadd.f32 %v258, %v259
  %v261 = vsel %vm200, %v243, 0.0
  %v262 = vadd.f32 %v260, %v261
  %v263 = vsel %vm200, %v244, 0.0
  %v264 = vadd.f32 %v262, %v263
  %v265 = vsel %vm200, %v245, 0.0
  %v266 = vadd.f32 %v264, %v265
  %v267 = vsel %vm200, %v246, 0.0
  %v268 = vadd.f32 %v266, %v267
  %v269 = vsel %vm200, %v247, 0.0
  %v270 = vadd.f32 %v268, %v269
  %v271 = vsel %vm200, %v248, 0.0
  %v272 = vadd.f32 %v270, %v271
  %v273 = vsel %vm200, %v249, 0.0
  %v274 = vadd.f32 %v272, %v273
  %v275 = vsel %vm200, %v250, 0.0
  %v276 = vadd.f32 %v274, %v275
  %v277 = vsel %vm200, %v251, 0.0
  %v278 = vadd.f32 %v276, %v277
  %v279 = vsel %vm200, %v252, 0.0
  %v280 = vadd.f32 %v278, %v279
  %v281 = vsel %vm200, %v253, 0.0
  %v282 = vadd.f32 %v280, %v281
  %v283 = vsel %vm200, %v254, 0.0
  %v284 = vadd.f32 %v282, %v283
  %v285 = vsel %vm200, %v255, 0.0
  %v286 = vadd.f32 %v284, %v285
  %v287 = vrot.slane %v286, 4
  %v288 = vadd.f32 %v286, %v287
  %v289 = vrot.slane %v288, 2
  %v290 = vadd.f32 %v288, %v289
  %v291 = vrot.slane %v290, 1
  %v292 = vadd.f32 %v290, %v291
  %293 = vst.msk [vmem:[%s4] sm:$0x1] %vm238, %v292
  // Predicated region
  $region10: #{psmnet_forward.68} parent=0 // pred_check
    _
  $region11: #{psmnet_forward.68} parent=0 // pred_check_branch
    %295 = sbr.rel (0) target = $region13
  $region12: #{psmnet_forward.68} parent=0 // pred_region
    _
  $region13: #{psmnet_forward.68} parent=0 // pred_fallthru
    _
  // Predicated region
  $region14: #{psmnet_forward.68} parent=0 // pred_check
    _
  $region15: #{psmnet_forward.68} parent=0 // pred_check_branch
    %297 = sbr.rel (0) target = $region17
  $region16: #{psmnet_forward.68} parent=0 // pred_region
    _
  $region17: #{psmnet_forward.68} parent=0 // pred_fallthru
    _
  // Predicated region
  $region18: #{psmnet_forward.68} parent=0 // pred_check
    _
  $region19: #{psmnet_forward.68} parent=0 // pred_check_branch
    %299 = sbr.rel (0) target = $region21
  $region20: #{psmnet_forward.68} parent=0 // pred_region
    _
  $region21: #{psmnet_forward.68} parent=0 // pred_fallthru
    _
  // Predicated region
  $region22: #{psmnet_forward.68} parent=0 // pred_check
    _
  $region23: #{psmnet_forward.68} parent=0 // pred_check_branch
    %301 = sbr.rel (0) target = $region25
  $region24: #{psmnet_forward.68} parent=0 // pred_region
    _
  $region25: #{psmnet_forward.68} parent=0 // pred_fallthru
    _
  // Predicated region
  $region26: #{psmnet_forward.68} parent=0 // pred_check
    _
  $region27: #{psmnet_forward.68} parent=0 // pred_check_branch
    %303 = sbr.rel (0) target = $region29
  $region28: #{psmnet_forward.68} parent=0 // pred_region
    _
  $region29: #{psmnet_forward.68} parent=0 // pred_fallthru
    _
  // Predicated region
  $region30: #{psmnet_forward.68} parent=0 // pred_check
    _
  $region31: #{psmnet_forward.68} parent=0 // pred_check_branch
    %305 = sbr.rel (0) target = $region33
  $region32: #{psmnet_forward.68} parent=0 // pred_region
    _
  $region33: #{psmnet_forward.68} parent=0 // pred_fallthru
    _

// kernel: psmnet_forward.71
$region0: #{psmnet_forward.71}
  #allocation0 [shape = 'u32[]', space=smem, size = 0x4, offset = 0x4, fixed_abs, tag = 'smem constant byte address 0x4 - core index']
  #allocation1 [shape = 'u32[72,128]{1,0:T(1,128)}', space=vmem, size = 0x9000, scoped, tag = 'internal scratch']
  %s0 = inlined_call_operand.vmem [shape: bf16[32,128], index: 0, kind: input, shape index: {}]
  %s1 = inlined_call_operand.vmem [shape: f32[1,128], index: 1, kind: input, shape index: {}]
  %s2 = inlined_call_operand.vmem [shape: f32[1,128], index: 2, kind: input, shape index: {}]
  %s3 = inlined_call_operand.vmem [shape: bf16[32,128], index: 3, kind: output, shape index: {}]
  %s4 = sld [smem:[#allocation0]]
  $region22: #{psmnet_forward.71} parent=0
    _
  %s6 = ssub.s32 1, %s4
  %s7 = scalar_select 0, %s6, %s4
  // Predicated region
  $region2: #{psmnet_forward.71} parent=0 // pred_check
    _
  $region3: #{psmnet_forward.71} parent=0 // pred_check_branch
    %9 = sbr.rel (0) target = $region5
  $region4: #{psmnet_forward.71} parent=0 // pred_region
    _
  $region5: #{psmnet_forward.71} parent=0 // pred_fallthru
    _
  // Predicated region
  $region6: #{psmnet_forward.71} parent=0 // pred_check
    _
  $region7: #{psmnet_forward.71} parent=0 // pred_check_branch
    %11 = sbr.rel (0) target = $region9
  $region8: #{psmnet_forward.71} parent=0 // pred_region
    _
  $region9: #{psmnet_forward.71} parent=0 // pred_fallthru
    _
  // Predicated region
  $region10: #{psmnet_forward.71} parent=0 // pred_check
    _
  $region11: #{psmnet_forward.71} parent=0 // pred_check_branch
    %13 = sbr.rel (0) target = $region13
  $region12: #{psmnet_forward.71} parent=0 // pred_region
    _
  $region13: #{psmnet_forward.71} parent=0 // pred_fallthru
    _
  %v14 = vld [vmem:[%s0] sm:$0xf]
  %v15 = vld [vmem:[%s0 + $0x4] sm:$0xf]
  %v16 = vld [vmem:[%s0 + $0x8] sm:$0xf]
  %v17 = vld [vmem:[%s0 + $0xc] sm:$0xf]
  %v18 = vunpack.c.l.bf16 %v14
  %v19 = vunpack.c.l.bf16 %v15
  %v20 = vunpack.c.l.bf16 %v16
  %v21 = vunpack.c.l.bf16 %v17
  %v22 = vld [vmem:[%s1] sm:$0x1]
  %v24 = vperm.slane %v22, 0
  %v26 = vmul.f32 %v18, %v24
  %v27 = vmul.f32 %v19, %v24
  %v28 = vmul.f32 %v20, %v24
  %v29 = vmul.f32 %v21, %v24
  %v30 = vld [vmem:[%s2] sm:$0x1]
  %v32 = vperm.slane %v30, 0
  %v34 = vadd.f32 %v26, %v32
  %v35 = vadd.f32 %v27, %v32
  %v36 = vadd.f32 %v28, %v32
  %v37 = vadd.f32 %v29, %v32
  %v38 = vmax.f32 %v34, 0.0
  %v39 = vmax.f32 %v35, 0.0
  %v40 = vmax.f32 %v36, 0.0
  %v41 = vmax.f32 %v37, 0.0
  %v42 = vpack.c.bf16 %v38, %v38
  %v43 = vpack.c.bf16 %v39, %v39
  %v44 = vpack.c.bf16 %v40, %v40
  %v45 = vpack.c.bf16 %v41, %v41
  %46 = vst [vmem:[%s3] sm:$0xf] %v42
  %47 = vst [vmem:[%s3 + $0x4] sm:$0xf] %v43
  %48 = vst [vmem:[%s3 + $0x8] sm:$0xf] %v44
  %49 = vst [vmem:[%s3 + $0xc] sm:$0xf] %v45
  // Predicated region
  $region14: #{psmnet_forward.71} parent=0 // pred_check
    _
  $region15: #{psmnet_forward.71} parent=0 // pred_check_branch
    %51 = sbr.rel (0) target = $region17
  $region16: #{psmnet_forward.71} parent=0 // pred_region
    _
  $region17: #{psmnet_forward.71} parent=0 // pred_fallthru
    _
  // Predicated region
  $region18: #{psmnet_forward.71} parent=0 // pred_check
    _
  $region19: #{psmnet_forward.71} parent=0 // pred_check_branch
    %53 = sbr.rel (0) target = $region21
  $region20: #{psmnet_forward.71} parent=0 // pred_region
    _
  $region21: #{psmnet_forward.71} parent=0 // pred_fallthru
    _

// kernel: psmnet_forward.70
$region0: #{psmnet_forward.70}
  #allocation0 [shape = 'u32[]', space=smem, size = 0x4, offset = 0x4, fixed_abs, tag = 'smem constant byte address 0x4 - core index']
  #allocation1 [shape = 'u32[72,128]{1,0:T(1,128)}', space=vmem, size = 0x9000, scoped, tag = 'internal scratch']
  %s0 = inlined_call_operand.vmem [shape: bf16[128,144], index: 0, kind: input, shape index: {}]
  %s1 = inlined_call_operand.vmem [shape: bf16[144,32], index: 1, kind: input, shape index: {}]
  %s2 = inlined_call_operand.vmem [shape: bf16[128,32], index: 2, kind: output, shape index: {0}]
  %s3 = inlined_call_operand.vmem [shape: f32[1,1,32], index: 3, kind: output, shape index: {1}]
  %s4 = inlined_call_operand.vmem [shape: f32[1,1,32], index: 4, kind: output, shape index: {2}]
  %5 = xla_tuple %s2, %s3, %s4
  %s6 = sld [smem:[#allocation0]]
  $region34: #{psmnet_forward.70} parent=0
    _
  %s8 = ssub.s32 1, %s6
  %s9 = scalar_select 0, %s8, %s6
  // Predicated region
  $region2: #{psmnet_forward.70} parent=0 // pred_check
    _
  $region3: #{psmnet_forward.70} parent=0 // pred_check_branch
    %11 = sbr.rel (0) target = $region5
  $region4: #{psmnet_forward.70} parent=0 // pred_region
    _
  $region5: #{psmnet_forward.70} parent=0 // pred_fallthru
    _
  // Predicated region
  $region6: #{psmnet_forward.70} parent=0 // pred_check
    _
  $region7: #{psmnet_forward.70} parent=0 // pred_check_branch
    %13 = sbr.rel (0) target = $region9
  $region8: #{psmnet_forward.70} parent=0 // pred_region
    _
  $region9: #{psmnet_forward.70} parent=0 // pred_fallthru
    _
  %v15 = vld [vmem:[%s0] sm:$0xff]
  %v16 = vld [vmem:[%s0 + $0x8] sm:$0xff]
  %v17 = vld [vmem:[%s0 + $0x10] sm:$0xff]
  %v18 = vld [vmem:[%s0 + $0x18] sm:$0xff]
  %v19 = vld [vmem:[%s0 + $0x20] sm:$0xff]
  %v20 = vld [vmem:[%s0 + $0x28] sm:$0xff]
  %v21 = vld [vmem:[%s0 + $0x30] sm:$0xff]
  %v22 = vld [vmem:[%s0 + $0x38] sm:$0xff]
  %v23 = vld [vmem:[%s0 + $0x40] sm:$0xff]
  %v24 = vld [vmem:[%s0 + $0x48] sm:$0xff]
  %v25 = vld [vmem:[%s0 + $0x50] sm:$0xff]
  %v26 = vld [vmem:[%s0 + $0x58] sm:$0xff]
  %v27 = vld [vmem:[%s0 + $0x60] sm:$0xff]
  %v28 = vld [vmem:[%s0 + $0x68] sm:$0xff]
  %v29 = vld [vmem:[%s0 + $0x70] sm:$0xff]
  %v30 = vld [vmem:[%s0 + $0x78] sm:$0xff]
  %v31 = vld [vmem:[%s1] sm:$0xf]
  %v32 = vld [vmem:[%s1 + $0x4] sm:$0xf]
  %v33 = vld [vmem:[%s1 + $0x8] sm:$0xf]
  %v34 = vld [vmem:[%s1 + $0xc] sm:$0xf]
  %v35 = vld [vmem:[%s1 + $0x10] sm:$0xf]
  %v36 = vld [vmem:[%s1 + $0x14] sm:$0xf]
  %v37 = vld [vmem:[%s1 + $0x18] sm:$0xf]
  %v38 = vld [vmem:[%s1 + $0x1c] sm:$0xf]
  %v39 = vld [vmem:[%s1 + $0x20] sm:$0xf]
  %v40 = vld [vmem:[%s1 + $0x24] sm:$0xf]
  %v41 = vld [vmem:[%s1 + $0x28] sm:$0xf]
  %v42 = vld [vmem:[%s1 + $0x2c] sm:$0xf]
  %v43 = vld [vmem:[%s1 + $0x30] sm:$0xf]
  %v44 = vld [vmem:[%s1 + $0x34] sm:$0xf]
  %v45 = vld [vmem:[%s1 + $0x38] sm:$0xf]
  %v46 = vld [vmem:[%s1 + $0x3c] sm:$0xf]
  %v47 = vld [vmem:[%s1 + $0x40] sm:$0xf]
  %v48 = vld [vmem:[%s1 + $0x44] sm:$0xf]
  %v65 = vunpack.c.l.b16 %v15
  %v66 = vunpack.c.h.b16 %v15
  %v67 = vunpack.c.l.b16 %v16
  %v68 = vunpack.c.h.b16 %v16
  %v69 = vunpack.c.l.b16 %v17
  %v70 = vunpack.c.h.b16 %v17
  %v71 = vunpack.c.l.b16 %v18
  %v72 = vunpack.c.h.b16 %v18
  %v73 = vunpack.c.l.b16 %v19
  %v74 = vunpack.c.h.b16 %v19
  %v75 = vunpack.c.l.b16 %v20
  %v76 = vunpack.c.h.b16 %v20
  %v77 = vunpack.c.l.b16 %v21
  %v78 = vunpack.c.h.b16 %v21
  %v79 = vunpack.c.l.b16 %v22
  %v80 = vunpack.c.h.b16 %v22
  %v81 = vunpack.c.l.b16 %v23
  %v82 = vunpack.c.h.b16 %v23
  %v83 = vunpack.c.l.b16 %v24
  %v84 = vunpack.c.h.b16 %v24
  %v85 = vunpack.c.l.b16 %v25
  %v86 = vunpack.c.h.b16 %v25
  %v87 = vunpack.c.l.b16 %v26
  %v88 = vunpack.c.h.b16 %v26
  %v89 = vunpack.c.l.b16 %v27
  %v90 = vunpack.c.h.b16 %v27
  %v91 = vunpack.c.l.b16 %v28
  %v92 = vunpack.c.h.b16 %v28
  %v93 = vunpack.c.l.b16 %v29
  %v94 = vunpack.c.h.b16 %v29
  %v95 = vunpack.c.l.b16 %v30
  %v96 = vunpack.c.h.b16 %v30
  %v97 = vpack.c.b16 %v67, %v65
  %v98 = vpack.c.b16 %v68, %v66
  %v99 = vpack.c.b16 %v71, %v69
  %v100 = vpack.c.b16 %v72, %v70
  %v101 = vpack.c.b16 %v75, %v73
  %v102 = vpack.c.b16 %v76, %v74
  %v103 = vpack.c.b16 %v79, %v77
  %v104 = vpack.c.b16 %v80, %v78
  %v105 = vpack.c.b16 %v83, %v81
  %v106 = vpack.c.b16 %v84, %v82
  %v107 = vpack.c.b16 %v87, %v85
  %v108 = vpack.c.b16 %v88, %v86
  %v109 = vpack.c.b16 %v91, %v89
  %v110 = vpack.c.b16 %v92, %v90
  %v111 = vpack.c.b16 %v95, %v93
  %v112 = vpack.c.b16 %v96, %v94
  %v139 = vunpack.c.l.b16 %v31
  %v140 = vunpack.c.l.b16 %v32
  %v141 = vunpack.c.l.b16 %v33
  %v142 = vunpack.c.l.b16 %v34
  %v143 = vunpack.c.l.b16 %v35
  %v144 = vunpack.c.l.b16 %v36
  %v145 = vunpack.c.l.b16 %v37
  %v146 = vunpack.c.l.b16 %v38
  %v147 = vunpack.c.l.b16 %v39
  %v148 = vunpack.c.l.b16 %v40
  %v149 = vunpack.c.l.b16 %v41
  %v150 = vunpack.c.l.b16 %v42
  %v151 = vunpack.c.l.b16 %v43
  %v152 = vunpack.c.l.b16 %v44
  %v153 = vunpack.c.l.b16 %v45
  %v154 = vunpack.c.l.b16 %v46
  %v155 = vunpack.c.l.b16 %v47
  %v156 = vunpack.c.l.b16 %v48
  %v157 = vpack.c.b16 %v140, %v139
  %v158 = vpack.c.b16 %v142, %v141
  %v159 = vpack.c.b16 %v144, %v143
  %v160 = vpack.c.b16 %v146, %v145
  %v161 = vpack.c.b16 %v148, %v147
  %v162 = vpack.c.b16 %v150, %v149
  %v163 = vpack.c.b16 %v152, %v151
  %v164 = vpack.c.b16 %v154, %v153
  %v165 = vpack.c.b16 %v156, %v155
  %vm175 = vcmask 130048
  %v177 = vsel %vm175, %v98, 0
  %v180 = vsel %vm175, %v100, 0
  %v183 = vsel %vm175, %v102, 0
  %v186 = vsel %vm175, %v104, 0
  %v189 = vsel %vm175, %v106, 0
  %v192 = vsel %vm175, %v108, 0
  %v195 = vsel %vm175, %v110, 0
  %v198 = vsel %vm175, %v112, 0
  %200 = vmatpush.bf16.msra.mxu0 %v164
  %201 = vmatpush.bf16.msra.mxu0 %v163
  %202 = vmatpush.bf16.msra.mxu0 %v162
  %203 = vmatpush.bf16.msra.mxu0 %v161
  %204 = vmatpush.bf16.msra.mxu0 %v160
  %205 = vmatpush.bf16.msra.mxu0 %v159
  %206 = vmatpush.bf16.msra.mxu0 %v158
  %207 = vmatpush.bf16.msra.mxu0 %v157
  %208 = vmatmul.bf16.gmra.mxu0 %v97
  %v209 = vpop.f32.mrf.mxu0
  %v210 = vadd.f32 0.0, %v209
  %v211 = vpop.f32.mrf.mxu0
  %v212 = vadd.f32 0.0, %v211
  %213 = vmatmul.bf16.gmra.mxu0 %v99
  %v214 = vpop.f32.mrf.mxu0
  %v215 = vadd.f32 0.0, %v214
  %v216 = vpop.f32.mrf.mxu0
  %v217 = vadd.f32 0.0, %v216
  %218 = vmatmul.bf16.gmra.mxu0 %v101
  %v219 = vpop.f32.mrf.mxu0
  %v220 = vadd.f32 0.0, %v219
  %v221 = vpop.f32.mrf.mxu0
  %v222 = vadd.f32 0.0, %v221
  %223 = vmatmul.bf16.gmra.mxu0 %v103
  %v224 = vpop.f32.mrf.mxu0
  %v225 = vadd.f32 0.0, %v224
  %v226 = vpop.f32.mrf.mxu0
  %v227 = vadd.f32 0.0, %v226
  %228 = vmatmul.bf16.gmra.mxu0 %v105
  %v229 = vpop.f32.mrf.mxu0
  %v230 = vadd.f32 0.0, %v229
  %v231 = vpop.f32.mrf.mxu0
  %v232 = vadd.f32 0.0, %v231
  %233 = vmatmul.bf16.gmra.mxu0 %v107
  %v234 = vpop.f32.mrf.mxu0
  %v235 = vadd.f32 0.0, %v234
  %v236 = vpop.f32.mrf.mxu0
  %v237 = vadd.f32 0.0, %v236
  %238 = vmatmul.bf16.gmra.mxu0 %v109
  %v239 = vpop.f32.mrf.mxu0
  %v240 = vadd.f32 0.0, %v239
  %v241 = vpop.f32.mrf.mxu0
  %v242 = vadd.f32 0.0, %v241
  %243 = vmatmul.bf16.gmra.mxu0 %v111
  %v244 = vpop.f32.mrf.mxu0
  %v245 = vadd.f32 0.0, %v244
  %v246 = vpop.f32.mrf.mxu0
  %v247 = vadd.f32 0.0, %v246
  %248 = vdwg.mxu0
  %249 = vmatpush.bf16.msra.mxu0 0
  %250 = vmatpush.bf16.msra.mxu0 0
  %251 = vmatpush.bf16.msra.mxu0 0
  %252 = vmatpush.bf16.msra.mxu0 0
  %253 = vmatpush.bf16.msra.mxu0 0
  %254 = vmatpush.bf16.msra.mxu0 0
  %255 = vmatpush.bf16.msra.mxu0 0
  %256 = vmatpush.bf16.msra.mxu0 %v165
  %257 = vmatmul.bf16.gmra.mxu0 %v177
  %v258 = vpop.f32.mrf.mxu0
  %v259 = vadd.f32 %v210, %v258
  %v260 = vpop.f32.mrf.mxu0
  %v261 = vadd.f32 %v212, %v260
  %262 = vmatmul.bf16.gmra.mxu0 %v180
  %v263 = vpop.f32.mrf.mxu0
  %v264 = vadd.f32 %v215, %v263
  %v265 = vpop.f32.mrf.mxu0
  %v266 = vadd.f32 %v217, %v265
  %267 = vmatmul.bf16.gmra.mxu0 %v183
  %v268 = vpop.f32.mrf.mxu0
  %v269 = vadd.f32 %v220, %v268
  %v270 = vpop.f32.mrf.mxu0
  %v271 = vadd.f32 %v222, %v270
  %272 = vmatmul.bf16.gmra.mxu0 %v186
  %v273 = vpop.f32.mrf.mxu0
  %v274 = vadd.f32 %v225, %v273
  %v275 = vpop.f32.mrf.mxu0
  %v276 = vadd.f32 %v227, %v275
  %277 = vmatmul.bf16.gmra.mxu0 %v189
  %v278 = vpop.f32.mrf.mxu0
  %v279 = vadd.f32 %v230, %v278
  %v280 = vpop.f32.mrf.mxu0
  %v281 = vadd.f32 %v232, %v280
  %282 = vmatmul.bf16.gmra.mxu0 %v192
  %v283 = vpop.f32.mrf.mxu0
  %v284 = vadd.f32 %v235, %v283
  %v285 = vpop.f32.mrf.mxu0
  %v286 = vadd.f32 %v237, %v285
  %287 = vmatmul.bf16.gmra.mxu0 %v195
  %v288 = vpop.f32.mrf.mxu0
  %v289 = vadd.f32 %v240, %v288
  %v290 = vpop.f32.mrf.mxu0
  %v291 = vadd.f32 %v242, %v290
  %292 = vmatmul.bf16.gmra.mxu0 %v198
  %v293 = vpop.f32.mrf.mxu0
  %v294 = vadd.f32 %v245, %v293
  %v295 = vpop.f32.mrf.mxu0
  %v296 = vadd.f32 %v247, %v295
  %297 = vdwg.mxu0
  %v298 = vpack.c.bf16 %v259, %v259
  %v299 = vpack.c.bf16 %v261, %v261
  %v300 = vpack.c.bf16 %v264, %v264
  %v301 = vpack.c.bf16 %v266, %v266
  %v302 = vpack.c.bf16 %v269, %v269
  %v303 = vpack.c.bf16 %v271, %v271
  %v304 = vpack.c.bf16 %v274, %v274
  %v305 = vpack.c.bf16 %v276, %v276
  %v306 = vpack.c.bf16 %v279, %v279
  %v307 = vpack.c.bf16 %v281, %v281
  %v308 = vpack.c.bf16 %v284, %v284
  %v309 = vpack.c.bf16 %v286, %v286
  %v310 = vpack.c.bf16 %v289, %v289
  %v311 = vpack.c.bf16 %v291, %v291
  %v312 = vpack.c.bf16 %v294, %v294
  %v313 = vpack.c.bf16 %v296, %v296
  %vm314 = vcmask 257024
  %315 = vst.msk [vmem:[%s2] sm:$0xf] %vm314, %v298
  %316 = vst.msk [vmem:[%s2 + $0x4] sm:$0xf] %vm314, %v299
  %317 = vst.msk [vmem:[%s2 + $0x8] sm:$0xf] %vm314, %v300
  %318 = vst.msk [vmem:[%s2 + $0xc] sm:$0xf] %vm314, %v301
  %319 = vst.msk [vmem:[%s2 + $0x10] sm:$0xf] %vm314, %v302
  %320 = vst.msk [vmem:[%s2 + $0x14] sm:$0xf] %vm314, %v303
  %321 = vst.msk [vmem:[%s2 + $0x18] sm:$0xf] %vm314, %v304
  %322 = vst.msk [vmem:[%s2 + $0x1c] sm:$0xf] %vm314, %v305
  %323 = vst.msk [vmem:[%s2 + $0x20] sm:$0xf] %vm314, %v306
  %324 = vst.msk [vmem:[%s2 + $0x24] sm:$0xf] %vm314, %v307
  %325 = vst.msk [vmem:[%s2 + $0x28] sm:$0xf] %vm314, %v308
  %326 = vst.msk [vmem:[%s2 + $0x2c] sm:$0xf] %vm314, %v309
  %327 = vst.msk [vmem:[%s2 + $0x30] sm:$0xf] %vm314, %v310
  %328 = vst.msk [vmem:[%s2 + $0x34] sm:$0xf] %vm314, %v311
  %329 = vst.msk [vmem:[%s2 + $0x38] sm:$0xf] %vm314, %v312
  %330 = vst.msk [vmem:[%s2 + $0x3c] sm:$0xf] %vm314, %v313
  %vm331 = vcmask 261120
  %v332 = vsel %vm331, %v259, 0.0
  %v333 = vsel %vm331, %v261, 0.0
  %v334 = vadd.f32 %v332, %v333
  %v335 = vsel %vm331, %v264, 0.0
  %v336 = vadd.f32 %v334, %v335
  %v337 = vsel %vm331, %v266, 0.0
  %v338 = vadd.f32 %v336, %v337
  %v339 = vsel %vm331, %v269, 0.0
  %v340 = vadd.f32 %v338, %v339
  %v341 = vsel %vm331, %v271, 0.0
  %v342 = vadd.f32 %v340, %v341
  %v343 = vsel %vm331, %v274, 0.0
  %v344 = vadd.f32 %v342, %v343
  %v345 = vsel %vm331, %v276, 0.0
  %v346 = vadd.f32 %v344, %v345
  %v347 = vsel %vm331, %v279, 0.0
  %v348 = vadd.f32 %v346, %v347
  %v349 = vsel %vm331, %v281, 0.0
  %v350 = vadd.f32 %v348, %v349
  %v351 = vsel %vm331, %v284, 0.0
  %v352 = vadd.f32 %v350, %v351
  %v353 = vsel %vm331, %v286, 0.0
  %v354 = vadd.f32 %v352, %v353
  %v355 = vsel %vm331, %v289, 0.0
  %v356 = vadd.f32 %v354, %v355
  %v357 = vsel %vm331, %v291, 0.0
  %v358 = vadd.f32 %v356, %v357
  %v359 = vsel %vm331, %v294, 0.0
  %v360 = vadd.f32 %v358, %v359
  %v361 = vsel %vm331, %v296, 0.0
  %v362 = vadd.f32 %v360, %v361
  %v363 = vrot.slane %v362, 4
  %v364 = vadd.f32 %v362, %v363
  %v365 = vrot.slane %v364, 2
  %v366 = vadd.f32 %v364, %v365
  %v367 = vrot.slane %v366, 1
  %v368 = vadd.f32 %v366, %v367
  %vm369 = vcmask 253952
  %370 = vst.msk [vmem:[%s3] sm:$0x1] %vm369, %v368
  %v371 = vmul.f32 %v259, %v259
  %v372 = vmul.f32 %v261, %v261
  %v373 = vmul.f32 %v264, %v264
  %v374 = vmul.f32 %v266, %v266
  %v375 = vmul.f32 %v269, %v269
  %v376 = vmul.f32 %v271, %v271
  %v377 = vmul.f32 %v274, %v274
  %v378 = vmul.f32 %v276, %v276
  %v379 = vmul.f32 %v279, %v279
  %v380 = vmul.f32 %v281, %v281
  %v381 = vmul.f32 %v284, %v284
  %v382 = vmul.f32 %v286, %v286
  %v383 = vmul.f32 %v289, %v289
  %v384 = vmul.f32 %v291, %v291
  %v385 = vmul.f32 %v294, %v294
  %v386 = vmul.f32 %v296, %v296
  %v387 = vsel %vm331, %v371, 0.0
  %v388 = vsel %vm331, %v372, 0.0
  %v389 = vadd.f32 %v387, %v388
  %v390 = vsel %vm331, %v373, 0.0
  %v391 = vadd.f32 %v389, %v390
  %v392 = vsel %vm331, %v374, 0.0
  %v393 = vadd.f32 %v391, %v392
  %v394 = vsel %vm331, %v375, 0.0
  %v395 = vadd.f32 %v393, %v394
  %v396 = vsel %vm331, %v376, 0.0
  %v397 = vadd.f32 %v395, %v396
  %v398 = vsel %vm331, %v377, 0.0
  %v399 = vadd.f32 %v397, %v398
  %v400 = vsel %vm331, %v378, 0.0
  %v401 = vadd.f32 %v399, %v400
  %v402 = vsel %vm331, %v379, 0.0
  %v403 = vadd.f32 %v401, %v402
  %v404 = vsel %vm331, %v380, 0.0
  %v405 = vadd.f32 %v403, %v404
  %v406 = vsel %vm331, %v381, 0.0
  %v407 = vadd.f32 %v405, %v406
  %v408 = vsel %vm331, %v382, 0.0
  %v409 = vadd.f32 %v407, %v408
  %v410 = vsel %vm331, %v383, 0.0
  %v411 = vadd.f32 %v409, %v410
  %v412 = vsel %vm331, %v384, 0.0
  %v413 = vadd.f32 %v411, %v412
  %v414 = vsel %vm331, %v385, 0.0
  %v415 = vadd.f32 %v413, %v414
  %v416 = vsel %vm331, %v386, 0.0
  %v417 = vadd.f32 %v415, %v416
  %v418 = vrot.slane %v417, 4
  %v419 = vadd.f32 %v417, %v418
  %v420 = vrot.slane %v419, 2
  %v421 = vadd.f32 %v419, %v420
  %v422 = vrot.slane %v421, 1
  %v423 = vadd.f32 %v421, %v422
  %424 = vst.msk [vmem:[%s4] sm:$0x1] %vm369, %v423
  // Predicated region
  $region10: #{psmnet_forward.70} parent=0 // pred_check
    _
  $region11: #{psmnet_forward.70} parent=0 // pred_check_branch
    %426 = sbr.rel (0) target = $region13
  $region12: #{psmnet_forward.70} parent=0 // pred_region
    _
  $region13: #{psmnet_forward.70} parent=0 // pred_fallthru
    _
  // Predicated region
  $region14: #{psmnet_forward.70} parent=0 // pred_check
    _
  $region15: #{psmnet_forward.70} parent=0 // pred_check_branch
    %428 = sbr.rel (0) target = $region17
  $region16: #{psmnet_forward.70} parent=0 // pred_region
    _
  $region17: #{psmnet_forward.70} parent=0 // pred_fallthru
    _
  // Predicated region
  $region18: #{psmnet_forward.70} parent=0 // pred_check
    _
  $region19: #{psmnet_forward.70} parent=0 // pred_check_branch
    %430 = sbr.rel (0) target = $region21
  $region20: #{psmnet_forward.70} parent=0 // pred_region
    _
  $region21: #{psmnet_forward.70} parent=0 // pred_fallthru
    _
  // Predicated region
  $region22: #{psmnet_forward.70} parent=0 // pred_check
    _
  $region23: #{psmnet_forward.70} parent=0 // pred_check_branch
    %432 = sbr.rel (0) target = $region25
  $region24: #{psmnet_forward.70} parent=0 // pred_region
    _
  $region25: #{psmnet_forward.70} parent=0 // pred_fallthru
    _
  // Predicated region
  $region26: #{psmnet_forward.70} parent=0 // pred_check
    _
  $region27: #{psmnet_forward.70} parent=0 // pred_check_branch
    %434 = sbr.rel (0) target = $region29
  $region28: #{psmnet_forward.70} parent=0 // pred_region
    _
  $region29: #{psmnet_forward.70} parent=0 // pred_fallthru
    _
  // Predicated region
  $region30: #{psmnet_forward.70} parent=0 // pred_check
    _
  $region31: #{psmnet_forward.70} parent=0 // pred_check_branch
    %436 = sbr.rel (0) target = $region33
  $region32: #{psmnet_forward.70} parent=0 // pred_region
    _
  $region33: #{psmnet_forward.70} parent=0 // pred_fallthru
    _

// kernel: psmnet_forward.72
$region0: #{psmnet_forward.72}
  #allocation0 [shape = 'u32[]', space=smem, size = 0x4, offset = 0x4, fixed_abs, tag = 'smem constant byte address 0x4 - core index']
  #allocation1 [shape = 'u32[72,128]{1,0:T(1,128)}', space=vmem, size = 0x9000, scoped, tag = 'internal scratch']
  %s0 = inlined_call_operand.vmem [shape: bf16[128,288], index: 0, kind: input, shape index: {}]
  %s1 = inlined_call_operand.vmem [shape: bf16[288,32], index: 1, kind: input, shape index: {}]
  %s2 = inlined_call_operand.vmem [shape: bf16[128,32], index: 2, kind: output, shape index: {0}]
  %s3 = inlined_call_operand.vmem [shape: f32[1,1,32], index: 3, kind: output, shape index: {1}]
  %s4 = inlined_call_operand.vmem [shape: f32[1,1,32], index: 4, kind: output, shape index: {2}]
  %5 = xla_tuple %s2, %s3, %s4
  %s6 = sld [smem:[#allocation0]]
  $region34: #{psmnet_forward.72} parent=0
    _
  %s8 = ssub.s32 1, %s6
  %s9 = scalar_select 0, %s8, %s6
  // Predicated region
  $region2: #{psmnet_forward.72} parent=0 // pred_check
    _
  $region3: #{psmnet_forward.72} parent=0 // pred_check_branch
    %11 = sbr.rel (0) target = $region5
  $region4: #{psmnet_forward.72} parent=0 // pred_region
    _
  $region5: #{psmnet_forward.72} parent=0 // pred_fallthru
    _
  // Predicated region
  $region6: #{psmnet_forward.72} parent=0 // pred_check
    _
  $region7: #{psmnet_forward.72} parent=0 // pred_check_branch
    %13 = sbr.rel (0) target = $region9
  $region8: #{psmnet_forward.72} parent=0 // pred_region
    _
  $region9: #{psmnet_forward.72} parent=0 // pred_fallthru
    _
  %v15 = vld [vmem:[%s0] sm:$0xff]
  %v16 = vld [vmem:[%s0 + $0x8] sm:$0xf]
  %v17 = vld [vmem:[%s0 + $0xc] sm:$0xff]
  %v18 = vld [vmem:[%s0 + $0x14] sm:$0xf]
  %v19 = vld [vmem:[%s0 + $0x18] sm:$0xff]
  %v20 = vld [vmem:[%s0 + $0x20] sm:$0xf]
  %v21 = vld [vmem:[%s0 + $0x24] sm:$0xff]
  %v22 = vld [vmem:[%s0 + $0x2c] sm:$0xf]
  %v23 = vld [vmem:[%s0 + $0x30] sm:$0xff]
  %v24 = vld [vmem:[%s0 + $0x38] sm:$0xf]
  %v25 = vld [vmem:[%s0 + $0x3c] sm:$0xff]
  %v26 = vld [vmem:[%s0 + $0x44] sm:$0xf]
  %v27 = vld [vmem:[%s0 + $0x48] sm:$0xff]
  %v28 = vld [vmem:[%s0 + $0x50] sm:$0xf]
  %v29 = vld [vmem:[%s0 + $0x54] sm:$0xff]
  %v30 = vld [vmem:[%s0 + $0x5c] sm:$0xf]
  %v31 = vld [vmem:[%s0 + $0x60] sm:$0xff]
  %v32 = vld [vmem:[%s0 + $0x68] sm:$0xf]
  %v33 = vld [vmem:[%s0 + $0x6c] sm:$0xff]
  %v34 = vld [vmem:[%s0 + $0x74] sm:$0xf]
  %v35 = vld [vmem:[%s0 + $0x78] sm:$0xff]
  %v36 = vld [vmem:[%s0 + $0x80] sm:$0xf]
  %v37 = vld [vmem:[%s0 + $0x84] sm:$0xff]
  %v38 = vld [vmem:[%s0 + $0x8c] sm:$0xf]
  %v39 = vld [vmem:[%s0 + $0x90] sm:$0xff]
  %v40 = vld [vmem:[%s0 + $0x98] sm:$0xf]
  %v41 = vld [vmem:[%s0 + $0x9c] sm:$0xff]
  %v42 = vld [vmem:[%s0 + $0xa4] sm:$0xf]
  %v43 = vld [vmem:[%s0 + $0xa8] sm:$0xff]
  %v44 = vld [vmem:[%s0 + $0xb0] sm:$0xf]
  %v45 = vld [vmem:[%s0 + $0xb4] sm:$0xff]
  %v46 = vld [vmem:[%s0 + $0xbc] sm:$0xf]
  %v47 = vld [vmem:[%s1] sm:$0xf]
  %v48 = vld [vmem:[%s1 + $0x4] sm:$0xf]
  %v49 = vld [vmem:[%s1 + $0x8] sm:$0xf]
  %v50 = vld [vmem:[%s1 + $0xc] sm:$0xf]
  %v51 = vld [vmem:[%s1 + $0x10] sm:$0xf]
  %v52 = vld [vmem:[%s1 + $0x14] sm:$0xf]
  %v53 = vld [vmem:[%s1 + $0x18] sm:$0xf]
  %v54 = vld [vmem:[%s1 + $0x1c] sm:$0xf]
  %v55 = vld [vmem:[%s1 + $0x20] sm:$0xf]
  %v56 = vld [vmem:[%s1 + $0x24] sm:$0xf]
  %v57 = vld [vmem:[%s1 + $0x28] sm:$0xf]
  %v58 = vld [vmem:[%s1 + $0x2c] sm:$0xf]
  %v59 = vld [vmem:[%s1 + $0x30] sm:$0xf]
  %v60 = vld [vmem:[%s1 + $0x34] sm:$0xf]
  %v61 = vld [vmem:[%s1 + $0x38] sm:$0xf]
  %v62 = vld [vmem:[%s1 + $0x3c] sm:$0xf]
  %v63 = vld [vmem:[%s1 + $0x40] sm:$0xf]
  %v64 = vld [vmem:[%s1 + $0x44] sm:$0xf]
  %v65 = vld [vmem:[%s1 + $0x48] sm:$0xf]
  %v66 = vld [vmem:[%s1 + $0x4c] sm:$0xf]
  %v67 = vld [vmem:[%s1 + $0x50] sm:$0xf]
  %v68 = vld [vmem:[%s1 + $0x54] sm:$0xf]
  %v69 = vld [vmem:[%s1 + $0x58] sm:$0xf]
  %v70 = vld [vmem:[%s1 + $0x5c] sm:$0xf]
  %v71 = vld [vmem:[%s1 + $0x60] sm:$0xf]
  %v72 = vld [vmem:[%s1 + $0x64] sm:$0xf]
  %v73 = vld [vmem:[%s1 + $0x68] sm:$0xf]
  %v74 = vld [vmem:[%s1 + $0x6c] sm:$0xf]
  %v75 = vld [vmem:[%s1 + $0x70] sm:$0xf]
  %v76 = vld [vmem:[%s1 + $0x74] sm:$0xf]
  %v77 = vld [vmem:[%s1 + $0x78] sm:$0xf]
  %v78 = vld [vmem:[%s1 + $0x7c] sm:$0xf]
  %v79 = vld [vmem:[%s1 + $0x80] sm:$0xf]
  %v80 = vld [vmem:[%s1 + $0x84] sm:$0xf]
  %v81 = vld [vmem:[%s1 + $0x88] sm:$0xf]
  %v82 = vld [vmem:[%s1 + $0x8c] sm:$0xf]
  %v115 = vunpack.c.l.b16 %v15
  %v116 = vunpack.c.h.b16 %v15
  %v117 = vunpack.c.l.b16 %v16
  %v118 = vunpack.c.l.b16 %v17
  %v119 = vunpack.c.h.b16 %v17
  %v120 = vunpack.c.l.b16 %v18
  %v121 = vunpack.c.l.b16 %v19
  %v122 = vunpack.c.h.b16 %v19
  %v123 = vunpack.c.l.b16 %v20
  %v124 = vunpack.c.l.b16 %v21
  %v125 = vunpack.c.h.b16 %v21
  %v126 = vunpack.c.l.b16 %v22
  %v127 = vunpack.c.l.b16 %v23
  %v128 = vunpack.c.h.b16 %v23
  %v129 = vunpack.c.l.b16 %v24
  %v130 = vunpack.c.l.b16 %v25
  %v131 = vunpack.c.h.b16 %v25
  %v132 = vunpack.c.l.b16 %v26
  %v133 = vunpack.c.l.b16 %v27
  %v134 = vunpack.c.h.b16 %v27
  %v135 = vunpack.c.l.b16 %v28
  %v136 = vunpack.c.l.b16 %v29
  %v137 = vunpack.c.h.b16 %v29
  %v138 = vunpack.c.l.b16 %v30
  %v139 = vunpack.c.l.b16 %v31
  %v140 = vunpack.c.h.b16 %v31
  %v141 = vunpack.c.l.b16 %v32
  %v142 = vunpack.c.l.b16 %v33
  %v143 = vunpack.c.h.b16 %v33
  %v144 = vunpack.c.l.b16 %v34
  %v145 = vunpack.c.l.b16 %v35
  %v146 = vunpack.c.h.b16 %v35
  %v147 = vunpack.c.l.b16 %v36
  %v148 = vunpack.c.l.b16 %v37
  %v149 = vunpack.c.h.b16 %v37
  %v150 = vunpack.c.l.b16 %v38
  %v151 = vunpack.c.l.b16 %v39
  %v152 = vunpack.c.h.b16 %v39
  %v153 = vunpack.c.l.b16 %v40
  %v154 = vunpack.c.l.b16 %v41
  %v155 = vunpack.c.h.b16 %v41
  %v156 = vunpack.c.l.b16 %v42
  %v157 = vunpack.c.l.b16 %v43
  %v158 = vunpack.c.h.b16 %v43
  %v159 = vunpack.c.l.b16 %v44
  %v160 = vunpack.c.l.b16 %v45
  %v161 = vunpack.c.h.b16 %v45
  %v162 = vunpack.c.l.b16 %v46
  %v163 = vpack.c.b16 %v118, %v115
  %v164 = vpack.c.b16 %v119, %v116
  %v165 = vpack.c.b16 %v120, %v117
  %v166 = vpack.c.b16 %v124, %v121
  %v167 = vpack.c.b16 %v125, %v122
  %v168 = vpack.c.b16 %v126, %v123
  %v169 = vpack.c.b16 %v130, %v127
  %v170 = vpack.c.b16 %v131, %v128
  %v171 = vpack.c.b16 %v132, %v129
  %v172 = vpack.c.b16 %v136, %v133
  %v173 = vpack.c.b16 %v137, %v134
  %v174 = vpack.c.b16 %v138, %v135
  %v175 = vpack.c.b16 %v142, %v139
  %v176 = vpack.c.b16 %v143, %v140
  %v177 = vpack.c.b16 %v144, %v141
  %v178 = vpack.c.b16 %v148, %v145
  %v179 = vpack.c.b16 %v149, %v146
  %v180 = vpack.c.b16 %v150, %v147
  %v181 = vpack.c.b16 %v154, %v151
  %v182 = vpack.c.b16 %v155, %v152
  %v183 = vpack.c.b16 %v156, %v153
  %v184 = vpack.c.b16 %v160, %v157
  %v185 = vpack.c.b16 %v161, %v158
  %v186 = vpack.c.b16 %v162, %v159
  %v239 = vunpack.c.l.b16 %v47
  %v240 = vunpack.c.l.b16 %v48
  %v241 = vunpack.c.l.b16 %v49
  %v242 = vunpack.c.l.b16 %v50
  %v243 = vunpack.c.l.b16 %v51
  %v244 = vunpack.c.l.b16 %v52
  %v245 = vunpack.c.l.b16 %v53
  %v246 = vunpack.c.l.b16 %v54
  %v247 = vunpack.c.l.b16 %v55
  %v248 = vunpack.c.l.b16 %v56
  %v249 = vunpack.c.l.b16 %v57
  %v250 = vunpack.c.l.b16 %v58
  %v251 = vunpack.c.l.b16 %v59
  %v252 = vunpack.c.l.b16 %v60
  %v253 = vunpack.c.l.b16 %v61
  %v254 = vunpack.c.l.b16 %v62
  %v255 = vunpack.c.l.b16 %v63
  %v256 = vunpack.c.l.b16 %v64
  %v257 = vunpack.c.l.b16 %v65
  %v258 = vunpack.c.l.b16 %v66
  %v259 = vunpack.c.l.b16 %v67
  %v260 = vunpack.c.l.b16 %v68
  %v261 = vunpack.c.l.b16 %v69
  %v262 = vunpack.c.l.b16 %v70
  %v263 = vunpack.c.l.b16 %v71
  %v264 = vunpack.c.l.b16 %v72
  %v265 = vunpack.c.l.b16 %v73
  %v266 = vunpack.c.l.b16 %v74
  %v267 = vunpack.c.l.b16 %v75
  %v268 = vunpack.c.l.b16 %v76
  %v269 = vunpack.c.l.b16 %v77
  %v270 = vunpack.c.l.b16 %v78
  %v271 = vunpack.c.l.b16 %v79
  %v272 = vunpack.c.l.b16 %v80
  %v273 = vunpack.c.l.b16 %v81
  %v274 = vunpack.c.l.b16 %v82
  %v275 = vpack.c.b16 %v240, %v239
  %v276 = vpack.c.b16 %v242, %v241
  %v277 = vpack.c.b16 %v244, %v243
  %v278 = vpack.c.b16 %v246, %v245
  %v279 = vpack.c.b16 %v248, %v247
  %v280 = vpack.c.b16 %v250, %v249
  %v281 = vpack.c.b16 %v252, %v251
  %v282 = vpack.c.b16 %v254, %v253
  %v283 = vpack.c.b16 %v256, %v255
  %v284 = vpack.c.b16 %v258, %v257
  %v285 = vpack.c.b16 %v260, %v259
  %v286 = vpack.c.b16 %v262, %v261
  %v287 = vpack.c.b16 %v264, %v263
  %v288 = vpack.c.b16 %v266, %v265
  %v289 = vpack.c.b16 %v268, %v267
  %v290 = vpack.c.b16 %v270, %v269
  %v291 = vpack.c.b16 %v272, %v271
  %v292 = vpack.c.b16 %v274, %v273
  %vm311 = vcmask 261120
  %v313 = vsel %vm311, %v165, 0
  %v316 = vsel %vm311, %v168, 0
  %v319 = vsel %vm311, %v171, 0
  %v322 = vsel %vm311, %v174, 0
  %v325 = vsel %vm311, %v177, 0
  %v328 = vsel %vm311, %v180, 0
  %v331 = vsel %vm311, %v183, 0
  %v334 = vsel %vm311, %v186, 0
  %336 = vmatpush.bf16.msra.mxu0 %v282
  %337 = vmatpush.bf16.msra.mxu0 %v281
  %338 = vmatpush.bf16.msra.mxu0 %v280
  %339 = vmatpush.bf16.msra.mxu0 %v279
  %340 = vmatpush.bf16.msra.mxu0 %v278
  %341 = vmatpush.bf16.msra.mxu0 %v277
  %342 = vmatpush.bf16.msra.mxu0 %v276
  %343 = vmatpush.bf16.msra.mxu0 %v275
  %344 = vmatmul.bf16.gmra.mxu0 %v163
  %v345 = vpop.f32.mrf.mxu0
  %v346 = vadd.f32 0.0, %v345
  %v347 = vpop.f32.mrf.mxu0
  %v348 = vadd.f32 0.0, %v347
  %349 = vmatmul.bf16.gmra.mxu0 %v166
  %v350 = vpop.f32.mrf.mxu0
  %v351 = vadd.f32 0.0, %v350
  %v352 = vpop.f32.mrf.mxu0
  %v353 = vadd.f32 0.0, %v352
  %354 = vmatmul.bf16.gmra.mxu0 %v169
  %v355 = vpop.f32.mrf.mxu0
  %v356 = vadd.f32 0.0, %v355
  %v357 = vpop.f32.mrf.mxu0
  %v358 = vadd.f32 0.0, %v357
  %359 = vmatmul.bf16.gmra.mxu0 %v172
  %v360 = vpop.f32.mrf.mxu0
  %v361 = vadd.f32 0.0, %v360
  %v362 = vpop.f32.mrf.mxu0
  %v363 = vadd.f32 0.0, %v362
  %364 = vmatmul.bf16.gmra.mxu0 %v175
  %v365 = vpop.f32.mrf.mxu0
  %v366 = vadd.f32 0.0, %v365
  %v367 = vpop.f32.mrf.mxu0
  %v368 = vadd.f32 0.0, %v367
  %369 = vmatmul.bf16.gmra.mxu0 %v178
  %v370 = vpop.f32.mrf.mxu0
  %v371 = vadd.f32 0.0, %v370
  %v372 = vpop.f32.mrf.mxu0
  %v373 = vadd.f32 0.0, %v372
  %374 = vmatmul.bf16.gmra.mxu0 %v181
  %v375 = vpop.f32.mrf.mxu0
  %v376 = vadd.f32 0.0, %v375
  %v377 = vpop.f32.mrf.mxu0
  %v378 = vadd.f32 0.0, %v377
  %379 = vmatmul.bf16.gmra.mxu0 %v184
  %v380 = vpop.f32.mrf.mxu0
  %v381 = vadd.f32 0.0, %v380
  %v382 = vpop.f32.mrf.mxu0
  %v383 = vadd.f32 0.0, %v382
  %384 = vdwg.mxu0
  %385 = vmatpush.bf16.msra.mxu0 %v290
  %386 = vmatpush.bf16.msra.mxu0 %v289
  %387 = vmatpush.bf16.msra.mxu0 %v288
  %388 = vmatpush.bf16.msra.mxu0 %v287
  %389 = vmatpush.bf16.msra.mxu0 %v286
  %390 = vmatpush.bf16.msra.mxu0 %v285
  %391 = vmatpush.bf16.msra.mxu0 %v284
  %392 = vmatpush.bf16.msra.mxu0 %v283
  %393 = vmatmul.bf16.gmra.mxu0 %v164
  %v394 = vpop.f32.mrf.mxu0
  %v395 = vadd.f32 %v346, %v394
  %v396 = vpop.f32.mrf.mxu0
  %v397 = vadd.f32 %v348, %v396
  %398 = vmatmul.bf16.gmra.mxu0 %v167
  %v399 = vpop.f32.mrf.mxu0
  %v400 = vadd.f32 %v351, %v399
  %v401 = vpop.f32.mrf.mxu0
  %v402 = vadd.f32 %v353, %v401
  %403 = vmatmul.bf16.gmra.mxu0 %v170
  %v404 = vpop.f32.mrf.mxu0
  %v405 = vadd.f32 %v356, %v404
  %v406 = vpop.f32.mrf.mxu0
  %v407 = vadd.f32 %v358, %v406
  %408 = vmatmul.bf16.gmra.mxu0 %v173
  %v409 = vpop.f32.mrf.mxu0
  %v410 = vadd.f32 %v361, %v409
  %v411 = vpop.f32.mrf.mxu0
  %v412 = vadd.f32 %v363, %v411
  %413 = vmatmul.bf16.gmra.mxu0 %v176
  %v414 = vpop.f32.mrf.mxu0
  %v415 = vadd.f32 %v366, %v414
  %v416 = vpop.f32.mrf.mxu0
  %v417 = vadd.f32 %v368, %v416
  %418 = vmatmul.bf16.gmra.mxu0 %v179
  %v419 = vpop.f32.mrf.mxu0
  %v420 = vadd.f32 %v371, %v419
  %v421 = vpop.f32.mrf.mxu0
  %v422 = vadd.f32 %v373, %v421
  %423 = vmatmul.bf16.gmra.mxu0 %v182
  %v424 = vpop.f32.mrf.mxu0
  %v425 = vadd.f32 %v376, %v424
  %v426 = vpop.f32.mrf.mxu0
  %v427 = vadd.f32 %v378, %v426
  %428 = vmatmul.bf16.gmra.mxu0 %v185
  %v429 = vpop.f32.mrf.mxu0
  %v430 = vadd.f32 %v381, %v429
  %v431 = vpop.f32.mrf.mxu0
  %v432 = vadd.f32 %v383, %v431
  %433 = vdwg.mxu0
  %434 = vmatpush.bf16.msra.mxu0 0
  %435 = vmatpush.bf16.msra.mxu0 0
  %436 = vmatpush.bf16.msra.mxu0 0
  %437 = vmatpush.bf16.msra.mxu0 0
  %438 = vmatpush.bf16.msra.mxu0 0
  %439 = vmatpush.bf16.msra.mxu0 0
  %440 = vmatpush.bf16.msra.mxu0 %v292
  %441 = vmatpush.bf16.msra.mxu0 %v291
  %442 = vmatmul.bf16.gmra.mxu0 %v313
  %v443 = vpop.f32.mrf.mxu0
  %v444 = vadd.f32 %v395, %v443
  %v445 = vpop.f32.mrf.mxu0
  %v446 = vadd.f32 %v397, %v445
  %447 = vmatmul.bf16.gmra.mxu0 %v316
  %v448 = vpop.f32.mrf.mxu0
  %v449 = vadd.f32 %v400, %v448
  %v450 = vpop.f32.mrf.mxu0
  %v451 = vadd.f32 %v402, %v450
  %452 = vmatmul.bf16.gmra.mxu0 %v319
  %v453 = vpop.f32.mrf.mxu0
  %v454 = vadd.f32 %v405, %v453
  %v455 = vpop.f32.mrf.mxu0
  %v456 = vadd.f32 %v407, %v455
  %457 = vmatmul.bf16.gmra.mxu0 %v322
  %v458 = vpop.f32.mrf.mxu0
  %v459 = vadd.f32 %v410, %v458
  %v460 = vpop.f32.mrf.mxu0
  %v461 = vadd.f32 %v412, %v460
  %462 = vmatmul.bf16.gmra.mxu0 %v325
  %v463 = vpop.f32.mrf.mxu0
  %v464 = vadd.f32 %v415, %v463
  %v465 = vpop.f32.mrf.mxu0
  %v466 = vadd.f32 %v417, %v465
  %467 = vmatmul.bf16.gmra.mxu0 %v328
  %v468 = vpop.f32.mrf.mxu0
  %v469 = vadd.f32 %v420, %v468
  %v470 = vpop.f32.mrf.mxu0
  %v471 = vadd.f32 %v422, %v470
  %472 = vmatmul.bf16.gmra.mxu0 %v331
  %v473 = vpop.f32.mrf.mxu0
  %v474 = vadd.f32 %v425, %v473
  %v475 = vpop.f32.mrf.mxu0
  %v476 = vadd.f32 %v427, %v475
  %477 = vmatmul.bf16.gmra.mxu0 %v334
  %v478 = vpop.f32.mrf.mxu0
  %v479 = vadd.f32 %v430, %v478
  %v480 = vpop.f32.mrf.mxu0
  %v481 = vadd.f32 %v432, %v480
  %482 = vdwg.mxu0
  %v483 = vpack.c.bf16 %v444, %v444
  %v484 = vpack.c.bf16 %v446, %v446
  %v485 = vpack.c.bf16 %v449, %v449
  %v486 = vpack.c.bf16 %v451, %v451
  %v487 = vpack.c.bf16 %v454, %v454
  %v488 = vpack.c.bf16 %v456, %v456
  %v489 = vpack.c.bf16 %v459, %v459
  %v490 = vpack.c.bf16 %v461, %v461
  %v491 = vpack.c.bf16 %v464, %v464
  %v492 = vpack.c.bf16 %v466, %v466
  %v493 = vpack.c.bf16 %v469, %v469
  %v494 = vpack.c.bf16 %v471, %v471
  %v495 = vpack.c.bf16 %v474, %v474
  %v496 = vpack.c.bf16 %v476, %v476
  %v497 = vpack.c.bf16 %v479, %v479
  %v498 = vpack.c.bf16 %v481, %v481
  %vm499 = vcmask 257024
  %500 = vst.msk [vmem:[%s2] sm:$0xf] %vm499, %v483
  %501 = vst.msk [vmem:[%s2 + $0x4] sm:$0xf] %vm499, %v484
  %502 = vst.msk [vmem:[%s2 + $0x8] sm:$0xf] %vm499, %v485
  %503 = vst.msk [vmem:[%s2 + $0xc] sm:$0xf] %vm499, %v486
  %504 = vst.msk [vmem:[%s2 + $0x10] sm:$0xf] %vm499, %v487
  %505 = vst.msk [vmem:[%s2 + $0x14] sm:$0xf] %vm499, %v488
  %506 = vst.msk [vmem:[%s2 + $0x18] sm:$0xf] %vm499, %v489
  %507 = vst.msk [vmem:[%s2 + $0x1c] sm:$0xf] %vm499, %v490
  %508 = vst.msk [vmem:[%s2 + $0x20] sm:$0xf] %vm499, %v491
  %509 = vst.msk [vmem:[%s2 + $0x24] sm:$0xf] %vm499, %v492
  %510 = vst.msk [vmem:[%s2 + $0x28] sm:$0xf] %vm499, %v493
  %511 = vst.msk [vmem:[%s2 + $0x2c] sm:$0xf] %vm499, %v494
  %512 = vst.msk [vmem:[%s2 + $0x30] sm:$0xf] %vm499, %v495
  %513 = vst.msk [vmem:[%s2 + $0x34] sm:$0xf] %vm499, %v496
  %514 = vst.msk [vmem:[%s2 + $0x38] sm:$0xf] %vm499, %v497
  %515 = vst.msk [vmem:[%s2 + $0x3c] sm:$0xf] %vm499, %v498
  %v516 = vsel %vm311, %v444, 0.0
  %v517 = vsel %vm311, %v446, 0.0
  %v518 = vadd.f32 %v516, %v517
  %v519 = vsel %vm311, %v449, 0.0
  %v520 = vadd.f32 %v518, %v519
  %v521 = vsel %vm311, %v451, 0.0
  %v522 = vadd.f32 %v520, %v521
  %v523 = vsel %vm311, %v454, 0.0
  %v524 = vadd.f32 %v522, %v523
  %v525 = vsel %vm311, %v456, 0.0
  %v526 = vadd.f32 %v524, %v525
  %v527 = vsel %vm311, %v459, 0.0
  %v528 = vadd.f32 %v526, %v527
  %v529 = vsel %vm311, %v461, 0.0
  %v530 = vadd.f32 %v528, %v529
  %v531 = vsel %vm311, %v464, 0.0
  %v532 = vadd.f32 %v530, %v531
  %v533 = vsel %vm311, %v466, 0.0
  %v534 = vadd.f32 %v532, %v533
  %v535 = vsel %vm311, %v469, 0.0
  %v536 = vadd.f32 %v534, %v535
  %v537 = vsel %vm311, %v471, 0.0
  %v538 = vadd.f32 %v536, %v537
  %v539 = vsel %vm311, %v474, 0.0
  %v540 = vadd.f32 %v538, %v539
  %v541 = vsel %vm311, %v476, 0.0
  %v542 = vadd.f32 %v540, %v541
  %v543 = vsel %vm311, %v479, 0.0
  %v544 = vadd.f32 %v542, %v543
  %v545 = vsel %vm311, %v481, 0.0
  %v546 = vadd.f32 %v544, %v545
  %v547 = vrot.slane %v546, 4
  %v548 = vadd.f32 %v546, %v547
  %v549 = vrot.slane %v548, 2
  %v550 = vadd.f32 %v548, %v549
  %v551 = vrot.slane %v550, 1
  %v552 = vadd.f32 %v550, %v551
  %vm553 = vcmask 253952
  %554 = vst.msk [vmem:[%s3] sm:$0x1] %vm553, %v552
  %v555 = vmul.f32 %v444, %v444
  %v556 = vmul.f32 %v446, %v446
  %v557 = vmul.f32 %v449, %v449
  %v558 = vmul.f32 %v451, %v451
  %v559 = vmul.f32 %v454, %v454
  %v560 = vmul.f32 %v456, %v456
  %v561 = vmul.f32 %v459, %v459
  %v562 = vmul.f32 %v461, %v461
  %v563 = vmul.f32 %v464, %v464
  %v564 = vmul.f32 %v466, %v466
  %v565 = vmul.f32 %v469, %v469
  %v566 = vmul.f32 %v471, %v471
  %v567 = vmul.f32 %v474, %v474
  %v568 = vmul.f32 %v476, %v476
  %v569 = vmul.f32 %v479, %v479
  %v570 = vmul.f32 %v481, %v481
  %v571 = vsel %vm311, %v555, 0.0
  %v572 = vsel %vm311, %v556, 0.0
  %v573 = vadd.f32 %v571, %v572
  %v574 = vsel %vm311, %v557, 0.0
  %v575 = vadd.f32 %v573, %v574
  %v576 = vsel %vm311, %v558, 0.0
  %v577 = vadd.f32 %v575, %v576
  %v578 = vsel %vm311, %v559, 0.0
  %v579 = vadd.f32 %v577, %v578
  %v580 = vsel %vm311, %v560, 0.0
  %v581 = vadd.f32 %v579, %v580
  %v582 = vsel %vm311, %v561, 0.0
  %v583 = vadd.f32 %v581, %v582
  %v584 = vsel %vm311, %v562, 0.0
  %v585 = vadd.f32 %v583, %v584
  %v586 = vsel %vm311, %v563, 0.0
  %v587 = vadd.f32 %v585, %v586
  %v588 = vsel %vm311, %v564, 0.0
  %v589 = vadd.f32 %v587, %v588
  %v590 = vsel %vm311, %v565, 0.0
  %v591 = vadd.f32 %v589, %v590
  %v592 = vsel %vm311, %v566, 0.0
  %v593 = vadd.f32 %v591, %v592
  %v594 = vsel %vm311, %v567, 0.0
  %v595 = vadd.f32 %v593, %v594
  %v596 = vsel %vm311, %v568, 0.0
  %v597 = vadd.f32 %v595, %v596
  %v598 = vsel %vm311, %v569, 0.0
  %v599 = vadd.f32 %v597, %v598
  %v600 = vsel %vm311, %v570, 0.0
  %v601 = vadd.f32 %v599, %v600
  %v602 = vrot.slane %v601, 4
  %v603 = vadd.f32 %v601, %v602
  %v604 = vrot.slane %v603, 2
  %v605 = vadd.f32 %v603, %v604
  %v606 = vrot.slane %v605, 1
  %v607 = vadd.f32 %v605, %v606
  %608 = vst.msk [vmem:[%s4] sm:$0x1] %vm553, %v607
  // Predicated region
  $region10: #{psmnet_forward.72} parent=0 // pred_check
    _
  $region11: #{psmnet_forward.72} parent=0 // pred_check_branch
    %610 = sbr.rel (0) target = $region13
  $region12: #{psmnet_forward.72} parent=0 // pred_region
    _
  $region13: #{psmnet_forward.72} parent=0 // pred_fallthru
    _
  // Predicated region
  $region14: #{psmnet_forward.72} parent=0 // pred_check
    _
  $region15: #{psmnet_forward.72} parent=0 // pred_check_branch
    %612 = sbr.rel (0) target = $region17
  $region16: #{psmnet_forward.72} parent=0 // pred_region
    _
  $region17: #{psmnet_forward.72} parent=0 // pred_fallthru
    _
  // Predicated region
  $region18: #{psmnet_forward.72} parent=0 // pred_check
    _
  $region19: #{psmnet_forward.72} parent=0 // pred_check_branch
    %614 = sbr.rel (0) target = $region21
  $region20: #{psmnet_forward.72} parent=0 // pred_region
    _
  $region21: #{psmnet_forward.72} parent=0 // pred_fallthru
    _
  // Predicated region
  $region22: #{psmnet_forward.72} parent=0 // pred_check
    _
  $region23: #{psmnet_forward.72} parent=0 // pred_check_branch
    %616 = sbr.rel (0) target = $region25
  $region24: #{psmnet_forward.72} parent=0 // pred_region
    _
  $region25: #{psmnet_forward.72} parent=0 // pred_fallthru
    _
  // Predicated region
  $region26: #{psmnet_forward.72} parent=0 // pred_check
    _
  $region27: #{psmnet_forward.72} parent=0 // pred_check_branch
    %618 = sbr.rel (0) target = $region29
  $region28: #{psmnet_forward.72} parent=0 // pred_region
    _
  $region29: #{psmnet_forward.72} parent=0 // pred_fallthru
    _
  // Predicated region
  $region30: #{psmnet_forward.72} parent=0 // pred_check
    _
  $region31: #{psmnet_forward.72} parent=0 // pred_check_branch
    %620 = sbr.rel (0) target = $region33
  $region32: #{psmnet_forward.72} parent=0 // pred_region
    _
  $region33: #{psmnet_forward.72} parent=0 // pred_fallthru
    _

// kernel: psmnet_forward.80
$region0: #{psmnet_forward.80}
  #allocation0 [shape = 'u32[]', space=smem, size = 0x4, offset = 0x4, fixed_abs, tag = 'smem constant byte address 0x4 - core index']
  #allocation1 [shape = 'u32[72,128]{1,0:T(1,128)}', space=vmem, size = 0x9000, scoped, tag = 'internal scratch']
  %s0 = inlined_call_operand.vmem [shape: bf16[128,1728], index: 0, kind: input, shape index: {}]
  %s1 = inlined_call_operand.vmem [shape: bf16[1728,32], index: 1, kind: input, shape index: {}]
  %s2 = inlined_call_operand.vmem [shape: bf16[128,32], index: 2, kind: output, shape index: {0}]
  %s3 = inlined_call_operand.vmem [shape: f32[1,1,32], index: 3, kind: output, shape index: {1}]
  %s4 = inlined_call_operand.vmem [shape: f32[1,1,32], index: 4, kind: output, shape index: {2}]
  %5 = xla_tuple %s2, %s3, %s4
  %s6 = sld [smem:[#allocation0]]
  $region34: #{psmnet_forward.80} parent=0
    _
  %s8 = ssub.s32 1, %s6
  %s9 = scalar_select 0, %s8, %s6
  // Predicated region
  $region2: #{psmnet_forward.80} parent=0 // pred_check
    _
  $region3: #{psmnet_forward.80} parent=0 // pred_check_branch
    %11 = sbr.rel (0) target = $region5
  $region4: #{psmnet_forward.80} parent=0 // pred_region
    _
  $region5: #{psmnet_forward.80} parent=0 // pred_fallthru
    _
  // Predicated region
  $region6: #{psmnet_forward.80} parent=0 // pred_check
    _
  $region7: #{psmnet_forward.80} parent=0 // pred_check_branch
    %13 = sbr.rel (0) target = $region9
  $region8: #{psmnet_forward.80} parent=0 // pred_region
    _
  $region9: #{psmnet_forward.80} parent=0 // pred_fallthru
    _
  %v15 = vld [vmem:[%s0] sm:$0xff]
  %v16 = vld [vmem:[%s0 + $0x8] sm:$0xff]
  %v17 = vld [vmem:[%s0 + $0x10] sm:$0xff]
  %v18 = vld [vmem:[%s0 + $0x18] sm:$0xff]
  %v19 = vld [vmem:[%s0 + $0x20] sm:$0xff]
  %v20 = vld [vmem:[%s0 + $0x28] sm:$0xff]
  %v21 = vld [vmem:[%s0 + $0x30] sm:$0xff]
  %v22 = vld [vmem:[%s0 + $0x38] sm:$0xff]
  %v23 = vld [vmem:[%s0 + $0x40] sm:$0xff]
  %v24 = vld [vmem:[%s0 + $0x48] sm:$0xff]
  %v25 = vld [vmem:[%s0 + $0x50] sm:$0xff]
  %v26 = vld [vmem:[%s0 + $0x58] sm:$0xff]
  %v27 = vld [vmem:[%s0 + $0x60] sm:$0xff]
  %v28 = vld [vmem:[%s0 + $0x68] sm:$0xff]
  %v29 = vld [vmem:[%s0 + $0x70] sm:$0xff]
  %v30 = vld [vmem:[%s0 + $0x78] sm:$0xff]
  %v31 = vld [vmem:[%s0 + $0x80] sm:$0xff]
  %v32 = vld [vmem:[%s0 + $0x88] sm:$0xff]
  %v33 = vld [vmem:[%s0 + $0x90] sm:$0xff]
  %v34 = vld [vmem:[%s0 + $0x98] sm:$0xff]
  %v35 = vld [vmem:[%s0 + $0xa0] sm:$0xff]
  %v36 = vld [vmem:[%s0 + $0xa8] sm:$0xff]
  %v37 = vld [vmem:[%s0 + $0xb0] sm:$0xff]
  %v38 = vld [vmem:[%s0 + $0xb8] sm:$0xff]
  %v39 = vld [vmem:[%s0 + $0xc0] sm:$0xff]
  %v40 = vld [vmem:[%s0 + $0xc8] sm:$0xff]
  %v41 = vld [vmem:[%s0 + $0xd0] sm:$0xff]
  %v42 = vld [vmem:[%s0 + $0xd8] sm:$0xff]
  %v43 = vld [vmem:[%s0 + $0xe0] sm:$0xff]
  %v44 = vld [vmem:[%s0 + $0xe8] sm:$0xff]
  %v45 = vld [vmem:[%s0 + $0xf0] sm:$0xff]
  %v46 = vld [vmem:[%s0 + $0xf8] sm:$0xff]
  %v47 = vld [vmem:[%s0 + $0x100] sm:$0xff]
  %v48 = vld [vmem:[%s0 + $0x108] sm:$0xff]
  %v49 = vld [vmem:[%s0 + $0x110] sm:$0xff]
  %v50 = vld [vmem:[%s0 + $0x118] sm:$0xff]
  %v51 = vld [vmem:[%s0 + $0x120] sm:$0xff]
  %v52 = vld [vmem:[%s0 + $0x128] sm:$0xff]
  %v53 = vld [vmem:[%s0 + $0x130] sm:$0xff]
  %v54 = vld [vmem:[%s0 + $0x138] sm:$0xff]
  %v55 = vld [vmem:[%s0 + $0x140] sm:$0xff]
  %v56 = vld [vmem:[%s0 + $0x148] sm:$0xff]
  %v57 = vld [vmem:[%s0 + $0x150] sm:$0xff]
  %v58 = vld [vmem:[%s0 + $0x158] sm:$0xff]
  %v59 = vld [vmem:[%s0 + $0x160] sm:$0xff]
  %v60 = vld [vmem:[%s0 + $0x168] sm:$0xff]
  %v61 = vld [vmem:[%s0 + $0x170] sm:$0xff]
  %v62 = vld [vmem:[%s0 + $0x178] sm:$0xff]
  %v63 = vld [vmem:[%s0 + $0x180] sm:$0xff]
  %v64 = vld [vmem:[%s0 + $0x188] sm:$0xff]
  %v65 = vld [vmem:[%s0 + $0x190] sm:$0xff]
  %v66 = vld [vmem:[%s0 + $0x198] sm:$0xff]
  %v67 = vld [vmem:[%s0 + $0x1a0] sm:$0xff]
  %v68 = vld [vmem:[%s0 + $0x1a8] sm:$0xff]
  %v69 = vld [vmem:[%s0 + $0x1b0] sm:$0xff]
  %v70 = vld [vmem:[%s0 + $0x1b8] sm:$0xff]
  %v71 = vld [vmem:[%s0 + $0x1c0] sm:$0xff]
  %v72 = vld [vmem:[%s0 + $0x1c8] sm:$0xff]
  %v73 = vld [vmem:[%s0 + $0x1d0] sm:$0xff]
  %v74 = vld [vmem:[%s0 + $0x1d8] sm:$0xff]
  %v75 = vld [vmem:[%s0 + $0x1e0] sm:$0xff]
  %v76 = vld [vmem:[%s0 + $0x1e8] sm:$0xff]
  %v77 = vld [vmem:[%s0 + $0x1f0] sm:$0xff]
  %v78 = vld [vmem:[%s0 + $0x1f8] sm:$0xff]
  %v79 = vld [vmem:[%s0 + $0x200] sm:$0xff]
  %v80 = vld [vmem:[%s0 + $0x208] sm:$0xff]
  %v81 = vld [vmem:[%s0 + $0x210] sm:$0xff]
  %v82 = vld [vmem:[%s0 + $0x218] sm:$0xff]
  %v83 = vld [vmem:[%s0 + $0x220] sm:$0xff]
  %v84 = vld [vmem:[%s0 + $0x228] sm:$0xff]
  %v85 = vld [vmem:[%s0 + $0x230] sm:$0xff]
  %v86 = vld [vmem:[%s0 + $0x238] sm:$0xff]
  %v87 = vld [vmem:[%s0 + $0x240] sm:$0xff]
  %v88 = vld [vmem:[%s0 + $0x248] sm:$0xff]
  %v89 = vld [vmem:[%s0 + $0x250] sm:$0xff]
  %v90 = vld [vmem:[%s0 + $0x258] sm:$0xff]
  %v91 = vld [vmem:[%s0 + $0x260] sm:$0xff]
  %v92 = vld [vmem:[%s0 + $0x268] sm:$0xff]
  %v93 = vld [vmem:[%s0 + $0x270] sm:$0xff]
  %v94 = vld [vmem:[%s0 + $0x278] sm:$0xff]
  %v95 = vld [vmem:[%s0 + $0x280] sm:$0xff]
  %v96 = vld [vmem:[%s0 + $0x288] sm:$0xff]
  %v97 = vld [vmem:[%s0 + $0x290] sm:$0xff]
  %v98 = vld [vmem:[%s0 + $0x298] sm:$0xff]
  %v99 = vld [vmem:[%s0 + $0x2a0] sm:$0xff]
  %v100 = vld [vmem:[%s0 + $0x2a8] sm:$0xff]
  %v101 = vld [vmem:[%s0 + $0x2b0] sm:$0xff]
  %v102 = vld [vmem:[%s0 + $0x2b8] sm:$0xff]
  %v103 = vld [vmem:[%s0 + $0x2c0] sm:$0xff]
  %v104 = vld [vmem:[%s0 + $0x2c8] sm:$0xff]
  %v105 = vld [vmem:[%s0 + $0x2d0] sm:$0xff]
  %v106 = vld [vmem:[%s0 + $0x2d8] sm:$0xff]
  %v107 = vld [vmem:[%s0 + $0x2e0] sm:$0xff]
  %v108 = vld [vmem:[%s0 + $0x2e8] sm:$0xff]
  %v109 = vld [vmem:[%s0 + $0x2f0] sm:$0xff]
  %v110 = vld [vmem:[%s0 + $0x2f8] sm:$0xff]
  %v111 = vld [vmem:[%s0 + $0x300] sm:$0xff]
  %v112 = vld [vmem:[%s0 + $0x308] sm:$0xff]
  %v113 = vld [vmem:[%s0 + $0x310] sm:$0xff]
  %v114 = vld [vmem:[%s0 + $0x318] sm:$0xff]
  %v115 = vld [vmem:[%s0 + $0x320] sm:$0xff]
  %v116 = vld [vmem:[%s0 + $0x328] sm:$0xff]
  %v117 = vld [vmem:[%s0 + $0x330] sm:$0xff]
  %v118 = vld [vmem:[%s0 + $0x338] sm:$0xff]
  %v119 = vld [vmem:[%s0 + $0x340] sm:$0xff]
  %v120 = vld [vmem:[%s0 + $0x348] sm:$0xff]
  %v121 = vld [vmem:[%s0 + $0x350] sm:$0xff]
  %v122 = vld [vmem:[%s0 + $0x358] sm:$0xff]
  %v123 = vld [vmem:[%s0 + $0x360] sm:$0xff]
  %v124 = vld [vmem:[%s0 + $0x368] sm:$0xff]
  %v125 = vld [vmem:[%s0 + $0x370] sm:$0xff]
  %v126 = vld [vmem:[%s0 + $0x378] sm:$0xff]
  %v127 = vld [vmem:[%s1] sm:$0xf]
  %v128 = vld [vmem:[%s1 + $0x4] sm:$0xf]
  %v129 = vld [vmem:[%s1 + $0x8] sm:$0xf]
  %v130 = vld [vmem:[%s1 + $0xc] sm:$0xf]
  %v131 = vld [vmem:[%s1 + $0x10] sm:$0xf]
  %v132 = vld [vmem:[%s1 + $0x14] sm:$0xf]
  %v133 = vld [vmem:[%s1 + $0x18] sm:$0xf]
  %v134 = vld [vmem:[%s1 + $0x1c] sm:$0xf]
  %v135 = vld [vmem:[%s1 + $0x20] sm:$0xf]
  %v136 = vld [vmem:[%s1 + $0x24] sm:$0xf]
  %v137 = vld [vmem:[%s1 + $0x28] sm:$0xf]
  %v138 = vld [vmem:[%s1 + $0x2c] sm:$0xf]
  %v139 = vld [vmem:[%s1 + $0x30] sm:$0xf]
  %v140 = vld [vmem:[%s1 + $0x34] sm:$0xf]
  %v141 = vld [vmem:[%s1 + $0x38] sm:$0xf]
  %v142 = vld [vmem:[%s1 + $0x3c] sm:$0xf]
  %v143 = vld [vmem:[%s1 + $0x40] sm:$0xf]
  %v144 = vld [vmem:[%s1 + $0x44] sm:$0xf]
  %v145 = vld [vmem:[%s1 + $0x48] sm:$0xf]
  %v146 = vld [vmem:[%s1 + $0x4c] sm:$0xf]
  %v147 = vld [vmem:[%s1 + $0x50] sm:$0xf]
  %v148 = vld [vmem:[%s1 + $0x54] sm:$0xf]
  %v149 = vld [vmem:[%s1 + $0x58] sm:$0xf]
  %v150 = vld [vmem:[%s1 + $0x5c] sm:$0xf]
  %v151 = vld [vmem:[%s1 + $0x60] sm:$0xf]
  %v152 = vld [vmem:[%s1 + $0x64] sm:$0xf]
  %v153 = vld [vmem:[%s1 + $0x68] sm:$0xf]
  %v154 = vld [vmem:[%s1 + $0x6c] sm:$0xf]
  %v155 = vld [vmem:[%s1 + $0x70] sm:$0xf]
  %v156 = vld [vmem:[%s1 + $0x74] sm:$0xf]
  %v157 = vld [vmem:[%s1 + $0x78] sm:$0xf]
  %v158 = vld [vmem:[%s1 + $0x7c] sm:$0xf]
  %v159 = vld [vmem:[%s1 + $0x80] sm:$0xf]
  %v160 = vld [vmem:[%s1 + $0x84] sm:$0xf]
  %v161 = vld [vmem:[%s1 + $0x88] sm:$0xf]
  %v162 = vld [vmem:[%s1 + $0x8c] sm:$0xf]
  %v163 = vld [vmem:[%s1 + $0x90] sm:$0xf]
  %v164 = vld [vmem:[%s1 + $0x94] sm:$0xf]
  %v165 = vld [vmem:[%s1 + $0x98] sm:$0xf]
  %v166 = vld [vmem:[%s1 + $0x9c] sm:$0xf]
  %v167 = vld [vmem:[%s1 + $0xa0] sm:$0xf]
  %v168 = vld [vmem:[%s1 + $0xa4] sm:$0xf]
  %v169 = vld [vmem:[%s1 + $0xa8] sm:$0xf]
  %v170 = vld [vmem:[%s1 + $0xac] sm:$0xf]
  %v171 = vld [vmem:[%s1 + $0xb0] sm:$0xf]
  %v172 = vld [vmem:[%s1 + $0xb4] sm:$0xf]
  %v173 = vld [vmem:[%s1 + $0xb8] sm:$0xf]
  %v174 = vld [vmem:[%s1 + $0xbc] sm:$0xf]
  %v175 = vld [vmem:[%s1 + $0xc0] sm:$0xf]
  %v176 = vld [vmem:[%s1 + $0xc4] sm:$0xf]
  %v177 = vld [vmem:[%s1 + $0xc8] sm:$0xf]
  %v178 = vld [vmem:[%s1 + $0xcc] sm:$0xf]
  %v179 = vld [vmem:[%s1 + $0xd0] sm:$0xf]
  %v180 = vld [vmem:[%s1 + $0xd4] sm:$0xf]
  %v181 = vld [vmem:[%s1 + $0xd8] sm:$0xf]
  %v182 = vld [vmem:[%s1 + $0xdc] sm:$0xf]
  %v183 = vld [vmem:[%s1 + $0xe0] sm:$0xf]
  %v184 = vld [vmem:[%s1 + $0xe4] sm:$0xf]
  %v185 = vld [vmem:[%s1 + $0xe8] sm:$0xf]
  %v186 = vld [vmem:[%s1 + $0xec] sm:$0xf]
  %v187 = vld [vmem:[%s1 + $0xf0] sm:$0xf]
  %v188 = vld [vmem:[%s1 + $0xf4] sm:$0xf]
  %v189 = vld [vmem:[%s1 + $0xf8] sm:$0xf]
  %v190 = vld [vmem:[%s1 + $0xfc] sm:$0xf]
  %v191 = vld [vmem:[%s1 + $0x100] sm:$0xf]
  %v192 = vld [vmem:[%s1 + $0x104] sm:$0xf]
  %v193 = vld [vmem:[%s1 + $0x108] sm:$0xf]
  %v194 = vld [vmem:[%s1 + $0x10c] sm:$0xf]
  %v195 = vld [vmem:[%s1 + $0x110] sm:$0xf]
  %v196 = vld [vmem:[%s1 + $0x114] sm:$0xf]
  %v197 = vld [vmem:[%s1 + $0x118] sm:$0xf]
  %v198 = vld [vmem:[%s1 + $0x11c] sm:$0xf]
  %v199 = vld [vmem:[%s1 + $0x120] sm:$0xf]
  %v200 = vld [vmem:[%s1 + $0x124] sm:$0xf]
  %v201 = vld [vmem:[%s1 + $0x128] sm:$0xf]
  %v202 = vld [vmem:[%s1 + $0x12c] sm:$0xf]
  %v203 = vld [vmem:[%s1 + $0x130] sm:$0xf]
  %v204 = vld [vmem:[%s1 + $0x134] sm:$0xf]
  %v205 = vld [vmem:[%s1 + $0x138] sm:$0xf]
  %v206 = vld [vmem:[%s1 + $0x13c] sm:$0xf]
  %v207 = vld [vmem:[%s1 + $0x140] sm:$0xf]
  %v208 = vld [vmem:[%s1 + $0x144] sm:$0xf]
  %v209 = vld [vmem:[%s1 + $0x148] sm:$0xf]
  %v210 = vld [vmem:[%s1 + $0x14c] sm:$0xf]
  %v211 = vld [vmem:[%s1 + $0x150] sm:$0xf]
  %v212 = vld [vmem:[%s1 + $0x154] sm:$0xf]
  %v213 = vld [vmem:[%s1 + $0x158] sm:$0xf]
  %v214 = vld [vmem:[%s1 + $0x15c] sm:$0xf]
  %v215 = vld [vmem:[%s1 + $0x160] sm:$0xf]
  %v216 = vld [vmem:[%s1 + $0x164] sm:$0xf]
  %v217 = vld [vmem:[%s1 + $0x168] sm:$0xf]
  %v218 = vld [vmem:[%s1 + $0x16c] sm:$0xf]
  %v219 = vld [vmem:[%s1 + $0x170] sm:$0xf]
  %v220 = vld [vmem:[%s1 + $0x174] sm:$0xf]
  %v221 = vld [vmem:[%s1 + $0x178] sm:$0xf]
  %v222 = vld [vmem:[%s1 + $0x17c] sm:$0xf]
  %v223 = vld [vmem:[%s1 + $0x180] sm:$0xf]
  %v224 = vld [vmem:[%s1 + $0x184] sm:$0xf]
  %v225 = vld [vmem:[%s1 + $0x188] sm:$0xf]
  %v226 = vld [vmem:[%s1 + $0x18c] sm:$0xf]
  %v227 = vld [vmem:[%s1 + $0x190] sm:$0xf]
  %v228 = vld [vmem:[%s1 + $0x194] sm:$0xf]
  %v229 = vld [vmem:[%s1 + $0x198] sm:$0xf]
  %v230 = vld [vmem:[%s1 + $0x19c] sm:$0xf]
  %v231 = vld [vmem:[%s1 + $0x1a0] sm:$0xf]
  %v232 = vld [vmem:[%s1 + $0x1a4] sm:$0xf]
  %v233 = vld [vmem:[%s1 + $0x1a8] sm:$0xf]
  %v234 = vld [vmem:[%s1 + $0x1ac] sm:$0xf]
  %v235 = vld [vmem:[%s1 + $0x1b0] sm:$0xf]
  %v236 = vld [vmem:[%s1 + $0x1b4] sm:$0xf]
  %v237 = vld [vmem:[%s1 + $0x1b8] sm:$0xf]
  %v238 = vld [vmem:[%s1 + $0x1bc] sm:$0xf]
  %v239 = vld [vmem:[%s1 + $0x1c0] sm:$0xf]
  %v240 = vld [vmem:[%s1 + $0x1c4] sm:$0xf]
  %v241 = vld [vmem:[%s1 + $0x1c8] sm:$0xf]
  %v242 = vld [vmem:[%s1 + $0x1cc] sm:$0xf]
  %v243 = vld [vmem:[%s1 + $0x1d0] sm:$0xf]
  %v244 = vld [vmem:[%s1 + $0x1d4] sm:$0xf]
  %v245 = vld [vmem:[%s1 + $0x1d8] sm:$0xf]
  %v246 = vld [vmem:[%s1 + $0x1dc] sm:$0xf]
  %v247 = vld [vmem:[%s1 + $0x1e0] sm:$0xf]
  %v248 = vld [vmem:[%s1 + $0x1e4] sm:$0xf]
  %v249 = vld [vmem:[%s1 + $0x1e8] sm:$0xf]
  %v250 = vld [vmem:[%s1 + $0x1ec] sm:$0xf]
  %v251 = vld [vmem:[%s1 + $0x1f0] sm:$0xf]
  %v252 = vld [vmem:[%s1 + $0x1f4] sm:$0xf]
  %v253 = vld [vmem:[%s1 + $0x1f8] sm:$0xf]
  %v254 = vld [vmem:[%s1 + $0x1fc] sm:$0xf]
  %v255 = vld [vmem:[%s1 + $0x200] sm:$0xf]
  %v256 = vld [vmem:[%s1 + $0x204] sm:$0xf]
  %v257 = vld [vmem:[%s1 + $0x208] sm:$0xf]
  %v258 = vld [vmem:[%s1 + $0x20c] sm:$0xf]
  %v259 = vld [vmem:[%s1 + $0x210] sm:$0xf]
  %v260 = vld [vmem:[%s1 + $0x214] sm:$0xf]
  %v261 = vld [vmem:[%s1 + $0x218] sm:$0xf]
  %v262 = vld [vmem:[%s1 + $0x21c] sm:$0xf]
  %v263 = vld [vmem:[%s1 + $0x220] sm:$0xf]
  %v264 = vld [vmem:[%s1 + $0x224] sm:$0xf]
  %v265 = vld [vmem:[%s1 + $0x228] sm:$0xf]
  %v266 = vld [vmem:[%s1 + $0x22c] sm:$0xf]
  %v267 = vld [vmem:[%s1 + $0x230] sm:$0xf]
  %v268 = vld [vmem:[%s1 + $0x234] sm:$0xf]
  %v269 = vld [vmem:[%s1 + $0x238] sm:$0xf]
  %v270 = vld [vmem:[%s1 + $0x23c] sm:$0xf]
  %v271 = vld [vmem:[%s1 + $0x240] sm:$0xf]
  %v272 = vld [vmem:[%s1 + $0x244] sm:$0xf]
  %v273 = vld [vmem:[%s1 + $0x248] sm:$0xf]
  %v274 = vld [vmem:[%s1 + $0x24c] sm:$0xf]
  %v275 = vld [vmem:[%s1 + $0x250] sm:$0xf]
  %v276 = vld [vmem:[%s1 + $0x254] sm:$0xf]
  %v277 = vld [vmem:[%s1 + $0x258] sm:$0xf]
  %v278 = vld [vmem:[%s1 + $0x25c] sm:$0xf]
  %v279 = vld [vmem:[%s1 + $0x260] sm:$0xf]
  %v280 = vld [vmem:[%s1 + $0x264] sm:$0xf]
  %v281 = vld [vmem:[%s1 + $0x268] sm:$0xf]
  %v282 = vld [vmem:[%s1 + $0x26c] sm:$0xf]
  %v283 = vld [vmem:[%s1 + $0x270] sm:$0xf]
  %v284 = vld [vmem:[%s1 + $0x274] sm:$0xf]
  %v285 = vld [vmem:[%s1 + $0x278] sm:$0xf]
  %v286 = vld [vmem:[%s1 + $0x27c] sm:$0xf]
  %v287 = vld [vmem:[%s1 + $0x280] sm:$0xf]
  %v288 = vld [vmem:[%s1 + $0x284] sm:$0xf]
  %v289 = vld [vmem:[%s1 + $0x288] sm:$0xf]
  %v290 = vld [vmem:[%s1 + $0x28c] sm:$0xf]
  %v291 = vld [vmem:[%s1 + $0x290] sm:$0xf]
  %v292 = vld [vmem:[%s1 + $0x294] sm:$0xf]
  %v293 = vld [vmem:[%s1 + $0x298] sm:$0xf]
  %v294 = vld [vmem:[%s1 + $0x29c] sm:$0xf]
  %v295 = vld [vmem:[%s1 + $0x2a0] sm:$0xf]
  %v296 = vld [vmem:[%s1 + $0x2a4] sm:$0xf]
  %v297 = vld [vmem:[%s1 + $0x2a8] sm:$0xf]
  %v298 = vld [vmem:[%s1 + $0x2ac] sm:$0xf]
  %v299 = vld [vmem:[%s1 + $0x2b0] sm:$0xf]
  %v300 = vld [vmem:[%s1 + $0x2b4] sm:$0xf]
  %v301 = vld [vmem:[%s1 + $0x2b8] sm:$0xf]
  %v302 = vld [vmem:[%s1 + $0x2bc] sm:$0xf]
  %v303 = vld [vmem:[%s1 + $0x2c0] sm:$0xf]
  %v304 = vld [vmem:[%s1 + $0x2c4] sm:$0xf]
  %v305 = vld [vmem:[%s1 + $0x2c8] sm:$0xf]
  %v306 = vld [vmem:[%s1 + $0x2cc] sm:$0xf]
  %v307 = vld [vmem:[%s1 + $0x2d0] sm:$0xf]
  %v308 = vld [vmem:[%s1 + $0x2d4] sm:$0xf]
  %v309 = vld [vmem:[%s1 + $0x2d8] sm:$0xf]
  %v310 = vld [vmem:[%s1 + $0x2dc] sm:$0xf]
  %v311 = vld [vmem:[%s1 + $0x2e0] sm:$0xf]
  %v312 = vld [vmem:[%s1 + $0x2e4] sm:$0xf]
  %v313 = vld [vmem:[%s1 + $0x2e8] sm:$0xf]
  %v314 = vld [vmem:[%s1 + $0x2ec] sm:$0xf]
  %v315 = vld [vmem:[%s1 + $0x2f0] sm:$0xf]
  %v316 = vld [vmem:[%s1 + $0x2f4] sm:$0xf]
  %v317 = vld [vmem:[%s1 + $0x2f8] sm:$0xf]
  %v318 = vld [vmem:[%s1 + $0x2fc] sm:$0xf]
  %v319 = vld [vmem:[%s1 + $0x300] sm:$0xf]
  %v320 = vld [vmem:[%s1 + $0x304] sm:$0xf]
  %v321 = vld [vmem:[%s1 + $0x308] sm:$0xf]
  %v322 = vld [vmem:[%s1 + $0x30c] sm:$0xf]
  %v323 = vld [vmem:[%s1 + $0x310] sm:$0xf]
  %v324 = vld [vmem:[%s1 + $0x314] sm:$0xf]
  %v325 = vld [vmem:[%s1 + $0x318] sm:$0xf]
  %v326 = vld [vmem:[%s1 + $0x31c] sm:$0xf]
  %v327 = vld [vmem:[%s1 + $0x320] sm:$0xf]
  %v328 = vld [vmem:[%s1 + $0x324] sm:$0xf]
  %v329 = vld [vmem:[%s1 + $0x328] sm:$0xf]
  %v330 = vld [vmem:[%s1 + $0x32c] sm:$0xf]
  %v331 = vld [vmem:[%s1 + $0x330] sm:$0xf]
  %v332 = vld [vmem:[%s1 + $0x334] sm:$0xf]
  %v333 = vld [vmem:[%s1 + $0x338] sm:$0xf]
  %v334 = vld [vmem:[%s1 + $0x33c] sm:$0xf]
  %v335 = vld [vmem:[%s1 + $0x340] sm:$0xf]
  %v336 = vld [vmem:[%s1 + $0x344] sm:$0xf]
  %v337 = vld [vmem:[%s1 + $0x348] sm:$0xf]
  %v338 = vld [vmem:[%s1 + $0x34c] sm:$0xf]
  %v339 = vld [vmem:[%s1 + $0x350] sm:$0xf]
  %v340 = vld [vmem:[%s1 + $0x354] sm:$0xf]
  %v341 = vld [vmem:[%s1 + $0x358] sm:$0xf]
  %v342 = vld [vmem:[%s1 + $0x35c] sm:$0xf]
  %v455 = vunpack.c.l.b16 %v15
  %v456 = vunpack.c.h.b16 %v15
  %v457 = vunpack.c.l.b16 %v16
  %v458 = vunpack.c.h.b16 %v16
  %v459 = vunpack.c.l.b16 %v17
  %v460 = vunpack.c.h.b16 %v17
  %v461 = vunpack.c.l.b16 %v18
  %v462 = vunpack.c.h.b16 %v18
  %v463 = vunpack.c.l.b16 %v19
  %v464 = vunpack.c.h.b16 %v19
  %v465 = vunpack.c.l.b16 %v20
  %v466 = vunpack.c.h.b16 %v20
  %v467 = vunpack.c.l.b16 %v21
  %v468 = vunpack.c.h.b16 %v21
  %v469 = vunpack.c.l.b16 %v22
  %v470 = vunpack.c.h.b16 %v22
  %v471 = vunpack.c.l.b16 %v23
  %v472 = vunpack.c.h.b16 %v23
  %v473 = vunpack.c.l.b16 %v24
  %v474 = vunpack.c.h.b16 %v24
  %v475 = vunpack.c.l.b16 %v25
  %v476 = vunpack.c.h.b16 %v25
  %v477 = vunpack.c.l.b16 %v26
  %v478 = vunpack.c.h.b16 %v26
  %v479 = vunpack.c.l.b16 %v27
  %v480 = vunpack.c.h.b16 %v27
  %v481 = vunpack.c.l.b16 %v28
  %v482 = vunpack.c.h.b16 %v28
  %v483 = vunpack.c.l.b16 %v29
  %v484 = vunpack.c.h.b16 %v29
  %v485 = vunpack.c.l.b16 %v30
  %v486 = vunpack.c.h.b16 %v30
  %v487 = vunpack.c.l.b16 %v31
  %v488 = vunpack.c.h.b16 %v31
  %v489 = vunpack.c.l.b16 %v32
  %v490 = vunpack.c.h.b16 %v32
  %v491 = vunpack.c.l.b16 %v33
  %v492 = vunpack.c.h.b16 %v33
  %v493 = vunpack.c.l.b16 %v34
  %v494 = vunpack.c.h.b16 %v34
  %v495 = vunpack.c.l.b16 %v35
  %v496 = vunpack.c.h.b16 %v35
  %v497 = vunpack.c.l.b16 %v36
  %v498 = vunpack.c.h.b16 %v36
  %v499 = vunpack.c.l.b16 %v37
  %v500 = vunpack.c.h.b16 %v37
  %v501 = vunpack.c.l.b16 %v38
  %v502 = vunpack.c.h.b16 %v38
  %v503 = vunpack.c.l.b16 %v39
  %v504 = vunpack.c.h.b16 %v39
  %v505 = vunpack.c.l.b16 %v40
  %v506 = vunpack.c.h.b16 %v40
  %v507 = vunpack.c.l.b16 %v41
  %v508 = vunpack.c.h.b16 %v41
  %v509 = vunpack.c.l.b16 %v42
  %v510 = vunpack.c.h.b16 %v42
  %v511 = vunpack.c.l.b16 %v43
  %v512 = vunpack.c.h.b16 %v43
  %v513 = vunpack.c.l.b16 %v44
  %v514 = vunpack.c.h.b16 %v44
  %v515 = vunpack.c.l.b16 %v45
  %v516 = vunpack.c.h.b16 %v45
  %v517 = vunpack.c.l.b16 %v46
  %v518 = vunpack.c.h.b16 %v46
  %v519 = vunpack.c.l.b16 %v47
  %v520 = vunpack.c.h.b16 %v47
  %v521 = vunpack.c.l.b16 %v48
  %v522 = vunpack.c.h.b16 %v48
  %v523 = vunpack.c.l.b16 %v49
  %v524 = vunpack.c.h.b16 %v49
  %v525 = vunpack.c.l.b16 %v50
  %v526 = vunpack.c.h.b16 %v50
  %v527 = vunpack.c.l.b16 %v51
  %v528 = vunpack.c.h.b16 %v51
  %v529 = vunpack.c.l.b16 %v52
  %v530 = vunpack.c.h.b16 %v52
  %v531 = vunpack.c.l.b16 %v53
  %v532 = vunpack.c.h.b16 %v53
  %v533 = vunpack.c.l.b16 %v54
  %v534 = vunpack.c.h.b16 %v54
  %v535 = vunpack.c.l.b16 %v55
  %v536 = vunpack.c.h.b16 %v55
  %v537 = vunpack.c.l.b16 %v56
  %v538 = vunpack.c.h.b16 %v56
  %v539 = vunpack.c.l.b16 %v57
  %v540 = vunpack.c.h.b16 %v57
  %v541 = vunpack.c.l.b16 %v58
  %v542 = vunpack.c.h.b16 %v58
  %v543 = vunpack.c.l.b16 %v59
  %v544 = vunpack.c.h.b16 %v59
  %v545 = vunpack.c.l.b16 %v60
  %v546 = vunpack.c.h.b16 %v60
  %v547 = vunpack.c.l.b16 %v61
  %v548 = vunpack.c.h.b16 %v61
  %v549 = vunpack.c.l.b16 %v62
  %v550 = vunpack.c.h.b16 %v62
  %v551 = vunpack.c.l.b16 %v63
  %v552 = vunpack.c.h.b16 %v63
  %v553 = vunpack.c.l.b16 %v64
  %v554 = vunpack.c.h.b16 %v64
  %v555 = vunpack.c.l.b16 %v65
  %v556 = vunpack.c.h.b16 %v65
  %v557 = vunpack.c.l.b16 %v66
  %v558 = vunpack.c.h.b16 %v66
  %v559 = vunpack.c.l.b16 %v67
  %v560 = vunpack.c.h.b16 %v67
  %v561 = vunpack.c.l.b16 %v68
  %v562 = vunpack.c.h.b16 %v68
  %v563 = vunpack.c.l.b16 %v69
  %v564 = vunpack.c.h.b16 %v69
  %v565 = vunpack.c.l.b16 %v70
  %v566 = vunpack.c.h.b16 %v70
  %v567 = vunpack.c.l.b16 %v71
  %v568 = vunpack.c.h.b16 %v71
  %v569 = vunpack.c.l.b16 %v72
  %v570 = vunpack.c.h.b16 %v72
  %v571 = vunpack.c.l.b16 %v73
  %v572 = vunpack.c.h.b16 %v73
  %v573 = vunpack.c.l.b16 %v74
  %v574 = vunpack.c.h.b16 %v74
  %v575 = vunpack.c.l.b16 %v75
  %v576 = vunpack.c.h.b16 %v75
  %v577 = vunpack.c.l.b16 %v76
  %v578 = vunpack.c.h.b16 %v76
  %v579 = vunpack.c.l.b16 %v77
  %v580 = vunpack.c.h.b16 %v77
  %v581 = vunpack.c.l.b16 %v78
  %v582 = vunpack.c.h.b16 %v78
  %v583 = vunpack.c.l.b16 %v79
  %v584 = vunpack.c.h.b16 %v79
  %v585 = vunpack.c.l.b16 %v80
  %v586 = vunpack.c.h.b16 %v80
  %v587 = vunpack.c.l.b16 %v81
  %v588 = vunpack.c.h.b16 %v81
  %v589 = vunpack.c.l.b16 %v82
  %v590 = vunpack.c.h.b16 %v82
  %v591 = vunpack.c.l.b16 %v83
  %v592 = vunpack.c.h.b16 %v83
  %v593 = vunpack.c.l.b16 %v84
  %v594 = vunpack.c.h.b16 %v84
  %v595 = vunpack.c.l.b16 %v85
  %v596 = vunpack.c.h.b16 %v85
  %v597 = vunpack.c.l.b16 %v86
  %v598 = vunpack.c.h.b16 %v86
  %v599 = vunpack.c.l.b16 %v87
  %v600 = vunpack.c.h.b16 %v87
  %v601 = vunpack.c.l.b16 %v88
  %v602 = vunpack.c.h.b16 %v88
  %v603 = vunpack.c.l.b16 %v89
  %v604 = vunpack.c.h.b16 %v89
  %v605 = vunpack.c.l.b16 %v90
  %v606 = vunpack.c.h.b16 %v90
  %v607 = vunpack.c.l.b16 %v91
  %v608 = vunpack.c.h.b16 %v91
  %v609 = vunpack.c.l.b16 %v92
  %v610 = vunpack.c.h.b16 %v92
  %v611 = vunpack.c.l.b16 %v93
  %v612 = vunpack.c.h.b16 %v93
  %v613 = vunpack.c.l.b16 %v94
  %v614 = vunpack.c.h.b16 %v94
  %v615 = vunpack.c.l.b16 %v95
  %v616 = vunpack.c.h.b16 %v95
  %v617 = vunpack.c.l.b16 %v96
  %v618 = vunpack.c.h.b16 %v96
  %v619 = vunpack.c.l.b16 %v97
  %v620 = vunpack.c.h.b16 %v97
  %v621 = vunpack.c.l.b16 %v98
  %v622 = vunpack.c.h.b16 %v98
  %v623 = vunpack.c.l.b16 %v99
  %v624 = vunpack.c.h.b16 %v99
  %v625 = vunpack.c.l.b16 %v100
  %v626 = vunpack.c.h.b16 %v100
  %v627 = vunpack.c.l.b16 %v101
  %v628 = vunpack.c.h.b16 %v101
  %v629 = vunpack.c.l.b16 %v102
  %v630 = vunpack.c.h.b16 %v102
  %v631 = vunpack.c.l.b16 %v103
  %v632 = vunpack.c.h.b16 %v103
  %v633 = vunpack.c.l.b16 %v104
  %v634 = vunpack.c.h.b16 %v104
  %v635 = vunpack.c.l.b16 %v105
  %v636 = vunpack.c.h.b16 %v105
  %v637 = vunpack.c.l.b16 %v106
  %v638 = vunpack.c.h.b16 %v106
  %v639 = vunpack.c.l.b16 %v107
  %v640 = vunpack.c.h.b16 %v107
  %v641 = vunpack.c.l.b16 %v108
  %v642 = vunpack.c.h.b16 %v108
  %v643 = vunpack.c.l.b16 %v109
  %v644 = vunpack.c.h.b16 %v109
  %v645 = vunpack.c.l.b16 %v110
  %v646 = vunpack.c.h.b16 %v110
  %v647 = vunpack.c.l.b16 %v111
  %v648 = vunpack.c.h.b16 %v111
  %v649 = vunpack.c.l.b16 %v112
  %v650 = vunpack.c.h.b16 %v112
  %v651 = vunpack.c.l.b16 %v113
  %v652 = vunpack.c.h.b16 %v113
  %v653 = vunpack.c.l.b16 %v114
  %v654 = vunpack.c.h.b16 %v114
  %v655 = vunpack.c.l.b16 %v115
  %v656 = vunpack.c.h.b16 %v115
  %v657 = vunpack.c.l.b16 %v116
  %v658 = vunpack.c.h.b16 %v116
  %v659 = vunpack.c.l.b16 %v117
  %v660 = vunpack.c.h.b16 %v117
  %v661 = vunpack.c.l.b16 %v118
  %v662 = vunpack.c.h.b16 %v118
  %v663 = vunpack.c.l.b16 %v119
  %v664 = vunpack.c.h.b16 %v119
  %v665 = vunpack.c.l.b16 %v120
  %v666 = vunpack.c.h.b16 %v120
  %v667 = vunpack.c.l.b16 %v121
  %v668 = vunpack.c.h.b16 %v121
  %v669 = vunpack.c.l.b16 %v122
  %v670 = vunpack.c.h.b16 %v122
  %v671 = vunpack.c.l.b16 %v123
  %v672 = vunpack.c.h.b16 %v123
  %v673 = vunpack.c.l.b16 %v124
  %v674 = vunpack.c.h.b16 %v124
  %v675 = vunpack.c.l.b16 %v125
  %v676 = vunpack.c.h.b16 %v125
  %v677 = vunpack.c.l.b16 %v126
  %v678 = vunpack.c.h.b16 %v126
  %v679 = vpack.c.b16 %v469, %v455
  %v680 = vpack.c.b16 %v470, %v456
  %v681 = vpack.c.b16 %v471, %v457
  %v682 = vpack.c.b16 %v472, %v458
  %v683 = vpack.c.b16 %v473, %v459
  %v684 = vpack.c.b16 %v474, %v460
  %v685 = vpack.c.b16 %v475, %v461
  %v686 = vpack.c.b16 %v476, %v462
  %v687 = vpack.c.b16 %v477, %v463
  %v688 = vpack.c.b16 %v478, %v464
  %v689 = vpack.c.b16 %v479, %v465
  %v690 = vpack.c.b16 %v480, %v466
  %v691 = vpack.c.b16 %v481, %v467
  %v692 = vpack.c.b16 %v482, %v468
  %v693 = vpack.c.b16 %v497, %v483
  %v694 = vpack.c.b16 %v498, %v484
  %v695 = vpack.c.b16 %v499, %v485
  %v696 = vpack.c.b16 %v500, %v486
  %v697 = vpack.c.b16 %v501, %v487
  %v698 = vpack.c.b16 %v502, %v488
  %v699 = vpack.c.b16 %v503, %v489
  %v700 = vpack.c.b16 %v504, %v490
  %v701 = vpack.c.b16 %v505, %v491
  %v702 = vpack.c.b16 %v506, %v492
  %v703 = vpack.c.b16 %v507, %v493
  %v704 = vpack.c.b16 %v508, %v494
  %v705 = vpack.c.b16 %v509, %v495
  %v706 = vpack.c.b16 %v510, %v496
  %v707 = vpack.c.b16 %v525, %v511
  %v708 = vpack.c.b16 %v526, %v512
  %v709 = vpack.c.b16 %v527, %v513
  %v710 = vpack.c.b16 %v528, %v514
  %v711 = vpack.c.b16 %v529, %v515
  %v712 = vpack.c.b16 %v530, %v516
  %v713 = vpack.c.b16 %v531, %v517
  %v714 = vpack.c.b16 %v532, %v518
  %v715 = vpack.c.b16 %v533, %v519
  %v716 = vpack.c.b16 %v534, %v520
  %v717 = vpack.c.b16 %v535, %v521
  %v718 = vpack.c.b16 %v536, %v522
  %v719 = vpack.c.b16 %v537, %v523
  %v720 = vpack.c.b16 %v538, %v524
  %v721 = vpack.c.b16 %v553, %v539
  %v722 = vpack.c.b16 %v554, %v540
  %v723 = vpack.c.b16 %v555, %v541
  %v724 = vpack.c.b16 %v556, %v542
  %v725 = vpack.c.b16 %v557, %v543
  %v726 = vpack.c.b16 %v558, %v544
  %v727 = vpack.c.b16 %v559, %v545
  %v728 = vpack.c.b16 %v560, %v546
  %v729 = vpack.c.b16 %v561, %v547
  %v730 = vpack.c.b16 %v562, %v548
  %v731 = vpack.c.b16 %v563, %v549
  %v732 = vpack.c.b16 %v564, %v550
  %v733 = vpack.c.b16 %v565, %v551
  %v734 = vpack.c.b16 %v566, %v552
  %v735 = vpack.c.b16 %v581, %v567
  %v736 = vpack.c.b16 %v582, %v568
  %v737 = vpack.c.b16 %v583, %v569
  %v738 = vpack.c.b16 %v584, %v570
  %v739 = vpack.c.b16 %v585, %v571
  %v740 = vpack.c.b16 %v586, %v572
  %v741 = vpack.c.b16 %v587, %v573
  %v742 = vpack.c.b16 %v588, %v574
  %v743 = vpack.c.b16 %v589, %v575
  %v744 = vpack.c.b16 %v590, %v576
  %v745 = vpack.c.b16 %v591, %v577
  %v746 = vpack.c.b16 %v592, %v578
  %v747 = vpack.c.b16 %v593, %v579
  %v748 = vpack.c.b16 %v594, %v580
  %v749 = vpack.c.b16 %v609, %v595
  %v750 = vpack.c.b16 %v610, %v596
  %v751 = vpack.c.b16 %v611, %v597
  %v752 = vpack.c.b16 %v612, %v598
  %v753 = vpack.c.b16 %v613, %v599
  %v754 = vpack.c.b16 %v614, %v600
  %v755 = vpack.c.b16 %v615, %v601
  %v756 = vpack.c.b16 %v616, %v602
  %v757 = vpack.c.b16 %v617, %v603
  %v758 = vpack.c.b16 %v618, %v604
  %v759 = vpack.c.b16 %v619, %v605
  %v760 = vpack.c.b16 %v620, %v606
  %v761 = vpack.c.b16 %v621, %v607
  %v762 = vpack.c.b16 %v622, %v608
  %v763 = vpack.c.b16 %v637, %v623
  %v764 = vpack.c.b16 %v638, %v624
  %v765 = vpack.c.b16 %v639, %v625
  %v766 = vpack.c.b16 %v640, %v626
  %v767 = vpack.c.b16 %v641, %v627
  %v768 = vpack.c.b16 %v642, %v628
  %v769 = vpack.c.b16 %v643, %v629
  %v770 = vpack.c.b16 %v644, %v630
  %v771 = vpack.c.b16 %v645, %v631
  %v772 = vpack.c.b16 %v646, %v632
  %v773 = vpack.c.b16 %v647, %v633
  %v774 = vpack.c.b16 %v648, %v634
  %v775 = vpack.c.b16 %v649, %v635
  %v776 = vpack.c.b16 %v650, %v636
  %v777 = vpack.c.b16 %v665, %v651
  %v778 = vpack.c.b16 %v666, %v652
  %v779 = vpack.c.b16 %v667, %v653
  %v780 = vpack.c.b16 %v668, %v654
  %v781 = vpack.c.b16 %v669, %v655
  %v782 = vpack.c.b16 %v670, %v656
  %v783 = vpack.c.b16 %v671, %v657
  %v784 = vpack.c.b16 %v672, %v658
  %v785 = vpack.c.b16 %v673, %v659
  %v786 = vpack.c.b16 %v674, %v660
  %v787 = vpack.c.b16 %v675, %v661
  %v788 = vpack.c.b16 %v676, %v662
  %v789 = vpack.c.b16 %v677, %v663
  %v790 = vpack.c.b16 %v678, %v664
  %v1111 = vunpack.c.l.b16 %v127
  %v1112 = vunpack.c.l.b16 %v128
  %v1113 = vunpack.c.l.b16 %v129
  %v1114 = vunpack.c.l.b16 %v130
  %v1115 = vunpack.c.l.b16 %v131
  %v1116 = vunpack.c.l.b16 %v132
  %v1117 = vunpack.c.l.b16 %v133
  %v1118 = vunpack.c.l.b16 %v134
  %v1119 = vunpack.c.l.b16 %v135
  %v1120 = vunpack.c.l.b16 %v136
  %v1121 = vunpack.c.l.b16 %v137
  %v1122 = vunpack.c.l.b16 %v138
  %v1123 = vunpack.c.l.b16 %v139
  %v1124 = vunpack.c.l.b16 %v140
  %v1125 = vunpack.c.l.b16 %v141
  %v1126 = vunpack.c.l.b16 %v142
  %v1127 = vunpack.c.l.b16 %v143
  %v1128 = vunpack.c.l.b16 %v144
  %v1129 = vunpack.c.l.b16 %v145
  %v1130 = vunpack.c.l.b16 %v146
  %v1131 = vunpack.c.l.b16 %v147
  %v1132 = vunpack.c.l.b16 %v148
  %v1133 = vunpack.c.l.b16 %v149
  %v1134 = vunpack.c.l.b16 %v150
  %v1135 = vunpack.c.l.b16 %v151
  %v1136 = vunpack.c.l.b16 %v152
  %v1137 = vunpack.c.l.b16 %v153
  %v1138 = vunpack.c.l.b16 %v154
  %v1139 = vunpack.c.l.b16 %v155
  %v1140 = vunpack.c.l.b16 %v156
  %v1141 = vunpack.c.l.b16 %v157
  %v1142 = vunpack.c.l.b16 %v158
  %v1143 = vunpack.c.l.b16 %v159
  %v1144 = vunpack.c.l.b16 %v160
  %v1145 = vunpack.c.l.b16 %v161
  %v1146 = vunpack.c.l.b16 %v162
  %v1147 = vunpack.c.l.b16 %v163
  %v1148 = vunpack.c.l.b16 %v164
  %v1149 = vunpack.c.l.b16 %v165
  %v1150 = vunpack.c.l.b16 %v166
  %v1151 = vunpack.c.l.b16 %v167
  %v1152 = vunpack.c.l.b16 %v168
  %v1153 = vunpack.c.l.b16 %v169
  %v1154 = vunpack.c.l.b16 %v170
  %v1155 = vunpack.c.l.b16 %v171
  %v1156 = vunpack.c.l.b16 %v172
  %v1157 = vunpack.c.l.b16 %v173
  %v1158 = vunpack.c.l.b16 %v174
  %v1159 = vunpack.c.l.b16 %v175
  %v1160 = vunpack.c.l.b16 %v176
  %v1161 = vunpack.c.l.b16 %v177
  %v1162 = vunpack.c.l.b16 %v178
  %v1163 = vunpack.c.l.b16 %v179
  %v1164 = vunpack.c.l.b16 %v180
  %v1165 = vunpack.c.l.b16 %v181
  %v1166 = vunpack.c.l.b16 %v182
  %v1167 = vunpack.c.l.b16 %v183
  %v1168 = vunpack.c.l.b16 %v184
  %v1169 = vunpack.c.l.b16 %v185
  %v1170 = vunpack.c.l.b16 %v186
  %v1171 = vunpack.c.l.b16 %v187
  %v1172 = vunpack.c.l.b16 %v188
  %v1173 = vunpack.c.l.b16 %v189
  %v1174 = vunpack.c.l.b16 %v190
  %v1175 = vunpack.c.l.b16 %v191
  %v1176 = vunpack.c.l.b16 %v192
  %v1177 = vunpack.c.l.b16 %v193
  %v1178 = vunpack.c.l.b16 %v194
  %v1179 = vunpack.c.l.b16 %v195
  %v1180 = vunpack.c.l.b16 %v196
  %v1181 = vunpack.c.l.b16 %v197
  %v1182 = vunpack.c.l.b16 %v198
  %v1183 = vunpack.c.l.b16 %v199
  %v1184 = vunpack.c.l.b16 %v200
  %v1185 = vunpack.c.l.b16 %v201
  %v1186 = vunpack.c.l.b16 %v202
  %v1187 = vunpack.c.l.b16 %v203
  %v1188 = vunpack.c.l.b16 %v204
  %v1189 = vunpack.c.l.b16 %v205
  %v1190 = vunpack.c.l.b16 %v206
  %v1191 = vunpack.c.l.b16 %v207
  %v1192 = vunpack.c.l.b16 %v208
  %v1193 = vunpack.c.l.b16 %v209
  %v1194 = vunpack.c.l.b16 %v210
  %v1195 = vunpack.c.l.b16 %v211
  %v1196 = vunpack.c.l.b16 %v212
  %v1197 = vunpack.c.l.b16 %v213
  %v1198 = vunpack.c.l.b16 %v214
  %v1199 = vunpack.c.l.b16 %v215
  %v1200 = vunpack.c.l.b16 %v216
  %v1201 = vunpack.c.l.b16 %v217
  %v1202 = vunpack.c.l.b16 %v218
  %v1203 = vunpack.c.l.b16 %v219
  %v1204 = vunpack.c.l.b16 %v220
  %v1205 = vunpack.c.l.b16 %v221
  %v1206 = vunpack.c.l.b16 %v222
  %v1207 = vunpack.c.l.b16 %v223
  %v1208 = vunpack.c.l.b16 %v224
  %v1209 = vunpack.c.l.b16 %v225
  %v1210 = vunpack.c.l.b16 %v226
  %v1211 = vunpack.c.l.b16 %v227
  %v1212 = vunpack.c.l.b16 %v228
  %v1213 = vunpack.c.l.b16 %v229
  %v1214 = vunpack.c.l.b16 %v230
  %v1215 = vunpack.c.l.b16 %v231
  %v1216 = vunpack.c.l.b16 %v232
  %v1217 = vunpack.c.l.b16 %v233
  %v1218 = vunpack.c.l.b16 %v234
  %v1219 = vunpack.c.l.b16 %v235
  %v1220 = vunpack.c.l.b16 %v236
  %v1221 = vunpack.c.l.b16 %v237
  %v1222 = vunpack.c.l.b16 %v238
  %v1223 = vunpack.c.l.b16 %v239
  %v1224 = vunpack.c.l.b16 %v240
  %v1225 = vunpack.c.l.b16 %v241
  %v1226 = vunpack.c.l.b16 %v242
  %v1227 = vunpack.c.l.b16 %v243
  %v1228 = vunpack.c.l.b16 %v244
  %v1229 = vunpack.c.l.b16 %v245
  %v1230 = vunpack.c.l.b16 %v246
  %v1231 = vunpack.c.l.b16 %v247
  %v1232 = vunpack.c.l.b16 %v248
  %v1233 = vunpack.c.l.b16 %v249
  %v1234 = vunpack.c.l.b16 %v250
  %v1235 = vunpack.c.l.b16 %v251
  %v1236 = vunpack.c.l.b16 %v252
  %v1237 = vunpack.c.l.b16 %v253
  %v1238 = vunpack.c.l.b16 %v254
  %v1239 = vunpack.c.l.b16 %v255
  %v1240 = vunpack.c.l.b16 %v256
  %v1241 = vunpack.c.l.b16 %v257
  %v1242 = vunpack.c.l.b16 %v258
  %v1243 = vunpack.c.l.b16 %v259
  %v1244 = vunpack.c.l.b16 %v260
  %v1245 = vunpack.c.l.b16 %v261
  %v1246 = vunpack.c.l.b16 %v262
  %v1247 = vunpack.c.l.b16 %v263
  %v1248 = vunpack.c.l.b16 %v264
  %v1249 = vunpack.c.l.b16 %v265
  %v1250 = vunpack.c.l.b16 %v266
  %v1251 = vunpack.c.l.b16 %v267
  %v1252 = vunpack.c.l.b16 %v268
  %v1253 = vunpack.c.l.b16 %v269
  %v1254 = vunpack.c.l.b16 %v270
  %v1255 = vunpack.c.l.b16 %v271
  %v1256 = vunpack.c.l.b16 %v272
  %v1257 = vunpack.c.l.b16 %v273
  %v1258 = vunpack.c.l.b16 %v274
  %v1259 = vunpack.c.l.b16 %v275
  %v1260 = vunpack.c.l.b16 %v276
  %v1261 = vunpack.c.l.b16 %v277
  %v1262 = vunpack.c.l.b16 %v278
  %v1263 = vunpack.c.l.b16 %v279
  %v1264 = vunpack.c.l.b16 %v280
  %v1265 = vunpack.c.l.b16 %v281
  %v1266 = vunpack.c.l.b16 %v282
  %v1267 = vunpack.c.l.b16 %v283
  %v1268 = vunpack.c.l.b16 %v284
  %v1269 = vunpack.c.l.b16 %v285
  %v1270 = vunpack.c.l.b16 %v286
  %v1271 = vunpack.c.l.b16 %v287
  %v1272 = vunpack.c.l.b16 %v288
  %v1273 = vunpack.c.l.b16 %v289
  %v1274 = vunpack.c.l.b16 %v290
  %v1275 = vunpack.c.l.b16 %v291
  %v1276 = vunpack.c.l.b16 %v292
  %v1277 = vunpack.c.l.b16 %v293
  %v1278 = vunpack.c.l.b16 %v294
  %v1279 = vunpack.c.l.b16 %v295
  %v1280 = vunpack.c.l.b16 %v296
  %v1281 = vunpack.c.l.b16 %v297
  %v1282 = vunpack.c.l.b16 %v298
  %v1283 = vunpack.c.l.b16 %v299
  %v1284 = vunpack.c.l.b16 %v300
  %v1285 = vunpack.c.l.b16 %v301
  %v1286 = vunpack.c.l.b16 %v302
  %v1287 = vunpack.c.l.b16 %v303
  %v1288 = vunpack.c.l.b16 %v304
  %v1289 = vunpack.c.l.b16 %v305
  %v1290 = vunpack.c.l.b16 %v306
  %v1291 = vunpack.c.l.b16 %v307
  %v1292 = vunpack.c.l.b16 %v308
  %v1293 = vunpack.c.l.b16 %v309
  %v1294 = vunpack.c.l.b16 %v310
  %v1295 = vunpack.c.l.b16 %v311
  %v1296 = vunpack.c.l.b16 %v312
  %v1297 = vunpack.c.l.b16 %v313
  %v1298 = vunpack.c.l.b16 %v314
  %v1299 = vunpack.c.l.b16 %v315
  %v1300 = vunpack.c.l.b16 %v316
  %v1301 = vunpack.c.l.b16 %v317
  %v1302 = vunpack.c.l.b16 %v318
  %v1303 = vunpack.c.l.b16 %v319
  %v1304 = vunpack.c.l.b16 %v320
  %v1305 = vunpack.c.l.b16 %v321
  %v1306 = vunpack.c.l.b16 %v322
  %v1307 = vunpack.c.l.b16 %v323
  %v1308 = vunpack.c.l.b16 %v324
  %v1309 = vunpack.c.l.b16 %v325
  %v1310 = vunpack.c.l.b16 %v326
  %v1311 = vunpack.c.l.b16 %v327
  %v1312 = vunpack.c.l.b16 %v328
  %v1313 = vunpack.c.l.b16 %v329
  %v1314 = vunpack.c.l.b16 %v330
  %v1315 = vunpack.c.l.b16 %v331
  %v1316 = vunpack.c.l.b16 %v332
  %v1317 = vunpack.c.l.b16 %v333
  %v1318 = vunpack.c.l.b16 %v334
  %v1319 = vunpack.c.l.b16 %v335
  %v1320 = vunpack.c.l.b16 %v336
  %v1321 = vunpack.c.l.b16 %v337
  %v1322 = vunpack.c.l.b16 %v338
  %v1323 = vunpack.c.l.b16 %v339
  %v1324 = vunpack.c.l.b16 %v340
  %v1325 = vunpack.c.l.b16 %v341
  %v1326 = vunpack.c.l.b16 %v342
  %v1327 = vpack.c.b16 %v1112, %v1111
  %v1328 = vpack.c.b16 %v1114, %v1113
  %v1329 = vpack.c.b16 %v1116, %v1115
  %v1330 = vpack.c.b16 %v1118, %v1117
  %v1331 = vpack.c.b16 %v1120, %v1119
  %v1332 = vpack.c.b16 %v1122, %v1121
  %v1333 = vpack.c.b16 %v1124, %v1123
  %v1334 = vpack.c.b16 %v1126, %v1125
  %v1335 = vpack.c.b16 %v1128, %v1127
  %v1336 = vpack.c.b16 %v1130, %v1129
  %v1337 = vpack.c.b16 %v1132, %v1131
  %v1338 = vpack.c.b16 %v1134, %v1133
  %v1339 = vpack.c.b16 %v1136, %v1135
  %v1340 = vpack.c.b16 %v1138, %v1137
  %v1341 = vpack.c.b16 %v1140, %v1139
  %v1342 = vpack.c.b16 %v1142, %v1141
  %v1343 = vpack.c.b16 %v1144, %v1143
  %v1344 = vpack.c.b16 %v1146, %v1145
  %v1345 = vpack.c.b16 %v1148, %v1147
  %v1346 = vpack.c.b16 %v1150, %v1149
  %v1347 = vpack.c.b16 %v1152, %v1151
  %v1348 = vpack.c.b16 %v1154, %v1153
  %v1349 = vpack.c.b16 %v1156, %v1155
  %v1350 = vpack.c.b16 %v1158, %v1157
  %v1351 = vpack.c.b16 %v1160, %v1159
  %v1352 = vpack.c.b16 %v1162, %v1161
  %v1353 = vpack.c.b16 %v1164, %v1163
  %v1354 = vpack.c.b16 %v1166, %v1165
  %v1355 = vpack.c.b16 %v1168, %v1167
  %v1356 = vpack.c.b16 %v1170, %v1169
  %v1357 = vpack.c.b16 %v1172, %v1171
  %v1358 = vpack.c.b16 %v1174, %v1173
  %v1359 = vpack.c.b16 %v1176, %v1175
  %v1360 = vpack.c.b16 %v1178, %v1177
  %v1361 = vpack.c.b16 %v1180, %v1179
  %v1362 = vpack.c.b16 %v1182, %v1181
  %v1363 = vpack.c.b16 %v1184, %v1183
  %v1364 = vpack.c.b16 %v1186, %v1185
  %v1365 = vpack.c.b16 %v1188, %v1187
  %v1366 = vpack.c.b16 %v1190, %v1189
  %v1367 = vpack.c.b16 %v1192, %v1191
  %v1368 = vpack.c.b16 %v1194, %v1193
  %v1369 = vpack.c.b16 %v1196, %v1195
  %v1370 = vpack.c.b16 %v1198, %v1197
  %v1371 = vpack.c.b16 %v1200, %v1199
  %v1372 = vpack.c.b16 %v1202, %v1201
  %v1373 = vpack.c.b16 %v1204, %v1203
  %v1374 = vpack.c.b16 %v1206, %v1205
  %v1375 = vpack.c.b16 %v1208, %v1207
  %v1376 = vpack.c.b16 %v1210, %v1209
  %v1377 = vpack.c.b16 %v1212, %v1211
  %v1378 = vpack.c.b16 %v1214, %v1213
  %v1379 = vpack.c.b16 %v1216, %v1215
  %v1380 = vpack.c.b16 %v1218, %v1217
  %v1381 = vpack.c.b16 %v1220, %v1219
  %v1382 = vpack.c.b16 %v1222, %v1221
  %v1383 = vpack.c.b16 %v1224, %v1223
  %v1384 = vpack.c.b16 %v1226, %v1225
  %v1385 = vpack.c.b16 %v1228, %v1227
  %v1386 = vpack.c.b16 %v1230, %v1229
  %v1387 = vpack.c.b16 %v1232, %v1231
  %v1388 = vpack.c.b16 %v1234, %v1233
  %v1389 = vpack.c.b16 %v1236, %v1235
  %v1390 = vpack.c.b16 %v1238, %v1237
  %v1391 = vpack.c.b16 %v1240, %v1239
  %v1392 = vpack.c.b16 %v1242, %v1241
  %v1393 = vpack.c.b16 %v1244, %v1243
  %v1394 = vpack.c.b16 %v1246, %v1245
  %v1395 = vpack.c.b16 %v1248, %v1247
  %v1396 = vpack.c.b16 %v1250, %v1249
  %v1397 = vpack.c.b16 %v1252, %v1251
  %v1398 = vpack.c.b16 %v1254, %v1253
  %v1399 = vpack.c.b16 %v1256, %v1255
  %v1400 = vpack.c.b16 %v1258, %v1257
  %v1401 = vpack.c.b16 %v1260, %v1259
  %v1402 = vpack.c.b16 %v1262, %v1261
  %v1403 = vpack.c.b16 %v1264, %v1263
  %v1404 = vpack.c.b16 %v1266, %v1265
  %v1405 = vpack.c.b16 %v1268, %v1267
  %v1406 = vpack.c.b16 %v1270, %v1269
  %v1407 = vpack.c.b16 %v1272, %v1271
  %v1408 = vpack.c.b16 %v1274, %v1273
  %v1409 = vpack.c.b16 %v1276, %v1275
  %v1410 = vpack.c.b16 %v1278, %v1277
  %v1411 = vpack.c.b16 %v1280, %v1279
  %v1412 = vpack.c.b16 %v1282, %v1281
  %v1413 = vpack.c.b16 %v1284, %v1283
  %v1414 = vpack.c.b16 %v1286, %v1285
  %v1415 = vpack.c.b16 %v1288, %v1287
  %v1416 = vpack.c.b16 %v1290, %v1289
  %v1417 = vpack.c.b16 %v1292, %v1291
  %v1418 = vpack.c.b16 %v1294, %v1293
  %v1419 = vpack.c.b16 %v1296, %v1295
  %v1420 = vpack.c.b16 %v1298, %v1297
  %v1421 = vpack.c.b16 %v1300, %v1299
  %v1422 = vpack.c.b16 %v1302, %v1301
  %v1423 = vpack.c.b16 %v1304, %v1303
  %v1424 = vpack.c.b16 %v1306, %v1305
  %v1425 = vpack.c.b16 %v1308, %v1307
  %v1426 = vpack.c.b16 %v1310, %v1309
  %v1427 = vpack.c.b16 %v1312, %v1311
  %v1428 = vpack.c.b16 %v1314, %v1313
  %v1429 = vpack.c.b16 %v1316, %v1315
  %v1430 = vpack.c.b16 %v1318, %v1317
  %v1431 = vpack.c.b16 %v1320, %v1319
  %v1432 = vpack.c.b16 %v1322, %v1321
  %v1433 = vpack.c.b16 %v1324, %v1323
  %v1434 = vpack.c.b16 %v1326, %v1325
  %vm1543 = vcmask 523264
  %v1545 = vsel %vm1543, %v692, 0
  %v1548 = vsel %vm1543, %v706, 0
  %v1551 = vsel %vm1543, %v720, 0
  %v1554 = vsel %vm1543, %v734, 0
  %v1557 = vsel %vm1543, %v748, 0
  %v1560 = vsel %vm1543, %v762, 0
  %v1563 = vsel %vm1543, %v776, 0
  %v1566 = vsel %vm1543, %v790, 0
  %1568 = vmatpush.bf16.msra.mxu0 %v1334
  %1569 = vmatpush.bf16.msra.mxu0 %v1333
  %1570 = vmatpush.bf16.msra.mxu0 %v1332
  %1571 = vmatpush.bf16.msra.mxu0 %v1331
  %1572 = vmatpush.bf16.msra.mxu0 %v1330
  %1573 = vmatpush.bf16.msra.mxu0 %v1329
  %1574 = vmatpush.bf16.msra.mxu0 %v1328
  %1575 = vmatpush.bf16.msra.mxu0 %v1327
  %1576 = vmatmul.bf16.gmra.mxu0 %v679
  %v1577 = vpop.f32.mrf.mxu0
  %v1578 = vadd.f32 0.0, %v1577
  %v1579 = vpop.f32.mrf.mxu0
  %v1580 = vadd.f32 0.0, %v1579
  %1581 = vmatmul.bf16.gmra.mxu0 %v693
  %v1582 = vpop.f32.mrf.mxu0
  %v1583 = vadd.f32 0.0, %v1582
  %v1584 = vpop.f32.mrf.mxu0
  %v1585 = vadd.f32 0.0, %v1584
  %1586 = vmatmul.bf16.gmra.mxu0 %v707
  %v1587 = vpop.f32.mrf.mxu0
  %v1588 = vadd.f32 0.0, %v1587
  %v1589 = vpop.f32.mrf.mxu0
  %v1590 = vadd.f32 0.0, %v1589
  %1591 = vmatmul.bf16.gmra.mxu0 %v721
  %v1592 = vpop.f32.mrf.mxu0
  %v1593 = vadd.f32 0.0, %v1592
  %v1594 = vpop.f32.mrf.mxu0
  %v1595 = vadd.f32 0.0, %v1594
  %1596 = vmatmul.bf16.gmra.mxu0 %v735
  %v1597 = vpop.f32.mrf.mxu0
  %v1598 = vadd.f32 0.0, %v1597
  %v1599 = vpop.f32.mrf.mxu0
  %v1600 = vadd.f32 0.0, %v1599
  %1601 = vmatmul.bf16.gmra.mxu0 %v749
  %v1602 = vpop.f32.mrf.mxu0
  %v1603 = vadd.f32 0.0, %v1602
  %v1604 = vpop.f32.mrf.mxu0
  %v1605 = vadd.f32 0.0, %v1604
  %1606 = vmatmul.bf16.gmra.mxu0 %v763
  %v1607 = vpop.f32.mrf.mxu0
  %v1608 = vadd.f32 0.0, %v1607
  %v1609 = vpop.f32.mrf.mxu0
  %v1610 = vadd.f32 0.0, %v1609
  %1611 = vmatmul.bf16.gmra.mxu0 %v777
  %v1612 = vpop.f32.mrf.mxu0
  %v1613 = vadd.f32 0.0, %v1612
  %v1614 = vpop.f32.mrf.mxu0
  %v1615 = vadd.f32 0.0, %v1614
  %1616 = vdwg.mxu0
  %1617 = vmatpush.bf16.msra.mxu0 %v1342
  %1618 = vmatpush.bf16.msra.mxu0 %v1341
  %1619 = vmatpush.bf16.msra.mxu0 %v1340
  %1620 = vmatpush.bf16.msra.mxu0 %v1339
  %1621 = vmatpush.bf16.msra.mxu0 %v1338
  %1622 = vmatpush.bf16.msra.mxu0 %v1337
  %1623 = vmatpush.bf16.msra.mxu0 %v1336
  %1624 = vmatpush.bf16.msra.mxu0 %v1335
  %1625 = vmatmul.bf16.gmra.mxu0 %v680
  %v1626 = vpop.f32.mrf.mxu0
  %v1627 = vadd.f32 %v1578, %v1626
  %v1628 = vpop.f32.mrf.mxu0
  %v1629 = vadd.f32 %v1580, %v1628
  %1630 = vmatmul.bf16.gmra.mxu0 %v694
  %v1631 = vpop.f32.mrf.mxu0
  %v1632 = vadd.f32 %v1583, %v1631
  %v1633 = vpop.f32.mrf.mxu0
  %v1634 = vadd.f32 %v1585, %v1633
  %1635 = vmatmul.bf16.gmra.mxu0 %v708
  %v1636 = vpop.f32.mrf.mxu0
  %v1637 = vadd.f32 %v1588, %v1636
  %v1638 = vpop.f32.mrf.mxu0
  %v1639 = vadd.f32 %v1590, %v1638
  %1640 = vmatmul.bf16.gmra.mxu0 %v722
  %v1641 = vpop.f32.mrf.mxu0
  %v1642 = vadd.f32 %v1593, %v1641
  %v1643 = vpop.f32.mrf.mxu0
  %v1644 = vadd.f32 %v1595, %v1643
  %1645 = vmatmul.bf16.gmra.mxu0 %v736
  %v1646 = vpop.f32.mrf.mxu0
  %v1647 = vadd.f32 %v1598, %v1646
  %v1648 = vpop.f32.mrf.mxu0
  %v1649 = vadd.f32 %v1600, %v1648
  %1650 = vmatmul.bf16.gmra.mxu0 %v750
  %v1651 = vpop.f32.mrf.mxu0
  %v1652 = vadd.f32 %v1603, %v1651
  %v1653 = vpop.f32.mrf.mxu0
  %v1654 = vadd.f32 %v1605, %v1653
  %1655 = vmatmul.bf16.gmra.mxu0 %v764
  %v1656 = vpop.f32.mrf.mxu0
  %v1657 = vadd.f32 %v1608, %v1656
  %v1658 = vpop.f32.mrf.mxu0
  %v1659 = vadd.f32 %v1610, %v1658
  %1660 = vmatmul.bf16.gmra.mxu0 %v778
  %v1661 = vpop.f32.mrf.mxu0
  %v1662 = vadd.f32 %v1613, %v1661
  %v1663 = vpop.f32.mrf.mxu0
  %v1664 = vadd.f32 %v1615, %v1663
  %1665 = vdwg.mxu0
  %1666 = vmatpush.bf16.msra.mxu0 %v1350
  %1667 = vmatpush.bf16.msra.mxu0 %v1349
  %1668 = vmatpush.bf16.msra.mxu0 %v1348
  %1669 = vmatpush.bf16.msra.mxu0 %v1347
  %1670 = vmatpush.bf16.msra.mxu0 %v1346
  %1671 = vmatpush.bf16.msra.mxu0 %v1345
  %1672 = vmatpush.bf16.msra.mxu0 %v1344
  %1673 = vmatpush.bf16.msra.mxu0 %v1343
  %1674 = vmatmul.bf16.gmra.mxu0 %v681
  %v1675 = vpop.f32.mrf.mxu0
  %v1676 = vadd.f32 %v1627, %v1675
  %v1677 = vpop.f32.mrf.mxu0
  %v1678 = vadd.f32 %v1629, %v1677
  %1679 = vmatmul.bf16.gmra.mxu0 %v695
  %v1680 = vpop.f32.mrf.mxu0
  %v1681 = vadd.f32 %v1632, %v1680
  %v1682 = vpop.f32.mrf.mxu0
  %v1683 = vadd.f32 %v1634, %v1682
  %1684 = vmatmul.bf16.gmra.mxu0 %v709
  %v1685 = vpop.f32.mrf.mxu0
  %v1686 = vadd.f32 %v1637, %v1685
  %v1687 = vpop.f32.mrf.mxu0
  %v1688 = vadd.f32 %v1639, %v1687
  %1689 = vmatmul.bf16.gmra.mxu0 %v723
  %v1690 = vpop.f32.mrf.mxu0
  %v1691 = vadd.f32 %v1642, %v1690
  %v1692 = vpop.f32.mrf.mxu0
  %v1693 = vadd.f32 %v1644, %v1692
  %1694 = vmatmul.bf16.gmra.mxu0 %v737
  %v1695 = vpop.f32.mrf.mxu0
  %v1696 = vadd.f32 %v1647, %v1695
  %v1697 = vpop.f32.mrf.mxu0
  %v1698 = vadd.f32 %v1649, %v1697
  %1699 = vmatmul.bf16.gmra.mxu0 %v751
  %v1700 = vpop.f32.mrf.mxu0
  %v1701 = vadd.f32 %v1652, %v1700
  %v1702 = vpop.f32.mrf.mxu0
  %v1703 = vadd.f32 %v1654, %v1702
  %1704 = vmatmul.bf16.gmra.mxu0 %v765
  %v1705 = vpop.f32.mrf.mxu0
  %v1706 = vadd.f32 %v1657, %v1705
  %v1707 = vpop.f32.mrf.mxu0
  %v1708 = vadd.f32 %v1659, %v1707
  %1709 = vmatmul.bf16.gmra.mxu0 %v779
  %v1710 = vpop.f32.mrf.mxu0
  %v1711 = vadd.f32 %v1662, %v1710
  %v1712 = vpop.f32.mrf.mxu0
  %v1713 = vadd.f32 %v1664, %v1712
  %1714 = vdwg.mxu0
  %1715 = vmatpush.bf16.msra.mxu0 %v1358
  %1716 = vmatpush.bf16.msra.mxu0 %v1357
  %1717 = vmatpush.bf16.msra.mxu0 %v1356
  %1718 = vmatpush.bf16.msra.mxu0 %v1355
  %1719 = vmatpush.bf16.msra.mxu0 %v1354
  %1720 = vmatpush.bf16.msra.mxu0 %v1353
  %1721 = vmatpush.bf16.msra.mxu0 %v1352
  %1722 = vmatpush.bf16.msra.mxu0 %v1351
  %1723 = vmatmul.bf16.gmra.mxu0 %v682
  %v1724 = vpop.f32.mrf.mxu0
  %v1725 = vadd.f32 %v1676, %v1724
  %v1726 = vpop.f32.mrf.mxu0
  %v1727 = vadd.f32 %v1678, %v1726
  %1728 = vmatmul.bf16.gmra.mxu0 %v696
  %v1729 = vpop.f32.mrf.mxu0
  %v1730 = vadd.f32 %v1681, %v1729
  %v1731 = vpop.f32.mrf.mxu0
  %v1732 = vadd.f32 %v1683, %v1731
  %1733 = vmatmul.bf16.gmra.mxu0 %v710
  %v1734 = vpop.f32.mrf.mxu0
  %v1735 = vadd.f32 %v1686, %v1734
  %v1736 = vpop.f32.mrf.mxu0
  %v1737 = vadd.f32 %v1688, %v1736
  %1738 = vmatmul.bf16.gmra.mxu0 %v724
  %v1739 = vpop.f32.mrf.mxu0
  %v1740 = vadd.f32 %v1691, %v1739
  %v1741 = vpop.f32.mrf.mxu0
  %v1742 = vadd.f32 %v1693, %v1741
  %1743 = vmatmul.bf16.gmra.mxu0 %v738
  %v1744 = vpop.f32.mrf.mxu0
  %v1745 = vadd.f32 %v1696, %v1744
  %v1746 = vpop.f32.mrf.mxu0
  %v1747 = vadd.f32 %v1698, %v1746
  %1748 = vmatmul.bf16.gmra.mxu0 %v752
  %v1749 = vpop.f32.mrf.mxu0
  %v1750 = vadd.f32 %v1701, %v1749
  %v1751 = vpop.f32.mrf.mxu0
  %v1752 = vadd.f32 %v1703, %v1751
  %1753 = vmatmul.bf16.gmra.mxu0 %v766
  %v1754 = vpop.f32.mrf.mxu0
  %v1755 = vadd.f32 %v1706, %v1754
  %v1756 = vpop.f32.mrf.mxu0
  %v1757 = vadd.f32 %v1708, %v1756
  %1758 = vmatmul.bf16.gmra.mxu0 %v780
  %v1759 = vpop.f32.mrf.mxu0
  %v1760 = vadd.f32 %v1711, %v1759
  %v1761 = vpop.f32.mrf.mxu0
  %v1762 = vadd.f32 %v1713, %v1761
  %1763 = vdwg.mxu0
  %1764 = vmatpush.bf16.msra.mxu0 %v1366
  %1765 = vmatpush.bf16.msra.mxu0 %v1365
  %1766 = vmatpush.bf16.msra.mxu0 %v1364
  %1767 = vmatpush.bf16.msra.mxu0 %v1363
  %1768 = vmatpush.bf16.msra.mxu0 %v1362
  %1769 = vmatpush.bf16.msra.mxu0 %v1361
  %1770 = vmatpush.bf16.msra.mxu0 %v1360
  %1771 = vmatpush.bf16.msra.mxu0 %v1359
  %1772 = vmatmul.bf16.gmra.mxu0 %v683
  %v1773 = vpop.f32.mrf.mxu0
  %v1774 = vadd.f32 %v1725, %v1773
  %v1775 = vpop.f32.mrf.mxu0
  %v1776 = vadd.f32 %v1727, %v1775
  %1777 = vmatmul.bf16.gmra.mxu0 %v697
  %v1778 = vpop.f32.mrf.mxu0
  %v1779 = vadd.f32 %v1730, %v1778
  %v1780 = vpop.f32.mrf.mxu0
  %v1781 = vadd.f32 %v1732, %v1780
  %1782 = vmatmul.bf16.gmra.mxu0 %v711
  %v1783 = vpop.f32.mrf.mxu0
  %v1784 = vadd.f32 %v1735, %v1783
  %v1785 = vpop.f32.mrf.mxu0
  %v1786 = vadd.f32 %v1737, %v1785
  %1787 = vmatmul.bf16.gmra.mxu0 %v725
  %v1788 = vpop.f32.mrf.mxu0
  %v1789 = vadd.f32 %v1740, %v1788
  %v1790 = vpop.f32.mrf.mxu0
  %v1791 = vadd.f32 %v1742, %v1790
  %1792 = vmatmul.bf16.gmra.mxu0 %v739
  %v1793 = vpop.f32.mrf.mxu0
  %v1794 = vadd.f32 %v1745, %v1793
  %v1795 = vpop.f32.mrf.mxu0
  %v1796 = vadd.f32 %v1747, %v1795
  %1797 = vmatmul.bf16.gmra.mxu0 %v753
  %v1798 = vpop.f32.mrf.mxu0
  %v1799 = vadd.f32 %v1750, %v1798
  %v1800 = vpop.f32.mrf.mxu0
  %v1801 = vadd.f32 %v1752, %v1800
  %1802 = vmatmul.bf16.gmra.mxu0 %v767
  %v1803 = vpop.f32.mrf.mxu0
  %v1804 = vadd.f32 %v1755, %v1803
  %v1805 = vpop.f32.mrf.mxu0
  %v1806 = vadd.f32 %v1757, %v1805
  %1807 = vmatmul.bf16.gmra.mxu0 %v781
  %v1808 = vpop.f32.mrf.mxu0
  %v1809 = vadd.f32 %v1760, %v1808
  %v1810 = vpop.f32.mrf.mxu0
  %v1811 = vadd.f32 %v1762, %v1810
  %1812 = vdwg.mxu0
  %1813 = vmatpush.bf16.msra.mxu0 %v1374
  %1814 = vmatpush.bf16.msra.mxu0 %v1373
  %1815 = vmatpush.bf16.msra.mxu0 %v1372
  %1816 = vmatpush.bf16.msra.mxu0 %v1371
  %1817 = vmatpush.bf16.msra.mxu0 %v1370
  %1818 = vmatpush.bf16.msra.mxu0 %v1369
  %1819 = vmatpush.bf16.msra.mxu0 %v1368
  %1820 = vmatpush.bf16.msra.mxu0 %v1367
  %1821 = vmatmul.bf16.gmra.mxu0 %v684
  %v1822 = vpop.f32.mrf.mxu0
  %v1823 = vadd.f32 %v1774, %v1822
  %v1824 = vpop.f32.mrf.mxu0
  %v1825 = vadd.f32 %v1776, %v1824
  %1826 = vmatmul.bf16.gmra.mxu0 %v698
  %v1827 = vpop.f32.mrf.mxu0
  %v1828 = vadd.f32 %v1779, %v1827
  %v1829 = vpop.f32.mrf.mxu0
  %v1830 = vadd.f32 %v1781, %v1829
  %1831 = vmatmul.bf16.gmra.mxu0 %v712
  %v1832 = vpop.f32.mrf.mxu0
  %v1833 = vadd.f32 %v1784, %v1832
  %v1834 = vpop.f32.mrf.mxu0
  %v1835 = vadd.f32 %v1786, %v1834
  %1836 = vmatmul.bf16.gmra.mxu0 %v726
  %v1837 = vpop.f32.mrf.mxu0
  %v1838 = vadd.f32 %v1789, %v1837
  %v1839 = vpop.f32.mrf.mxu0
  %v1840 = vadd.f32 %v1791, %v1839
  %1841 = vmatmul.bf16.gmra.mxu0 %v740
  %v1842 = vpop.f32.mrf.mxu0
  %v1843 = vadd.f32 %v1794, %v1842
  %v1844 = vpop.f32.mrf.mxu0
  %v1845 = vadd.f32 %v1796, %v1844
  %1846 = vmatmul.bf16.gmra.mxu0 %v754
  %v1847 = vpop.f32.mrf.mxu0
  %v1848 = vadd.f32 %v1799, %v1847
  %v1849 = vpop.f32.mrf.mxu0
  %v1850 = vadd.f32 %v1801, %v1849
  %1851 = vmatmul.bf16.gmra.mxu0 %v768
  %v1852 = vpop.f32.mrf.mxu0
  %v1853 = vadd.f32 %v1804, %v1852
  %v1854 = vpop.f32.mrf.mxu0
  %v1855 = vadd.f32 %v1806, %v1854
  %1856 = vmatmul.bf16.gmra.mxu0 %v782
  %v1857 = vpop.f32.mrf.mxu0
  %v1858 = vadd.f32 %v1809, %v1857
  %v1859 = vpop.f32.mrf.mxu0
  %v1860 = vadd.f32 %v1811, %v1859
  %1861 = vdwg.mxu0
  %1862 = vmatpush.bf16.msra.mxu0 %v1382
  %1863 = vmatpush.bf16.msra.mxu0 %v1381
  %1864 = vmatpush.bf16.msra.mxu0 %v1380
  %1865 = vmatpush.bf16.msra.mxu0 %v1379
  %1866 = vmatpush.bf16.msra.mxu0 %v1378
  %1867 = vmatpush.bf16.msra.mxu0 %v1377
  %1868 = vmatpush.bf16.msra.mxu0 %v1376
  %1869 = vmatpush.bf16.msra.mxu0 %v1375
  %1870 = vmatmul.bf16.gmra.mxu0 %v685
  %v1871 = vpop.f32.mrf.mxu0
  %v1872 = vadd.f32 %v1823, %v1871
  %v1873 = vpop.f32.mrf.mxu0
  %v1874 = vadd.f32 %v1825, %v1873
  %1875 = vmatmul.bf16.gmra.mxu0 %v699
  %v1876 = vpop.f32.mrf.mxu0
  %v1877 = vadd.f32 %v1828, %v1876
  %v1878 = vpop.f32.mrf.mxu0
  %v1879 = vadd.f32 %v1830, %v1878
  %1880 = vmatmul.bf16.gmra.mxu0 %v713
  %v1881 = vpop.f32.mrf.mxu0
  %v1882 = vadd.f32 %v1833, %v1881
  %v1883 = vpop.f32.mrf.mxu0
  %v1884 = vadd.f32 %v1835, %v1883
  %1885 = vmatmul.bf16.gmra.mxu0 %v727
  %v1886 = vpop.f32.mrf.mxu0
  %v1887 = vadd.f32 %v1838, %v1886
  %v1888 = vpop.f32.mrf.mxu0
  %v1889 = vadd.f32 %v1840, %v1888
  %1890 = vmatmul.bf16.gmra.mxu0 %v741
  %v1891 = vpop.f32.mrf.mxu0
  %v1892 = vadd.f32 %v1843, %v1891
  %v1893 = vpop.f32.mrf.mxu0
  %v1894 = vadd.f32 %v1845, %v1893
  %1895 = vmatmul.bf16.gmra.mxu0 %v755
  %v1896 = vpop.f32.mrf.mxu0
  %v1897 = vadd.f32 %v1848, %v1896
  %v1898 = vpop.f32.mrf.mxu0
  %v1899 = vadd.f32 %v1850, %v1898
  %1900 = vmatmul.bf16.gmra.mxu0 %v769
  %v1901 = vpop.f32.mrf.mxu0
  %v1902 = vadd.f32 %v1853, %v1901
  %v1903 = vpop.f32.mrf.mxu0
  %v1904 = vadd.f32 %v1855, %v1903
  %1905 = vmatmul.bf16.gmra.mxu0 %v783
  %v1906 = vpop.f32.mrf.mxu0
  %v1907 = vadd.f32 %v1858, %v1906
  %v1908 = vpop.f32.mrf.mxu0
  %v1909 = vadd.f32 %v1860, %v1908
  %1910 = vdwg.mxu0
  %1911 = vmatpush.bf16.msra.mxu0 %v1390
  %1912 = vmatpush.bf16.msra.mxu0 %v1389
  %1913 = vmatpush.bf16.msra.mxu0 %v1388
  %1914 = vmatpush.bf16.msra.mxu0 %v1387
  %1915 = vmatpush.bf16.msra.mxu0 %v1386
  %1916 = vmatpush.bf16.msra.mxu0 %v1385
  %1917 = vmatpush.bf16.msra.mxu0 %v1384
  %1918 = vmatpush.bf16.msra.mxu0 %v1383
  %1919 = vmatmul.bf16.gmra.mxu0 %v686
  %v1920 = vpop.f32.mrf.mxu0
  %v1921 = vadd.f32 %v1872, %v1920
  %v1922 = vpop.f32.mrf.mxu0
  %v1923 = vadd.f32 %v1874, %v1922
  %1924 = vmatmul.bf16.gmra.mxu0 %v700
  %v1925 = vpop.f32.mrf.mxu0
  %v1926 = vadd.f32 %v1877, %v1925
  %v1927 = vpop.f32.mrf.mxu0
  %v1928 = vadd.f32 %v1879, %v1927
  %1929 = vmatmul.bf16.gmra.mxu0 %v714
  %v1930 = vpop.f32.mrf.mxu0
  %v1931 = vadd.f32 %v1882, %v1930
  %v1932 = vpop.f32.mrf.mxu0
  %v1933 = vadd.f32 %v1884, %v1932
  %1934 = vmatmul.bf16.gmra.mxu0 %v728
  %v1935 = vpop.f32.mrf.mxu0
  %v1936 = vadd.f32 %v1887, %v1935
  %v1937 = vpop.f32.mrf.mxu0
  %v1938 = vadd.f32 %v1889, %v1937
  %1939 = vmatmul.bf16.gmra.mxu0 %v742
  %v1940 = vpop.f32.mrf.mxu0
  %v1941 = vadd.f32 %v1892, %v1940
  %v1942 = vpop.f32.mrf.mxu0
  %v1943 = vadd.f32 %v1894, %v1942
  %1944 = vmatmul.bf16.gmra.mxu0 %v756
  %v1945 = vpop.f32.mrf.mxu0
  %v1946 = vadd.f32 %v1897, %v1945
  %v1947 = vpop.f32.mrf.mxu0
  %v1948 = vadd.f32 %v1899, %v1947
  %1949 = vmatmul.bf16.gmra.mxu0 %v770
  %v1950 = vpop.f32.mrf.mxu0
  %v1951 = vadd.f32 %v1902, %v1950
  %v1952 = vpop.f32.mrf.mxu0
  %v1953 = vadd.f32 %v1904, %v1952
  %1954 = vmatmul.bf16.gmra.mxu0 %v784
  %v1955 = vpop.f32.mrf.mxu0
  %v1956 = vadd.f32 %v1907, %v1955
  %v1957 = vpop.f32.mrf.mxu0
  %v1958 = vadd.f32 %v1909, %v1957
  %1959 = vdwg.mxu0
  %1960 = vmatpush.bf16.msra.mxu0 %v1398
  %1961 = vmatpush.bf16.msra.mxu0 %v1397
  %1962 = vmatpush.bf16.msra.mxu0 %v1396
  %1963 = vmatpush.bf16.msra.mxu0 %v1395
  %1964 = vmatpush.bf16.msra.mxu0 %v1394
  %1965 = vmatpush.bf16.msra.mxu0 %v1393
  %1966 = vmatpush.bf16.msra.mxu0 %v1392
  %1967 = vmatpush.bf16.msra.mxu0 %v1391
  %1968 = vmatmul.bf16.gmra.mxu0 %v687
  %v1969 = vpop.f32.mrf.mxu0
  %v1970 = vadd.f32 %v1921, %v1969
  %v1971 = vpop.f32.mrf.mxu0
  %v1972 = vadd.f32 %v1923, %v1971
  %1973 = vmatmul.bf16.gmra.mxu0 %v701
  %v1974 = vpop.f32.mrf.mxu0
  %v1975 = vadd.f32 %v1926, %v1974
  %v1976 = vpop.f32.mrf.mxu0
  %v1977 = vadd.f32 %v1928, %v1976
  %1978 = vmatmul.bf16.gmra.mxu0 %v715
  %v1979 = vpop.f32.mrf.mxu0
  %v1980 = vadd.f32 %v1931, %v1979
  %v1981 = vpop.f32.mrf.mxu0
  %v1982 = vadd.f32 %v1933, %v1981
  %1983 = vmatmul.bf16.gmra.mxu0 %v729
  %v1984 = vpop.f32.mrf.mxu0
  %v1985 = vadd.f32 %v1936, %v1984
  %v1986 = vpop.f32.mrf.mxu0
  %v1987 = vadd.f32 %v1938, %v1986
  %1988 = vmatmul.bf16.gmra.mxu0 %v743
  %v1989 = vpop.f32.mrf.mxu0
  %v1990 = vadd.f32 %v1941, %v1989
  %v1991 = vpop.f32.mrf.mxu0
  %v1992 = vadd.f32 %v1943, %v1991
  %1993 = vmatmul.bf16.gmra.mxu0 %v757
  %v1994 = vpop.f32.mrf.mxu0
  %v1995 = vadd.f32 %v1946, %v1994
  %v1996 = vpop.f32.mrf.mxu0
  %v1997 = vadd.f32 %v1948, %v1996
  %1998 = vmatmul.bf16.gmra.mxu0 %v771
  %v1999 = vpop.f32.mrf.mxu0
  %v2000 = vadd.f32 %v1951, %v1999
  %v2001 = vpop.f32.mrf.mxu0
  %v2002 = vadd.f32 %v1953, %v2001
  %2003 = vmatmul.bf16.gmra.mxu0 %v785
  %v2004 = vpop.f32.mrf.mxu0
  %v2005 = vadd.f32 %v1956, %v2004
  %v2006 = vpop.f32.mrf.mxu0
  %v2007 = vadd.f32 %v1958, %v2006
  %2008 = vdwg.mxu0
  %2009 = vmatpush.bf16.msra.mxu0 %v1406
  %2010 = vmatpush.bf16.msra.mxu0 %v1405
  %2011 = vmatpush.bf16.msra.mxu0 %v1404
  %2012 = vmatpush.bf16.msra.mxu0 %v1403
  %2013 = vmatpush.bf16.msra.mxu0 %v1402
  %2014 = vmatpush.bf16.msra.mxu0 %v1401
  %2015 = vmatpush.bf16.msra.mxu0 %v1400
  %2016 = vmatpush.bf16.msra.mxu0 %v1399
  %2017 = vmatmul.bf16.gmra.mxu0 %v688
  %v2018 = vpop.f32.mrf.mxu0
  %v2019 = vadd.f32 %v1970, %v2018
  %v2020 = vpop.f32.mrf.mxu0
  %v2021 = vadd.f32 %v1972, %v2020
  %2022 = vmatmul.bf16.gmra.mxu0 %v702
  %v2023 = vpop.f32.mrf.mxu0
  %v2024 = vadd.f32 %v1975, %v2023
  %v2025 = vpop.f32.mrf.mxu0
  %v2026 = vadd.f32 %v1977, %v2025
  %2027 = vmatmul.bf16.gmra.mxu0 %v716
  %v2028 = vpop.f32.mrf.mxu0
  %v2029 = vadd.f32 %v1980, %v2028
  %v2030 = vpop.f32.mrf.mxu0
  %v2031 = vadd.f32 %v1982, %v2030
  %2032 = vmatmul.bf16.gmra.mxu0 %v730
  %v2033 = vpop.f32.mrf.mxu0
  %v2034 = vadd.f32 %v1985, %v2033
  %v2035 = vpop.f32.mrf.mxu0
  %v2036 = vadd.f32 %v1987, %v2035
  %2037 = vmatmul.bf16.gmra.mxu0 %v744
  %v2038 = vpop.f32.mrf.mxu0
  %v2039 = vadd.f32 %v1990, %v2038
  %v2040 = vpop.f32.mrf.mxu0
  %v2041 = vadd.f32 %v1992, %v2040
  %2042 = vmatmul.bf16.gmra.mxu0 %v758
  %v2043 = vpop.f32.mrf.mxu0
  %v2044 = vadd.f32 %v1995, %v2043
  %v2045 = vpop.f32.mrf.mxu0
  %v2046 = vadd.f32 %v1997, %v2045
  %2047 = vmatmul.bf16.gmra.mxu0 %v772
  %v2048 = vpop.f32.mrf.mxu0
  %v2049 = vadd.f32 %v2000, %v2048
  %v2050 = vpop.f32.mrf.mxu0
  %v2051 = vadd.f32 %v2002, %v2050
  %2052 = vmatmul.bf16.gmra.mxu0 %v786
  %v2053 = vpop.f32.mrf.mxu0
  %v2054 = vadd.f32 %v2005, %v2053
  %v2055 = vpop.f32.mrf.mxu0
  %v2056 = vadd.f32 %v2007, %v2055
  %2057 = vdwg.mxu0
  %2058 = vmatpush.bf16.msra.mxu0 %v1414
  %2059 = vmatpush.bf16.msra.mxu0 %v1413
  %2060 = vmatpush.bf16.msra.mxu0 %v1412
  %2061 = vmatpush.bf16.msra.mxu0 %v1411
  %2062 = vmatpush.bf16.msra.mxu0 %v1410
  %2063 = vmatpush.bf16.msra.mxu0 %v1409
  %2064 = vmatpush.bf16.msra.mxu0 %v1408
  %2065 = vmatpush.bf16.msra.mxu0 %v1407
  %2066 = vmatmul.bf16.gmra.mxu0 %v689
  %v2067 = vpop.f32.mrf.mxu0
  %v2068 = vadd.f32 %v2019, %v2067
  %v2069 = vpop.f32.mrf.mxu0
  %v2070 = vadd.f32 %v2021, %v2069
  %2071 = vmatmul.bf16.gmra.mxu0 %v703
  %v2072 = vpop.f32.mrf.mxu0
  %v2073 = vadd.f32 %v2024, %v2072
  %v2074 = vpop.f32.mrf.mxu0
  %v2075 = vadd.f32 %v2026, %v2074
  %2076 = vmatmul.bf16.gmra.mxu0 %v717
  %v2077 = vpop.f32.mrf.mxu0
  %v2078 = vadd.f32 %v2029, %v2077
  %v2079 = vpop.f32.mrf.mxu0
  %v2080 = vadd.f32 %v2031, %v2079
  %2081 = vmatmul.bf16.gmra.mxu0 %v731
  %v2082 = vpop.f32.mrf.mxu0
  %v2083 = vadd.f32 %v2034, %v2082
  %v2084 = vpop.f32.mrf.mxu0
  %v2085 = vadd.f32 %v2036, %v2084
  %2086 = vmatmul.bf16.gmra.mxu0 %v745
  %v2087 = vpop.f32.mrf.mxu0
  %v2088 = vadd.f32 %v2039, %v2087
  %v2089 = vpop.f32.mrf.mxu0
  %v2090 = vadd.f32 %v2041, %v2089
  %2091 = vmatmul.bf16.gmra.mxu0 %v759
  %v2092 = vpop.f32.mrf.mxu0
  %v2093 = vadd.f32 %v2044, %v2092
  %v2094 = vpop.f32.mrf.mxu0
  %v2095 = vadd.f32 %v2046, %v2094
  %2096 = vmatmul.bf16.gmra.mxu0 %v773
  %v2097 = vpop.f32.mrf.mxu0
  %v2098 = vadd.f32 %v2049, %v2097
  %v2099 = vpop.f32.mrf.mxu0
  %v2100 = vadd.f32 %v2051, %v2099
  %2101 = vmatmul.bf16.gmra.mxu0 %v787
  %v2102 = vpop.f32.mrf.mxu0
  %v2103 = vadd.f32 %v2054, %v2102
  %v2104 = vpop.f32.mrf.mxu0
  %v2105 = vadd.f32 %v2056, %v2104
  %2106 = vdwg.mxu0
  %2107 = vmatpush.bf16.msra.mxu0 %v1422
  %2108 = vmatpush.bf16.msra.mxu0 %v1421
  %2109 = vmatpush.bf16.msra.mxu0 %v1420
  %2110 = vmatpush.bf16.msra.mxu0 %v1419
  %2111 = vmatpush.bf16.msra.mxu0 %v1418
  %2112 = vmatpush.bf16.msra.mxu0 %v1417
  %2113 = vmatpush.bf16.msra.mxu0 %v1416
  %2114 = vmatpush.bf16.msra.mxu0 %v1415
  %2115 = vmatmul.bf16.gmra.mxu0 %v690
  %v2116 = vpop.f32.mrf.mxu0
  %v2117 = vadd.f32 %v2068, %v2116
  %v2118 = vpop.f32.mrf.mxu0
  %v2119 = vadd.f32 %v2070, %v2118
  %2120 = vmatmul.bf16.gmra.mxu0 %v704
  %v2121 = vpop.f32.mrf.mxu0
  %v2122 = vadd.f32 %v2073, %v2121
  %v2123 = vpop.f32.mrf.mxu0
  %v2124 = vadd.f32 %v2075, %v2123
  %2125 = vmatmul.bf16.gmra.mxu0 %v718
  %v2126 = vpop.f32.mrf.mxu0
  %v2127 = vadd.f32 %v2078, %v2126
  %v2128 = vpop.f32.mrf.mxu0
  %v2129 = vadd.f32 %v2080, %v2128
  %2130 = vmatmul.bf16.gmra.mxu0 %v732
  %v2131 = vpop.f32.mrf.mxu0
  %v2132 = vadd.f32 %v2083, %v2131
  %v2133 = vpop.f32.mrf.mxu0
  %v2134 = vadd.f32 %v2085, %v2133
  %2135 = vmatmul.bf16.gmra.mxu0 %v746
  %v2136 = vpop.f32.mrf.mxu0
  %v2137 = vadd.f32 %v2088, %v2136
  %v2138 = vpop.f32.mrf.mxu0
  %v2139 = vadd.f32 %v2090, %v2138
  %2140 = vmatmul.bf16.gmra.mxu0 %v760
  %v2141 = vpop.f32.mrf.mxu0
  %v2142 = vadd.f32 %v2093, %v2141
  %v2143 = vpop.f32.mrf.mxu0
  %v2144 = vadd.f32 %v2095, %v2143
  %2145 = vmatmul.bf16.gmra.mxu0 %v774
  %v2146 = vpop.f32.mrf.mxu0
  %v2147 = vadd.f32 %v2098, %v2146
  %v2148 = vpop.f32.mrf.mxu0
  %v2149 = vadd.f32 %v2100, %v2148
  %2150 = vmatmul.bf16.gmra.mxu0 %v788
  %v2151 = vpop.f32.mrf.mxu0
  %v2152 = vadd.f32 %v2103, %v2151
  %v2153 = vpop.f32.mrf.mxu0
  %v2154 = vadd.f32 %v2105, %v2153
  %2155 = vdwg.mxu0
  %2156 = vmatpush.bf16.msra.mxu0 %v1430
  %2157 = vmatpush.bf16.msra.mxu0 %v1429
  %2158 = vmatpush.bf16.msra.mxu0 %v1428
  %2159 = vmatpush.bf16.msra.mxu0 %v1427
  %2160 = vmatpush.bf16.msra.mxu0 %v1426
  %2161 = vmatpush.bf16.msra.mxu0 %v1425
  %2162 = vmatpush.bf16.msra.mxu0 %v1424
  %2163 = vmatpush.bf16.msra.mxu0 %v1423
  %2164 = vmatmul.bf16.gmra.mxu0 %v691
  %v2165 = vpop.f32.mrf.mxu0
  %v2166 = vadd.f32 %v2117, %v2165
  %v2167 = vpop.f32.mrf.mxu0
  %v2168 = vadd.f32 %v2119, %v2167
  %2169 = vmatmul.bf16.gmra.mxu0 %v705
  %v2170 = vpop.f32.mrf.mxu0
  %v2171 = vadd.f32 %v2122, %v2170
  %v2172 = vpop.f32.mrf.mxu0
  %v2173 = vadd.f32 %v2124, %v2172
  %2174 = vmatmul.bf16.gmra.mxu0 %v719
  %v2175 = vpop.f32.mrf.mxu0
  %v2176 = vadd.f32 %v2127, %v2175
  %v2177 = vpop.f32.mrf.mxu0
  %v2178 = vadd.f32 %v2129, %v2177
  %2179 = vmatmul.bf16.gmra.mxu0 %v733
  %v2180 = vpop.f32.mrf.mxu0
  %v2181 = vadd.f32 %v2132, %v2180
  %v2182 = vpop.f32.mrf.mxu0
  %v2183 = vadd.f32 %v2134, %v2182
  %2184 = vmatmul.bf16.gmra.mxu0 %v747
  %v2185 = vpop.f32.mrf.mxu0
  %v2186 = vadd.f32 %v2137, %v2185
  %v2187 = vpop.f32.mrf.mxu0
  %v2188 = vadd.f32 %v2139, %v2187
  %2189 = vmatmul.bf16.gmra.mxu0 %v761
  %v2190 = vpop.f32.mrf.mxu0
  %v2191 = vadd.f32 %v2142, %v2190
  %v2192 = vpop.f32.mrf.mxu0
  %v2193 = vadd.f32 %v2144, %v2192
  %2194 = vmatmul.bf16.gmra.mxu0 %v775
  %v2195 = vpop.f32.mrf.mxu0
  %v2196 = vadd.f32 %v2147, %v2195
  %v2197 = vpop.f32.mrf.mxu0
  %v2198 = vadd.f32 %v2149, %v2197
  %2199 = vmatmul.bf16.gmra.mxu0 %v789
  %v2200 = vpop.f32.mrf.mxu0
  %v2201 = vadd.f32 %v2152, %v2200
  %v2202 = vpop.f32.mrf.mxu0
  %v2203 = vadd.f32 %v2154, %v2202
  %2204 = vdwg.mxu0
  %2205 = vmatpush.bf16.msra.mxu0 0
  %2206 = vmatpush.bf16.msra.mxu0 0
  %2207 = vmatpush.bf16.msra.mxu0 0
  %2208 = vmatpush.bf16.msra.mxu0 0
  %2209 = vmatpush.bf16.msra.mxu0 %v1434
  %2210 = vmatpush.bf16.msra.mxu0 %v1433
  %2211 = vmatpush.bf16.msra.mxu0 %v1432
  %2212 = vmatpush.bf16.msra.mxu0 %v1431
  %2213 = vmatmul.bf16.gmra.mxu0 %v1545
  %v2214 = vpop.f32.mrf.mxu0
  %v2215 = vadd.f32 %v2166, %v2214
  %v2216 = vpop.f32.mrf.mxu0
  %v2217 = vadd.f32 %v2168, %v2216
  %2218 = vmatmul.bf16.gmra.mxu0 %v1548
  %v2219 = vpop.f32.mrf.mxu0
  %v2220 = vadd.f32 %v2171, %v2219
  %v2221 = vpop.f32.mrf.mxu0
  %v2222 = vadd.f32 %v2173, %v2221
  %2223 = vmatmul.bf16.gmra.mxu0 %v1551
  %v2224 = vpop.f32.mrf.mxu0
  %v2225 = vadd.f32 %v2176, %v2224
  %v2226 = vpop.f32.mrf.mxu0
  %v2227 = vadd.f32 %v2178, %v2226
  %2228 = vmatmul.bf16.gmra.mxu0 %v1554
  %v2229 = vpop.f32.mrf.mxu0
  %v2230 = vadd.f32 %v2181, %v2229
  %v2231 = vpop.f32.mrf.mxu0
  %v2232 = vadd.f32 %v2183, %v2231
  %2233 = vmatmul.bf16.gmra.mxu0 %v1557
  %v2234 = vpop.f32.mrf.mxu0
  %v2235 = vadd.f32 %v2186, %v2234
  %v2236 = vpop.f32.mrf.mxu0
  %v2237 = vadd.f32 %v2188, %v2236
  %2238 = vmatmul.bf16.gmra.mxu0 %v1560
  %v2239 = vpop.f32.mrf.mxu0
  %v2240 = vadd.f32 %v2191, %v2239
  %v2241 = vpop.f32.mrf.mxu0
  %v2242 = vadd.f32 %v2193, %v2241
  %2243 = vmatmul.bf16.gmra.mxu0 %v1563
  %v2244 = vpop.f32.mrf.mxu0
  %v2245 = vadd.f32 %v2196, %v2244
  %v2246 = vpop.f32.mrf.mxu0
  %v2247 = vadd.f32 %v2198, %v2246
  %2248 = vmatmul.bf16.gmra.mxu0 %v1566
  %v2249 = vpop.f32.mrf.mxu0
  %v2250 = vadd.f32 %v2201, %v2249
  %v2251 = vpop.f32.mrf.mxu0
  %v2252 = vadd.f32 %v2203, %v2251
  %2253 = vdwg.mxu0
  %v2254 = vpack.c.bf16 %v2215, %v2215
  %v2255 = vpack.c.bf16 %v2217, %v2217
  %v2256 = vpack.c.bf16 %v2220, %v2220
  %v2257 = vpack.c.bf16 %v2222, %v2222
  %v2258 = vpack.c.bf16 %v2225, %v2225
  %v2259 = vpack.c.bf16 %v2227, %v2227
  %v2260 = vpack.c.bf16 %v2230, %v2230
  %v2261 = vpack.c.bf16 %v2232, %v2232
  %v2262 = vpack.c.bf16 %v2235, %v2235
  %v2263 = vpack.c.bf16 %v2237, %v2237
  %v2264 = vpack.c.bf16 %v2240, %v2240
  %v2265 = vpack.c.bf16 %v2242, %v2242
  %v2266 = vpack.c.bf16 %v2245, %v2245
  %v2267 = vpack.c.bf16 %v2247, %v2247
  %v2268 = vpack.c.bf16 %v2250, %v2250
  %v2269 = vpack.c.bf16 %v2252, %v2252
  %vm2270 = vcmask 257024
  %2271 = vst.msk [vmem:[%s2] sm:$0xf] %vm2270, %v2254
  %2272 = vst.msk [vmem:[%s2 + $0x4] sm:$0xf] %vm2270, %v2255
  %2273 = vst.msk [vmem:[%s2 + $0x8] sm:$0xf] %vm2270, %v2256
  %2274 = vst.msk [vmem:[%s2 + $0xc] sm:$0xf] %vm2270, %v2257
  %2275 = vst.msk [vmem:[%s2 + $0x10] sm:$0xf] %vm2270, %v2258
  %2276 = vst.msk [vmem:[%s2 + $0x14] sm:$0xf] %vm2270, %v2259
  %2277 = vst.msk [vmem:[%s2 + $0x18] sm:$0xf] %vm2270, %v2260
  %2278 = vst.msk [vmem:[%s2 + $0x1c] sm:$0xf] %vm2270, %v2261
  %2279 = vst.msk [vmem:[%s2 + $0x20] sm:$0xf] %vm2270, %v2262
  %2280 = vst.msk [vmem:[%s2 + $0x24] sm:$0xf] %vm2270, %v2263
  %2281 = vst.msk [vmem:[%s2 + $0x28] sm:$0xf] %vm2270, %v2264
  %2282 = vst.msk [vmem:[%s2 + $0x2c] sm:$0xf] %vm2270, %v2265
  %2283 = vst.msk [vmem:[%s2 + $0x30] sm:$0xf] %vm2270, %v2266
  %2284 = vst.msk [vmem:[%s2 + $0x34] sm:$0xf] %vm2270, %v2267
  %2285 = vst.msk [vmem:[%s2 + $0x38] sm:$0xf] %vm2270, %v2268
  %2286 = vst.msk [vmem:[%s2 + $0x3c] sm:$0xf] %vm2270, %v2269
  %vm2287 = vcmask 261120
  %v2288 = vsel %vm2287, %v2215, 0.0
  %v2289 = vsel %vm2287, %v2217, 0.0
  %v2290 = vadd.f32 %v2288, %v2289
  %v2291 = vsel %vm2287, %v2220, 0.0
  %v2292 = vadd.f32 %v2290, %v2291
  %v2293 = vsel %vm2287, %v2222, 0.0
  %v2294 = vadd.f32 %v2292, %v2293
  %v2295 = vsel %vm2287, %v2225, 0.0
  %v2296 = vadd.f32 %v2294, %v2295
  %v2297 = vsel %vm2287, %v2227, 0.0
  %v2298 = vadd.f32 %v2296, %v2297
  %v2299 = vsel %vm2287, %v2230, 0.0
  %v2300 = vadd.f32 %v2298, %v2299
  %v2301 = vsel %vm2287, %v2232, 0.0
  %v2302 = vadd.f32 %v2300, %v2301
  %v2303 = vsel %vm2287, %v2235, 0.0
  %v2304 = vadd.f32 %v2302, %v2303
  %v2305 = vsel %vm2287, %v2237, 0.0
  %v2306 = vadd.f32 %v2304, %v2305
  %v2307 = vsel %vm2287, %v2240, 0.0
  %v2308 = vadd.f32 %v2306, %v2307
  %v2309 = vsel %vm2287, %v2242, 0.0
  %v2310 = vadd.f32 %v2308, %v2309
  %v2311 = vsel %vm2287, %v2245, 0.0
  %v2312 = vadd.f32 %v2310, %v2311
  %v2313 = vsel %vm2287, %v2247, 0.0
  %v2314 = vadd.f32 %v2312, %v2313
  %v2315 = vsel %vm2287, %v2250, 0.0
  %v2316 = vadd.f32 %v2314, %v2315
  %v2317 = vsel %vm2287, %v2252, 0.0
  %v2318 = vadd.f32 %v2316, %v2317
  %v2319 = vrot.slane %v2318, 4
  %v2320 = vadd.f32 %v2318, %v2319
  %v2321 = vrot.slane %v2320, 2
  %v2322 = vadd.f32 %v2320, %v2321
  %v2323 = vrot.slane %v2322, 1
  %v2324 = vadd.f32 %v2322, %v2323
  %vm2325 = vcmask 253952
  %2326 = vst.msk [vmem:[%s3] sm:$0x1] %vm2325, %v2324
  %v2327 = vmul.f32 %v2215, %v2215
  %v2328 = vmul.f32 %v2217, %v2217
  %v2329 = vmul.f32 %v2220, %v2220
  %v2330 = vmul.f32 %v2222, %v2222
  %v2331 = vmul.f32 %v2225, %v2225
  %v2332 = vmul.f32 %v2227, %v2227
  %v2333 = vmul.f32 %v2230, %v2230
  %v2334 = vmul.f32 %v2232, %v2232
  %v2335 = vmul.f32 %v2235, %v2235
  %v2336 = vmul.f32 %v2237, %v2237
  %v2337 = vmul.f32 %v2240, %v2240
  %v2338 = vmul.f32 %v2242, %v2242
  %v2339 = vmul.f32 %v2245, %v2245
  %v2340 = vmul.f32 %v2247, %v2247
  %v2341 = vmul.f32 %v2250, %v2250
  %v2342 = vmul.f32 %v2252, %v2252
  %v2343 = vsel %vm2287, %v2327, 0.0
  %v2344 = vsel %vm2287, %v2328, 0.0
  %v2345 = vadd.f32 %v2343, %v2344
  %v2346 = vsel %vm2287, %v2329, 0.0
  %v2347 = vadd.f32 %v2345, %v2346
  %v2348 = vsel %vm2287, %v2330, 0.0
  %v2349 = vadd.f32 %v2347, %v2348
  %v2350 = vsel %vm2287, %v2331, 0.0
  %v2351 = vadd.f32 %v2349, %v2350
  %v2352 = vsel %vm2287, %v2332, 0.0
  %v2353 = vadd.f32 %v2351, %v2352
  %v2354 = vsel %vm2287, %v2333, 0.0
  %v2355 = vadd.f32 %v2353, %v2354
  %v2356 = vsel %vm2287, %v2334, 0.0
  %v2357 = vadd.f32 %v2355, %v2356
  %v2358 = vsel %vm2287, %v2335, 0.0
  %v2359 = vadd.f32 %v2357, %v2358
  %v2360 = vsel %vm2287, %v2336, 0.0
  %v2361 = vadd.f32 %v2359, %v2360
  %v2362 = vsel %vm2287, %v2337, 0.0
  %v2363 = vadd.f32 %v2361, %v2362
  %v2364 = vsel %vm2287, %v2338, 0.0
  %v2365 = vadd.f32 %v2363, %v2364
  %v2366 = vsel %vm2287, %v2339, 0.0
  %v2367 = vadd.f32 %v2365, %v2366
  %v2368 = vsel %vm2287, %v2340, 0.0
  %v2369 = vadd.f32 %v2367, %v2368
  %v2370 = vsel %vm2287, %v2341, 0.0
  %v2371 = vadd.f32 %v2369, %v2370
  %v2372 = vsel %vm2287, %v2342, 0.0
  %v2373 = vadd.f32 %v2371, %v2372
  %v2374 = vrot.slane %v2373, 4
  %v2375 = vadd.f32 %v2373, %v2374
  %v2376 = vrot.slane %v2375, 2
  %v2377 = vadd.f32 %v2375, %v2376
  %v2378 = vrot.slane %v2377, 1
  %v2379 = vadd.f32 %v2377, %v2378
  %2380 = vst.msk [vmem:[%s4] sm:$0x1] %vm2325, %v2379
  // Predicated region
  $region10: #{psmnet_forward.80} parent=0 // pred_check
    _
  $region11: #{psmnet_forward.80} parent=0 // pred_check_branch
    %2382 = sbr.rel (0) target = $region13
  $region12: #{psmnet_forward.80} parent=0 // pred_region
    _
  $region13: #{psmnet_forward.80} parent=0 // pred_fallthru
    _
  // Predicated region
  $region14: #{psmnet_forward.80} parent=0 // pred_check
    _
  $region15: #{psmnet_forward.80} parent=0 // pred_check_branch
    %2384 = sbr.rel (0) target = $region17
  $region16: #{psmnet_forward.80} parent=0 // pred_region
    _
  $region17: #{psmnet_forward.80} parent=0 // pred_fallthru
    _
  // Predicated region
  $region18: #{psmnet_forward.80} parent=0 // pred_check
    _
  $region19: #{psmnet_forward.80} parent=0 // pred_check_branch
    %2386 = sbr.rel (0) target = $region21
  $region20: #{psmnet_forward.80} parent=0 // pred_region
    _
  $region21: #{psmnet_forward.80} parent=0 // pred_fallthru
    _
  // Predicated region
  $region22: #{psmnet_forward.80} parent=0 // pred_check
    _
  $region23: #{psmnet_forward.80} parent=0 // pred_check_branch
    %2388 = sbr.rel (0) target = $region25
  $region24: #{psmnet_forward.80} parent=0 // pred_region
    _
  $region25: #{psmnet_forward.80} parent=0 // pred_fallthru
    _
  // Predicated region
  $region26: #{psmnet_forward.80} parent=0 // pred_check
    _
  $region27: #{psmnet_forward.80} parent=0 // pred_check_branch
    %2390 = sbr.rel (0) target = $region29
  $region28: #{psmnet_forward.80} parent=0 // pred_region
    _
  $region29: #{psmnet_forward.80} parent=0 // pred_fallthru
    _
  // Predicated region
  $region30: #{psmnet_forward.80} parent=0 // pred_check
    _
  $region31: #{psmnet_forward.80} parent=0 // pred_check_branch
    %2392 = sbr.rel (0) target = $region33
  $region32: #{psmnet_forward.80} parent=0 // pred_region
    _
  $region33: #{psmnet_forward.80} parent=0 // pred_fallthru
    _

// kernel: psmnet_forward.87
$region0: #{psmnet_forward.87}
  #allocation0 [shape = 'u32[]', space=smem, size = 0x4, offset = 0x4, fixed_abs, tag = 'smem constant byte address 0x4 - core index']
  #allocation1 [shape = 'u32[72,128]{1,0:T(1,128)}', space=vmem, size = 0x9000, scoped, tag = 'internal scratch']
  %s0 = inlined_call_operand.vmem [shape: bf16[32,128], index: 0, kind: input, shape index: {}]
  %s1 = inlined_call_operand.vmem [shape: f32[1,128], index: 1, kind: input, shape index: {}]
  %s2 = inlined_call_operand.vmem [shape: f32[1,128], index: 2, kind: input, shape index: {}]
  %s3 = inlined_call_operand.vmem [shape: bf16[32,128], index: 3, kind: input, shape index: {}]
  %s4 = inlined_call_operand.vmem [shape: bf16[32,128], index: 4, kind: output, shape index: {}]
  %s5 = sld [smem:[#allocation0]]
  $region26: #{psmnet_forward.87} parent=0
    _
  %s7 = ssub.s32 1, %s5
  %s8 = scalar_select 0, %s7, %s5
  // Predicated region
  $region2: #{psmnet_forward.87} parent=0 // pred_check
    _
  $region3: #{psmnet_forward.87} parent=0 // pred_check_branch
    %10 = sbr.rel (0) target = $region5
  $region4: #{psmnet_forward.87} parent=0 // pred_region
    _
  $region5: #{psmnet_forward.87} parent=0 // pred_fallthru
    _
  // Predicated region
  $region6: #{psmnet_forward.87} parent=0 // pred_check
    _
  $region7: #{psmnet_forward.87} parent=0 // pred_check_branch
    %12 = sbr.rel (0) target = $region9
  $region8: #{psmnet_forward.87} parent=0 // pred_region
    _
  $region9: #{psmnet_forward.87} parent=0 // pred_fallthru
    _
  // Predicated region
  $region10: #{psmnet_forward.87} parent=0 // pred_check
    _
  $region11: #{psmnet_forward.87} parent=0 // pred_check_branch
    %14 = sbr.rel (0) target = $region13
  $region12: #{psmnet_forward.87} parent=0 // pred_region
    _
  $region13: #{psmnet_forward.87} parent=0 // pred_fallthru
    _
  // Predicated region
  $region14: #{psmnet_forward.87} parent=0 // pred_check
    _
  $region15: #{psmnet_forward.87} parent=0 // pred_check_branch
    %16 = sbr.rel (0) target = $region17
  $region16: #{psmnet_forward.87} parent=0 // pred_region
    _
  $region17: #{psmnet_forward.87} parent=0 // pred_fallthru
    _
  %v17 = vld [vmem:[%s0] sm:$0xf]
  %v18 = vld [vmem:[%s0 + $0x4] sm:$0xf]
  %v19 = vld [vmem:[%s0 + $0x8] sm:$0xf]
  %v20 = vld [vmem:[%s0 + $0xc] sm:$0xf]
  %v21 = vunpack.c.l.bf16 %v17
  %v22 = vunpack.c.l.bf16 %v18
  %v23 = vunpack.c.l.bf16 %v19
  %v24 = vunpack.c.l.bf16 %v20
  %v25 = vld [vmem:[%s1] sm:$0x1]
  %v27 = vperm.slane %v25, 0
  %v29 = vmul.f32 %v21, %v27
  %v30 = vmul.f32 %v22, %v27
  %v31 = vmul.f32 %v23, %v27
  %v32 = vmul.f32 %v24, %v27
  %v33 = vld [vmem:[%s2] sm:$0x1]
  %v35 = vperm.slane %v33, 0
  %v37 = vadd.f32 %v29, %v35
  %v38 = vadd.f32 %v30, %v35
  %v39 = vadd.f32 %v31, %v35
  %v40 = vadd.f32 %v32, %v35
  %v41 = vld [vmem:[%s3] sm:$0xf]
  %v42 = vld [vmem:[%s3 + $0x4] sm:$0xf]
  %v43 = vld [vmem:[%s3 + $0x8] sm:$0xf]
  %v44 = vld [vmem:[%s3 + $0xc] sm:$0xf]
  %v45 = vunpack.c.l.bf16 %v41
  %v46 = vunpack.c.l.bf16 %v42
  %v47 = vunpack.c.l.bf16 %v43
  %v48 = vunpack.c.l.bf16 %v44
  %v49 = vadd.f32 %v37, %v45
  %v50 = vadd.f32 %v38, %v46
  %v51 = vadd.f32 %v39, %v47
  %v52 = vadd.f32 %v40, %v48
  %v53 = vpack.c.bf16 %v49, %v49
  %v54 = vpack.c.bf16 %v50, %v50
  %v55 = vpack.c.bf16 %v51, %v51
  %v56 = vpack.c.bf16 %v52, %v52
  %57 = vst [vmem:[%s4] sm:$0xf] %v53
  %58 = vst [vmem:[%s4 + $0x4] sm:$0xf] %v54
  %59 = vst [vmem:[%s4 + $0x8] sm:$0xf] %v55
  %60 = vst [vmem:[%s4 + $0xc] sm:$0xf] %v56
  // Predicated region
  $region18: #{psmnet_forward.87} parent=0 // pred_check
    _
  $region19: #{psmnet_forward.87} parent=0 // pred_check_branch
    %62 = sbr.rel (0) target = $region21
  $region20: #{psmnet_forward.87} parent=0 // pred_region
    _
  $region21: #{psmnet_forward.87} parent=0 // pred_fallthru
    _
  // Predicated region
  $region22: #{psmnet_forward.87} parent=0 // pred_check
    _
  $region23: #{psmnet_forward.87} parent=0 // pred_check_branch
    %64 = sbr.rel (0) target = $region25
  $region24: #{psmnet_forward.87} parent=0 // pred_region
    _
  $region25: #{psmnet_forward.87} parent=0 // pred_fallthru
    _

// kernel: psmnet_forward.82
$region0: #{psmnet_forward.82}
  #allocation0 [shape = 'u32[]', space=smem, size = 0x4, offset = 0x4, fixed_abs, tag = 'smem constant byte address 0x4 - core index']
  #allocation1 [shape = 'u32[72,128]{1,0:T(1,128)}', space=vmem, size = 0x9000, scoped, tag = 'internal scratch']
  %s0 = inlined_call_operand.vmem [shape: bf16[128,864], index: 0, kind: input, shape index: {}]
  %s1 = inlined_call_operand.vmem [shape: bf16[864,32], index: 1, kind: input, shape index: {}]
  %s2 = inlined_call_operand.vmem [shape: bf16[128,32], index: 2, kind: output, shape index: {0}]
  %s3 = inlined_call_operand.vmem [shape: f32[1,1,32], index: 3, kind: output, shape index: {1}]
  %s4 = inlined_call_operand.vmem [shape: f32[1,1,32], index: 4, kind: output, shape index: {2}]
  %5 = xla_tuple %s2, %s3, %s4
  %s6 = sld [smem:[#allocation0]]
  $region34: #{psmnet_forward.82} parent=0
    _
  %s8 = ssub.s32 1, %s6
  %s9 = scalar_select 0, %s8, %s6
  // Predicated region
  $region2: #{psmnet_forward.82} parent=0 // pred_check
    _
  $region3: #{psmnet_forward.82} parent=0 // pred_check_branch
    %11 = sbr.rel (0) target = $region5
  $region4: #{psmnet_forward.82} parent=0 // pred_region
    _
  $region5: #{psmnet_forward.82} parent=0 // pred_fallthru
    _
  // Predicated region
  $region6: #{psmnet_forward.82} parent=0 // pred_check
    _
  $region7: #{psmnet_forward.82} parent=0 // pred_check_branch
    %13 = sbr.rel (0) target = $region9
  $region8: #{psmnet_forward.82} parent=0 // pred_region
    _
  $region9: #{psmnet_forward.82} parent=0 // pred_fallthru
    _
  %v15 = vld [vmem:[%s0] sm:$0xff]
  %v16 = vld [vmem:[%s0 + $0x8] sm:$0xff]
  %v17 = vld [vmem:[%s0 + $0x10] sm:$0xff]
  %v18 = vld [vmem:[%s0 + $0x18] sm:$0xf]
  %v19 = vld [vmem:[%s0 + $0x1c] sm:$0xff]
  %v20 = vld [vmem:[%s0 + $0x24] sm:$0xff]
  %v21 = vld [vmem:[%s0 + $0x2c] sm:$0xff]
  %v22 = vld [vmem:[%s0 + $0x34] sm:$0xf]
  %v23 = vld [vmem:[%s0 + $0x38] sm:$0xff]
  %v24 = vld [vmem:[%s0 + $0x40] sm:$0xff]
  %v25 = vld [vmem:[%s0 + $0x48] sm:$0xff]
  %v26 = vld [vmem:[%s0 + $0x50] sm:$0xf]
  %v27 = vld [vmem:[%s0 + $0x54] sm:$0xff]
  %v28 = vld [vmem:[%s0 + $0x5c] sm:$0xff]
  %v29 = vld [vmem:[%s0 + $0x64] sm:$0xff]
  %v30 = vld [vmem:[%s0 + $0x6c] sm:$0xf]
  %v31 = vld [vmem:[%s0 + $0x70] sm:$0xff]
  %v32 = vld [vmem:[%s0 + $0x78] sm:$0xff]
  %v33 = vld [vmem:[%s0 + $0x80] sm:$0xff]
  %v34 = vld [vmem:[%s0 + $0x88] sm:$0xf]
  %v35 = vld [vmem:[%s0 + $0x8c] sm:$0xff]
  %v36 = vld [vmem:[%s0 + $0x94] sm:$0xff]
  %v37 = vld [vmem:[%s0 + $0x9c] sm:$0xff]
  %v38 = vld [vmem:[%s0 + $0xa4] sm:$0xf]
  %v39 = vld [vmem:[%s0 + $0xa8] sm:$0xff]
  %v40 = vld [vmem:[%s0 + $0xb0] sm:$0xff]
  %v41 = vld [vmem:[%s0 + $0xb8] sm:$0xff]
  %v42 = vld [vmem:[%s0 + $0xc0] sm:$0xf]
  %v43 = vld [vmem:[%s0 + $0xc4] sm:$0xff]
  %v44 = vld [vmem:[%s0 + $0xcc] sm:$0xff]
  %v45 = vld [vmem:[%s0 + $0xd4] sm:$0xff]
  %v46 = vld [vmem:[%s0 + $0xdc] sm:$0xf]
  %v47 = vld [vmem:[%s0 + $0xe0] sm:$0xff]
  %v48 = vld [vmem:[%s0 + $0xe8] sm:$0xff]
  %v49 = vld [vmem:[%s0 + $0xf0] sm:$0xff]
  %v50 = vld [vmem:[%s0 + $0xf8] sm:$0xf]
  %v51 = vld [vmem:[%s0 + $0xfc] sm:$0xff]
  %v52 = vld [vmem:[%s0 + $0x104] sm:$0xff]
  %v53 = vld [vmem:[%s0 + $0x10c] sm:$0xff]
  %v54 = vld [vmem:[%s0 + $0x114] sm:$0xf]
  %v55 = vld [vmem:[%s0 + $0x118] sm:$0xff]
  %v56 = vld [vmem:[%s0 + $0x120] sm:$0xff]
  %v57 = vld [vmem:[%s0 + $0x128] sm:$0xff]
  %v58 = vld [vmem:[%s0 + $0x130] sm:$0xf]
  %v59 = vld [vmem:[%s0 + $0x134] sm:$0xff]
  %v60 = vld [vmem:[%s0 + $0x13c] sm:$0xff]
  %v61 = vld [vmem:[%s0 + $0x144] sm:$0xff]
  %v62 = vld [vmem:[%s0 + $0x14c] sm:$0xf]
  %v63 = vld [vmem:[%s0 + $0x150] sm:$0xff]
  %v64 = vld [vmem:[%s0 + $0x158] sm:$0xff]
  %v65 = vld [vmem:[%s0 + $0x160] sm:$0xff]
  %v66 = vld [vmem:[%s0 + $0x168] sm:$0xf]
  %v67 = vld [vmem:[%s0 + $0x16c] sm:$0xff]
  %v68 = vld [vmem:[%s0 + $0x174] sm:$0xff]
  %v69 = vld [vmem:[%s0 + $0x17c] sm:$0xff]
  %v70 = vld [vmem:[%s0 + $0x184] sm:$0xf]
  %v71 = vld [vmem:[%s0 + $0x188] sm:$0xff]
  %v72 = vld [vmem:[%s0 + $0x190] sm:$0xff]
  %v73 = vld [vmem:[%s0 + $0x198] sm:$0xff]
  %v74 = vld [vmem:[%s0 + $0x1a0] sm:$0xf]
  %v75 = vld [vmem:[%s0 + $0x1a4] sm:$0xff]
  %v76 = vld [vmem:[%s0 + $0x1ac] sm:$0xff]
  %v77 = vld [vmem:[%s0 + $0x1b4] sm:$0xff]
  %v78 = vld [vmem:[%s0 + $0x1bc] sm:$0xf]
  %v79 = vld [vmem:[%s1] sm:$0xf]
  %v80 = vld [vmem:[%s1 + $0x4] sm:$0xf]
  %v81 = vld [vmem:[%s1 + $0x8] sm:$0xf]
  %v82 = vld [vmem:[%s1 + $0xc] sm:$0xf]
  %v83 = vld [vmem:[%s1 + $0x10] sm:$0xf]
  %v84 = vld [vmem:[%s1 + $0x14] sm:$0xf]
  %v85 = vld [vmem:[%s1 + $0x18] sm:$0xf]
  %v86 = vld [vmem:[%s1 + $0x1c] sm:$0xf]
  %v87 = vld [vmem:[%s1 + $0x20] sm:$0xf]
  %v88 = vld [vmem:[%s1 + $0x24] sm:$0xf]
  %v89 = vld [vmem:[%s1 + $0x28] sm:$0xf]
  %v90 = vld [vmem:[%s1 + $0x2c] sm:$0xf]
  %v91 = vld [vmem:[%s1 + $0x30] sm:$0xf]
  %v92 = vld [vmem:[%s1 + $0x34] sm:$0xf]
  %v93 = vld [vmem:[%s1 + $0x38] sm:$0xf]
  %v94 = vld [vmem:[%s1 + $0x3c] sm:$0xf]
  %v95 = vld [vmem:[%s1 + $0x40] sm:$0xf]
  %v96 = vld [vmem:[%s1 + $0x44] sm:$0xf]
  %v97 = vld [vmem:[%s1 + $0x48] sm:$0xf]
  %v98 = vld [vmem:[%s1 + $0x4c] sm:$0xf]
  %v99 = vld [vmem:[%s1 + $0x50] sm:$0xf]
  %v100 = vld [vmem:[%s1 + $0x54] sm:$0xf]
  %v101 = vld [vmem:[%s1 + $0x58] sm:$0xf]
  %v102 = vld [vmem:[%s1 + $0x5c] sm:$0xf]
  %v103 = vld [vmem:[%s1 + $0x60] sm:$0xf]
  %v104 = vld [vmem:[%s1 + $0x64] sm:$0xf]
  %v105 = vld [vmem:[%s1 + $0x68] sm:$0xf]
  %v106 = vld [vmem:[%s1 + $0x6c] sm:$0xf]
  %v107 = vld [vmem:[%s1 + $0x70] sm:$0xf]
  %v108 = vld [vmem:[%s1 + $0x74] sm:$0xf]
  %v109 = vld [vmem:[%s1 + $0x78] sm:$0xf]
  %v110 = vld [vmem:[%s1 + $0x7c] sm:$0xf]
  %v111 = vld [vmem:[%s1 + $0x80] sm:$0xf]
  %v112 = vld [vmem:[%s1 + $0x84] sm:$0xf]
  %v113 = vld [vmem:[%s1 + $0x88] sm:$0xf]
  %v114 = vld [vmem:[%s1 + $0x8c] sm:$0xf]
  %v115 = vld [vmem:[%s1 + $0x90] sm:$0xf]
  %v116 = vld [vmem:[%s1 + $0x94] sm:$0xf]
  %v117 = vld [vmem:[%s1 + $0x98] sm:$0xf]
  %v118 = vld [vmem:[%s1 + $0x9c] sm:$0xf]
  %v119 = vld [vmem:[%s1 + $0xa0] sm:$0xf]
  %v120 = vld [vmem:[%s1 + $0xa4] sm:$0xf]
  %v121 = vld [vmem:[%s1 + $0xa8] sm:$0xf]
  %v122 = vld [vmem:[%s1 + $0xac] sm:$0xf]
  %v123 = vld [vmem:[%s1 + $0xb0] sm:$0xf]
  %v124 = vld [vmem:[%s1 + $0xb4] sm:$0xf]
  %v125 = vld [vmem:[%s1 + $0xb8] sm:$0xf]
  %v126 = vld [vmem:[%s1 + $0xbc] sm:$0xf]
  %v127 = vld [vmem:[%s1 + $0xc0] sm:$0xf]
  %v128 = vld [vmem:[%s1 + $0xc4] sm:$0xf]
  %v129 = vld [vmem:[%s1 + $0xc8] sm:$0xf]
  %v130 = vld [vmem:[%s1 + $0xcc] sm:$0xf]
  %v131 = vld [vmem:[%s1 + $0xd0] sm:$0xf]
  %v132 = vld [vmem:[%s1 + $0xd4] sm:$0xf]
  %v133 = vld [vmem:[%s1 + $0xd8] sm:$0xf]
  %v134 = vld [vmem:[%s1 + $0xdc] sm:$0xf]
  %v135 = vld [vmem:[%s1 + $0xe0] sm:$0xf]
  %v136 = vld [vmem:[%s1 + $0xe4] sm:$0xf]
  %v137 = vld [vmem:[%s1 + $0xe8] sm:$0xf]
  %v138 = vld [vmem:[%s1 + $0xec] sm:$0xf]
  %v139 = vld [vmem:[%s1 + $0xf0] sm:$0xf]
  %v140 = vld [vmem:[%s1 + $0xf4] sm:$0xf]
  %v141 = vld [vmem:[%s1 + $0xf8] sm:$0xf]
  %v142 = vld [vmem:[%s1 + $0xfc] sm:$0xf]
  %v143 = vld [vmem:[%s1 + $0x100] sm:$0xf]
  %v144 = vld [vmem:[%s1 + $0x104] sm:$0xf]
  %v145 = vld [vmem:[%s1 + $0x108] sm:$0xf]
  %v146 = vld [vmem:[%s1 + $0x10c] sm:$0xf]
  %v147 = vld [vmem:[%s1 + $0x110] sm:$0xf]
  %v148 = vld [vmem:[%s1 + $0x114] sm:$0xf]
  %v149 = vld [vmem:[%s1 + $0x118] sm:$0xf]
  %v150 = vld [vmem:[%s1 + $0x11c] sm:$0xf]
  %v151 = vld [vmem:[%s1 + $0x120] sm:$0xf]
  %v152 = vld [vmem:[%s1 + $0x124] sm:$0xf]
  %v153 = vld [vmem:[%s1 + $0x128] sm:$0xf]
  %v154 = vld [vmem:[%s1 + $0x12c] sm:$0xf]
  %v155 = vld [vmem:[%s1 + $0x130] sm:$0xf]
  %v156 = vld [vmem:[%s1 + $0x134] sm:$0xf]
  %v157 = vld [vmem:[%s1 + $0x138] sm:$0xf]
  %v158 = vld [vmem:[%s1 + $0x13c] sm:$0xf]
  %v159 = vld [vmem:[%s1 + $0x140] sm:$0xf]
  %v160 = vld [vmem:[%s1 + $0x144] sm:$0xf]
  %v161 = vld [vmem:[%s1 + $0x148] sm:$0xf]
  %v162 = vld [vmem:[%s1 + $0x14c] sm:$0xf]
  %v163 = vld [vmem:[%s1 + $0x150] sm:$0xf]
  %v164 = vld [vmem:[%s1 + $0x154] sm:$0xf]
  %v165 = vld [vmem:[%s1 + $0x158] sm:$0xf]
  %v166 = vld [vmem:[%s1 + $0x15c] sm:$0xf]
  %v167 = vld [vmem:[%s1 + $0x160] sm:$0xf]
  %v168 = vld [vmem:[%s1 + $0x164] sm:$0xf]
  %v169 = vld [vmem:[%s1 + $0x168] sm:$0xf]
  %v170 = vld [vmem:[%s1 + $0x16c] sm:$0xf]
  %v171 = vld [vmem:[%s1 + $0x170] sm:$0xf]
  %v172 = vld [vmem:[%s1 + $0x174] sm:$0xf]
  %v173 = vld [vmem:[%s1 + $0x178] sm:$0xf]
  %v174 = vld [vmem:[%s1 + $0x17c] sm:$0xf]
  %v175 = vld [vmem:[%s1 + $0x180] sm:$0xf]
  %v176 = vld [vmem:[%s1 + $0x184] sm:$0xf]
  %v177 = vld [vmem:[%s1 + $0x188] sm:$0xf]
  %v178 = vld [vmem:[%s1 + $0x18c] sm:$0xf]
  %v179 = vld [vmem:[%s1 + $0x190] sm:$0xf]
  %v180 = vld [vmem:[%s1 + $0x194] sm:$0xf]
  %v181 = vld [vmem:[%s1 + $0x198] sm:$0xf]
  %v182 = vld [vmem:[%s1 + $0x19c] sm:$0xf]
  %v183 = vld [vmem:[%s1 + $0x1a0] sm:$0xf]
  %v184 = vld [vmem:[%s1 + $0x1a4] sm:$0xf]
  %v185 = vld [vmem:[%s1 + $0x1a8] sm:$0xf]
  %v186 = vld [vmem:[%s1 + $0x1ac] sm:$0xf]
  %v251 = vunpack.c.l.b16 %v15
  %v252 = vunpack.c.h.b16 %v15
  %v253 = vunpack.c.l.b16 %v16
  %v254 = vunpack.c.h.b16 %v16
  %v255 = vunpack.c.l.b16 %v17
  %v256 = vunpack.c.h.b16 %v17
  %v257 = vunpack.c.l.b16 %v18
  %v258 = vunpack.c.l.b16 %v19
  %v259 = vunpack.c.h.b16 %v19
  %v260 = vunpack.c.l.b16 %v20
  %v261 = vunpack.c.h.b16 %v20
  %v262 = vunpack.c.l.b16 %v21
  %v263 = vunpack.c.h.b16 %v21
  %v264 = vunpack.c.l.b16 %v22
  %v265 = vunpack.c.l.b16 %v23
  %v266 = vunpack.c.h.b16 %v23
  %v267 = vunpack.c.l.b16 %v24
  %v268 = vunpack.c.h.b16 %v24
  %v269 = vunpack.c.l.b16 %v25
  %v270 = vunpack.c.h.b16 %v25
  %v271 = vunpack.c.l.b16 %v26
  %v272 = vunpack.c.l.b16 %v27
  %v273 = vunpack.c.h.b16 %v27
  %v274 = vunpack.c.l.b16 %v28
  %v275 = vunpack.c.h.b16 %v28
  %v276 = vunpack.c.l.b16 %v29
  %v277 = vunpack.c.h.b16 %v29
  %v278 = vunpack.c.l.b16 %v30
  %v279 = vunpack.c.l.b16 %v31
  %v280 = vunpack.c.h.b16 %v31
  %v281 = vunpack.c.l.b16 %v32
  %v282 = vunpack.c.h.b16 %v32
  %v283 = vunpack.c.l.b16 %v33
  %v284 = vunpack.c.h.b16 %v33
  %v285 = vunpack.c.l.b16 %v34
  %v286 = vunpack.c.l.b16 %v35
  %v287 = vunpack.c.h.b16 %v35
  %v288 = vunpack.c.l.b16 %v36
  %v289 = vunpack.c.h.b16 %v36
  %v290 = vunpack.c.l.b16 %v37
  %v291 = vunpack.c.h.b16 %v37
  %v292 = vunpack.c.l.b16 %v38
  %v293 = vunpack.c.l.b16 %v39
  %v294 = vunpack.c.h.b16 %v39
  %v295 = vunpack.c.l.b16 %v40
  %v296 = vunpack.c.h.b16 %v40
  %v297 = vunpack.c.l.b16 %v41
  %v298 = vunpack.c.h.b16 %v41
  %v299 = vunpack.c.l.b16 %v42
  %v300 = vunpack.c.l.b16 %v43
  %v301 = vunpack.c.h.b16 %v43
  %v302 = vunpack.c.l.b16 %v44
  %v303 = vunpack.c.h.b16 %v44
  %v304 = vunpack.c.l.b16 %v45
  %v305 = vunpack.c.h.b16 %v45
  %v306 = vunpack.c.l.b16 %v46
  %v307 = vunpack.c.l.b16 %v47
  %v308 = vunpack.c.h.b16 %v47
  %v309 = vunpack.c.l.b16 %v48
  %v310 = vunpack.c.h.b16 %v48
  %v311 = vunpack.c.l.b16 %v49
  %v312 = vunpack.c.h.b16 %v49
  %v313 = vunpack.c.l.b16 %v50
  %v314 = vunpack.c.l.b16 %v51
  %v315 = vunpack.c.h.b16 %v51
  %v316 = vunpack.c.l.b16 %v52
  %v317 = vunpack.c.h.b16 %v52
  %v318 = vunpack.c.l.b16 %v53
  %v319 = vunpack.c.h.b16 %v53
  %v320 = vunpack.c.l.b16 %v54
  %v321 = vunpack.c.l.b16 %v55
  %v322 = vunpack.c.h.b16 %v55
  %v323 = vunpack.c.l.b16 %v56
  %v324 = vunpack.c.h.b16 %v56
  %v325 = vunpack.c.l.b16 %v57
  %v326 = vunpack.c.h.b16 %v57
  %v327 = vunpack.c.l.b16 %v58
  %v328 = vunpack.c.l.b16 %v59
  %v329 = vunpack.c.h.b16 %v59
  %v330 = vunpack.c.l.b16 %v60
  %v331 = vunpack.c.h.b16 %v60
  %v332 = vunpack.c.l.b16 %v61
  %v333 = vunpack.c.h.b16 %v61
  %v334 = vunpack.c.l.b16 %v62
  %v335 = vunpack.c.l.b16 %v63
  %v336 = vunpack.c.h.b16 %v63
  %v337 = vunpack.c.l.b16 %v64
  %v338 = vunpack.c.h.b16 %v64
  %v339 = vunpack.c.l.b16 %v65
  %v340 = vunpack.c.h.b16 %v65
  %v341 = vunpack.c.l.b16 %v66
  %v342 = vunpack.c.l.b16 %v67
  %v343 = vunpack.c.h.b16 %v67
  %v344 = vunpack.c.l.b16 %v68
  %v345 = vunpack.c.h.b16 %v68
  %v346 = vunpack.c.l.b16 %v69
  %v347 = vunpack.c.h.b16 %v69
  %v348 = vunpack.c.l.b16 %v70
  %v349 = vunpack.c.l.b16 %v71
  %v350 = vunpack.c.h.b16 %v71
  %v351 = vunpack.c.l.b16 %v72
  %v352 = vunpack.c.h.b16 %v72
  %v353 = vunpack.c.l.b16 %v73
  %v354 = vunpack.c.h.b16 %v73
  %v355 = vunpack.c.l.b16 %v74
  %v356 = vunpack.c.l.b16 %v75
  %v357 = vunpack.c.h.b16 %v75
  %v358 = vunpack.c.l.b16 %v76
  %v359 = vunpack.c.h.b16 %v76
  %v360 = vunpack.c.l.b16 %v77
  %v361 = vunpack.c.h.b16 %v77
  %v362 = vunpack.c.l.b16 %v78
  %v363 = vpack.c.b16 %v258, %v251
  %v364 = vpack.c.b16 %v259, %v252
  %v365 = vpack.c.b16 %v260, %v253
  %v366 = vpack.c.b16 %v261, %v254
  %v367 = vpack.c.b16 %v262, %v255
  %v368 = vpack.c.b16 %v263, %v256
  %v369 = vpack.c.b16 %v264, %v257
  %v370 = vpack.c.b16 %v272, %v265
  %v371 = vpack.c.b16 %v273, %v266
  %v372 = vpack.c.b16 %v274, %v267
  %v373 = vpack.c.b16 %v275, %v268
  %v374 = vpack.c.b16 %v276, %v269
  %v375 = vpack.c.b16 %v277, %v270
  %v376 = vpack.c.b16 %v278, %v271
  %v377 = vpack.c.b16 %v286, %v279
  %v378 = vpack.c.b16 %v287, %v280
  %v379 = vpack.c.b16 %v288, %v281
  %v380 = vpack.c.b16 %v289, %v282
  %v381 = vpack.c.b16 %v290, %v283
  %v382 = vpack.c.b16 %v291, %v284
  %v383 = vpack.c.b16 %v292, %v285
  %v384 = vpack.c.b16 %v300, %v293
  %v385 = vpack.c.b16 %v301, %v294
  %v386 = vpack.c.b16 %v302, %v295
  %v387 = vpack.c.b16 %v303, %v296
  %v388 = vpack.c.b16 %v304, %v297
  %v389 = vpack.c.b16 %v305, %v298
  %v390 = vpack.c.b16 %v306, %v299
  %v391 = vpack.c.b16 %v314, %v307
  %v392 = vpack.c.b16 %v315, %v308
  %v393 = vpack.c.b16 %v316, %v309
  %v394 = vpack.c.b16 %v317, %v310
  %v395 = vpack.c.b16 %v318, %v311
  %v396 = vpack.c.b16 %v319, %v312
  %v397 = vpack.c.b16 %v320, %v313
  %v398 = vpack.c.b16 %v328, %v321
  %v399 = vpack.c.b16 %v329, %v322
  %v400 = vpack.c.b16 %v330, %v323
  %v401 = vpack.c.b16 %v331, %v324
  %v402 = vpack.c.b16 %v332, %v325
  %v403 = vpack.c.b16 %v333, %v326
  %v404 = vpack.c.b16 %v334, %v327
  %v405 = vpack.c.b16 %v342, %v335
  %v406 = vpack.c.b16 %v343, %v336
  %v407 = vpack.c.b16 %v344, %v337
  %v408 = vpack.c.b16 %v345, %v338
  %v409 = vpack.c.b16 %v346, %v339
  %v410 = vpack.c.b16 %v347, %v340
  %v411 = vpack.c.b16 %v348, %v341
  %v412 = vpack.c.b16 %v356, %v349
  %v413 = vpack.c.b16 %v357, %v350
  %v414 = vpack.c.b16 %v358, %v351
  %v415 = vpack.c.b16 %v359, %v352
  %v416 = vpack.c.b16 %v360, %v353
  %v417 = vpack.c.b16 %v361, %v354
  %v418 = vpack.c.b16 %v362, %v355
  %v575 = vunpack.c.l.b16 %v79
  %v576 = vunpack.c.l.b16 %v80
  %v577 = vunpack.c.l.b16 %v81
  %v578 = vunpack.c.l.b16 %v82
  %v579 = vunpack.c.l.b16 %v83
  %v580 = vunpack.c.l.b16 %v84
  %v581 = vunpack.c.l.b16 %v85
  %v582 = vunpack.c.l.b16 %v86
  %v583 = vunpack.c.l.b16 %v87
  %v584 = vunpack.c.l.b16 %v88
  %v585 = vunpack.c.l.b16 %v89
  %v586 = vunpack.c.l.b16 %v90
  %v587 = vunpack.c.l.b16 %v91
  %v588 = vunpack.c.l.b16 %v92
  %v589 = vunpack.c.l.b16 %v93
  %v590 = vunpack.c.l.b16 %v94
  %v591 = vunpack.c.l.b16 %v95
  %v592 = vunpack.c.l.b16 %v96
  %v593 = vunpack.c.l.b16 %v97
  %v594 = vunpack.c.l.b16 %v98
  %v595 = vunpack.c.l.b16 %v99
  %v596 = vunpack.c.l.b16 %v100
  %v597 = vunpack.c.l.b16 %v101
  %v598 = vunpack.c.l.b16 %v102
  %v599 = vunpack.c.l.b16 %v103
  %v600 = vunpack.c.l.b16 %v104
  %v601 = vunpack.c.l.b16 %v105
  %v602 = vunpack.c.l.b16 %v106
  %v603 = vunpack.c.l.b16 %v107
  %v604 = vunpack.c.l.b16 %v108
  %v605 = vunpack.c.l.b16 %v109
  %v606 = vunpack.c.l.b16 %v110
  %v607 = vunpack.c.l.b16 %v111
  %v608 = vunpack.c.l.b16 %v112
  %v609 = vunpack.c.l.b16 %v113
  %v610 = vunpack.c.l.b16 %v114
  %v611 = vunpack.c.l.b16 %v115
  %v612 = vunpack.c.l.b16 %v116
  %v613 = vunpack.c.l.b16 %v117
  %v614 = vunpack.c.l.b16 %v118
  %v615 = vunpack.c.l.b16 %v119
  %v616 = vunpack.c.l.b16 %v120
  %v617 = vunpack.c.l.b16 %v121
  %v618 = vunpack.c.l.b16 %v122
  %v619 = vunpack.c.l.b16 %v123
  %v620 = vunpack.c.l.b16 %v124
  %v621 = vunpack.c.l.b16 %v125
  %v622 = vunpack.c.l.b16 %v126
  %v623 = vunpack.c.l.b16 %v127
  %v624 = vunpack.c.l.b16 %v128
  %v625 = vunpack.c.l.b16 %v129
  %v626 = vunpack.c.l.b16 %v130
  %v627 = vunpack.c.l.b16 %v131
  %v628 = vunpack.c.l.b16 %v132
  %v629 = vunpack.c.l.b16 %v133
  %v630 = vunpack.c.l.b16 %v134
  %v631 = vunpack.c.l.b16 %v135
  %v632 = vunpack.c.l.b16 %v136
  %v633 = vunpack.c.l.b16 %v137
  %v634 = vunpack.c.l.b16 %v138
  %v635 = vunpack.c.l.b16 %v139
  %v636 = vunpack.c.l.b16 %v140
  %v637 = vunpack.c.l.b16 %v141
  %v638 = vunpack.c.l.b16 %v142
  %v639 = vunpack.c.l.b16 %v143
  %v640 = vunpack.c.l.b16 %v144
  %v641 = vunpack.c.l.b16 %v145
  %v642 = vunpack.c.l.b16 %v146
  %v643 = vunpack.c.l.b16 %v147
  %v644 = vunpack.c.l.b16 %v148
  %v645 = vunpack.c.l.b16 %v149
  %v646 = vunpack.c.l.b16 %v150
  %v647 = vunpack.c.l.b16 %v151
  %v648 = vunpack.c.l.b16 %v152
  %v649 = vunpack.c.l.b16 %v153
  %v650 = vunpack.c.l.b16 %v154
  %v651 = vunpack.c.l.b16 %v155
  %v652 = vunpack.c.l.b16 %v156
  %v653 = vunpack.c.l.b16 %v157
  %v654 = vunpack.c.l.b16 %v158
  %v655 = vunpack.c.l.b16 %v159
  %v656 = vunpack.c.l.b16 %v160
  %v657 = vunpack.c.l.b16 %v161
  %v658 = vunpack.c.l.b16 %v162
  %v659 = vunpack.c.l.b16 %v163
  %v660 = vunpack.c.l.b16 %v164
  %v661 = vunpack.c.l.b16 %v165
  %v662 = vunpack.c.l.b16 %v166
  %v663 = vunpack.c.l.b16 %v167
  %v664 = vunpack.c.l.b16 %v168
  %v665 = vunpack.c.l.b16 %v169
  %v666 = vunpack.c.l.b16 %v170
  %v667 = vunpack.c.l.b16 %v171
  %v668 = vunpack.c.l.b16 %v172
  %v669 = vunpack.c.l.b16 %v173
  %v670 = vunpack.c.l.b16 %v174
  %v671 = vunpack.c.l.b16 %v175
  %v672 = vunpack.c.l.b16 %v176
  %v673 = vunpack.c.l.b16 %v177
  %v674 = vunpack.c.l.b16 %v178
  %v675 = vunpack.c.l.b16 %v179
  %v676 = vunpack.c.l.b16 %v180
  %v677 = vunpack.c.l.b16 %v181
  %v678 = vunpack.c.l.b16 %v182
  %v679 = vunpack.c.l.b16 %v183
  %v680 = vunpack.c.l.b16 %v184
  %v681 = vunpack.c.l.b16 %v185
  %v682 = vunpack.c.l.b16 %v186
  %v683 = vpack.c.b16 %v576, %v575
  %v684 = vpack.c.b16 %v578, %v577
  %v685 = vpack.c.b16 %v580, %v579
  %v686 = vpack.c.b16 %v582, %v581
  %v687 = vpack.c.b16 %v584, %v583
  %v688 = vpack.c.b16 %v586, %v585
  %v689 = vpack.c.b16 %v588, %v587
  %v690 = vpack.c.b16 %v590, %v589
  %v691 = vpack.c.b16 %v592, %v591
  %v692 = vpack.c.b16 %v594, %v593
  %v693 = vpack.c.b16 %v596, %v595
  %v694 = vpack.c.b16 %v598, %v597
  %v695 = vpack.c.b16 %v600, %v599
  %v696 = vpack.c.b16 %v602, %v601
  %v697 = vpack.c.b16 %v604, %v603
  %v698 = vpack.c.b16 %v606, %v605
  %v699 = vpack.c.b16 %v608, %v607
  %v700 = vpack.c.b16 %v610, %v609
  %v701 = vpack.c.b16 %v612, %v611
  %v702 = vpack.c.b16 %v614, %v613
  %v703 = vpack.c.b16 %v616, %v615
  %v704 = vpack.c.b16 %v618, %v617
  %v705 = vpack.c.b16 %v620, %v619
  %v706 = vpack.c.b16 %v622, %v621
  %v707 = vpack.c.b16 %v624, %v623
  %v708 = vpack.c.b16 %v626, %v625
  %v709 = vpack.c.b16 %v628, %v627
  %v710 = vpack.c.b16 %v630, %v629
  %v711 = vpack.c.b16 %v632, %v631
  %v712 = vpack.c.b16 %v634, %v633
  %v713 = vpack.c.b16 %v636, %v635
  %v714 = vpack.c.b16 %v638, %v637
  %v715 = vpack.c.b16 %v640, %v639
  %v716 = vpack.c.b16 %v642, %v641
  %v717 = vpack.c.b16 %v644, %v643
  %v718 = vpack.c.b16 %v646, %v645
  %v719 = vpack.c.b16 %v648, %v647
  %v720 = vpack.c.b16 %v650, %v649
  %v721 = vpack.c.b16 %v652, %v651
  %v722 = vpack.c.b16 %v654, %v653
  %v723 = vpack.c.b16 %v656, %v655
  %v724 = vpack.c.b16 %v658, %v657
  %v725 = vpack.c.b16 %v660, %v659
  %v726 = vpack.c.b16 %v662, %v661
  %v727 = vpack.c.b16 %v664, %v663
  %v728 = vpack.c.b16 %v666, %v665
  %v729 = vpack.c.b16 %v668, %v667
  %v730 = vpack.c.b16 %v670, %v669
  %v731 = vpack.c.b16 %v672, %v671
  %v732 = vpack.c.b16 %v674, %v673
  %v733 = vpack.c.b16 %v676, %v675
  %v734 = vpack.c.b16 %v678, %v677
  %v735 = vpack.c.b16 %v680, %v679
  %v736 = vpack.c.b16 %v682, %v681
  %vm791 = vcmask 785408
  %v793 = vsel %vm791, %v369, 0
  %v796 = vsel %vm791, %v376, 0
  %v799 = vsel %vm791, %v383, 0
  %v802 = vsel %vm791, %v390, 0
  %v805 = vsel %vm791, %v397, 0
  %v808 = vsel %vm791, %v404, 0
  %v811 = vsel %vm791, %v411, 0
  %v814 = vsel %vm791, %v418, 0
  %816 = vmatpush.bf16.msra.mxu0 %v690
  %817 = vmatpush.bf16.msra.mxu0 %v689
  %818 = vmatpush.bf16.msra.mxu0 %v688
  %819 = vmatpush.bf16.msra.mxu0 %v687
  %820 = vmatpush.bf16.msra.mxu0 %v686
  %821 = vmatpush.bf16.msra.mxu0 %v685
  %822 = vmatpush.bf16.msra.mxu0 %v684
  %823 = vmatpush.bf16.msra.mxu0 %v683
  %824 = vmatmul.bf16.gmra.mxu0 %v363
  %v825 = vpop.f32.mrf.mxu0
  %v826 = vadd.f32 0.0, %v825
  %v827 = vpop.f32.mrf.mxu0
  %v828 = vadd.f32 0.0, %v827
  %829 = vmatmul.bf16.gmra.mxu0 %v370
  %v830 = vpop.f32.mrf.mxu0
  %v831 = vadd.f32 0.0, %v830
  %v832 = vpop.f32.mrf.mxu0
  %v833 = vadd.f32 0.0, %v832
  %834 = vmatmul.bf16.gmra.mxu0 %v377
  %v835 = vpop.f32.mrf.mxu0
  %v836 = vadd.f32 0.0, %v835
  %v837 = vpop.f32.mrf.mxu0
  %v838 = vadd.f32 0.0, %v837
  %839 = vmatmul.bf16.gmra.mxu0 %v384
  %v840 = vpop.f32.mrf.mxu0
  %v841 = vadd.f32 0.0, %v840
  %v842 = vpop.f32.mrf.mxu0
  %v843 = vadd.f32 0.0, %v842
  %844 = vmatmul.bf16.gmra.mxu0 %v391
  %v845 = vpop.f32.mrf.mxu0
  %v846 = vadd.f32 0.0, %v845
  %v847 = vpop.f32.mrf.mxu0
  %v848 = vadd.f32 0.0, %v847
  %849 = vmatmul.bf16.gmra.mxu0 %v398
  %v850 = vpop.f32.mrf.mxu0
  %v851 = vadd.f32 0.0, %v850
  %v852 = vpop.f32.mrf.mxu0
  %v853 = vadd.f32 0.0, %v852
  %854 = vmatmul.bf16.gmra.mxu0 %v405
  %v855 = vpop.f32.mrf.mxu0
  %v856 = vadd.f32 0.0, %v855
  %v857 = vpop.f32.mrf.mxu0
  %v858 = vadd.f32 0.0, %v857
  %859 = vmatmul.bf16.gmra.mxu0 %v412
  %v860 = vpop.f32.mrf.mxu0
  %v861 = vadd.f32 0.0, %v860
  %v862 = vpop.f32.mrf.mxu0
  %v863 = vadd.f32 0.0, %v862
  %864 = vdwg.mxu0
  %865 = vmatpush.bf16.msra.mxu0 %v698
  %866 = vmatpush.bf16.msra.mxu0 %v697
  %867 = vmatpush.bf16.msra.mxu0 %v696
  %868 = vmatpush.bf16.msra.mxu0 %v695
  %869 = vmatpush.bf16.msra.mxu0 %v694
  %870 = vmatpush.bf16.msra.mxu0 %v693
  %871 = vmatpush.bf16.msra.mxu0 %v692
  %872 = vmatpush.bf16.msra.mxu0 %v691
  %873 = vmatmul.bf16.gmra.mxu0 %v364
  %v874 = vpop.f32.mrf.mxu0
  %v875 = vadd.f32 %v826, %v874
  %v876 = vpop.f32.mrf.mxu0
  %v877 = vadd.f32 %v828, %v876
  %878 = vmatmul.bf16.gmra.mxu0 %v371
  %v879 = vpop.f32.mrf.mxu0
  %v880 = vadd.f32 %v831, %v879
  %v881 = vpop.f32.mrf.mxu0
  %v882 = vadd.f32 %v833, %v881
  %883 = vmatmul.bf16.gmra.mxu0 %v378
  %v884 = vpop.f32.mrf.mxu0
  %v885 = vadd.f32 %v836, %v884
  %v886 = vpop.f32.mrf.mxu0
  %v887 = vadd.f32 %v838, %v886
  %888 = vmatmul.bf16.gmra.mxu0 %v385
  %v889 = vpop.f32.mrf.mxu0
  %v890 = vadd.f32 %v841, %v889
  %v891 = vpop.f32.mrf.mxu0
  %v892 = vadd.f32 %v843, %v891
  %893 = vmatmul.bf16.gmra.mxu0 %v392
  %v894 = vpop.f32.mrf.mxu0
  %v895 = vadd.f32 %v846, %v894
  %v896 = vpop.f32.mrf.mxu0
  %v897 = vadd.f32 %v848, %v896
  %898 = vmatmul.bf16.gmra.mxu0 %v399
  %v899 = vpop.f32.mrf.mxu0
  %v900 = vadd.f32 %v851, %v899
  %v901 = vpop.f32.mrf.mxu0
  %v902 = vadd.f32 %v853, %v901
  %903 = vmatmul.bf16.gmra.mxu0 %v406
  %v904 = vpop.f32.mrf.mxu0
  %v905 = vadd.f32 %v856, %v904
  %v906 = vpop.f32.mrf.mxu0
  %v907 = vadd.f32 %v858, %v906
  %908 = vmatmul.bf16.gmra.mxu0 %v413
  %v909 = vpop.f32.mrf.mxu0
  %v910 = vadd.f32 %v861, %v909
  %v911 = vpop.f32.mrf.mxu0
  %v912 = vadd.f32 %v863, %v911
  %913 = vdwg.mxu0
  %914 = vmatpush.bf16.msra.mxu0 %v706
  %915 = vmatpush.bf16.msra.mxu0 %v705
  %916 = vmatpush.bf16.msra.mxu0 %v704
  %917 = vmatpush.bf16.msra.mxu0 %v703
  %918 = vmatpush.bf16.msra.mxu0 %v702
  %919 = vmatpush.bf16.msra.mxu0 %v701
  %920 = vmatpush.bf16.msra.mxu0 %v700
  %921 = vmatpush.bf16.msra.mxu0 %v699
  %922 = vmatmul.bf16.gmra.mxu0 %v365
  %v923 = vpop.f32.mrf.mxu0
  %v924 = vadd.f32 %v875, %v923
  %v925 = vpop.f32.mrf.mxu0
  %v926 = vadd.f32 %v877, %v925
  %927 = vmatmul.bf16.gmra.mxu0 %v372
  %v928 = vpop.f32.mrf.mxu0
  %v929 = vadd.f32 %v880, %v928
  %v930 = vpop.f32.mrf.mxu0
  %v931 = vadd.f32 %v882, %v930
  %932 = vmatmul.bf16.gmra.mxu0 %v379
  %v933 = vpop.f32.mrf.mxu0
  %v934 = vadd.f32 %v885, %v933
  %v935 = vpop.f32.mrf.mxu0
  %v936 = vadd.f32 %v887, %v935
  %937 = vmatmul.bf16.gmra.mxu0 %v386
  %v938 = vpop.f32.mrf.mxu0
  %v939 = vadd.f32 %v890, %v938
  %v940 = vpop.f32.mrf.mxu0
  %v941 = vadd.f32 %v892, %v940
  %942 = vmatmul.bf16.gmra.mxu0 %v393
  %v943 = vpop.f32.mrf.mxu0
  %v944 = vadd.f32 %v895, %v943
  %v945 = vpop.f32.mrf.mxu0
  %v946 = vadd.f32 %v897, %v945
  %947 = vmatmul.bf16.gmra.mxu0 %v400
  %v948 = vpop.f32.mrf.mxu0
  %v949 = vadd.f32 %v900, %v948
  %v950 = vpop.f32.mrf.mxu0
  %v951 = vadd.f32 %v902, %v950
  %952 = vmatmul.bf16.gmra.mxu0 %v407
  %v953 = vpop.f32.mrf.mxu0
  %v954 = vadd.f32 %v905, %v953
  %v955 = vpop.f32.mrf.mxu0
  %v956 = vadd.f32 %v907, %v955
  %957 = vmatmul.bf16.gmra.mxu0 %v414
  %v958 = vpop.f32.mrf.mxu0
  %v959 = vadd.f32 %v910, %v958
  %v960 = vpop.f32.mrf.mxu0
  %v961 = vadd.f32 %v912, %v960
  %962 = vdwg.mxu0
  %963 = vmatpush.bf16.msra.mxu0 %v714
  %964 = vmatpush.bf16.msra.mxu0 %v713
  %965 = vmatpush.bf16.msra.mxu0 %v712
  %966 = vmatpush.bf16.msra.mxu0 %v711
  %967 = vmatpush.bf16.msra.mxu0 %v710
  %968 = vmatpush.bf16.msra.mxu0 %v709
  %969 = vmatpush.bf16.msra.mxu0 %v708
  %970 = vmatpush.bf16.msra.mxu0 %v707
  %971 = vmatmul.bf16.gmra.mxu0 %v366
  %v972 = vpop.f32.mrf.mxu0
  %v973 = vadd.f32 %v924, %v972
  %v974 = vpop.f32.mrf.mxu0
  %v975 = vadd.f32 %v926, %v974
  %976 = vmatmul.bf16.gmra.mxu0 %v373
  %v977 = vpop.f32.mrf.mxu0
  %v978 = vadd.f32 %v929, %v977
  %v979 = vpop.f32.mrf.mxu0
  %v980 = vadd.f32 %v931, %v979
  %981 = vmatmul.bf16.gmra.mxu0 %v380
  %v982 = vpop.f32.mrf.mxu0
  %v983 = vadd.f32 %v934, %v982
  %v984 = vpop.f32.mrf.mxu0
  %v985 = vadd.f32 %v936, %v984
  %986 = vmatmul.bf16.gmra.mxu0 %v387
  %v987 = vpop.f32.mrf.mxu0
  %v988 = vadd.f32 %v939, %v987
  %v989 = vpop.f32.mrf.mxu0
  %v990 = vadd.f32 %v941, %v989
  %991 = vmatmul.bf16.gmra.mxu0 %v394
  %v992 = vpop.f32.mrf.mxu0
  %v993 = vadd.f32 %v944, %v992
  %v994 = vpop.f32.mrf.mxu0
  %v995 = vadd.f32 %v946, %v994
  %996 = vmatmul.bf16.gmra.mxu0 %v401
  %v997 = vpop.f32.mrf.mxu0
  %v998 = vadd.f32 %v949, %v997
  %v999 = vpop.f32.mrf.mxu0
  %v1000 = vadd.f32 %v951, %v999
  %1001 = vmatmul.bf16.gmra.mxu0 %v408
  %v1002 = vpop.f32.mrf.mxu0
  %v1003 = vadd.f32 %v954, %v1002
  %v1004 = vpop.f32.mrf.mxu0
  %v1005 = vadd.f32 %v956, %v1004
  %1006 = vmatmul.bf16.gmra.mxu0 %v415
  %v1007 = vpop.f32.mrf.mxu0
  %v1008 = vadd.f32 %v959, %v1007
  %v1009 = vpop.f32.mrf.mxu0
  %v1010 = vadd.f32 %v961, %v1009
  %1011 = vdwg.mxu0
  %1012 = vmatpush.bf16.msra.mxu0 %v722
  %1013 = vmatpush.bf16.msra.mxu0 %v721
  %1014 = vmatpush.bf16.msra.mxu0 %v720
  %1015 = vmatpush.bf16.msra.mxu0 %v719
  %1016 = vmatpush.bf16.msra.mxu0 %v718
  %1017 = vmatpush.bf16.msra.mxu0 %v717
  %1018 = vmatpush.bf16.msra.mxu0 %v716
  %1019 = vmatpush.bf16.msra.mxu0 %v715
  %1020 = vmatmul.bf16.gmra.mxu0 %v367
  %v1021 = vpop.f32.mrf.mxu0
  %v1022 = vadd.f32 %v973, %v1021
  %v1023 = vpop.f32.mrf.mxu0
  %v1024 = vadd.f32 %v975, %v1023
  %1025 = vmatmul.bf16.gmra.mxu0 %v374
  %v1026 = vpop.f32.mrf.mxu0
  %v1027 = vadd.f32 %v978, %v1026
  %v1028 = vpop.f32.mrf.mxu0
  %v1029 = vadd.f32 %v980, %v1028
  %1030 = vmatmul.bf16.gmra.mxu0 %v381
  %v1031 = vpop.f32.mrf.mxu0
  %v1032 = vadd.f32 %v983, %v1031
  %v1033 = vpop.f32.mrf.mxu0
  %v1034 = vadd.f32 %v985, %v1033
  %1035 = vmatmul.bf16.gmra.mxu0 %v388
  %v1036 = vpop.f32.mrf.mxu0
  %v1037 = vadd.f32 %v988, %v1036
  %v1038 = vpop.f32.mrf.mxu0
  %v1039 = vadd.f32 %v990, %v1038
  %1040 = vmatmul.bf16.gmra.mxu0 %v395
  %v1041 = vpop.f32.mrf.mxu0
  %v1042 = vadd.f32 %v993, %v1041
  %v1043 = vpop.f32.mrf.mxu0
  %v1044 = vadd.f32 %v995, %v1043
  %1045 = vmatmul.bf16.gmra.mxu0 %v402
  %v1046 = vpop.f32.mrf.mxu0
  %v1047 = vadd.f32 %v998, %v1046
  %v1048 = vpop.f32.mrf.mxu0
  %v1049 = vadd.f32 %v1000, %v1048
  %1050 = vmatmul.bf16.gmra.mxu0 %v409
  %v1051 = vpop.f32.mrf.mxu0
  %v1052 = vadd.f32 %v1003, %v1051
  %v1053 = vpop.f32.mrf.mxu0
  %v1054 = vadd.f32 %v1005, %v1053
  %1055 = vmatmul.bf16.gmra.mxu0 %v416
  %v1056 = vpop.f32.mrf.mxu0
  %v1057 = vadd.f32 %v1008, %v1056
  %v1058 = vpop.f32.mrf.mxu0
  %v1059 = vadd.f32 %v1010, %v1058
  %1060 = vdwg.mxu0
  %1061 = vmatpush.bf16.msra.mxu0 %v730
  %1062 = vmatpush.bf16.msra.mxu0 %v729
  %1063 = vmatpush.bf16.msra.mxu0 %v728
  %1064 = vmatpush.bf16.msra.mxu0 %v727
  %1065 = vmatpush.bf16.msra.mxu0 %v726
  %1066 = vmatpush.bf16.msra.mxu0 %v725
  %1067 = vmatpush.bf16.msra.mxu0 %v724
  %1068 = vmatpush.bf16.msra.mxu0 %v723
  %1069 = vmatmul.bf16.gmra.mxu0 %v368
  %v1070 = vpop.f32.mrf.mxu0
  %v1071 = vadd.f32 %v1022, %v1070
  %v1072 = vpop.f32.mrf.mxu0
  %v1073 = vadd.f32 %v1024, %v1072
  %1074 = vmatmul.bf16.gmra.mxu0 %v375
  %v1075 = vpop.f32.mrf.mxu0
  %v1076 = vadd.f32 %v1027, %v1075
  %v1077 = vpop.f32.mrf.mxu0
  %v1078 = vadd.f32 %v1029, %v1077
  %1079 = vmatmul.bf16.gmra.mxu0 %v382
  %v1080 = vpop.f32.mrf.mxu0
  %v1081 = vadd.f32 %v1032, %v1080
  %v1082 = vpop.f32.mrf.mxu0
  %v1083 = vadd.f32 %v1034, %v1082
  %1084 = vmatmul.bf16.gmra.mxu0 %v389
  %v1085 = vpop.f32.mrf.mxu0
  %v1086 = vadd.f32 %v1037, %v1085
  %v1087 = vpop.f32.mrf.mxu0
  %v1088 = vadd.f32 %v1039, %v1087
  %1089 = vmatmul.bf16.gmra.mxu0 %v396
  %v1090 = vpop.f32.mrf.mxu0
  %v1091 = vadd.f32 %v1042, %v1090
  %v1092 = vpop.f32.mrf.mxu0
  %v1093 = vadd.f32 %v1044, %v1092
  %1094 = vmatmul.bf16.gmra.mxu0 %v403
  %v1095 = vpop.f32.mrf.mxu0
  %v1096 = vadd.f32 %v1047, %v1095
  %v1097 = vpop.f32.mrf.mxu0
  %v1098 = vadd.f32 %v1049, %v1097
  %1099 = vmatmul.bf16.gmra.mxu0 %v410
  %v1100 = vpop.f32.mrf.mxu0
  %v1101 = vadd.f32 %v1052, %v1100
  %v1102 = vpop.f32.mrf.mxu0
  %v1103 = vadd.f32 %v1054, %v1102
  %1104 = vmatmul.bf16.gmra.mxu0 %v417
  %v1105 = vpop.f32.mrf.mxu0
  %v1106 = vadd.f32 %v1057, %v1105
  %v1107 = vpop.f32.mrf.mxu0
  %v1108 = vadd.f32 %v1059, %v1107
  %1109 = vdwg.mxu0
  %1110 = vmatpush.bf16.msra.mxu0 0
  %1111 = vmatpush.bf16.msra.mxu0 0
  %1112 = vmatpush.bf16.msra.mxu0 %v736
  %1113 = vmatpush.bf16.msra.mxu0 %v735
  %1114 = vmatpush.bf16.msra.mxu0 %v734
  %1115 = vmatpush.bf16.msra.mxu0 %v733
  %1116 = vmatpush.bf16.msra.mxu0 %v732
  %1117 = vmatpush.bf16.msra.mxu0 %v731
  %1118 = vmatmul.bf16.gmra.mxu0 %v793
  %v1119 = vpop.f32.mrf.mxu0
  %v1120 = vadd.f32 %v1071, %v1119
  %v1121 = vpop.f32.mrf.mxu0
  %v1122 = vadd.f32 %v1073, %v1121
  %1123 = vmatmul.bf16.gmra.mxu0 %v796
  %v1124 = vpop.f32.mrf.mxu0
  %v1125 = vadd.f32 %v1076, %v1124
  %v1126 = vpop.f32.mrf.mxu0
  %v1127 = vadd.f32 %v1078, %v1126
  %1128 = vmatmul.bf16.gmra.mxu0 %v799
  %v1129 = vpop.f32.mrf.mxu0
  %v1130 = vadd.f32 %v1081, %v1129
  %v1131 = vpop.f32.mrf.mxu0
  %v1132 = vadd.f32 %v1083, %v1131
  %1133 = vmatmul.bf16.gmra.mxu0 %v802
  %v1134 = vpop.f32.mrf.mxu0
  %v1135 = vadd.f32 %v1086, %v1134
  %v1136 = vpop.f32.mrf.mxu0
  %v1137 = vadd.f32 %v1088, %v1136
  %1138 = vmatmul.bf16.gmra.mxu0 %v805
  %v1139 = vpop.f32.mrf.mxu0
  %v1140 = vadd.f32 %v1091, %v1139
  %v1141 = vpop.f32.mrf.mxu0
  %v1142 = vadd.f32 %v1093, %v1141
  %1143 = vmatmul.bf16.gmra.mxu0 %v808
  %v1144 = vpop.f32.mrf.mxu0
  %v1145 = vadd.f32 %v1096, %v1144
  %v1146 = vpop.f32.mrf.mxu0
  %v1147 = vadd.f32 %v1098, %v1146
  %1148 = vmatmul.bf16.gmra.mxu0 %v811
  %v1149 = vpop.f32.mrf.mxu0
  %v1150 = vadd.f32 %v1101, %v1149
  %v1151 = vpop.f32.mrf.mxu0
  %v1152 = vadd.f32 %v1103, %v1151
  %1153 = vmatmul.bf16.gmra.mxu0 %v814
  %v1154 = vpop.f32.mrf.mxu0
  %v1155 = vadd.f32 %v1106, %v1154
  %v1156 = vpop.f32.mrf.mxu0
  %v1157 = vadd.f32 %v1108, %v1156
  %1158 = vdwg.mxu0
  %v1159 = vpack.c.bf16 %v1120, %v1120
  %v1160 = vpack.c.bf16 %v1122, %v1122
  %v1161 = vpack.c.bf16 %v1125, %v1125
  %v1162 = vpack.c.bf16 %v1127, %v1127
  %v1163 = vpack.c.bf16 %v1130, %v1130
  %v1164 = vpack.c.bf16 %v1132, %v1132
  %v1165 = vpack.c.bf16 %v1135, %v1135
  %v1166 = vpack.c.bf16 %v1137, %v1137
  %v1167 = vpack.c.bf16 %v1140, %v1140
  %v1168 = vpack.c.bf16 %v1142, %v1142
  %v1169 = vpack.c.bf16 %v1145, %v1145
  %v1170 = vpack.c.bf16 %v1147, %v1147
  %v1171 = vpack.c.bf16 %v1150, %v1150
  %v1172 = vpack.c.bf16 %v1152, %v1152
  %v1173 = vpack.c.bf16 %v1155, %v1155
  %v1174 = vpack.c.bf16 %v1157, %v1157
  %vm1175 = vcmask 257024
  %1176 = vst.msk [vmem:[%s2] sm:$0xf] %vm1175, %v1159
  %1177 = vst.msk [vmem:[%s2 + $0x4] sm:$0xf] %vm1175, %v1160
  %1178 = vst.msk [vmem:[%s2 + $0x8] sm:$0xf] %vm1175, %v1161
  %1179 = vst.msk [vmem:[%s2 + $0xc] sm:$0xf] %vm1175, %v1162
  %1180 = vst.msk [vmem:[%s2 + $0x10] sm:$0xf] %vm1175, %v1163
  %1181 = vst.msk [vmem:[%s2 + $0x14] sm:$0xf] %vm1175, %v1164
  %1182 = vst.msk [vmem:[%s2 + $0x18] sm:$0xf] %vm1175, %v1165
  %1183 = vst.msk [vmem:[%s2 + $0x1c] sm:$0xf] %vm1175, %v1166
  %1184 = vst.msk [vmem:[%s2 + $0x20] sm:$0xf] %vm1175, %v1167
  %1185 = vst.msk [vmem:[%s2 + $0x24] sm:$0xf] %vm1175, %v1168
  %1186 = vst.msk [vmem:[%s2 + $0x28] sm:$0xf] %vm1175, %v1169
  %1187 = vst.msk [vmem:[%s2 + $0x2c] sm:$0xf] %vm1175, %v1170
  %1188 = vst.msk [vmem:[%s2 + $0x30] sm:$0xf] %vm1175, %v1171
  %1189 = vst.msk [vmem:[%s2 + $0x34] sm:$0xf] %vm1175, %v1172
  %1190 = vst.msk [vmem:[%s2 + $0x38] sm:$0xf] %vm1175, %v1173
  %1191 = vst.msk [vmem:[%s2 + $0x3c] sm:$0xf] %vm1175, %v1174
  %vm1192 = vcmask 261120
  %v1193 = vsel %vm1192, %v1120, 0.0
  %v1194 = vsel %vm1192, %v1122, 0.0
  %v1195 = vadd.f32 %v1193, %v1194
  %v1196 = vsel %vm1192, %v1125, 0.0
  %v1197 = vadd.f32 %v1195, %v1196
  %v1198 = vsel %vm1192, %v1127, 0.0
  %v1199 = vadd.f32 %v1197, %v1198
  %v1200 = vsel %vm1192, %v1130, 0.0
  %v1201 = vadd.f32 %v1199, %v1200
  %v1202 = vsel %vm1192, %v1132, 0.0
  %v1203 = vadd.f32 %v1201, %v1202
  %v1204 = vsel %vm1192, %v1135, 0.0
  %v1205 = vadd.f32 %v1203, %v1204
  %v1206 = vsel %vm1192, %v1137, 0.0
  %v1207 = vadd.f32 %v1205, %v1206
  %v1208 = vsel %vm1192, %v1140, 0.0
  %v1209 = vadd.f32 %v1207, %v1208
  %v1210 = vsel %vm1192, %v1142, 0.0
  %v1211 = vadd.f32 %v1209, %v1210
  %v1212 = vsel %vm1192, %v1145, 0.0
  %v1213 = vadd.f32 %v1211, %v1212
  %v1214 = vsel %vm1192, %v1147, 0.0
  %v1215 = vadd.f32 %v1213, %v1214
  %v1216 = vsel %vm1192, %v1150, 0.0
  %v1217 = vadd.f32 %v1215, %v1216
  %v1218 = vsel %vm1192, %v1152, 0.0
  %v1219 = vadd.f32 %v1217, %v1218
  %v1220 = vsel %vm1192, %v1155, 0.0
  %v1221 = vadd.f32 %v1219, %v1220
  %v1222 = vsel %vm1192, %v1157, 0.0
  %v1223 = vadd.f32 %v1221, %v1222
  %v1224 = vrot.slane %v1223, 4
  %v1225 = vadd.f32 %v1223, %v1224
  %v1226 = vrot.slane %v1225, 2
  %v1227 = vadd.f32 %v1225, %v1226
  %v1228 = vrot.slane %v1227, 1
  %v1229 = vadd.f32 %v1227, %v1228
  %vm1230 = vcmask 253952
  %1231 = vst.msk [vmem:[%s3] sm:$0x1] %vm1230, %v1229
  %v1232 = vmul.f32 %v1120, %v1120
  %v1233 = vmul.f32 %v1122, %v1122
  %v1234 = vmul.f32 %v1125, %v1125
  %v1235 = vmul.f32 %v1127, %v1127
  %v1236 = vmul.f32 %v1130, %v1130
  %v1237 = vmul.f32 %v1132, %v1132
  %v1238 = vmul.f32 %v1135, %v1135
  %v1239 = vmul.f32 %v1137, %v1137
  %v1240 = vmul.f32 %v1140, %v1140
  %v1241 = vmul.f32 %v1142, %v1142
  %v1242 = vmul.f32 %v1145, %v1145
  %v1243 = vmul.f32 %v1147, %v1147
  %v1244 = vmul.f32 %v1150, %v1150
  %v1245 = vmul.f32 %v1152, %v1152
  %v1246 = vmul.f32 %v1155, %v1155
  %v1247 = vmul.f32 %v1157, %v1157
  %v1248 = vsel %vm1192, %v1232, 0.0
  %v1249 = vsel %vm1192, %v1233, 0.0
  %v1250 = vadd.f32 %v1248, %v1249
  %v1251 = vsel %vm1192, %v1234, 0.0
  %v1252 = vadd.f32 %v1250, %v1251
  %v1253 = vsel %vm1192, %v1235, 0.0
  %v1254 = vadd.f32 %v1252, %v1253
  %v1255 = vsel %vm1192, %v1236, 0.0
  %v1256 = vadd.f32 %v1254, %v1255
  %v1257 = vsel %vm1192, %v1237, 0.0
  %v1258 = vadd.f32 %v1256, %v1257
  %v1259 = vsel %vm1192, %v1238, 0.0
  %v1260 = vadd.f32 %v1258, %v1259
  %v1261 = vsel %vm1192, %v1239, 0.0
  %v1262 = vadd.f32 %v1260, %v1261
  %v1263 = vsel %vm1192, %v1240, 0.0
  %v1264 = vadd.f32 %v1262, %v1263
  %v1265 = vsel %vm1192, %v1241, 0.0
  %v1266 = vadd.f32 %v1264, %v1265
  %v1267 = vsel %vm1192, %v1242, 0.0
  %v1268 = vadd.f32 %v1266, %v1267
  %v1269 = vsel %vm1192, %v1243, 0.0
  %v1270 = vadd.f32 %v1268, %v1269
  %v1271 = vsel %vm1192, %v1244, 0.0
  %v1272 = vadd.f32 %v1270, %v1271
  %v1273 = vsel %vm1192, %v1245, 0.0
  %v1274 = vadd.f32 %v1272, %v1273
  %v1275 = vsel %vm1192, %v1246, 0.0
  %v1276 = vadd.f32 %v1274, %v1275
  %v1277 = vsel %vm1192, %v1247, 0.0
  %v1278 = vadd.f32 %v1276, %v1277
  %v1279 = vrot.slane %v1278, 4
  %v1280 = vadd.f32 %v1278, %v1279
  %v1281 = vrot.slane %v1280, 2
  %v1282 = vadd.f32 %v1280, %v1281
  %v1283 = vrot.slane %v1282, 1
  %v1284 = vadd.f32 %v1282, %v1283
  %1285 = vst.msk [vmem:[%s4] sm:$0x1] %vm1230, %v1284
  // Predicated region
  $region10: #{psmnet_forward.82} parent=0 // pred_check
    _
  $region11: #{psmnet_forward.82} parent=0 // pred_check_branch
    %1287 = sbr.rel (0) target = $region13
  $region12: #{psmnet_forward.82} parent=0 // pred_region
    _
  $region13: #{psmnet_forward.82} parent=0 // pred_fallthru
    _
  // Predicated region
  $region14: #{psmnet_forward.82} parent=0 // pred_check
    _
  $region15: #{psmnet_forward.82} parent=0 // pred_check_branch
    %1289 = sbr.rel (0) target = $region17
  $region16: #{psmnet_forward.82} parent=0 // pred_region
    _
  $region17: #{psmnet_forward.82} parent=0 // pred_fallthru
    _
  // Predicated region
  $region18: #{psmnet_forward.82} parent=0 // pred_check
    _
  $region19: #{psmnet_forward.82} parent=0 // pred_check_branch
    %1291 = sbr.rel (0) target = $region21
  $region20: #{psmnet_forward.82} parent=0 // pred_region
    _
  $region21: #{psmnet_forward.82} parent=0 // pred_fallthru
    _
  // Predicated region
  $region22: #{psmnet_forward.82} parent=0 // pred_check
    _
  $region23: #{psmnet_forward.82} parent=0 // pred_check_branch
    %1293 = sbr.rel (0) target = $region25
  $region24: #{psmnet_forward.82} parent=0 // pred_region
    _
  $region25: #{psmnet_forward.82} parent=0 // pred_fallthru
    _
  // Predicated region
  $region26: #{psmnet_forward.82} parent=0 // pred_check
    _
  $region27: #{psmnet_forward.82} parent=0 // pred_check_branch
    %1295 = sbr.rel (0) target = $region29
  $region28: #{psmnet_forward.82} parent=0 // pred_region
    _
  $region29: #{psmnet_forward.82} parent=0 // pred_fallthru
    _
  // Predicated region
  $region30: #{psmnet_forward.82} parent=0 // pred_check
    _
  $region31: #{psmnet_forward.82} parent=0 // pred_check_branch
    %1297 = sbr.rel (0) target = $region33
  $region32: #{psmnet_forward.82} parent=0 // pred_region
    _
  $region33: #{psmnet_forward.82} parent=0 // pred_fallthru
    _

// kernel: psmnet_forward.89
$region0: #{psmnet_forward.89}
  #allocation0 [shape = 'u32[]', space=smem, size = 0x4, offset = 0x4, fixed_abs, tag = 'smem constant byte address 0x4 - core index']
  #allocation1 [shape = 'u32[72,128]{1,0:T(1,128)}', space=vmem, size = 0x9000, scoped, tag = 'internal scratch']
  %s0 = inlined_call_operand.vmem [shape: bf16[64,128], index: 0, kind: input, shape index: {}]
  %s1 = inlined_call_operand.vmem [shape: f32[1,128], index: 1, kind: input, shape index: {}]
  %s2 = inlined_call_operand.vmem [shape: f32[1,128], index: 2, kind: input, shape index: {}]
  %s3 = inlined_call_operand.vmem [shape: bf16[64,128], index: 3, kind: output, shape index: {}]
  %s4 = sld [smem:[#allocation0]]
  $region22: #{psmnet_forward.89} parent=0
    _
  %s6 = ssub.s32 1, %s4
  %s7 = scalar_select 0, %s6, %s4
  // Predicated region
  $region2: #{psmnet_forward.89} parent=0 // pred_check
    _
  $region3: #{psmnet_forward.89} parent=0 // pred_check_branch
    %9 = sbr.rel (0) target = $region5
  $region4: #{psmnet_forward.89} parent=0 // pred_region
    _
  $region5: #{psmnet_forward.89} parent=0 // pred_fallthru
    _
  // Predicated region
  $region6: #{psmnet_forward.89} parent=0 // pred_check
    _
  $region7: #{psmnet_forward.89} parent=0 // pred_check_branch
    %11 = sbr.rel (0) target = $region9
  $region8: #{psmnet_forward.89} parent=0 // pred_region
    _
  $region9: #{psmnet_forward.89} parent=0 // pred_fallthru
    _
  // Predicated region
  $region10: #{psmnet_forward.89} parent=0 // pred_check
    _
  $region11: #{psmnet_forward.89} parent=0 // pred_check_branch
    %13 = sbr.rel (0) target = $region13
  $region12: #{psmnet_forward.89} parent=0 // pred_region
    _
  $region13: #{psmnet_forward.89} parent=0 // pred_fallthru
    _
  %v14 = vld [vmem:[%s0] sm:$0xf]
  %v15 = vld [vmem:[%s0 + $0x4] sm:$0xf]
  %v16 = vld [vmem:[%s0 + $0x8] sm:$0xf]
  %v17 = vld [vmem:[%s0 + $0xc] sm:$0xf]
  %v18 = vld [vmem:[%s0 + $0x10] sm:$0xf]
  %v19 = vld [vmem:[%s0 + $0x14] sm:$0xf]
  %v20 = vld [vmem:[%s0 + $0x18] sm:$0xf]
  %v21 = vld [vmem:[%s0 + $0x1c] sm:$0xf]
  %v22 = vunpack.c.l.bf16 %v14
  %v23 = vunpack.c.l.bf16 %v15
  %v24 = vunpack.c.l.bf16 %v16
  %v25 = vunpack.c.l.bf16 %v17
  %v26 = vunpack.c.l.bf16 %v18
  %v27 = vunpack.c.l.bf16 %v19
  %v28 = vunpack.c.l.bf16 %v20
  %v29 = vunpack.c.l.bf16 %v21
  %v30 = vld [vmem:[%s1] sm:$0x1]
  %v32 = vperm.slane %v30, 0
  %v34 = vmul.f32 %v22, %v32
  %v35 = vmul.f32 %v23, %v32
  %v36 = vmul.f32 %v24, %v32
  %v37 = vmul.f32 %v25, %v32
  %v38 = vmul.f32 %v26, %v32
  %v39 = vmul.f32 %v27, %v32
  %v40 = vmul.f32 %v28, %v32
  %v41 = vmul.f32 %v29, %v32
  %v42 = vld [vmem:[%s2] sm:$0x1]
  %v44 = vperm.slane %v42, 0
  %v46 = vadd.f32 %v34, %v44
  %v47 = vadd.f32 %v35, %v44
  %v48 = vadd.f32 %v36, %v44
  %v49 = vadd.f32 %v37, %v44
  %v50 = vadd.f32 %v38, %v44
  %v51 = vadd.f32 %v39, %v44
  %v52 = vadd.f32 %v40, %v44
  %v53 = vadd.f32 %v41, %v44
  %v54 = vmax.f32 %v46, 0.0
  %v55 = vmax.f32 %v47, 0.0
  %v56 = vmax.f32 %v48, 0.0
  %v57 = vmax.f32 %v49, 0.0
  %v58 = vmax.f32 %v50, 0.0
  %v59 = vmax.f32 %v51, 0.0
  %v60 = vmax.f32 %v52, 0.0
  %v61 = vmax.f32 %v53, 0.0
  %v62 = vpack.c.bf16 %v54, %v54
  %v63 = vpack.c.bf16 %v55, %v55
  %v64 = vpack.c.bf16 %v56, %v56
  %v65 = vpack.c.bf16 %v57, %v57
  %v66 = vpack.c.bf16 %v58, %v58
  %v67 = vpack.c.bf16 %v59, %v59
  %v68 = vpack.c.bf16 %v60, %v60
  %v69 = vpack.c.bf16 %v61, %v61
  %70 = vst [vmem:[%s3] sm:$0xf] %v62
  %71 = vst [vmem:[%s3 + $0x4] sm:$0xf] %v63
  %72 = vst [vmem:[%s3 + $0x8] sm:$0xf] %v64
  %73 = vst [vmem:[%s3 + $0xc] sm:$0xf] %v65
  %74 = vst [vmem:[%s3 + $0x10] sm:$0xf] %v66
  %75 = vst [vmem:[%s3 + $0x14] sm:$0xf] %v67
  %76 = vst [vmem:[%s3 + $0x18] sm:$0xf] %v68
  %77 = vst [vmem:[%s3 + $0x1c] sm:$0xf] %v69
  // Predicated region
  $region14: #{psmnet_forward.89} parent=0 // pred_check
    _
  $region15: #{psmnet_forward.89} parent=0 // pred_check_branch
    %79 = sbr.rel (0) target = $region17
  $region16: #{psmnet_forward.89} parent=0 // pred_region
    _
  $region17: #{psmnet_forward.89} parent=0 // pred_fallthru
    _
  // Predicated region
  $region18: #{psmnet_forward.89} parent=0 // pred_check
    _
  $region19: #{psmnet_forward.89} parent=0 // pred_check_branch
    %81 = sbr.rel (0) target = $region21
  $region20: #{psmnet_forward.89} parent=0 // pred_region
    _
  $region21: #{psmnet_forward.89} parent=0 // pred_fallthru
    _

// kernel: psmnet_forward.88
$region0: #{psmnet_forward.88}
  #allocation0 [shape = 'u32[]', space=smem, size = 0x4, offset = 0x4, fixed_abs, tag = 'smem constant byte address 0x4 - core index']
  #allocation1 [shape = 'u32[72,128]{1,0:T(1,128)}', space=vmem, size = 0x9000, scoped, tag = 'internal scratch']
  %s0 = inlined_call_operand.vmem [shape: bf16[128,864], index: 0, kind: input, shape index: {}]
  %s1 = inlined_call_operand.vmem [shape: bf16[864,64], index: 1, kind: input, shape index: {}]
  %s2 = inlined_call_operand.vmem [shape: bf16[128,64], index: 2, kind: output, shape index: {0}]
  %s3 = inlined_call_operand.vmem [shape: f32[1,1,64], index: 3, kind: output, shape index: {1}]
  %s4 = inlined_call_operand.vmem [shape: f32[1,1,64], index: 4, kind: output, shape index: {2}]
  %5 = xla_tuple %s2, %s3, %s4
  %s6 = sld [smem:[#allocation0]]
  $region34: #{psmnet_forward.88} parent=0
    _
  %s8 = ssub.s32 1, %s6
  %s9 = scalar_select 0, %s8, %s6
  // Predicated region
  $region2: #{psmnet_forward.88} parent=0 // pred_check
    _
  $region3: #{psmnet_forward.88} parent=0 // pred_check_branch
    %11 = sbr.rel (0) target = $region5
  $region4: #{psmnet_forward.88} parent=0 // pred_region
    _
  $region5: #{psmnet_forward.88} parent=0 // pred_fallthru
    _
  // Predicated region
  $region6: #{psmnet_forward.88} parent=0 // pred_check
    _
  $region7: #{psmnet_forward.88} parent=0 // pred_check_branch
    %13 = sbr.rel (0) target = $region9
  $region8: #{psmnet_forward.88} parent=0 // pred_region
    _
  $region9: #{psmnet_forward.88} parent=0 // pred_fallthru
    _
  %v15 = vld [vmem:[%s0] sm:$0xff]
  %v16 = vld [vmem:[%s0 + $0x8] sm:$0xff]
  %v17 = vld [vmem:[%s0 + $0x10] sm:$0xff]
  %v18 = vld [vmem:[%s0 + $0x18] sm:$0xf]
  %v19 = vld [vmem:[%s0 + $0x1c] sm:$0xff]
  %v20 = vld [vmem:[%s0 + $0x24] sm:$0xff]
  %v21 = vld [vmem:[%s0 + $0x2c] sm:$0xff]
  %v22 = vld [vmem:[%s0 + $0x34] sm:$0xf]
  %v23 = vld [vmem:[%s0 + $0x38] sm:$0xff]
  %v24 = vld [vmem:[%s0 + $0x40] sm:$0xff]
  %v25 = vld [vmem:[%s0 + $0x48] sm:$0xff]
  %v26 = vld [vmem:[%s0 + $0x50] sm:$0xf]
  %v27 = vld [vmem:[%s0 + $0x54] sm:$0xff]
  %v28 = vld [vmem:[%s0 + $0x5c] sm:$0xff]
  %v29 = vld [vmem:[%s0 + $0x64] sm:$0xff]
  %v30 = vld [vmem:[%s0 + $0x6c] sm:$0xf]
  %v31 = vld [vmem:[%s0 + $0x70] sm:$0xff]
  %v32 = vld [vmem:[%s0 + $0x78] sm:$0xff]
  %v33 = vld [vmem:[%s0 + $0x80] sm:$0xff]
  %v34 = vld [vmem:[%s0 + $0x88] sm:$0xf]
  %v35 = vld [vmem:[%s0 + $0x8c] sm:$0xff]
  %v36 = vld [vmem:[%s0 + $0x94] sm:$0xff]
  %v37 = vld [vmem:[%s0 + $0x9c] sm:$0xff]
  %v38 = vld [vmem:[%s0 + $0xa4] sm:$0xf]
  %v39 = vld [vmem:[%s0 + $0xa8] sm:$0xff]
  %v40 = vld [vmem:[%s0 + $0xb0] sm:$0xff]
  %v41 = vld [vmem:[%s0 + $0xb8] sm:$0xff]
  %v42 = vld [vmem:[%s0 + $0xc0] sm:$0xf]
  %v43 = vld [vmem:[%s0 + $0xc4] sm:$0xff]
  %v44 = vld [vmem:[%s0 + $0xcc] sm:$0xff]
  %v45 = vld [vmem:[%s0 + $0xd4] sm:$0xff]
  %v46 = vld [vmem:[%s0 + $0xdc] sm:$0xf]
  %v47 = vld [vmem:[%s0 + $0xe0] sm:$0xff]
  %v48 = vld [vmem:[%s0 + $0xe8] sm:$0xff]
  %v49 = vld [vmem:[%s0 + $0xf0] sm:$0xff]
  %v50 = vld [vmem:[%s0 + $0xf8] sm:$0xf]
  %v51 = vld [vmem:[%s0 + $0xfc] sm:$0xff]
  %v52 = vld [vmem:[%s0 + $0x104] sm:$0xff]
  %v53 = vld [vmem:[%s0 + $0x10c] sm:$0xff]
  %v54 = vld [vmem:[%s0 + $0x114] sm:$0xf]
  %v55 = vld [vmem:[%s0 + $0x118] sm:$0xff]
  %v56 = vld [vmem:[%s0 + $0x120] sm:$0xff]
  %v57 = vld [vmem:[%s0 + $0x128] sm:$0xff]
  %v58 = vld [vmem:[%s0 + $0x130] sm:$0xf]
  %v59 = vld [vmem:[%s0 + $0x134] sm:$0xff]
  %v60 = vld [vmem:[%s0 + $0x13c] sm:$0xff]
  %v61 = vld [vmem:[%s0 + $0x144] sm:$0xff]
  %v62 = vld [vmem:[%s0 + $0x14c] sm:$0xf]
  %v63 = vld [vmem:[%s0 + $0x150] sm:$0xff]
  %v64 = vld [vmem:[%s0 + $0x158] sm:$0xff]
  %v65 = vld [vmem:[%s0 + $0x160] sm:$0xff]
  %v66 = vld [vmem:[%s0 + $0x168] sm:$0xf]
  %v67 = vld [vmem:[%s0 + $0x16c] sm:$0xff]
  %v68 = vld [vmem:[%s0 + $0x174] sm:$0xff]
  %v69 = vld [vmem:[%s0 + $0x17c] sm:$0xff]
  %v70 = vld [vmem:[%s0 + $0x184] sm:$0xf]
  %v71 = vld [vmem:[%s0 + $0x188] sm:$0xff]
  %v72 = vld [vmem:[%s0 + $0x190] sm:$0xff]
  %v73 = vld [vmem:[%s0 + $0x198] sm:$0xff]
  %v74 = vld [vmem:[%s0 + $0x1a0] sm:$0xf]
  %v75 = vld [vmem:[%s0 + $0x1a4] sm:$0xff]
  %v76 = vld [vmem:[%s0 + $0x1ac] sm:$0xff]
  %v77 = vld [vmem:[%s0 + $0x1b4] sm:$0xff]
  %v78 = vld [vmem:[%s0 + $0x1bc] sm:$0xf]
  %v79 = vld [vmem:[%s1] sm:$0xf]
  %v80 = vld [vmem:[%s1 + $0x4] sm:$0xf]
  %v81 = vld [vmem:[%s1 + $0x8] sm:$0xf]
  %v82 = vld [vmem:[%s1 + $0xc] sm:$0xf]
  %v83 = vld [vmem:[%s1 + $0x10] sm:$0xf]
  %v84 = vld [vmem:[%s1 + $0x14] sm:$0xf]
  %v85 = vld [vmem:[%s1 + $0x18] sm:$0xf]
  %v86 = vld [vmem:[%s1 + $0x1c] sm:$0xf]
  %v87 = vld [vmem:[%s1 + $0x20] sm:$0xf]
  %v88 = vld [vmem:[%s1 + $0x24] sm:$0xf]
  %v89 = vld [vmem:[%s1 + $0x28] sm:$0xf]
  %v90 = vld [vmem:[%s1 + $0x2c] sm:$0xf]
  %v91 = vld [vmem:[%s1 + $0x30] sm:$0xf]
  %v92 = vld [vmem:[%s1 + $0x34] sm:$0xf]
  %v93 = vld [vmem:[%s1 + $0x38] sm:$0xf]
  %v94 = vld [vmem:[%s1 + $0x3c] sm:$0xf]
  %v95 = vld [vmem:[%s1 + $0x40] sm:$0xf]
  %v96 = vld [vmem:[%s1 + $0x44] sm:$0xf]
  %v97 = vld [vmem:[%s1 + $0x48] sm:$0xf]
  %v98 = vld [vmem:[%s1 + $0x4c] sm:$0xf]
  %v99 = vld [vmem:[%s1 + $0x50] sm:$0xf]
  %v100 = vld [vmem:[%s1 + $0x54] sm:$0xf]
  %v101 = vld [vmem:[%s1 + $0x58] sm:$0xf]
  %v102 = vld [vmem:[%s1 + $0x5c] sm:$0xf]
  %v103 = vld [vmem:[%s1 + $0x60] sm:$0xf]
  %v104 = vld [vmem:[%s1 + $0x64] sm:$0xf]
  %v105 = vld [vmem:[%s1 + $0x68] sm:$0xf]
  %v106 = vld [vmem:[%s1 + $0x6c] sm:$0xf]
  %v107 = vld [vmem:[%s1 + $0x70] sm:$0xf]
  %v108 = vld [vmem:[%s1 + $0x74] sm:$0xf]
  %v109 = vld [vmem:[%s1 + $0x78] sm:$0xf]
  %v110 = vld [vmem:[%s1 + $0x7c] sm:$0xf]
  %v111 = vld [vmem:[%s1 + $0x80] sm:$0xf]
  %v112 = vld [vmem:[%s1 + $0x84] sm:$0xf]
  %v113 = vld [vmem:[%s1 + $0x88] sm:$0xf]
  %v114 = vld [vmem:[%s1 + $0x8c] sm:$0xf]
  %v115 = vld [vmem:[%s1 + $0x90] sm:$0xf]
  %v116 = vld [vmem:[%s1 + $0x94] sm:$0xf]
  %v117 = vld [vmem:[%s1 + $0x98] sm:$0xf]
  %v118 = vld [vmem:[%s1 + $0x9c] sm:$0xf]
  %v119 = vld [vmem:[%s1 + $0xa0] sm:$0xf]
  %v120 = vld [vmem:[%s1 + $0xa4] sm:$0xf]
  %v121 = vld [vmem:[%s1 + $0xa8] sm:$0xf]
  %v122 = vld [vmem:[%s1 + $0xac] sm:$0xf]
  %v123 = vld [vmem:[%s1 + $0xb0] sm:$0xf]
  %v124 = vld [vmem:[%s1 + $0xb4] sm:$0xf]
  %v125 = vld [vmem:[%s1 + $0xb8] sm:$0xf]
  %v126 = vld [vmem:[%s1 + $0xbc] sm:$0xf]
  %v127 = vld [vmem:[%s1 + $0xc0] sm:$0xf]
  %v128 = vld [vmem:[%s1 + $0xc4] sm:$0xf]
  %v129 = vld [vmem:[%s1 + $0xc8] sm:$0xf]
  %v130 = vld [vmem:[%s1 + $0xcc] sm:$0xf]
  %v131 = vld [vmem:[%s1 + $0xd0] sm:$0xf]
  %v132 = vld [vmem:[%s1 + $0xd4] sm:$0xf]
  %v133 = vld [vmem:[%s1 + $0xd8] sm:$0xf]
  %v134 = vld [vmem:[%s1 + $0xdc] sm:$0xf]
  %v135 = vld [vmem:[%s1 + $0xe0] sm:$0xf]
  %v136 = vld [vmem:[%s1 + $0xe4] sm:$0xf]
  %v137 = vld [vmem:[%s1 + $0xe8] sm:$0xf]
  %v138 = vld [vmem:[%s1 + $0xec] sm:$0xf]
  %v139 = vld [vmem:[%s1 + $0xf0] sm:$0xf]
  %v140 = vld [vmem:[%s1 + $0xf4] sm:$0xf]
  %v141 = vld [vmem:[%s1 + $0xf8] sm:$0xf]
  %v142 = vld [vmem:[%s1 + $0xfc] sm:$0xf]
  %v143 = vld [vmem:[%s1 + $0x100] sm:$0xf]
  %v144 = vld [vmem:[%s1 + $0x104] sm:$0xf]
  %v145 = vld [vmem:[%s1 + $0x108] sm:$0xf]
  %v146 = vld [vmem:[%s1 + $0x10c] sm:$0xf]
  %v147 = vld [vmem:[%s1 + $0x110] sm:$0xf]
  %v148 = vld [vmem:[%s1 + $0x114] sm:$0xf]
  %v149 = vld [vmem:[%s1 + $0x118] sm:$0xf]
  %v150 = vld [vmem:[%s1 + $0x11c] sm:$0xf]
  %v151 = vld [vmem:[%s1 + $0x120] sm:$0xf]
  %v152 = vld [vmem:[%s1 + $0x124] sm:$0xf]
  %v153 = vld [vmem:[%s1 + $0x128] sm:$0xf]
  %v154 = vld [vmem:[%s1 + $0x12c] sm:$0xf]
  %v155 = vld [vmem:[%s1 + $0x130] sm:$0xf]
  %v156 = vld [vmem:[%s1 + $0x134] sm:$0xf]
  %v157 = vld [vmem:[%s1 + $0x138] sm:$0xf]
  %v158 = vld [vmem:[%s1 + $0x13c] sm:$0xf]
  %v159 = vld [vmem:[%s1 + $0x140] sm:$0xf]
  %v160 = vld [vmem:[%s1 + $0x144] sm:$0xf]
  %v161 = vld [vmem:[%s1 + $0x148] sm:$0xf]
  %v162 = vld [vmem:[%s1 + $0x14c] sm:$0xf]
  %v163 = vld [vmem:[%s1 + $0x150] sm:$0xf]
  %v164 = vld [vmem:[%s1 + $0x154] sm:$0xf]
  %v165 = vld [vmem:[%s1 + $0x158] sm:$0xf]
  %v166 = vld [vmem:[%s1 + $0x15c] sm:$0xf]
  %v167 = vld [vmem:[%s1 + $0x160] sm:$0xf]
  %v168 = vld [vmem:[%s1 + $0x164] sm:$0xf]
  %v169 = vld [vmem:[%s1 + $0x168] sm:$0xf]
  %v170 = vld [vmem:[%s1 + $0x16c] sm:$0xf]
  %v171 = vld [vmem:[%s1 + $0x170] sm:$0xf]
  %v172 = vld [vmem:[%s1 + $0x174] sm:$0xf]
  %v173 = vld [vmem:[%s1 + $0x178] sm:$0xf]
  %v174 = vld [vmem:[%s1 + $0x17c] sm:$0xf]
  %v175 = vld [vmem:[%s1 + $0x180] sm:$0xf]
  %v176 = vld [vmem:[%s1 + $0x184] sm:$0xf]
  %v177 = vld [vmem:[%s1 + $0x188] sm:$0xf]
  %v178 = vld [vmem:[%s1 + $0x18c] sm:$0xf]
  %v179 = vld [vmem:[%s1 + $0x190] sm:$0xf]
  %v180 = vld [vmem:[%s1 + $0x194] sm:$0xf]
  %v181 = vld [vmem:[%s1 + $0x198] sm:$0xf]
  %v182 = vld [vmem:[%s1 + $0x19c] sm:$0xf]
  %v183 = vld [vmem:[%s1 + $0x1a0] sm:$0xf]
  %v184 = vld [vmem:[%s1 + $0x1a4] sm:$0xf]
  %v185 = vld [vmem:[%s1 + $0x1a8] sm:$0xf]
  %v186 = vld [vmem:[%s1 + $0x1ac] sm:$0xf]
  %v251 = vunpack.c.l.b16 %v15
  %v252 = vunpack.c.h.b16 %v15
  %v253 = vunpack.c.l.b16 %v16
  %v254 = vunpack.c.h.b16 %v16
  %v255 = vunpack.c.l.b16 %v17
  %v256 = vunpack.c.h.b16 %v17
  %v257 = vunpack.c.l.b16 %v18
  %v258 = vunpack.c.l.b16 %v19
  %v259 = vunpack.c.h.b16 %v19
  %v260 = vunpack.c.l.b16 %v20
  %v261 = vunpack.c.h.b16 %v20
  %v262 = vunpack.c.l.b16 %v21
  %v263 = vunpack.c.h.b16 %v21
  %v264 = vunpack.c.l.b16 %v22
  %v265 = vunpack.c.l.b16 %v23
  %v266 = vunpack.c.h.b16 %v23
  %v267 = vunpack.c.l.b16 %v24
  %v268 = vunpack.c.h.b16 %v24
  %v269 = vunpack.c.l.b16 %v25
  %v270 = vunpack.c.h.b16 %v25
  %v271 = vunpack.c.l.b16 %v26
  %v272 = vunpack.c.l.b16 %v27
  %v273 = vunpack.c.h.b16 %v27
  %v274 = vunpack.c.l.b16 %v28
  %v275 = vunpack.c.h.b16 %v28
  %v276 = vunpack.c.l.b16 %v29
  %v277 = vunpack.c.h.b16 %v29
  %v278 = vunpack.c.l.b16 %v30
  %v279 = vunpack.c.l.b16 %v31
  %v280 = vunpack.c.h.b16 %v31
  %v281 = vunpack.c.l.b16 %v32
  %v282 = vunpack.c.h.b16 %v32
  %v283 = vunpack.c.l.b16 %v33
  %v284 = vunpack.c.h.b16 %v33
  %v285 = vunpack.c.l.b16 %v34
  %v286 = vunpack.c.l.b16 %v35
  %v287 = vunpack.c.h.b16 %v35
  %v288 = vunpack.c.l.b16 %v36
  %v289 = vunpack.c.h.b16 %v36
  %v290 = vunpack.c.l.b16 %v37
  %v291 = vunpack.c.h.b16 %v37
  %v292 = vunpack.c.l.b16 %v38
  %v293 = vunpack.c.l.b16 %v39
  %v294 = vunpack.c.h.b16 %v39
  %v295 = vunpack.c.l.b16 %v40
  %v296 = vunpack.c.h.b16 %v40
  %v297 = vunpack.c.l.b16 %v41
  %v298 = vunpack.c.h.b16 %v41
  %v299 = vunpack.c.l.b16 %v42
  %v300 = vunpack.c.l.b16 %v43
  %v301 = vunpack.c.h.b16 %v43
  %v302 = vunpack.c.l.b16 %v44
  %v303 = vunpack.c.h.b16 %v44
  %v304 = vunpack.c.l.b16 %v45
  %v305 = vunpack.c.h.b16 %v45
  %v306 = vunpack.c.l.b16 %v46
  %v307 = vunpack.c.l.b16 %v47
  %v308 = vunpack.c.h.b16 %v47
  %v309 = vunpack.c.l.b16 %v48
  %v310 = vunpack.c.h.b16 %v48
  %v311 = vunpack.c.l.b16 %v49
  %v312 = vunpack.c.h.b16 %v49
  %v313 = vunpack.c.l.b16 %v50
  %v314 = vunpack.c.l.b16 %v51
  %v315 = vunpack.c.h.b16 %v51
  %v316 = vunpack.c.l.b16 %v52
  %v317 = vunpack.c.h.b16 %v52
  %v318 = vunpack.c.l.b16 %v53
  %v319 = vunpack.c.h.b16 %v53
  %v320 = vunpack.c.l.b16 %v54
  %v321 = vunpack.c.l.b16 %v55
  %v322 = vunpack.c.h.b16 %v55
  %v323 = vunpack.c.l.b16 %v56
  %v324 = vunpack.c.h.b16 %v56
  %v325 = vunpack.c.l.b16 %v57
  %v326 = vunpack.c.h.b16 %v57
  %v327 = vunpack.c.l.b16 %v58
  %v328 = vunpack.c.l.b16 %v59
  %v329 = vunpack.c.h.b16 %v59
  %v330 = vunpack.c.l.b16 %v60
  %v331 = vunpack.c.h.b16 %v60
  %v332 = vunpack.c.l.b16 %v61
  %v333 = vunpack.c.h.b16 %v61
  %v334 = vunpack.c.l.b16 %v62
  %v335 = vunpack.c.l.b16 %v63
  %v336 = vunpack.c.h.b16 %v63
  %v337 = vunpack.c.l.b16 %v64
  %v338 = vunpack.c.h.b16 %v64
  %v339 = vunpack.c.l.b16 %v65
  %v340 = vunpack.c.h.b16 %v65
  %v341 = vunpack.c.l.b16 %v66
  %v342 = vunpack.c.l.b16 %v67
  %v343 = vunpack.c.h.b16 %v67
  %v344 = vunpack.c.l.b16 %v68
  %v345 = vunpack.c.h.b16 %v68
  %v346 = vunpack.c.l.b16 %v69
  %v347 = vunpack.c.h.b16 %v69
  %v348 = vunpack.c.l.b16 %v70
  %v349 = vunpack.c.l.b16 %v71
  %v350 = vunpack.c.h.b16 %v71
  %v351 = vunpack.c.l.b16 %v72
  %v352 = vunpack.c.h.b16 %v72
  %v353 = vunpack.c.l.b16 %v73
  %v354 = vunpack.c.h.b16 %v73
  %v355 = vunpack.c.l.b16 %v74
  %v356 = vunpack.c.l.b16 %v75
  %v357 = vunpack.c.h.b16 %v75
  %v358 = vunpack.c.l.b16 %v76
  %v359 = vunpack.c.h.b16 %v76
  %v360 = vunpack.c.l.b16 %v77
  %v361 = vunpack.c.h.b16 %v77
  %v362 = vunpack.c.l.b16 %v78
  %v363 = vpack.c.b16 %v258, %v251
  %v364 = vpack.c.b16 %v259, %v252
  %v365 = vpack.c.b16 %v260, %v253
  %v366 = vpack.c.b16 %v261, %v254
  %v367 = vpack.c.b16 %v262, %v255
  %v368 = vpack.c.b16 %v263, %v256
  %v369 = vpack.c.b16 %v264, %v257
  %v370 = vpack.c.b16 %v272, %v265
  %v371 = vpack.c.b16 %v273, %v266
  %v372 = vpack.c.b16 %v274, %v267
  %v373 = vpack.c.b16 %v275, %v268
  %v374 = vpack.c.b16 %v276, %v269
  %v375 = vpack.c.b16 %v277, %v270
  %v376 = vpack.c.b16 %v278, %v271
  %v377 = vpack.c.b16 %v286, %v279
  %v378 = vpack.c.b16 %v287, %v280
  %v379 = vpack.c.b16 %v288, %v281
  %v380 = vpack.c.b16 %v289, %v282
  %v381 = vpack.c.b16 %v290, %v283
  %v382 = vpack.c.b16 %v291, %v284
  %v383 = vpack.c.b16 %v292, %v285
  %v384 = vpack.c.b16 %v300, %v293
  %v385 = vpack.c.b16 %v301, %v294
  %v386 = vpack.c.b16 %v302, %v295
  %v387 = vpack.c.b16 %v303, %v296
  %v388 = vpack.c.b16 %v304, %v297
  %v389 = vpack.c.b16 %v305, %v298
  %v390 = vpack.c.b16 %v306, %v299
  %v391 = vpack.c.b16 %v314, %v307
  %v392 = vpack.c.b16 %v315, %v308
  %v393 = vpack.c.b16 %v316, %v309
  %v394 = vpack.c.b16 %v317, %v310
  %v395 = vpack.c.b16 %v318, %v311
  %v396 = vpack.c.b16 %v319, %v312
  %v397 = vpack.c.b16 %v320, %v313
  %v398 = vpack.c.b16 %v328, %v321
  %v399 = vpack.c.b16 %v329, %v322
  %v400 = vpack.c.b16 %v330, %v323
  %v401 = vpack.c.b16 %v331, %v324
  %v402 = vpack.c.b16 %v332, %v325
  %v403 = vpack.c.b16 %v333, %v326
  %v404 = vpack.c.b16 %v334, %v327
  %v405 = vpack.c.b16 %v342, %v335
  %v406 = vpack.c.b16 %v343, %v336
  %v407 = vpack.c.b16 %v344, %v337
  %v408 = vpack.c.b16 %v345, %v338
  %v409 = vpack.c.b16 %v346, %v339
  %v410 = vpack.c.b16 %v347, %v340
  %v411 = vpack.c.b16 %v348, %v341
  %v412 = vpack.c.b16 %v356, %v349
  %v413 = vpack.c.b16 %v357, %v350
  %v414 = vpack.c.b16 %v358, %v351
  %v415 = vpack.c.b16 %v359, %v352
  %v416 = vpack.c.b16 %v360, %v353
  %v417 = vpack.c.b16 %v361, %v354
  %v418 = vpack.c.b16 %v362, %v355
  %v575 = vunpack.c.l.b16 %v79
  %v576 = vunpack.c.l.b16 %v80
  %v577 = vunpack.c.l.b16 %v81
  %v578 = vunpack.c.l.b16 %v82
  %v579 = vunpack.c.l.b16 %v83
  %v580 = vunpack.c.l.b16 %v84
  %v581 = vunpack.c.l.b16 %v85
  %v582 = vunpack.c.l.b16 %v86
  %v583 = vunpack.c.l.b16 %v87
  %v584 = vunpack.c.l.b16 %v88
  %v585 = vunpack.c.l.b16 %v89
  %v586 = vunpack.c.l.b16 %v90
  %v587 = vunpack.c.l.b16 %v91
  %v588 = vunpack.c.l.b16 %v92
  %v589 = vunpack.c.l.b16 %v93
  %v590 = vunpack.c.l.b16 %v94
  %v591 = vunpack.c.l.b16 %v95
  %v592 = vunpack.c.l.b16 %v96
  %v593 = vunpack.c.l.b16 %v97
  %v594 = vunpack.c.l.b16 %v98
  %v595 = vunpack.c.l.b16 %v99
  %v596 = vunpack.c.l.b16 %v100
  %v597 = vunpack.c.l.b16 %v101
  %v598 = vunpack.c.l.b16 %v102
  %v599 = vunpack.c.l.b16 %v103
  %v600 = vunpack.c.l.b16 %v104
  %v601 = vunpack.c.l.b16 %v105
  %v602 = vunpack.c.l.b16 %v106
  %v603 = vunpack.c.l.b16 %v107
  %v604 = vunpack.c.l.b16 %v108
  %v605 = vunpack.c.l.b16 %v109
  %v606 = vunpack.c.l.b16 %v110
  %v607 = vunpack.c.l.b16 %v111
  %v608 = vunpack.c.l.b16 %v112
  %v609 = vunpack.c.l.b16 %v113
  %v610 = vunpack.c.l.b16 %v114
  %v611 = vunpack.c.l.b16 %v115
  %v612 = vunpack.c.l.b16 %v116
  %v613 = vunpack.c.l.b16 %v117
  %v614 = vunpack.c.l.b16 %v118
  %v615 = vunpack.c.l.b16 %v119
  %v616 = vunpack.c.l.b16 %v120
  %v617 = vunpack.c.l.b16 %v121
  %v618 = vunpack.c.l.b16 %v122
  %v619 = vunpack.c.l.b16 %v123
  %v620 = vunpack.c.l.b16 %v124
  %v621 = vunpack.c.l.b16 %v125
  %v622 = vunpack.c.l.b16 %v126
  %v623 = vunpack.c.l.b16 %v127
  %v624 = vunpack.c.l.b16 %v128
  %v625 = vunpack.c.l.b16 %v129
  %v626 = vunpack.c.l.b16 %v130
  %v627 = vunpack.c.l.b16 %v131
  %v628 = vunpack.c.l.b16 %v132
  %v629 = vunpack.c.l.b16 %v133
  %v630 = vunpack.c.l.b16 %v134
  %v631 = vunpack.c.l.b16 %v135
  %v632 = vunpack.c.l.b16 %v136
  %v633 = vunpack.c.l.b16 %v137
  %v634 = vunpack.c.l.b16 %v138
  %v635 = vunpack.c.l.b16 %v139
  %v636 = vunpack.c.l.b16 %v140
  %v637 = vunpack.c.l.b16 %v141
  %v638 = vunpack.c.l.b16 %v142
  %v639 = vunpack.c.l.b16 %v143
  %v640 = vunpack.c.l.b16 %v144
  %v641 = vunpack.c.l.b16 %v145
  %v642 = vunpack.c.l.b16 %v146
  %v643 = vunpack.c.l.b16 %v147
  %v644 = vunpack.c.l.b16 %v148
  %v645 = vunpack.c.l.b16 %v149
  %v646 = vunpack.c.l.b16 %v150
  %v647 = vunpack.c.l.b16 %v151
  %v648 = vunpack.c.l.b16 %v152
  %v649 = vunpack.c.l.b16 %v153
  %v650 = vunpack.c.l.b16 %v154
  %v651 = vunpack.c.l.b16 %v155
  %v652 = vunpack.c.l.b16 %v156
  %v653 = vunpack.c.l.b16 %v157
  %v654 = vunpack.c.l.b16 %v158
  %v655 = vunpack.c.l.b16 %v159
  %v656 = vunpack.c.l.b16 %v160
  %v657 = vunpack.c.l.b16 %v161
  %v658 = vunpack.c.l.b16 %v162
  %v659 = vunpack.c.l.b16 %v163
  %v660 = vunpack.c.l.b16 %v164
  %v661 = vunpack.c.l.b16 %v165
  %v662 = vunpack.c.l.b16 %v166
  %v663 = vunpack.c.l.b16 %v167
  %v664 = vunpack.c.l.b16 %v168
  %v665 = vunpack.c.l.b16 %v169
  %v666 = vunpack.c.l.b16 %v170
  %v667 = vunpack.c.l.b16 %v171
  %v668 = vunpack.c.l.b16 %v172
  %v669 = vunpack.c.l.b16 %v173
  %v670 = vunpack.c.l.b16 %v174
  %v671 = vunpack.c.l.b16 %v175
  %v672 = vunpack.c.l.b16 %v176
  %v673 = vunpack.c.l.b16 %v177
  %v674 = vunpack.c.l.b16 %v178
  %v675 = vunpack.c.l.b16 %v179
  %v676 = vunpack.c.l.b16 %v180
  %v677 = vunpack.c.l.b16 %v181
  %v678 = vunpack.c.l.b16 %v182
  %v679 = vunpack.c.l.b16 %v183
  %v680 = vunpack.c.l.b16 %v184
  %v681 = vunpack.c.l.b16 %v185
  %v682 = vunpack.c.l.b16 %v186
  %v683 = vpack.c.b16 %v576, %v575
  %v684 = vpack.c.b16 %v578, %v577
  %v685 = vpack.c.b16 %v580, %v579
  %v686 = vpack.c.b16 %v582, %v581
  %v687 = vpack.c.b16 %v584, %v583
  %v688 = vpack.c.b16 %v586, %v585
  %v689 = vpack.c.b16 %v588, %v587
  %v690 = vpack.c.b16 %v590, %v589
  %v691 = vpack.c.b16 %v592, %v591
  %v692 = vpack.c.b16 %v594, %v593
  %v693 = vpack.c.b16 %v596, %v595
  %v694 = vpack.c.b16 %v598, %v597
  %v695 = vpack.c.b16 %v600, %v599
  %v696 = vpack.c.b16 %v602, %v601
  %v697 = vpack.c.b16 %v604, %v603
  %v698 = vpack.c.b16 %v606, %v605
  %v699 = vpack.c.b16 %v608, %v607
  %v700 = vpack.c.b16 %v610, %v609
  %v701 = vpack.c.b16 %v612, %v611
  %v702 = vpack.c.b16 %v614, %v613
  %v703 = vpack.c.b16 %v616, %v615
  %v704 = vpack.c.b16 %v618, %v617
  %v705 = vpack.c.b16 %v620, %v619
  %v706 = vpack.c.b16 %v622, %v621
  %v707 = vpack.c.b16 %v624, %v623
  %v708 = vpack.c.b16 %v626, %v625
  %v709 = vpack.c.b16 %v628, %v627
  %v710 = vpack.c.b16 %v630, %v629
  %v711 = vpack.c.b16 %v632, %v631
  %v712 = vpack.c.b16 %v634, %v633
  %v713 = vpack.c.b16 %v636, %v635
  %v714 = vpack.c.b16 %v638, %v637
  %v715 = vpack.c.b16 %v640, %v639
  %v716 = vpack.c.b16 %v642, %v641
  %v717 = vpack.c.b16 %v644, %v643
  %v718 = vpack.c.b16 %v646, %v645
  %v719 = vpack.c.b16 %v648, %v647
  %v720 = vpack.c.b16 %v650, %v649
  %v721 = vpack.c.b16 %v652, %v651
  %v722 = vpack.c.b16 %v654, %v653
  %v723 = vpack.c.b16 %v656, %v655
  %v724 = vpack.c.b16 %v658, %v657
  %v725 = vpack.c.b16 %v660, %v659
  %v726 = vpack.c.b16 %v662, %v661
  %v727 = vpack.c.b16 %v664, %v663
  %v728 = vpack.c.b16 %v666, %v665
  %v729 = vpack.c.b16 %v668, %v667
  %v730 = vpack.c.b16 %v670, %v669
  %v731 = vpack.c.b16 %v672, %v671
  %v732 = vpack.c.b16 %v674, %v673
  %v733 = vpack.c.b16 %v676, %v675
  %v734 = vpack.c.b16 %v678, %v677
  %v735 = vpack.c.b16 %v680, %v679
  %v736 = vpack.c.b16 %v682, %v681
  %vm791 = vcmask 785408
  %v793 = vsel %vm791, %v369, 0
  %v796 = vsel %vm791, %v376, 0
  %v799 = vsel %vm791, %v383, 0
  %v802 = vsel %vm791, %v390, 0
  %v805 = vsel %vm791, %v397, 0
  %v808 = vsel %vm791, %v404, 0
  %v811 = vsel %vm791, %v411, 0
  %v814 = vsel %vm791, %v418, 0
  %816 = vmatpush.bf16.msra.mxu0 %v690
  %817 = vmatpush.bf16.msra.mxu0 %v689
  %818 = vmatpush.bf16.msra.mxu0 %v688
  %819 = vmatpush.bf16.msra.mxu0 %v687
  %820 = vmatpush.bf16.msra.mxu0 %v686
  %821 = vmatpush.bf16.msra.mxu0 %v685
  %822 = vmatpush.bf16.msra.mxu0 %v684
  %823 = vmatpush.bf16.msra.mxu0 %v683
  %824 = vmatmul.bf16.gmra.mxu0 %v363
  %v825 = vpop.f32.mrf.mxu0
  %v826 = vadd.f32 0.0, %v825
  %v827 = vpop.f32.mrf.mxu0
  %v828 = vadd.f32 0.0, %v827
  %829 = vmatmul.bf16.gmra.mxu0 %v370
  %v830 = vpop.f32.mrf.mxu0
  %v831 = vadd.f32 0.0, %v830
  %v832 = vpop.f32.mrf.mxu0
  %v833 = vadd.f32 0.0, %v832
  %834 = vmatmul.bf16.gmra.mxu0 %v377
  %v835 = vpop.f32.mrf.mxu0
  %v836 = vadd.f32 0.0, %v835
  %v837 = vpop.f32.mrf.mxu0
  %v838 = vadd.f32 0.0, %v837
  %839 = vmatmul.bf16.gmra.mxu0 %v384
  %v840 = vpop.f32.mrf.mxu0
  %v841 = vadd.f32 0.0, %v840
  %v842 = vpop.f32.mrf.mxu0
  %v843 = vadd.f32 0.0, %v842
  %844 = vmatmul.bf16.gmra.mxu0 %v391
  %v845 = vpop.f32.mrf.mxu0
  %v846 = vadd.f32 0.0, %v845
  %v847 = vpop.f32.mrf.mxu0
  %v848 = vadd.f32 0.0, %v847
  %849 = vmatmul.bf16.gmra.mxu0 %v398
  %v850 = vpop.f32.mrf.mxu0
  %v851 = vadd.f32 0.0, %v850
  %v852 = vpop.f32.mrf.mxu0
  %v853 = vadd.f32 0.0, %v852
  %854 = vmatmul.bf16.gmra.mxu0 %v405
  %v855 = vpop.f32.mrf.mxu0
  %v856 = vadd.f32 0.0, %v855
  %v857 = vpop.f32.mrf.mxu0
  %v858 = vadd.f32 0.0, %v857
  %859 = vmatmul.bf16.gmra.mxu0 %v412
  %v860 = vpop.f32.mrf.mxu0
  %v861 = vadd.f32 0.0, %v860
  %v862 = vpop.f32.mrf.mxu0
  %v863 = vadd.f32 0.0, %v862
  %864 = vdwg.mxu0
  %865 = vmatpush.bf16.msra.mxu0 %v698
  %866 = vmatpush.bf16.msra.mxu0 %v697
  %867 = vmatpush.bf16.msra.mxu0 %v696
  %868 = vmatpush.bf16.msra.mxu0 %v695
  %869 = vmatpush.bf16.msra.mxu0 %v694
  %870 = vmatpush.bf16.msra.mxu0 %v693
  %871 = vmatpush.bf16.msra.mxu0 %v692
  %872 = vmatpush.bf16.msra.mxu0 %v691
  %873 = vmatmul.bf16.gmra.mxu0 %v364
  %v874 = vpop.f32.mrf.mxu0
  %v875 = vadd.f32 %v826, %v874
  %v876 = vpop.f32.mrf.mxu0
  %v877 = vadd.f32 %v828, %v876
  %878 = vmatmul.bf16.gmra.mxu0 %v371
  %v879 = vpop.f32.mrf.mxu0
  %v880 = vadd.f32 %v831, %v879
  %v881 = vpop.f32.mrf.mxu0
  %v882 = vadd.f32 %v833, %v881
  %883 = vmatmul.bf16.gmra.mxu0 %v378
  %v884 = vpop.f32.mrf.mxu0
  %v885 = vadd.f32 %v836, %v884
  %v886 = vpop.f32.mrf.mxu0
  %v887 = vadd.f32 %v838, %v886
  %888 = vmatmul.bf16.gmra.mxu0 %v385
  %v889 = vpop.f32.mrf.mxu0
  %v890 = vadd.f32 %v841, %v889
  %v891 = vpop.f32.mrf.mxu0
  %v892 = vadd.f32 %v843, %v891
  %893 = vmatmul.bf16.gmra.mxu0 %v392
  %v894 = vpop.f32.mrf.mxu0
  %v895 = vadd.f32 %v846, %v894
  %v896 = vpop.f32.mrf.mxu0
  %v897 = vadd.f32 %v848, %v896
  %898 = vmatmul.bf16.gmra.mxu0 %v399
  %v899 = vpop.f32.mrf.mxu0
  %v900 = vadd.f32 %v851, %v899
  %v901 = vpop.f32.mrf.mxu0
  %v902 = vadd.f32 %v853, %v901
  %903 = vmatmul.bf16.gmra.mxu0 %v406
  %v904 = vpop.f32.mrf.mxu0
  %v905 = vadd.f32 %v856, %v904
  %v906 = vpop.f32.mrf.mxu0
  %v907 = vadd.f32 %v858, %v906
  %908 = vmatmul.bf16.gmra.mxu0 %v413
  %v909 = vpop.f32.mrf.mxu0
  %v910 = vadd.f32 %v861, %v909
  %v911 = vpop.f32.mrf.mxu0
  %v912 = vadd.f32 %v863, %v911
  %913 = vdwg.mxu0
  %914 = vmatpush.bf16.msra.mxu0 %v706
  %915 = vmatpush.bf16.msra.mxu0 %v705
  %916 = vmatpush.bf16.msra.mxu0 %v704
  %917 = vmatpush.bf16.msra.mxu0 %v703
  %918 = vmatpush.bf16.msra.mxu0 %v702
  %919 = vmatpush.bf16.msra.mxu0 %v701
  %920 = vmatpush.bf16.msra.mxu0 %v700
  %921 = vmatpush.bf16.msra.mxu0 %v699
  %922 = vmatmul.bf16.gmra.mxu0 %v365
  %v923 = vpop.f32.mrf.mxu0
  %v924 = vadd.f32 %v875, %v923
  %v925 = vpop.f32.mrf.mxu0
  %v926 = vadd.f32 %v877, %v925
  %927 = vmatmul.bf16.gmra.mxu0 %v372
  %v928 = vpop.f32.mrf.mxu0
  %v929 = vadd.f32 %v880, %v928
  %v930 = vpop.f32.mrf.mxu0
  %v931 = vadd.f32 %v882, %v930
  %932 = vmatmul.bf16.gmra.mxu0 %v379
  %v933 = vpop.f32.mrf.mxu0
  %v934 = vadd.f32 %v885, %v933
  %v935 = vpop.f32.mrf.mxu0
  %v936 = vadd.f32 %v887, %v935
  %937 = vmatmul.bf16.gmra.mxu0 %v386
  %v938 = vpop.f32.mrf.mxu0
  %v939 = vadd.f32 %v890, %v938
  %v940 = vpop.f32.mrf.mxu0
  %v941 = vadd.f32 %v892, %v940
  %942 = vmatmul.bf16.gmra.mxu0 %v393
  %v943 = vpop.f32.mrf.mxu0
  %v944 = vadd.f32 %v895, %v943
  %v945 = vpop.f32.mrf.mxu0
  %v946 = vadd.f32 %v897, %v945
  %947 = vmatmul.bf16.gmra.mxu0 %v400
  %v948 = vpop.f32.mrf.mxu0
  %v949 = vadd.f32 %v900, %v948
  %v950 = vpop.f32.mrf.mxu0
  %v951 = vadd.f32 %v902, %v950
  %952 = vmatmul.bf16.gmra.mxu0 %v407
  %v953 = vpop.f32.mrf.mxu0
  %v954 = vadd.f32 %v905, %v953
  %v955 = vpop.f32.mrf.mxu0
  %v956 = vadd.f32 %v907, %v955
  %957 = vmatmul.bf16.gmra.mxu0 %v414
  %v958 = vpop.f32.mrf.mxu0
  %v959 = vadd.f32 %v910, %v958
  %v960 = vpop.f32.mrf.mxu0
  %v961 = vadd.f32 %v912, %v960
  %962 = vdwg.mxu0
  %963 = vmatpush.bf16.msra.mxu0 %v714
  %964 = vmatpush.bf16.msra.mxu0 %v713
  %965 = vmatpush.bf16.msra.mxu0 %v712
  %966 = vmatpush.bf16.msra.mxu0 %v711
  %967 = vmatpush.bf16.msra.mxu0 %v710
  %968 = vmatpush.bf16.msra.mxu0 %v709
  %969 = vmatpush.bf16.msra.mxu0 %v708
  %970 = vmatpush.bf16.msra.mxu0 %v707
  %971 = vmatmul.bf16.gmra.mxu0 %v366
  %v972 = vpop.f32.mrf.mxu0
  %v973 = vadd.f32 %v924, %v972
  %v974 = vpop.f32.mrf.mxu0
  %v975 = vadd.f32 %v926, %v974
  %976 = vmatmul.bf16.gmra.mxu0 %v373
  %v977 = vpop.f32.mrf.mxu0
  %v978 = vadd.f32 %v929, %v977
  %v979 = vpop.f32.mrf.mxu0
  %v980 = vadd.f32 %v931, %v979
  %981 = vmatmul.bf16.gmra.mxu0 %v380
  %v982 = vpop.f32.mrf.mxu0
  %v983 = vadd.f32 %v934, %v982
  %v984 = vpop.f32.mrf.mxu0
  %v985 = vadd.f32 %v936, %v984
  %986 = vmatmul.bf16.gmra.mxu0 %v387
  %v987 = vpop.f32.mrf.mxu0
  %v988 = vadd.f32 %v939, %v987
  %v989 = vpop.f32.mrf.mxu0
  %v990 = vadd.f32 %v941, %v989
  %991 = vmatmul.bf16.gmra.mxu0 %v394
  %v992 = vpop.f32.mrf.mxu0
  %v993 = vadd.f32 %v944, %v992
  %v994 = vpop.f32.mrf.mxu0
  %v995 = vadd.f32 %v946, %v994
  %996 = vmatmul.bf16.gmra.mxu0 %v401
  %v997 = vpop.f32.mrf.mxu0
  %v998 = vadd.f32 %v949, %v997
  %v999 = vpop.f32.mrf.mxu0
  %v1000 = vadd.f32 %v951, %v999
  %1001 = vmatmul.bf16.gmra.mxu0 %v408
  %v1002 = vpop.f32.mrf.mxu0
  %v1003 = vadd.f32 %v954, %v1002
  %v1004 = vpop.f32.mrf.mxu0
  %v1005 = vadd.f32 %v956, %v1004
  %1006 = vmatmul.bf16.gmra.mxu0 %v415
  %v1007 = vpop.f32.mrf.mxu0
  %v1008 = vadd.f32 %v959, %v1007
  %v1009 = vpop.f32.mrf.mxu0
  %v1010 = vadd.f32 %v961, %v1009
  %1011 = vdwg.mxu0
  %1012 = vmatpush.bf16.msra.mxu0 %v722
  %1013 = vmatpush.bf16.msra.mxu0 %v721
  %1014 = vmatpush.bf16.msra.mxu0 %v720
  %1015 = vmatpush.bf16.msra.mxu0 %v719
  %1016 = vmatpush.bf16.msra.mxu0 %v718
  %1017 = vmatpush.bf16.msra.mxu0 %v717
  %1018 = vmatpush.bf16.msra.mxu0 %v716
  %1019 = vmatpush.bf16.msra.mxu0 %v715
  %1020 = vmatmul.bf16.gmra.mxu0 %v367
  %v1021 = vpop.f32.mrf.mxu0
  %v1022 = vadd.f32 %v973, %v1021
  %v1023 = vpop.f32.mrf.mxu0
  %v1024 = vadd.f32 %v975, %v1023
  %1025 = vmatmul.bf16.gmra.mxu0 %v374
  %v1026 = vpop.f32.mrf.mxu0
  %v1027 = vadd.f32 %v978, %v1026
  %v1028 = vpop.f32.mrf.mxu0
  %v1029 = vadd.f32 %v980, %v1028
  %1030 = vmatmul.bf16.gmra.mxu0 %v381
  %v1031 = vpop.f32.mrf.mxu0
  %v1032 = vadd.f32 %v983, %v1031
  %v1033 = vpop.f32.mrf.mxu0
  %v1034 = vadd.f32 %v985, %v1033
  %1035 = vmatmul.bf16.gmra.mxu0 %v388
  %v1036 = vpop.f32.mrf.mxu0
  %v1037 = vadd.f32 %v988, %v1036
  %v1038 = vpop.f32.mrf.mxu0
  %v1039 = vadd.f32 %v990, %v1038
  %1040 = vmatmul.bf16.gmra.mxu0 %v395
  %v1041 = vpop.f32.mrf.mxu0
  %v1042 = vadd.f32 %v993, %v1041
  %v1043 = vpop.f32.mrf.mxu0
  %v1044 = vadd.f32 %v995, %v1043
  %1045 = vmatmul.bf16.gmra.mxu0 %v402
  %v1046 = vpop.f32.mrf.mxu0
  %v1047 = vadd.f32 %v998, %v1046
  %v1048 = vpop.f32.mrf.mxu0
  %v1049 = vadd.f32 %v1000, %v1048
  %1050 = vmatmul.bf16.gmra.mxu0 %v409
  %v1051 = vpop.f32.mrf.mxu0
  %v1052 = vadd.f32 %v1003, %v1051
  %v1053 = vpop.f32.mrf.mxu0
  %v1054 = vadd.f32 %v1005, %v1053
  %1055 = vmatmul.bf16.gmra.mxu0 %v416
  %v1056 = vpop.f32.mrf.mxu0
  %v1057 = vadd.f32 %v1008, %v1056
  %v1058 = vpop.f32.mrf.mxu0
  %v1059 = vadd.f32 %v1010, %v1058
  %1060 = vdwg.mxu0
  %1061 = vmatpush.bf16.msra.mxu0 %v730
  %1062 = vmatpush.bf16.msra.mxu0 %v729
  %1063 = vmatpush.bf16.msra.mxu0 %v728
  %1064 = vmatpush.bf16.msra.mxu0 %v727
  %1065 = vmatpush.bf16.msra.mxu0 %v726
  %1066 = vmatpush.bf16.msra.mxu0 %v725
  %1067 = vmatpush.bf16.msra.mxu0 %v724
  %1068 = vmatpush.bf16.msra.mxu0 %v723
  %1069 = vmatmul.bf16.gmra.mxu0 %v368
  %v1070 = vpop.f32.mrf.mxu0
  %v1071 = vadd.f32 %v1022, %v1070
  %v1072 = vpop.f32.mrf.mxu0
  %v1073 = vadd.f32 %v1024, %v1072
  %1074 = vmatmul.bf16.gmra.mxu0 %v375
  %v1075 = vpop.f32.mrf.mxu0
  %v1076 = vadd.f32 %v1027, %v1075
  %v1077 = vpop.f32.mrf.mxu0
  %v1078 = vadd.f32 %v1029, %v1077
  %1079 = vmatmul.bf16.gmra.mxu0 %v382
  %v1080 = vpop.f32.mrf.mxu0
  %v1081 = vadd.f32 %v1032, %v1080
  %v1082 = vpop.f32.mrf.mxu0
  %v1083 = vadd.f32 %v1034, %v1082
  %1084 = vmatmul.bf16.gmra.mxu0 %v389
  %v1085 = vpop.f32.mrf.mxu0
  %v1086 = vadd.f32 %v1037, %v1085
  %v1087 = vpop.f32.mrf.mxu0
  %v1088 = vadd.f32 %v1039, %v1087
  %1089 = vmatmul.bf16.gmra.mxu0 %v396
  %v1090 = vpop.f32.mrf.mxu0
  %v1091 = vadd.f32 %v1042, %v1090
  %v1092 = vpop.f32.mrf.mxu0
  %v1093 = vadd.f32 %v1044, %v1092
  %1094 = vmatmul.bf16.gmra.mxu0 %v403
  %v1095 = vpop.f32.mrf.mxu0
  %v1096 = vadd.f32 %v1047, %v1095
  %v1097 = vpop.f32.mrf.mxu0
  %v1098 = vadd.f32 %v1049, %v1097
  %1099 = vmatmul.bf16.gmra.mxu0 %v410
  %v1100 = vpop.f32.mrf.mxu0
  %v1101 = vadd.f32 %v1052, %v1100
  %v1102 = vpop.f32.mrf.mxu0
  %v1103 = vadd.f32 %v1054, %v1102
  %1104 = vmatmul.bf16.gmra.mxu0 %v417
  %v1105 = vpop.f32.mrf.mxu0
  %v1106 = vadd.f32 %v1057, %v1105
  %v1107 = vpop.f32.mrf.mxu0
  %v1108 = vadd.f32 %v1059, %v1107
  %1109 = vdwg.mxu0
  %1110 = vmatpush.bf16.msra.mxu0 0
  %1111 = vmatpush.bf16.msra.mxu0 0
  %1112 = vmatpush.bf16.msra.mxu0 %v736
  %1113 = vmatpush.bf16.msra.mxu0 %v735
  %1114 = vmatpush.bf16.msra.mxu0 %v734
  %1115 = vmatpush.bf16.msra.mxu0 %v733
  %1116 = vmatpush.bf16.msra.mxu0 %v732
  %1117 = vmatpush.bf16.msra.mxu0 %v731
  %1118 = vmatmul.bf16.gmra.mxu0 %v793
  %v1119 = vpop.f32.mrf.mxu0
  %v1120 = vadd.f32 %v1071, %v1119
  %v1121 = vpop.f32.mrf.mxu0
  %v1122 = vadd.f32 %v1073, %v1121
  %1123 = vmatmul.bf16.gmra.mxu0 %v796
  %v1124 = vpop.f32.mrf.mxu0
  %v1125 = vadd.f32 %v1076, %v1124
  %v1126 = vpop.f32.mrf.mxu0
  %v1127 = vadd.f32 %v1078, %v1126
  %1128 = vmatmul.bf16.gmra.mxu0 %v799
  %v1129 = vpop.f32.mrf.mxu0
  %v1130 = vadd.f32 %v1081, %v1129
  %v1131 = vpop.f32.mrf.mxu0
  %v1132 = vadd.f32 %v1083, %v1131
  %1133 = vmatmul.bf16.gmra.mxu0 %v802
  %v1134 = vpop.f32.mrf.mxu0
  %v1135 = vadd.f32 %v1086, %v1134
  %v1136 = vpop.f32.mrf.mxu0
  %v1137 = vadd.f32 %v1088, %v1136
  %1138 = vmatmul.bf16.gmra.mxu0 %v805
  %v1139 = vpop.f32.mrf.mxu0
  %v1140 = vadd.f32 %v1091, %v1139
  %v1141 = vpop.f32.mrf.mxu0
  %v1142 = vadd.f32 %v1093, %v1141
  %1143 = vmatmul.bf16.gmra.mxu0 %v808
  %v1144 = vpop.f32.mrf.mxu0
  %v1145 = vadd.f32 %v1096, %v1144
  %v1146 = vpop.f32.mrf.mxu0
  %v1147 = vadd.f32 %v1098, %v1146
  %1148 = vmatmul.bf16.gmra.mxu0 %v811
  %v1149 = vpop.f32.mrf.mxu0
  %v1150 = vadd.f32 %v1101, %v1149
  %v1151 = vpop.f32.mrf.mxu0
  %v1152 = vadd.f32 %v1103, %v1151
  %1153 = vmatmul.bf16.gmra.mxu0 %v814
  %v1154 = vpop.f32.mrf.mxu0
  %v1155 = vadd.f32 %v1106, %v1154
  %v1156 = vpop.f32.mrf.mxu0
  %v1157 = vadd.f32 %v1108, %v1156
  %1158 = vdwg.mxu0
  %v1159 = vpack.c.bf16 %v1120, %v1120
  %v1160 = vpack.c.bf16 %v1122, %v1122
  %v1161 = vpack.c.bf16 %v1125, %v1125
  %v1162 = vpack.c.bf16 %v1127, %v1127
  %v1163 = vpack.c.bf16 %v1130, %v1130
  %v1164 = vpack.c.bf16 %v1132, %v1132
  %v1165 = vpack.c.bf16 %v1135, %v1135
  %v1166 = vpack.c.bf16 %v1137, %v1137
  %v1167 = vpack.c.bf16 %v1140, %v1140
  %v1168 = vpack.c.bf16 %v1142, %v1142
  %v1169 = vpack.c.bf16 %v1145, %v1145
  %v1170 = vpack.c.bf16 %v1147, %v1147
  %v1171 = vpack.c.bf16 %v1150, %v1150
  %v1172 = vpack.c.bf16 %v1152, %v1152
  %v1173 = vpack.c.bf16 %v1155, %v1155
  %v1174 = vpack.c.bf16 %v1157, %v1157
  %vm1175 = vcmask 519168
  %1176 = vst.msk [vmem:[%s2] sm:$0xf] %vm1175, %v1159
  %1177 = vst.msk [vmem:[%s2 + $0x4] sm:$0xf] %vm1175, %v1160
  %1178 = vst.msk [vmem:[%s2 + $0x8] sm:$0xf] %vm1175, %v1161
  %1179 = vst.msk [vmem:[%s2 + $0xc] sm:$0xf] %vm1175, %v1162
  %1180 = vst.msk [vmem:[%s2 + $0x10] sm:$0xf] %vm1175, %v1163
  %1181 = vst.msk [vmem:[%s2 + $0x14] sm:$0xf] %vm1175, %v1164
  %1182 = vst.msk [vmem:[%s2 + $0x18] sm:$0xf] %vm1175, %v1165
  %1183 = vst.msk [vmem:[%s2 + $0x1c] sm:$0xf] %vm1175, %v1166
  %1184 = vst.msk [vmem:[%s2 + $0x20] sm:$0xf] %vm1175, %v1167
  %1185 = vst.msk [vmem:[%s2 + $0x24] sm:$0xf] %vm1175, %v1168
  %1186 = vst.msk [vmem:[%s2 + $0x28] sm:$0xf] %vm1175, %v1169
  %1187 = vst.msk [vmem:[%s2 + $0x2c] sm:$0xf] %vm1175, %v1170
  %1188 = vst.msk [vmem:[%s2 + $0x30] sm:$0xf] %vm1175, %v1171
  %1189 = vst.msk [vmem:[%s2 + $0x34] sm:$0xf] %vm1175, %v1172
  %1190 = vst.msk [vmem:[%s2 + $0x38] sm:$0xf] %vm1175, %v1173
  %1191 = vst.msk [vmem:[%s2 + $0x3c] sm:$0xf] %vm1175, %v1174
  %vm1192 = vcmask 523264
  %v1193 = vsel %vm1192, %v1120, 0.0
  %v1194 = vsel %vm1192, %v1122, 0.0
  %v1195 = vadd.f32 %v1193, %v1194
  %v1196 = vsel %vm1192, %v1125, 0.0
  %v1197 = vadd.f32 %v1195, %v1196
  %v1198 = vsel %vm1192, %v1127, 0.0
  %v1199 = vadd.f32 %v1197, %v1198
  %v1200 = vsel %vm1192, %v1130, 0.0
  %v1201 = vadd.f32 %v1199, %v1200
  %v1202 = vsel %vm1192, %v1132, 0.0
  %v1203 = vadd.f32 %v1201, %v1202
  %v1204 = vsel %vm1192, %v1135, 0.0
  %v1205 = vadd.f32 %v1203, %v1204
  %v1206 = vsel %vm1192, %v1137, 0.0
  %v1207 = vadd.f32 %v1205, %v1206
  %v1208 = vsel %vm1192, %v1140, 0.0
  %v1209 = vadd.f32 %v1207, %v1208
  %v1210 = vsel %vm1192, %v1142, 0.0
  %v1211 = vadd.f32 %v1209, %v1210
  %v1212 = vsel %vm1192, %v1145, 0.0
  %v1213 = vadd.f32 %v1211, %v1212
  %v1214 = vsel %vm1192, %v1147, 0.0
  %v1215 = vadd.f32 %v1213, %v1214
  %v1216 = vsel %vm1192, %v1150, 0.0
  %v1217 = vadd.f32 %v1215, %v1216
  %v1218 = vsel %vm1192, %v1152, 0.0
  %v1219 = vadd.f32 %v1217, %v1218
  %v1220 = vsel %vm1192, %v1155, 0.0
  %v1221 = vadd.f32 %v1219, %v1220
  %v1222 = vsel %vm1192, %v1157, 0.0
  %v1223 = vadd.f32 %v1221, %v1222
  %v1224 = vrot.slane %v1223, 4
  %v1225 = vadd.f32 %v1223, %v1224
  %v1226 = vrot.slane %v1225, 2
  %v1227 = vadd.f32 %v1225, %v1226
  %v1228 = vrot.slane %v1227, 1
  %v1229 = vadd.f32 %v1227, %v1228
  %vm1230 = vcmask 516096
  %1231 = vst.msk [vmem:[%s3] sm:$0x1] %vm1230, %v1229
  %v1232 = vmul.f32 %v1120, %v1120
  %v1233 = vmul.f32 %v1122, %v1122
  %v1234 = vmul.f32 %v1125, %v1125
  %v1235 = vmul.f32 %v1127, %v1127
  %v1236 = vmul.f32 %v1130, %v1130
  %v1237 = vmul.f32 %v1132, %v1132
  %v1238 = vmul.f32 %v1135, %v1135
  %v1239 = vmul.f32 %v1137, %v1137
  %v1240 = vmul.f32 %v1140, %v1140
  %v1241 = vmul.f32 %v1142, %v1142
  %v1242 = vmul.f32 %v1145, %v1145
  %v1243 = vmul.f32 %v1147, %v1147
  %v1244 = vmul.f32 %v1150, %v1150
  %v1245 = vmul.f32 %v1152, %v1152
  %v1246 = vmul.f32 %v1155, %v1155
  %v1247 = vmul.f32 %v1157, %v1157
  %v1248 = vsel %vm1192, %v1232, 0.0
  %v1249 = vsel %vm1192, %v1233, 0.0
  %v1250 = vadd.f32 %v1248, %v1249
  %v1251 = vsel %vm1192, %v1234, 0.0
  %v1252 = vadd.f32 %v1250, %v1251
  %v1253 = vsel %vm1192, %v1235, 0.0
  %v1254 = vadd.f32 %v1252, %v1253
  %v1255 = vsel %vm1192, %v1236, 0.0
  %v1256 = vadd.f32 %v1254, %v1255
  %v1257 = vsel %vm1192, %v1237, 0.0
  %v1258 = vadd.f32 %v1256, %v1257
  %v1259 = vsel %vm1192, %v1238, 0.0
  %v1260 = vadd.f32 %v1258, %v1259
  %v1261 = vsel %vm1192, %v1239, 0.0
  %v1262 = vadd.f32 %v1260, %v1261
  %v1263 = vsel %vm1192, %v1240, 0.0
  %v1264 = vadd.f32 %v1262, %v1263
  %v1265 = vsel %vm1192, %v1241, 0.0
  %v1266 = vadd.f32 %v1264, %v1265
  %v1267 = vsel %vm1192, %v1242, 0.0
  %v1268 = vadd.f32 %v1266, %v1267
  %v1269 = vsel %vm1192, %v1243, 0.0
  %v1270 = vadd.f32 %v1268, %v1269
  %v1271 = vsel %vm1192, %v1244, 0.0
  %v1272 = vadd.f32 %v1270, %v1271
  %v1273 = vsel %vm1192, %v1245, 0.0
  %v1274 = vadd.f32 %v1272, %v1273
  %v1275 = vsel %vm1192, %v1246, 0.0
  %v1276 = vadd.f32 %v1274, %v1275
  %v1277 = vsel %vm1192, %v1247, 0.0
  %v1278 = vadd.f32 %v1276, %v1277
  %v1279 = vrot.slane %v1278, 4
  %v1280 = vadd.f32 %v1278, %v1279
  %v1281 = vrot.slane %v1280, 2
  %v1282 = vadd.f32 %v1280, %v1281
  %v1283 = vrot.slane %v1282, 1
  %v1284 = vadd.f32 %v1282, %v1283
  %1285 = vst.msk [vmem:[%s4] sm:$0x1] %vm1230, %v1284
  // Predicated region
  $region10: #{psmnet_forward.88} parent=0 // pred_check
    _
  $region11: #{psmnet_forward.88} parent=0 // pred_check_branch
    %1287 = sbr.rel (0) target = $region13
  $region12: #{psmnet_forward.88} parent=0 // pred_region
    _
  $region13: #{psmnet_forward.88} parent=0 // pred_fallthru
    _
  // Predicated region
  $region14: #{psmnet_forward.88} parent=0 // pred_check
    _
  $region15: #{psmnet_forward.88} parent=0 // pred_check_branch
    %1289 = sbr.rel (0) target = $region17
  $region16: #{psmnet_forward.88} parent=0 // pred_region
    _
  $region17: #{psmnet_forward.88} parent=0 // pred_fallthru
    _
  // Predicated region
  $region18: #{psmnet_forward.88} parent=0 // pred_check
    _
  $region19: #{psmnet_forward.88} parent=0 // pred_check_branch
    %1291 = sbr.rel (0) target = $region21
  $region20: #{psmnet_forward.88} parent=0 // pred_region
    _
  $region21: #{psmnet_forward.88} parent=0 // pred_fallthru
    _
  // Predicated region
  $region22: #{psmnet_forward.88} parent=0 // pred_check
    _
  $region23: #{psmnet_forward.88} parent=0 // pred_check_branch
    %1293 = sbr.rel (0) target = $region25
  $region24: #{psmnet_forward.88} parent=0 // pred_region
    _
  $region25: #{psmnet_forward.88} parent=0 // pred_fallthru
    _
  // Predicated region
  $region26: #{psmnet_forward.88} parent=0 // pred_check
    _
  $region27: #{psmnet_forward.88} parent=0 // pred_check_branch
    %1295 = sbr.rel (0) target = $region29
  $region28: #{psmnet_forward.88} parent=0 // pred_region
    _
  $region29: #{psmnet_forward.88} parent=0 // pred_fallthru
    _
  // Predicated region
  $region30: #{psmnet_forward.88} parent=0 // pred_check
    _
  $region31: #{psmnet_forward.88} parent=0 // pred_check_branch
    %1297 = sbr.rel (0) target = $region33
  $region32: #{psmnet_forward.88} parent=0 // pred_region
    _
  $region33: #{psmnet_forward.88} parent=0 // pred_fallthru
    _

// kernel: psmnet_forward.90
$region0: #{psmnet_forward.90}
  #allocation0 [shape = 'u32[]', space=smem, size = 0x4, offset = 0x4, fixed_abs, tag = 'smem constant byte address 0x4 - core index']
  #allocation1 [shape = 'u32[72,128]{1,0:T(1,128)}', space=vmem, size = 0x9000, scoped, tag = 'internal scratch']
  %s0 = inlined_call_operand.vmem [shape: bf16[128,1728], index: 0, kind: input, shape index: {}]
  %s1 = inlined_call_operand.vmem [shape: bf16[1728,64], index: 1, kind: input, shape index: {}]
  %s2 = inlined_call_operand.vmem [shape: bf16[128,64], index: 2, kind: output, shape index: {0}]
  %s3 = inlined_call_operand.vmem [shape: f32[1,1,64], index: 3, kind: output, shape index: {1}]
  %s4 = inlined_call_operand.vmem [shape: f32[1,1,64], index: 4, kind: output, shape index: {2}]
  %5 = xla_tuple %s2, %s3, %s4
  %s6 = sld [smem:[#allocation0]]
  $region34: #{psmnet_forward.90} parent=0
    _
  %s8 = ssub.s32 1, %s6
  %s9 = scalar_select 0, %s8, %s6
  // Predicated region
  $region2: #{psmnet_forward.90} parent=0 // pred_check
    _
  $region3: #{psmnet_forward.90} parent=0 // pred_check_branch
    %11 = sbr.rel (0) target = $region5
  $region4: #{psmnet_forward.90} parent=0 // pred_region
    _
  $region5: #{psmnet_forward.90} parent=0 // pred_fallthru
    _
  // Predicated region
  $region6: #{psmnet_forward.90} parent=0 // pred_check
    _
  $region7: #{psmnet_forward.90} parent=0 // pred_check_branch
    %13 = sbr.rel (0) target = $region9
  $region8: #{psmnet_forward.90} parent=0 // pred_region
    _
  $region9: #{psmnet_forward.90} parent=0 // pred_fallthru
    _
  %v15 = vld [vmem:[%s0] sm:$0xff]
  %v16 = vld [vmem:[%s0 + $0x8] sm:$0xff]
  %v17 = vld [vmem:[%s0 + $0x10] sm:$0xff]
  %v18 = vld [vmem:[%s0 + $0x18] sm:$0xff]
  %v19 = vld [vmem:[%s0 + $0x20] sm:$0xff]
  %v20 = vld [vmem:[%s0 + $0x28] sm:$0xff]
  %v21 = vld [vmem:[%s0 + $0x30] sm:$0xff]
  %v22 = vld [vmem:[%s0 + $0x38] sm:$0xff]
  %v23 = vld [vmem:[%s0 + $0x40] sm:$0xff]
  %v24 = vld [vmem:[%s0 + $0x48] sm:$0xff]
  %v25 = vld [vmem:[%s0 + $0x50] sm:$0xff]
  %v26 = vld [vmem:[%s0 + $0x58] sm:$0xff]
  %v27 = vld [vmem:[%s0 + $0x60] sm:$0xff]
  %v28 = vld [vmem:[%s0 + $0x68] sm:$0xff]
  %v29 = vld [vmem:[%s0 + $0x70] sm:$0xff]
  %v30 = vld [vmem:[%s0 + $0x78] sm:$0xff]
  %v31 = vld [vmem:[%s0 + $0x80] sm:$0xff]
  %v32 = vld [vmem:[%s0 + $0x88] sm:$0xff]
  %v33 = vld [vmem:[%s0 + $0x90] sm:$0xff]
  %v34 = vld [vmem:[%s0 + $0x98] sm:$0xff]
  %v35 = vld [vmem:[%s0 + $0xa0] sm:$0xff]
  %v36 = vld [vmem:[%s0 + $0xa8] sm:$0xff]
  %v37 = vld [vmem:[%s0 + $0xb0] sm:$0xff]
  %v38 = vld [vmem:[%s0 + $0xb8] sm:$0xff]
  %v39 = vld [vmem:[%s0 + $0xc0] sm:$0xff]
  %v40 = vld [vmem:[%s0 + $0xc8] sm:$0xff]
  %v41 = vld [vmem:[%s0 + $0xd0] sm:$0xff]
  %v42 = vld [vmem:[%s0 + $0xd8] sm:$0xff]
  %v43 = vld [vmem:[%s0 + $0xe0] sm:$0xff]
  %v44 = vld [vmem:[%s0 + $0xe8] sm:$0xff]
  %v45 = vld [vmem:[%s0 + $0xf0] sm:$0xff]
  %v46 = vld [vmem:[%s0 + $0xf8] sm:$0xff]
  %v47 = vld [vmem:[%s0 + $0x100] sm:$0xff]
  %v48 = vld [vmem:[%s0 + $0x108] sm:$0xff]
  %v49 = vld [vmem:[%s0 + $0x110] sm:$0xff]
  %v50 = vld [vmem:[%s0 + $0x118] sm:$0xff]
  %v51 = vld [vmem:[%s0 + $0x120] sm:$0xff]
  %v52 = vld [vmem:[%s0 + $0x128] sm:$0xff]
  %v53 = vld [vmem:[%s0 + $0x130] sm:$0xff]
  %v54 = vld [vmem:[%s0 + $0x138] sm:$0xff]
  %v55 = vld [vmem:[%s0 + $0x140] sm:$0xff]
  %v56 = vld [vmem:[%s0 + $0x148] sm:$0xff]
  %v57 = vld [vmem:[%s0 + $0x150] sm:$0xff]
  %v58 = vld [vmem:[%s0 + $0x158] sm:$0xff]
  %v59 = vld [vmem:[%s0 + $0x160] sm:$0xff]
  %v60 = vld [vmem:[%s0 + $0x168] sm:$0xff]
  %v61 = vld [vmem:[%s0 + $0x170] sm:$0xff]
  %v62 = vld [vmem:[%s0 + $0x178] sm:$0xff]
  %v63 = vld [vmem:[%s0 + $0x180] sm:$0xff]
  %v64 = vld [vmem:[%s0 + $0x188] sm:$0xff]
  %v65 = vld [vmem:[%s0 + $0x190] sm:$0xff]
  %v66 = vld [vmem:[%s0 + $0x198] sm:$0xff]
  %v67 = vld [vmem:[%s0 + $0x1a0] sm:$0xff]
  %v68 = vld [vmem:[%s0 + $0x1a8] sm:$0xff]
  %v69 = vld [vmem:[%s0 + $0x1b0] sm:$0xff]
  %v70 = vld [vmem:[%s0 + $0x1b8] sm:$0xff]
  %v71 = vld [vmem:[%s0 + $0x1c0] sm:$0xff]
  %v72 = vld [vmem:[%s0 + $0x1c8] sm:$0xff]
  %v73 = vld [vmem:[%s0 + $0x1d0] sm:$0xff]
  %v74 = vld [vmem:[%s0 + $0x1d8] sm:$0xff]
  %v75 = vld [vmem:[%s0 + $0x1e0] sm:$0xff]
  %v76 = vld [vmem:[%s0 + $0x1e8] sm:$0xff]
  %v77 = vld [vmem:[%s0 + $0x1f0] sm:$0xff]
  %v78 = vld [vmem:[%s0 + $0x1f8] sm:$0xff]
  %v79 = vld [vmem:[%s0 + $0x200] sm:$0xff]
  %v80 = vld [vmem:[%s0 + $0x208] sm:$0xff]
  %v81 = vld [vmem:[%s0 + $0x210] sm:$0xff]
  %v82 = vld [vmem:[%s0 + $0x218] sm:$0xff]
  %v83 = vld [vmem:[%s0 + $0x220] sm:$0xff]
  %v84 = vld [vmem:[%s0 + $0x228] sm:$0xff]
  %v85 = vld [vmem:[%s0 + $0x230] sm:$0xff]
  %v86 = vld [vmem:[%s0 + $0x238] sm:$0xff]
  %v87 = vld [vmem:[%s0 + $0x240] sm:$0xff]
  %v88 = vld [vmem:[%s0 + $0x248] sm:$0xff]
  %v89 = vld [vmem:[%s0 + $0x250] sm:$0xff]
  %v90 = vld [vmem:[%s0 + $0x258] sm:$0xff]
  %v91 = vld [vmem:[%s0 + $0x260] sm:$0xff]
  %v92 = vld [vmem:[%s0 + $0x268] sm:$0xff]
  %v93 = vld [vmem:[%s0 + $0x270] sm:$0xff]
  %v94 = vld [vmem:[%s0 + $0x278] sm:$0xff]
  %v95 = vld [vmem:[%s0 + $0x280] sm:$0xff]
  %v96 = vld [vmem:[%s0 + $0x288] sm:$0xff]
  %v97 = vld [vmem:[%s0 + $0x290] sm:$0xff]
  %v98 = vld [vmem:[%s0 + $0x298] sm:$0xff]
  %v99 = vld [vmem:[%s0 + $0x2a0] sm:$0xff]
  %v100 = vld [vmem:[%s0 + $0x2a8] sm:$0xff]
  %v101 = vld [vmem:[%s0 + $0x2b0] sm:$0xff]
  %v102 = vld [vmem:[%s0 + $0x2b8] sm:$0xff]
  %v103 = vld [vmem:[%s0 + $0x2c0] sm:$0xff]
  %v104 = vld [vmem:[%s0 + $0x2c8] sm:$0xff]
  %v105 = vld [vmem:[%s0 + $0x2d0] sm:$0xff]
  %v106 = vld [vmem:[%s0 + $0x2d8] sm:$0xff]
  %v107 = vld [vmem:[%s0 + $0x2e0] sm:$0xff]
  %v108 = vld [vmem:[%s0 + $0x2e8] sm:$0xff]
  %v109 = vld [vmem:[%s0 + $0x2f0] sm:$0xff]
  %v110 = vld [vmem:[%s0 + $0x2f8] sm:$0xff]
  %v111 = vld [vmem:[%s0 + $0x300] sm:$0xff]
  %v112 = vld [vmem:[%s0 + $0x308] sm:$0xff]
  %v113 = vld [vmem:[%s0 + $0x310] sm:$0xff]
  %v114 = vld [vmem:[%s0 + $0x318] sm:$0xff]
  %v115 = vld [vmem:[%s0 + $0x320] sm:$0xff]
  %v116 = vld [vmem:[%s0 + $0x328] sm:$0xff]
  %v117 = vld [vmem:[%s0 + $0x330] sm:$0xff]
  %v118 = vld [vmem:[%s0 + $0x338] sm:$0xff]
  %v119 = vld [vmem:[%s0 + $0x340] sm:$0xff]
  %v120 = vld [vmem:[%s0 + $0x348] sm:$0xff]
  %v121 = vld [vmem:[%s0 + $0x350] sm:$0xff]
  %v122 = vld [vmem:[%s0 + $0x358] sm:$0xff]
  %v123 = vld [vmem:[%s0 + $0x360] sm:$0xff]
  %v124 = vld [vmem:[%s0 + $0x368] sm:$0xff]
  %v125 = vld [vmem:[%s0 + $0x370] sm:$0xff]
  %v126 = vld [vmem:[%s0 + $0x378] sm:$0xff]
  %v127 = vld [vmem:[%s1] sm:$0xf]
  %v128 = vld [vmem:[%s1 + $0x4] sm:$0xf]
  %v129 = vld [vmem:[%s1 + $0x8] sm:$0xf]
  %v130 = vld [vmem:[%s1 + $0xc] sm:$0xf]
  %v131 = vld [vmem:[%s1 + $0x10] sm:$0xf]
  %v132 = vld [vmem:[%s1 + $0x14] sm:$0xf]
  %v133 = vld [vmem:[%s1 + $0x18] sm:$0xf]
  %v134 = vld [vmem:[%s1 + $0x1c] sm:$0xf]
  %v135 = vld [vmem:[%s1 + $0x20] sm:$0xf]
  %v136 = vld [vmem:[%s1 + $0x24] sm:$0xf]
  %v137 = vld [vmem:[%s1 + $0x28] sm:$0xf]
  %v138 = vld [vmem:[%s1 + $0x2c] sm:$0xf]
  %v139 = vld [vmem:[%s1 + $0x30] sm:$0xf]
  %v140 = vld [vmem:[%s1 + $0x34] sm:$0xf]
  %v141 = vld [vmem:[%s1 + $0x38] sm:$0xf]
  %v142 = vld [vmem:[%s1 + $0x3c] sm:$0xf]
  %v143 = vld [vmem:[%s1 + $0x40] sm:$0xf]
  %v144 = vld [vmem:[%s1 + $0x44] sm:$0xf]
  %v145 = vld [vmem:[%s1 + $0x48] sm:$0xf]
  %v146 = vld [vmem:[%s1 + $0x4c] sm:$0xf]
  %v147 = vld [vmem:[%s1 + $0x50] sm:$0xf]
  %v148 = vld [vmem:[%s1 + $0x54] sm:$0xf]
  %v149 = vld [vmem:[%s1 + $0x58] sm:$0xf]
  %v150 = vld [vmem:[%s1 + $0x5c] sm:$0xf]
  %v151 = vld [vmem:[%s1 + $0x60] sm:$0xf]
  %v152 = vld [vmem:[%s1 + $0x64] sm:$0xf]
  %v153 = vld [vmem:[%s1 + $0x68] sm:$0xf]
  %v154 = vld [vmem:[%s1 + $0x6c] sm:$0xf]
  %v155 = vld [vmem:[%s1 + $0x70] sm:$0xf]
  %v156 = vld [vmem:[%s1 + $0x74] sm:$0xf]
  %v157 = vld [vmem:[%s1 + $0x78] sm:$0xf]
  %v158 = vld [vmem:[%s1 + $0x7c] sm:$0xf]
  %v159 = vld [vmem:[%s1 + $0x80] sm:$0xf]
  %v160 = vld [vmem:[%s1 + $0x84] sm:$0xf]
  %v161 = vld [vmem:[%s1 + $0x88] sm:$0xf]
  %v162 = vld [vmem:[%s1 + $0x8c] sm:$0xf]
  %v163 = vld [vmem:[%s1 + $0x90] sm:$0xf]
  %v164 = vld [vmem:[%s1 + $0x94] sm:$0xf]
  %v165 = vld [vmem:[%s1 + $0x98] sm:$0xf]
  %v166 = vld [vmem:[%s1 + $0x9c] sm:$0xf]
  %v167 = vld [vmem:[%s1 + $0xa0] sm:$0xf]
  %v168 = vld [vmem:[%s1 + $0xa4] sm:$0xf]
  %v169 = vld [vmem:[%s1 + $0xa8] sm:$0xf]
  %v170 = vld [vmem:[%s1 + $0xac] sm:$0xf]
  %v171 = vld [vmem:[%s1 + $0xb0] sm:$0xf]
  %v172 = vld [vmem:[%s1 + $0xb4] sm:$0xf]
  %v173 = vld [vmem:[%s1 + $0xb8] sm:$0xf]
  %v174 = vld [vmem:[%s1 + $0xbc] sm:$0xf]
  %v175 = vld [vmem:[%s1 + $0xc0] sm:$0xf]
  %v176 = vld [vmem:[%s1 + $0xc4] sm:$0xf]
  %v177 = vld [vmem:[%s1 + $0xc8] sm:$0xf]
  %v178 = vld [vmem:[%s1 + $0xcc] sm:$0xf]
  %v179 = vld [vmem:[%s1 + $0xd0] sm:$0xf]
  %v180 = vld [vmem:[%s1 + $0xd4] sm:$0xf]
  %v181 = vld [vmem:[%s1 + $0xd8] sm:$0xf]
  %v182 = vld [vmem:[%s1 + $0xdc] sm:$0xf]
  %v183 = vld [vmem:[%s1 + $0xe0] sm:$0xf]
  %v184 = vld [vmem:[%s1 + $0xe4] sm:$0xf]
  %v185 = vld [vmem:[%s1 + $0xe8] sm:$0xf]
  %v186 = vld [vmem:[%s1 + $0xec] sm:$0xf]
  %v187 = vld [vmem:[%s1 + $0xf0] sm:$0xf]
  %v188 = vld [vmem:[%s1 + $0xf4] sm:$0xf]
  %v189 = vld [vmem:[%s1 + $0xf8] sm:$0xf]
  %v190 = vld [vmem:[%s1 + $0xfc] sm:$0xf]
  %v191 = vld [vmem:[%s1 + $0x100] sm:$0xf]
  %v192 = vld [vmem:[%s1 + $0x104] sm:$0xf]
  %v193 = vld [vmem:[%s1 + $0x108] sm:$0xf]
  %v194 = vld [vmem:[%s1 + $0x10c] sm:$0xf]
  %v195 = vld [vmem:[%s1 + $0x110] sm:$0xf]
  %v196 = vld [vmem:[%s1 + $0x114] sm:$0xf]
  %v197 = vld [vmem:[%s1 + $0x118] sm:$0xf]
  %v198 = vld [vmem:[%s1 + $0x11c] sm:$0xf]
  %v199 = vld [vmem:[%s1 + $0x120] sm:$0xf]
  %v200 = vld [vmem:[%s1 + $0x124] sm:$0xf]
  %v201 = vld [vmem:[%s1 + $0x128] sm:$0xf]
  %v202 = vld [vmem:[%s1 + $0x12c] sm:$0xf]
  %v203 = vld [vmem:[%s1 + $0x130] sm:$0xf]
  %v204 = vld [vmem:[%s1 + $0x134] sm:$0xf]
  %v205 = vld [vmem:[%s1 + $0x138] sm:$0xf]
  %v206 = vld [vmem:[%s1 + $0x13c] sm:$0xf]
  %v207 = vld [vmem:[%s1 + $0x140] sm:$0xf]
  %v208 = vld [vmem:[%s1 + $0x144] sm:$0xf]
  %v209 = vld [vmem:[%s1 + $0x148] sm:$0xf]
  %v210 = vld [vmem:[%s1 + $0x14c] sm:$0xf]
  %v211 = vld [vmem:[%s1 + $0x150] sm:$0xf]
  %v212 = vld [vmem:[%s1 + $0x154] sm:$0xf]
  %v213 = vld [vmem:[%s1 + $0x158] sm:$0xf]
  %v214 = vld [vmem:[%s1 + $0x15c] sm:$0xf]
  %v215 = vld [vmem:[%s1 + $0x160] sm:$0xf]
  %v216 = vld [vmem:[%s1 + $0x164] sm:$0xf]
  %v217 = vld [vmem:[%s1 + $0x168] sm:$0xf]
  %v218 = vld [vmem:[%s1 + $0x16c] sm:$0xf]
  %v219 = vld [vmem:[%s1 + $0x170] sm:$0xf]
  %v220 = vld [vmem:[%s1 + $0x174] sm:$0xf]
  %v221 = vld [vmem:[%s1 + $0x178] sm:$0xf]
  %v222 = vld [vmem:[%s1 + $0x17c] sm:$0xf]
  %v223 = vld [vmem:[%s1 + $0x180] sm:$0xf]
  %v224 = vld [vmem:[%s1 + $0x184] sm:$0xf]
  %v225 = vld [vmem:[%s1 + $0x188] sm:$0xf]
  %v226 = vld [vmem:[%s1 + $0x18c] sm:$0xf]
  %v227 = vld [vmem:[%s1 + $0x190] sm:$0xf]
  %v228 = vld [vmem:[%s1 + $0x194] sm:$0xf]
  %v229 = vld [vmem:[%s1 + $0x198] sm:$0xf]
  %v230 = vld [vmem:[%s1 + $0x19c] sm:$0xf]
  %v231 = vld [vmem:[%s1 + $0x1a0] sm:$0xf]
  %v232 = vld [vmem:[%s1 + $0x1a4] sm:$0xf]
  %v233 = vld [vmem:[%s1 + $0x1a8] sm:$0xf]
  %v234 = vld [vmem:[%s1 + $0x1ac] sm:$0xf]
  %v235 = vld [vmem:[%s1 + $0x1b0] sm:$0xf]
  %v236 = vld [vmem:[%s1 + $0x1b4] sm:$0xf]
  %v237 = vld [vmem:[%s1 + $0x1b8] sm:$0xf]
  %v238 = vld [vmem:[%s1 + $0x1bc] sm:$0xf]
  %v239 = vld [vmem:[%s1 + $0x1c0] sm:$0xf]
  %v240 = vld [vmem:[%s1 + $0x1c4] sm:$0xf]
  %v241 = vld [vmem:[%s1 + $0x1c8] sm:$0xf]
  %v242 = vld [vmem:[%s1 + $0x1cc] sm:$0xf]
  %v243 = vld [vmem:[%s1 + $0x1d0] sm:$0xf]
  %v244 = vld [vmem:[%s1 + $0x1d4] sm:$0xf]
  %v245 = vld [vmem:[%s1 + $0x1d8] sm:$0xf]
  %v246 = vld [vmem:[%s1 + $0x1dc] sm:$0xf]
  %v247 = vld [vmem:[%s1 + $0x1e0] sm:$0xf]
  %v248 = vld [vmem:[%s1 + $0x1e4] sm:$0xf]
  %v249 = vld [vmem:[%s1 + $0x1e8] sm:$0xf]
  %v250 = vld [vmem:[%s1 + $0x1ec] sm:$0xf]
  %v251 = vld [vmem:[%s1 + $0x1f0] sm:$0xf]
  %v252 = vld [vmem:[%s1 + $0x1f4] sm:$0xf]
  %v253 = vld [vmem:[%s1 + $0x1f8] sm:$0xf]
  %v254 = vld [vmem:[%s1 + $0x1fc] sm:$0xf]
  %v255 = vld [vmem:[%s1 + $0x200] sm:$0xf]
  %v256 = vld [vmem:[%s1 + $0x204] sm:$0xf]
  %v257 = vld [vmem:[%s1 + $0x208] sm:$0xf]
  %v258 = vld [vmem:[%s1 + $0x20c] sm:$0xf]
  %v259 = vld [vmem:[%s1 + $0x210] sm:$0xf]
  %v260 = vld [vmem:[%s1 + $0x214] sm:$0xf]
  %v261 = vld [vmem:[%s1 + $0x218] sm:$0xf]
  %v262 = vld [vmem:[%s1 + $0x21c] sm:$0xf]
  %v263 = vld [vmem:[%s1 + $0x220] sm:$0xf]
  %v264 = vld [vmem:[%s1 + $0x224] sm:$0xf]
  %v265 = vld [vmem:[%s1 + $0x228] sm:$0xf]
  %v266 = vld [vmem:[%s1 + $0x22c] sm:$0xf]
  %v267 = vld [vmem:[%s1 + $0x230] sm:$0xf]
  %v268 = vld [vmem:[%s1 + $0x234] sm:$0xf]
  %v269 = vld [vmem:[%s1 + $0x238] sm:$0xf]
  %v270 = vld [vmem:[%s1 + $0x23c] sm:$0xf]
  %v271 = vld [vmem:[%s1 + $0x240] sm:$0xf]
  %v272 = vld [vmem:[%s1 + $0x244] sm:$0xf]
  %v273 = vld [vmem:[%s1 + $0x248] sm:$0xf]
  %v274 = vld [vmem:[%s1 + $0x24c] sm:$0xf]
  %v275 = vld [vmem:[%s1 + $0x250] sm:$0xf]
  %v276 = vld [vmem:[%s1 + $0x254] sm:$0xf]
  %v277 = vld [vmem:[%s1 + $0x258] sm:$0xf]
  %v278 = vld [vmem:[%s1 + $0x25c] sm:$0xf]
  %v279 = vld [vmem:[%s1 + $0x260] sm:$0xf]
  %v280 = vld [vmem:[%s1 + $0x264] sm:$0xf]
  %v281 = vld [vmem:[%s1 + $0x268] sm:$0xf]
  %v282 = vld [vmem:[%s1 + $0x26c] sm:$0xf]
  %v283 = vld [vmem:[%s1 + $0x270] sm:$0xf]
  %v284 = vld [vmem:[%s1 + $0x274] sm:$0xf]
  %v285 = vld [vmem:[%s1 + $0x278] sm:$0xf]
  %v286 = vld [vmem:[%s1 + $0x27c] sm:$0xf]
  %v287 = vld [vmem:[%s1 + $0x280] sm:$0xf]
  %v288 = vld [vmem:[%s1 + $0x284] sm:$0xf]
  %v289 = vld [vmem:[%s1 + $0x288] sm:$0xf]
  %v290 = vld [vmem:[%s1 + $0x28c] sm:$0xf]
  %v291 = vld [vmem:[%s1 + $0x290] sm:$0xf]
  %v292 = vld [vmem:[%s1 + $0x294] sm:$0xf]
  %v293 = vld [vmem:[%s1 + $0x298] sm:$0xf]
  %v294 = vld [vmem:[%s1 + $0x29c] sm:$0xf]
  %v295 = vld [vmem:[%s1 + $0x2a0] sm:$0xf]
  %v296 = vld [vmem:[%s1 + $0x2a4] sm:$0xf]
  %v297 = vld [vmem:[%s1 + $0x2a8] sm:$0xf]
  %v298 = vld [vmem:[%s1 + $0x2ac] sm:$0xf]
  %v299 = vld [vmem:[%s1 + $0x2b0] sm:$0xf]
  %v300 = vld [vmem:[%s1 + $0x2b4] sm:$0xf]
  %v301 = vld [vmem:[%s1 + $0x2b8] sm:$0xf]
  %v302 = vld [vmem:[%s1 + $0x2bc] sm:$0xf]
  %v303 = vld [vmem:[%s1 + $0x2c0] sm:$0xf]
  %v304 = vld [vmem:[%s1 + $0x2c4] sm:$0xf]
  %v305 = vld [vmem:[%s1 + $0x2c8] sm:$0xf]
  %v306 = vld [vmem:[%s1 + $0x2cc] sm:$0xf]
  %v307 = vld [vmem:[%s1 + $0x2d0] sm:$0xf]
  %v308 = vld [vmem:[%s1 + $0x2d4] sm:$0xf]
  %v309 = vld [vmem:[%s1 + $0x2d8] sm:$0xf]
  %v310 = vld [vmem:[%s1 + $0x2dc] sm:$0xf]
  %v311 = vld [vmem:[%s1 + $0x2e0] sm:$0xf]
  %v312 = vld [vmem:[%s1 + $0x2e4] sm:$0xf]
  %v313 = vld [vmem:[%s1 + $0x2e8] sm:$0xf]
  %v314 = vld [vmem:[%s1 + $0x2ec] sm:$0xf]
  %v315 = vld [vmem:[%s1 + $0x2f0] sm:$0xf]
  %v316 = vld [vmem:[%s1 + $0x2f4] sm:$0xf]
  %v317 = vld [vmem:[%s1 + $0x2f8] sm:$0xf]
  %v318 = vld [vmem:[%s1 + $0x2fc] sm:$0xf]
  %v319 = vld [vmem:[%s1 + $0x300] sm:$0xf]
  %v320 = vld [vmem:[%s1 + $0x304] sm:$0xf]
  %v321 = vld [vmem:[%s1 + $0x308] sm:$0xf]
  %v322 = vld [vmem:[%s1 + $0x30c] sm:$0xf]
  %v323 = vld [vmem:[%s1 + $0x310] sm:$0xf]
  %v324 = vld [vmem:[%s1 + $0x314] sm:$0xf]
  %v325 = vld [vmem:[%s1 + $0x318] sm:$0xf]
  %v326 = vld [vmem:[%s1 + $0x31c] sm:$0xf]
  %v327 = vld [vmem:[%s1 + $0x320] sm:$0xf]
  %v328 = vld [vmem:[%s1 + $0x324] sm:$0xf]
  %v329 = vld [vmem:[%s1 + $0x328] sm:$0xf]
  %v330 = vld [vmem:[%s1 + $0x32c] sm:$0xf]
  %v331 = vld [vmem:[%s1 + $0x330] sm:$0xf]
  %v332 = vld [vmem:[%s1 + $0x334] sm:$0xf]
  %v333 = vld [vmem:[%s1 + $0x338] sm:$0xf]
  %v334 = vld [vmem:[%s1 + $0x33c] sm:$0xf]
  %v335 = vld [vmem:[%s1 + $0x340] sm:$0xf]
  %v336 = vld [vmem:[%s1 + $0x344] sm:$0xf]
  %v337 = vld [vmem:[%s1 + $0x348] sm:$0xf]
  %v338 = vld [vmem:[%s1 + $0x34c] sm:$0xf]
  %v339 = vld [vmem:[%s1 + $0x350] sm:$0xf]
  %v340 = vld [vmem:[%s1 + $0x354] sm:$0xf]
  %v341 = vld [vmem:[%s1 + $0x358] sm:$0xf]
  %v342 = vld [vmem:[%s1 + $0x35c] sm:$0xf]
  %v455 = vunpack.c.l.b16 %v15
  %v456 = vunpack.c.h.b16 %v15
  %v457 = vunpack.c.l.b16 %v16
  %v458 = vunpack.c.h.b16 %v16
  %v459 = vunpack.c.l.b16 %v17
  %v460 = vunpack.c.h.b16 %v17
  %v461 = vunpack.c.l.b16 %v18
  %v462 = vunpack.c.h.b16 %v18
  %v463 = vunpack.c.l.b16 %v19
  %v464 = vunpack.c.h.b16 %v19
  %v465 = vunpack.c.l.b16 %v20
  %v466 = vunpack.c.h.b16 %v20
  %v467 = vunpack.c.l.b16 %v21
  %v468 = vunpack.c.h.b16 %v21
  %v469 = vunpack.c.l.b16 %v22
  %v470 = vunpack.c.h.b16 %v22
  %v471 = vunpack.c.l.b16 %v23
  %v472 = vunpack.c.h.b16 %v23
  %v473 = vunpack.c.l.b16 %v24
  %v474 = vunpack.c.h.b16 %v24
  %v475 = vunpack.c.l.b16 %v25
  %v476 = vunpack.c.h.b16 %v25
  %v477 = vunpack.c.l.b16 %v26
  %v478 = vunpack.c.h.b16 %v26
  %v479 = vunpack.c.l.b16 %v27
  %v480 = vunpack.c.h.b16 %v27
  %v481 = vunpack.c.l.b16 %v28
  %v482 = vunpack.c.h.b16 %v28
  %v483 = vunpack.c.l.b16 %v29
  %v484 = vunpack.c.h.b16 %v29
  %v485 = vunpack.c.l.b16 %v30
  %v486 = vunpack.c.h.b16 %v30
  %v487 = vunpack.c.l.b16 %v31
  %v488 = vunpack.c.h.b16 %v31
  %v489 = vunpack.c.l.b16 %v32
  %v490 = vunpack.c.h.b16 %v32
  %v491 = vunpack.c.l.b16 %v33
  %v492 = vunpack.c.h.b16 %v33
  %v493 = vunpack.c.l.b16 %v34
  %v494 = vunpack.c.h.b16 %v34
  %v495 = vunpack.c.l.b16 %v35
  %v496 = vunpack.c.h.b16 %v35
  %v497 = vunpack.c.l.b16 %v36
  %v498 = vunpack.c.h.b16 %v36
  %v499 = vunpack.c.l.b16 %v37
  %v500 = vunpack.c.h.b16 %v37
  %v501 = vunpack.c.l.b16 %v38
  %v502 = vunpack.c.h.b16 %v38
  %v503 = vunpack.c.l.b16 %v39
  %v504 = vunpack.c.h.b16 %v39
  %v505 = vunpack.c.l.b16 %v40
  %v506 = vunpack.c.h.b16 %v40
  %v507 = vunpack.c.l.b16 %v41
  %v508 = vunpack.c.h.b16 %v41
  %v509 = vunpack.c.l.b16 %v42
  %v510 = vunpack.c.h.b16 %v42
  %v511 = vunpack.c.l.b16 %v43
  %v512 = vunpack.c.h.b16 %v43
  %v513 = vunpack.c.l.b16 %v44
  %v514 = vunpack.c.h.b16 %v44
  %v515 = vunpack.c.l.b16 %v45
  %v516 = vunpack.c.h.b16 %v45
  %v517 = vunpack.c.l.b16 %v46
  %v518 = vunpack.c.h.b16 %v46
  %v519 = vunpack.c.l.b16 %v47
  %v520 = vunpack.c.h.b16 %v47
  %v521 = vunpack.c.l.b16 %v48
  %v522 = vunpack.c.h.b16 %v48
  %v523 = vunpack.c.l.b16 %v49
  %v524 = vunpack.c.h.b16 %v49
  %v525 = vunpack.c.l.b16 %v50
  %v526 = vunpack.c.h.b16 %v50
  %v527 = vunpack.c.l.b16 %v51
  %v528 = vunpack.c.h.b16 %v51
  %v529 = vunpack.c.l.b16 %v52
  %v530 = vunpack.c.h.b16 %v52
  %v531 = vunpack.c.l.b16 %v53
  %v532 = vunpack.c.h.b16 %v53
  %v533 = vunpack.c.l.b16 %v54
  %v534 = vunpack.c.h.b16 %v54
  %v535 = vunpack.c.l.b16 %v55
  %v536 = vunpack.c.h.b16 %v55
  %v537 = vunpack.c.l.b16 %v56
  %v538 = vunpack.c.h.b16 %v56
  %v539 = vunpack.c.l.b16 %v57
  %v540 = vunpack.c.h.b16 %v57
  %v541 = vunpack.c.l.b16 %v58
  %v542 = vunpack.c.h.b16 %v58
  %v543 = vunpack.c.l.b16 %v59
  %v544 = vunpack.c.h.b16 %v59
  %v545 = vunpack.c.l.b16 %v60
  %v546 = vunpack.c.h.b16 %v60
  %v547 = vunpack.c.l.b16 %v61
  %v548 = vunpack.c.h.b16 %v61
  %v549 = vunpack.c.l.b16 %v62
  %v550 = vunpack.c.h.b16 %v62
  %v551 = vunpack.c.l.b16 %v63
  %v552 = vunpack.c.h.b16 %v63
  %v553 = vunpack.c.l.b16 %v64
  %v554 = vunpack.c.h.b16 %v64
  %v555 = vunpack.c.l.b16 %v65
  %v556 = vunpack.c.h.b16 %v65
  %v557 = vunpack.c.l.b16 %v66
  %v558 = vunpack.c.h.b16 %v66
  %v559 = vunpack.c.l.b16 %v67
  %v560 = vunpack.c.h.b16 %v67
  %v561 = vunpack.c.l.b16 %v68
  %v562 = vunpack.c.h.b16 %v68
  %v563 = vunpack.c.l.b16 %v69
  %v564 = vunpack.c.h.b16 %v69
  %v565 = vunpack.c.l.b16 %v70
  %v566 = vunpack.c.h.b16 %v70
  %v567 = vunpack.c.l.b16 %v71
  %v568 = vunpack.c.h.b16 %v71
  %v569 = vunpack.c.l.b16 %v72
  %v570 = vunpack.c.h.b16 %v72
  %v571 = vunpack.c.l.b16 %v73
  %v572 = vunpack.c.h.b16 %v73
  %v573 = vunpack.c.l.b16 %v74
  %v574 = vunpack.c.h.b16 %v74
  %v575 = vunpack.c.l.b16 %v75
  %v576 = vunpack.c.h.b16 %v75
  %v577 = vunpack.c.l.b16 %v76
  %v578 = vunpack.c.h.b16 %v76
  %v579 = vunpack.c.l.b16 %v77
  %v580 = vunpack.c.h.b16 %v77
  %v581 = vunpack.c.l.b16 %v78
  %v582 = vunpack.c.h.b16 %v78
  %v583 = vunpack.c.l.b16 %v79
  %v584 = vunpack.c.h.b16 %v79
  %v585 = vunpack.c.l.b16 %v80
  %v586 = vunpack.c.h.b16 %v80
  %v587 = vunpack.c.l.b16 %v81
  %v588 = vunpack.c.h.b16 %v81
  %v589 = vunpack.c.l.b16 %v82
  %v590 = vunpack.c.h.b16 %v82
  %v591 = vunpack.c.l.b16 %v83
  %v592 = vunpack.c.h.b16 %v83
  %v593 = vunpack.c.l.b16 %v84
  %v594 = vunpack.c.h.b16 %v84
  %v595 = vunpack.c.l.b16 %v85
  %v596 = vunpack.c.h.b16 %v85
  %v597 = vunpack.c.l.b16 %v86
  %v598 = vunpack.c.h.b16 %v86
  %v599 = vunpack.c.l.b16 %v87
  %v600 = vunpack.c.h.b16 %v87
  %v601 = vunpack.c.l.b16 %v88
  %v602 = vunpack.c.h.b16 %v88
  %v603 = vunpack.c.l.b16 %v89
  %v604 = vunpack.c.h.b16 %v89
  %v605 = vunpack.c.l.b16 %v90
  %v606 = vunpack.c.h.b16 %v90
  %v607 = vunpack.c.l.b16 %v91
  %v608 = vunpack.c.h.b16 %v91
  %v609 = vunpack.c.l.b16 %v92
  %v610 = vunpack.c.h.b16 %v92
  %v611 = vunpack.c.l.b16 %v93
  %v612 = vunpack.c.h.b16 %v93
  %v613 = vunpack.c.l.b16 %v94
  %v614 = vunpack.c.h.b16 %v94
  %v615 = vunpack.c.l.b16 %v95
  %v616 = vunpack.c.h.b16 %v95
  %v617 = vunpack.c.l.b16 %v96
  %v618 = vunpack.c.h.b16 %v96
  %v619 = vunpack.c.l.b16 %v97
  %v620 = vunpack.c.h.b16 %v97
  %v621 = vunpack.c.l.b16 %v98
  %v622 = vunpack.c.h.b16 %v98
  %v623 = vunpack.c.l.b16 %v99
  %v624 = vunpack.c.h.b16 %v99
  %v625 = vunpack.c.l.b16 %v100
  %v626 = vunpack.c.h.b16 %v100
  %v627 = vunpack.c.l.b16 %v101
  %v628 = vunpack.c.h.b16 %v101
  %v629 = vunpack.c.l.b16 %v102
  %v630 = vunpack.c.h.b16 %v102
  %v631 = vunpack.c.l.b16 %v103
  %v632 = vunpack.c.h.b16 %v103
  %v633 = vunpack.c.l.b16 %v104
  %v634 = vunpack.c.h.b16 %v104
  %v635 = vunpack.c.l.b16 %v105
  %v636 = vunpack.c.h.b16 %v105
  %v637 = vunpack.c.l.b16 %v106
  %v638 = vunpack.c.h.b16 %v106
  %v639 = vunpack.c.l.b16 %v107
  %v640 = vunpack.c.h.b16 %v107
  %v641 = vunpack.c.l.b16 %v108
  %v642 = vunpack.c.h.b16 %v108
  %v643 = vunpack.c.l.b16 %v109
  %v644 = vunpack.c.h.b16 %v109
  %v645 = vunpack.c.l.b16 %v110
  %v646 = vunpack.c.h.b16 %v110
  %v647 = vunpack.c.l.b16 %v111
  %v648 = vunpack.c.h.b16 %v111
  %v649 = vunpack.c.l.b16 %v112
  %v650 = vunpack.c.h.b16 %v112
  %v651 = vunpack.c.l.b16 %v113
  %v652 = vunpack.c.h.b16 %v113
  %v653 = vunpack.c.l.b16 %v114
  %v654 = vunpack.c.h.b16 %v114
  %v655 = vunpack.c.l.b16 %v115
  %v656 = vunpack.c.h.b16 %v115
  %v657 = vunpack.c.l.b16 %v116
  %v658 = vunpack.c.h.b16 %v116
  %v659 = vunpack.c.l.b16 %v117
  %v660 = vunpack.c.h.b16 %v117
  %v661 = vunpack.c.l.b16 %v118
  %v662 = vunpack.c.h.b16 %v118
  %v663 = vunpack.c.l.b16 %v119
  %v664 = vunpack.c.h.b16 %v119
  %v665 = vunpack.c.l.b16 %v120
  %v666 = vunpack.c.h.b16 %v120
  %v667 = vunpack.c.l.b16 %v121
  %v668 = vunpack.c.h.b16 %v121
  %v669 = vunpack.c.l.b16 %v122
  %v670 = vunpack.c.h.b16 %v122
  %v671 = vunpack.c.l.b16 %v123
  %v672 = vunpack.c.h.b16 %v123
  %v673 = vunpack.c.l.b16 %v124
  %v674 = vunpack.c.h.b16 %v124
  %v675 = vunpack.c.l.b16 %v125
  %v676 = vunpack.c.h.b16 %v125
  %v677 = vunpack.c.l.b16 %v126
  %v678 = vunpack.c.h.b16 %v126
  %v679 = vpack.c.b16 %v469, %v455
  %v680 = vpack.c.b16 %v470, %v456
  %v681 = vpack.c.b16 %v471, %v457
  %v682 = vpack.c.b16 %v472, %v458
  %v683 = vpack.c.b16 %v473, %v459
  %v684 = vpack.c.b16 %v474, %v460
  %v685 = vpack.c.b16 %v475, %v461
  %v686 = vpack.c.b16 %v476, %v462
  %v687 = vpack.c.b16 %v477, %v463
  %v688 = vpack.c.b16 %v478, %v464
  %v689 = vpack.c.b16 %v479, %v465
  %v690 = vpack.c.b16 %v480, %v466
  %v691 = vpack.c.b16 %v481, %v467
  %v692 = vpack.c.b16 %v482, %v468
  %v693 = vpack.c.b16 %v497, %v483
  %v694 = vpack.c.b16 %v498, %v484
  %v695 = vpack.c.b16 %v499, %v485
  %v696 = vpack.c.b16 %v500, %v486
  %v697 = vpack.c.b16 %v501, %v487
  %v698 = vpack.c.b16 %v502, %v488
  %v699 = vpack.c.b16 %v503, %v489
  %v700 = vpack.c.b16 %v504, %v490
  %v701 = vpack.c.b16 %v505, %v491
  %v702 = vpack.c.b16 %v506, %v492
  %v703 = vpack.c.b16 %v507, %v493
  %v704 = vpack.c.b16 %v508, %v494
  %v705 = vpack.c.b16 %v509, %v495
  %v706 = vpack.c.b16 %v510, %v496
  %v707 = vpack.c.b16 %v525, %v511
  %v708 = vpack.c.b16 %v526, %v512
  %v709 = vpack.c.b16 %v527, %v513
  %v710 = vpack.c.b16 %v528, %v514
  %v711 = vpack.c.b16 %v529, %v515
  %v712 = vpack.c.b16 %v530, %v516
  %v713 = vpack.c.b16 %v531, %v517
  %v714 = vpack.c.b16 %v532, %v518
  %v715 = vpack.c.b16 %v533, %v519
  %v716 = vpack.c.b16 %v534, %v520
  %v717 = vpack.c.b16 %v535, %v521
  %v718 = vpack.c.b16 %v536, %v522
  %v719 = vpack.c.b16 %v537, %v523
  %v720 = vpack.c.b16 %v538, %v524
  %v721 = vpack.c.b16 %v553, %v539
  %v722 = vpack.c.b16 %v554, %v540
  %v723 = vpack.c.b16 %v555, %v541
  %v724 = vpack.c.b16 %v556, %v542
  %v725 = vpack.c.b16 %v557, %v543
  %v726 = vpack.c.b16 %v558, %v544
  %v727 = vpack.c.b16 %v559, %v545
  %v728 = vpack.c.b16 %v560, %v546
  %v729 = vpack.c.b16 %v561, %v547
  %v730 = vpack.c.b16 %v562, %v548
  %v731 = vpack.c.b16 %v563, %v549
  %v732 = vpack.c.b16 %v564, %v550
  %v733 = vpack.c.b16 %v565, %v551
  %v734 = vpack.c.b16 %v566, %v552
  %v735 = vpack.c.b16 %v581, %v567
  %v736 = vpack.c.b16 %v582, %v568
  %v737 = vpack.c.b16 %v583, %v569
  %v738 = vpack.c.b16 %v584, %v570
  %v739 = vpack.c.b16 %v585, %v571
  %v740 = vpack.c.b16 %v586, %v572
  %v741 = vpack.c.b16 %v587, %v573
  %v742 = vpack.c.b16 %v588, %v574
  %v743 = vpack.c.b16 %v589, %v575
  %v744 = vpack.c.b16 %v590, %v576
  %v745 = vpack.c.b16 %v591, %v577
  %v746 = vpack.c.b16 %v592, %v578
  %v747 = vpack.c.b16 %v593, %v579
  %v748 = vpack.c.b16 %v594, %v580
  %v749 = vpack.c.b16 %v609, %v595
  %v750 = vpack.c.b16 %v610, %v596
  %v751 = vpack.c.b16 %v611, %v597
  %v752 = vpack.c.b16 %v612, %v598
  %v753 = vpack.c.b16 %v613, %v599
  %v754 = vpack.c.b16 %v614, %v600
  %v755 = vpack.c.b16 %v615, %v601
  %v756 = vpack.c.b16 %v616, %v602
  %v757 = vpack.c.b16 %v617, %v603
  %v758 = vpack.c.b16 %v618, %v604
  %v759 = vpack.c.b16 %v619, %v605
  %v760 = vpack.c.b16 %v620, %v606
  %v761 = vpack.c.b16 %v621, %v607
  %v762 = vpack.c.b16 %v622, %v608
  %v763 = vpack.c.b16 %v637, %v623
  %v764 = vpack.c.b16 %v638, %v624
  %v765 = vpack.c.b16 %v639, %v625
  %v766 = vpack.c.b16 %v640, %v626
  %v767 = vpack.c.b16 %v641, %v627
  %v768 = vpack.c.b16 %v642, %v628
  %v769 = vpack.c.b16 %v643, %v629
  %v770 = vpack.c.b16 %v644, %v630
  %v771 = vpack.c.b16 %v645, %v631
  %v772 = vpack.c.b16 %v646, %v632
  %v773 = vpack.c.b16 %v647, %v633
  %v774 = vpack.c.b16 %v648, %v634
  %v775 = vpack.c.b16 %v649, %v635
  %v776 = vpack.c.b16 %v650, %v636
  %v777 = vpack.c.b16 %v665, %v651
  %v778 = vpack.c.b16 %v666, %v652
  %v779 = vpack.c.b16 %v667, %v653
  %v780 = vpack.c.b16 %v668, %v654
  %v781 = vpack.c.b16 %v669, %v655
  %v782 = vpack.c.b16 %v670, %v656
  %v783 = vpack.c.b16 %v671, %v657
  %v784 = vpack.c.b16 %v672, %v658
  %v785 = vpack.c.b16 %v673, %v659
  %v786 = vpack.c.b16 %v674, %v660
  %v787 = vpack.c.b16 %v675, %v661
  %v788 = vpack.c.b16 %v676, %v662
  %v789 = vpack.c.b16 %v677, %v663
  %v790 = vpack.c.b16 %v678, %v664
  %v1111 = vunpack.c.l.b16 %v127
  %v1112 = vunpack.c.l.b16 %v128
  %v1113 = vunpack.c.l.b16 %v129
  %v1114 = vunpack.c.l.b16 %v130
  %v1115 = vunpack.c.l.b16 %v131
  %v1116 = vunpack.c.l.b16 %v132
  %v1117 = vunpack.c.l.b16 %v133
  %v1118 = vunpack.c.l.b16 %v134
  %v1119 = vunpack.c.l.b16 %v135
  %v1120 = vunpack.c.l.b16 %v136
  %v1121 = vunpack.c.l.b16 %v137
  %v1122 = vunpack.c.l.b16 %v138
  %v1123 = vunpack.c.l.b16 %v139
  %v1124 = vunpack.c.l.b16 %v140
  %v1125 = vunpack.c.l.b16 %v141
  %v1126 = vunpack.c.l.b16 %v142
  %v1127 = vunpack.c.l.b16 %v143
  %v1128 = vunpack.c.l.b16 %v144
  %v1129 = vunpack.c.l.b16 %v145
  %v1130 = vunpack.c.l.b16 %v146
  %v1131 = vunpack.c.l.b16 %v147
  %v1132 = vunpack.c.l.b16 %v148
  %v1133 = vunpack.c.l.b16 %v149
  %v1134 = vunpack.c.l.b16 %v150
  %v1135 = vunpack.c.l.b16 %v151
  %v1136 = vunpack.c.l.b16 %v152
  %v1137 = vunpack.c.l.b16 %v153
  %v1138 = vunpack.c.l.b16 %v154
  %v1139 = vunpack.c.l.b16 %v155
  %v1140 = vunpack.c.l.b16 %v156
  %v1141 = vunpack.c.l.b16 %v157
  %v1142 = vunpack.c.l.b16 %v158
  %v1143 = vunpack.c.l.b16 %v159
  %v1144 = vunpack.c.l.b16 %v160
  %v1145 = vunpack.c.l.b16 %v161
  %v1146 = vunpack.c.l.b16 %v162
  %v1147 = vunpack.c.l.b16 %v163
  %v1148 = vunpack.c.l.b16 %v164
  %v1149 = vunpack.c.l.b16 %v165
  %v1150 = vunpack.c.l.b16 %v166
  %v1151 = vunpack.c.l.b16 %v167
  %v1152 = vunpack.c.l.b16 %v168
  %v1153 = vunpack.c.l.b16 %v169
  %v1154 = vunpack.c.l.b16 %v170
  %v1155 = vunpack.c.l.b16 %v171
  %v1156 = vunpack.c.l.b16 %v172
  %v1157 = vunpack.c.l.b16 %v173
  %v1158 = vunpack.c.l.b16 %v174
  %v1159 = vunpack.c.l.b16 %v175
  %v1160 = vunpack.c.l.b16 %v176
  %v1161 = vunpack.c.l.b16 %v177
  %v1162 = vunpack.c.l.b16 %v178
  %v1163 = vunpack.c.l.b16 %v179
  %v1164 = vunpack.c.l.b16 %v180
  %v1165 = vunpack.c.l.b16 %v181
  %v1166 = vunpack.c.l.b16 %v182
  %v1167 = vunpack.c.l.b16 %v183
  %v1168 = vunpack.c.l.b16 %v184
  %v1169 = vunpack.c.l.b16 %v185
  %v1170 = vunpack.c.l.b16 %v186
  %v1171 = vunpack.c.l.b16 %v187
  %v1172 = vunpack.c.l.b16 %v188
  %v1173 = vunpack.c.l.b16 %v189
  %v1174 = vunpack.c.l.b16 %v190
  %v1175 = vunpack.c.l.b16 %v191
  %v1176 = vunpack.c.l.b16 %v192
  %v1177 = vunpack.c.l.b16 %v193
  %v1178 = vunpack.c.l.b16 %v194
  %v1179 = vunpack.c.l.b16 %v195
  %v1180 = vunpack.c.l.b16 %v196
  %v1181 = vunpack.c.l.b16 %v197
  %v1182 = vunpack.c.l.b16 %v198
  %v1183 = vunpack.c.l.b16 %v199
  %v1184 = vunpack.c.l.b16 %v200
  %v1185 = vunpack.c.l.b16 %v201
  %v1186 = vunpack.c.l.b16 %v202
  %v1187 = vunpack.c.l.b16 %v203
  %v1188 = vunpack.c.l.b16 %v204
  %v1189 = vunpack.c.l.b16 %v205
  %v1190 = vunpack.c.l.b16 %v206
  %v1191 = vunpack.c.l.b16 %v207
  %v1192 = vunpack.c.l.b16 %v208
  %v1193 = vunpack.c.l.b16 %v209
  %v1194 = vunpack.c.l.b16 %v210
  %v1195 = vunpack.c.l.b16 %v211
  %v1196 = vunpack.c.l.b16 %v212
  %v1197 = vunpack.c.l.b16 %v213
  %v1198 = vunpack.c.l.b16 %v214
  %v1199 = vunpack.c.l.b16 %v215
  %v1200 = vunpack.c.l.b16 %v216
  %v1201 = vunpack.c.l.b16 %v217
  %v1202 = vunpack.c.l.b16 %v218
  %v1203 = vunpack.c.l.b16 %v219
  %v1204 = vunpack.c.l.b16 %v220
  %v1205 = vunpack.c.l.b16 %v221
  %v1206 = vunpack.c.l.b16 %v222
  %v1207 = vunpack.c.l.b16 %v223
  %v1208 = vunpack.c.l.b16 %v224
  %v1209 = vunpack.c.l.b16 %v225
  %v1210 = vunpack.c.l.b16 %v226
  %v1211 = vunpack.c.l.b16 %v227
  %v1212 = vunpack.c.l.b16 %v228
  %v1213 = vunpack.c.l.b16 %v229
  %v1214 = vunpack.c.l.b16 %v230
  %v1215 = vunpack.c.l.b16 %v231
  %v1216 = vunpack.c.l.b16 %v232
  %v1217 = vunpack.c.l.b16 %v233
  %v1218 = vunpack.c.l.b16 %v234
  %v1219 = vunpack.c.l.b16 %v235
  %v1220 = vunpack.c.l.b16 %v236
  %v1221 = vunpack.c.l.b16 %v237
  %v1222 = vunpack.c.l.b16 %v238
  %v1223 = vunpack.c.l.b16 %v239
  %v1224 = vunpack.c.l.b16 %v240
  %v1225 = vunpack.c.l.b16 %v241
  %v1226 = vunpack.c.l.b16 %v242
  %v1227 = vunpack.c.l.b16 %v243
  %v1228 = vunpack.c.l.b16 %v244
  %v1229 = vunpack.c.l.b16 %v245
  %v1230 = vunpack.c.l.b16 %v246
  %v1231 = vunpack.c.l.b16 %v247
  %v1232 = vunpack.c.l.b16 %v248
  %v1233 = vunpack.c.l.b16 %v249
  %v1234 = vunpack.c.l.b16 %v250
  %v1235 = vunpack.c.l.b16 %v251
  %v1236 = vunpack.c.l.b16 %v252
  %v1237 = vunpack.c.l.b16 %v253
  %v1238 = vunpack.c.l.b16 %v254
  %v1239 = vunpack.c.l.b16 %v255
  %v1240 = vunpack.c.l.b16 %v256
  %v1241 = vunpack.c.l.b16 %v257
  %v1242 = vunpack.c.l.b16 %v258
  %v1243 = vunpack.c.l.b16 %v259
  %v1244 = vunpack.c.l.b16 %v260
  %v1245 = vunpack.c.l.b16 %v261
  %v1246 = vunpack.c.l.b16 %v262
  %v1247 = vunpack.c.l.b16 %v263
  %v1248 = vunpack.c.l.b16 %v264
  %v1249 = vunpack.c.l.b16 %v265
  %v1250 = vunpack.c.l.b16 %v266
  %v1251 = vunpack.c.l.b16 %v267
  %v1252 = vunpack.c.l.b16 %v268
  %v1253 = vunpack.c.l.b16 %v269
  %v1254 = vunpack.c.l.b16 %v270
  %v1255 = vunpack.c.l.b16 %v271
  %v1256 = vunpack.c.l.b16 %v272
  %v1257 = vunpack.c.l.b16 %v273
  %v1258 = vunpack.c.l.b16 %v274
  %v1259 = vunpack.c.l.b16 %v275
  %v1260 = vunpack.c.l.b16 %v276
  %v1261 = vunpack.c.l.b16 %v277
  %v1262 = vunpack.c.l.b16 %v278
  %v1263 = vunpack.c.l.b16 %v279
  %v1264 = vunpack.c.l.b16 %v280
  %v1265 = vunpack.c.l.b16 %v281
  %v1266 = vunpack.c.l.b16 %v282
  %v1267 = vunpack.c.l.b16 %v283
  %v1268 = vunpack.c.l.b16 %v284
  %v1269 = vunpack.c.l.b16 %v285
  %v1270 = vunpack.c.l.b16 %v286
  %v1271 = vunpack.c.l.b16 %v287
  %v1272 = vunpack.c.l.b16 %v288
  %v1273 = vunpack.c.l.b16 %v289
  %v1274 = vunpack.c.l.b16 %v290
  %v1275 = vunpack.c.l.b16 %v291
  %v1276 = vunpack.c.l.b16 %v292
  %v1277 = vunpack.c.l.b16 %v293
  %v1278 = vunpack.c.l.b16 %v294
  %v1279 = vunpack.c.l.b16 %v295
  %v1280 = vunpack.c.l.b16 %v296
  %v1281 = vunpack.c.l.b16 %v297
  %v1282 = vunpack.c.l.b16 %v298
  %v1283 = vunpack.c.l.b16 %v299
  %v1284 = vunpack.c.l.b16 %v300
  %v1285 = vunpack.c.l.b16 %v301
  %v1286 = vunpack.c.l.b16 %v302
  %v1287 = vunpack.c.l.b16 %v303
  %v1288 = vunpack.c.l.b16 %v304
  %v1289 = vunpack.c.l.b16 %v305
  %v1290 = vunpack.c.l.b16 %v306
  %v1291 = vunpack.c.l.b16 %v307
  %v1292 = vunpack.c.l.b16 %v308
  %v1293 = vunpack.c.l.b16 %v309
  %v1294 = vunpack.c.l.b16 %v310
  %v1295 = vunpack.c.l.b16 %v311
  %v1296 = vunpack.c.l.b16 %v312
  %v1297 = vunpack.c.l.b16 %v313
  %v1298 = vunpack.c.l.b16 %v314
  %v1299 = vunpack.c.l.b16 %v315
  %v1300 = vunpack.c.l.b16 %v316
  %v1301 = vunpack.c.l.b16 %v317
  %v1302 = vunpack.c.l.b16 %v318
  %v1303 = vunpack.c.l.b16 %v319
  %v1304 = vunpack.c.l.b16 %v320
  %v1305 = vunpack.c.l.b16 %v321
  %v1306 = vunpack.c.l.b16 %v322
  %v1307 = vunpack.c.l.b16 %v323
  %v1308 = vunpack.c.l.b16 %v324
  %v1309 = vunpack.c.l.b16 %v325
  %v1310 = vunpack.c.l.b16 %v326
  %v1311 = vunpack.c.l.b16 %v327
  %v1312 = vunpack.c.l.b16 %v328
  %v1313 = vunpack.c.l.b16 %v329
  %v1314 = vunpack.c.l.b16 %v330
  %v1315 = vunpack.c.l.b16 %v331
  %v1316 = vunpack.c.l.b16 %v332
  %v1317 = vunpack.c.l.b16 %v333
  %v1318 = vunpack.c.l.b16 %v334
  %v1319 = vunpack.c.l.b16 %v335
  %v1320 = vunpack.c.l.b16 %v336
  %v1321 = vunpack.c.l.b16 %v337
  %v1322 = vunpack.c.l.b16 %v338
  %v1323 = vunpack.c.l.b16 %v339
  %v1324 = vunpack.c.l.b16 %v340
  %v1325 = vunpack.c.l.b16 %v341
  %v1326 = vunpack.c.l.b16 %v342
  %v1327 = vpack.c.b16 %v1112, %v1111
  %v1328 = vpack.c.b16 %v1114, %v1113
  %v1329 = vpack.c.b16 %v1116, %v1115
  %v1330 = vpack.c.b16 %v1118, %v1117
  %v1331 = vpack.c.b16 %v1120, %v1119
  %v1332 = vpack.c.b16 %v1122, %v1121
  %v1333 = vpack.c.b16 %v1124, %v1123
  %v1334 = vpack.c.b16 %v1126, %v1125
  %v1335 = vpack.c.b16 %v1128, %v1127
  %v1336 = vpack.c.b16 %v1130, %v1129
  %v1337 = vpack.c.b16 %v1132, %v1131
  %v1338 = vpack.c.b16 %v1134, %v1133
  %v1339 = vpack.c.b16 %v1136, %v1135
  %v1340 = vpack.c.b16 %v1138, %v1137
  %v1341 = vpack.c.b16 %v1140, %v1139
  %v1342 = vpack.c.b16 %v1142, %v1141
  %v1343 = vpack.c.b16 %v1144, %v1143
  %v1344 = vpack.c.b16 %v1146, %v1145
  %v1345 = vpack.c.b16 %v1148, %v1147
  %v1346 = vpack.c.b16 %v1150, %v1149
  %v1347 = vpack.c.b16 %v1152, %v1151
  %v1348 = vpack.c.b16 %v1154, %v1153
  %v1349 = vpack.c.b16 %v1156, %v1155
  %v1350 = vpack.c.b16 %v1158, %v1157
  %v1351 = vpack.c.b16 %v1160, %v1159
  %v1352 = vpack.c.b16 %v1162, %v1161
  %v1353 = vpack.c.b16 %v1164, %v1163
  %v1354 = vpack.c.b16 %v1166, %v1165
  %v1355 = vpack.c.b16 %v1168, %v1167
  %v1356 = vpack.c.b16 %v1170, %v1169
  %v1357 = vpack.c.b16 %v1172, %v1171
  %v1358 = vpack.c.b16 %v1174, %v1173
  %v1359 = vpack.c.b16 %v1176, %v1175
  %v1360 = vpack.c.b16 %v1178, %v1177
  %v1361 = vpack.c.b16 %v1180, %v1179
  %v1362 = vpack.c.b16 %v1182, %v1181
  %v1363 = vpack.c.b16 %v1184, %v1183
  %v1364 = vpack.c.b16 %v1186, %v1185
  %v1365 = vpack.c.b16 %v1188, %v1187
  %v1366 = vpack.c.b16 %v1190, %v1189
  %v1367 = vpack.c.b16 %v1192, %v1191
  %v1368 = vpack.c.b16 %v1194, %v1193
  %v1369 = vpack.c.b16 %v1196, %v1195
  %v1370 = vpack.c.b16 %v1198, %v1197
  %v1371 = vpack.c.b16 %v1200, %v1199
  %v1372 = vpack.c.b16 %v1202, %v1201
  %v1373 = vpack.c.b16 %v1204, %v1203
  %v1374 = vpack.c.b16 %v1206, %v1205
  %v1375 = vpack.c.b16 %v1208, %v1207
  %v1376 = vpack.c.b16 %v1210, %v1209
  %v1377 = vpack.c.b16 %v1212, %v1211
  %v1378 = vpack.c.b16 %v1214, %v1213
  %v1379 = vpack.c.b16 %v1216, %v1215
  %v1380 = vpack.c.b16 %v1218, %v1217
  %v1381 = vpack.c.b16 %v1220, %v1219
  %v1382 = vpack.c.b16 %v1222, %v1221
  %v1383 = vpack.c.b16 %v1224, %v1223
  %v1384 = vpack.c.b16 %v1226, %v1225
  %v1385 = vpack.c.b16 %v1228, %v1227
  %v1386 = vpack.c.b16 %v1230, %v1229
  %v1387 = vpack.c.b16 %v1232, %v1231
  %v1388 = vpack.c.b16 %v1234, %v1233
  %v1389 = vpack.c.b16 %v1236, %v1235
  %v1390 = vpack.c.b16 %v1238, %v1237
  %v1391 = vpack.c.b16 %v1240, %v1239
  %v1392 = vpack.c.b16 %v1242, %v1241
  %v1393 = vpack.c.b16 %v1244, %v1243
  %v1394 = vpack.c.b16 %v1246, %v1245
  %v1395 = vpack.c.b16 %v1248, %v1247
  %v1396 = vpack.c.b16 %v1250, %v1249
  %v1397 = vpack.c.b16 %v1252, %v1251
  %v1398 = vpack.c.b16 %v1254, %v1253
  %v1399 = vpack.c.b16 %v1256, %v1255
  %v1400 = vpack.c.b16 %v1258, %v1257
  %v1401 = vpack.c.b16 %v1260, %v1259
  %v1402 = vpack.c.b16 %v1262, %v1261
  %v1403 = vpack.c.b16 %v1264, %v1263
  %v1404 = vpack.c.b16 %v1266, %v1265
  %v1405 = vpack.c.b16 %v1268, %v1267
  %v1406 = vpack.c.b16 %v1270, %v1269
  %v1407 = vpack.c.b16 %v1272, %v1271
  %v1408 = vpack.c.b16 %v1274, %v1273
  %v1409 = vpack.c.b16 %v1276, %v1275
  %v1410 = vpack.c.b16 %v1278, %v1277
  %v1411 = vpack.c.b16 %v1280, %v1279
  %v1412 = vpack.c.b16 %v1282, %v1281
  %v1413 = vpack.c.b16 %v1284, %v1283
  %v1414 = vpack.c.b16 %v1286, %v1285
  %v1415 = vpack.c.b16 %v1288, %v1287
  %v1416 = vpack.c.b16 %v1290, %v1289
  %v1417 = vpack.c.b16 %v1292, %v1291
  %v1418 = vpack.c.b16 %v1294, %v1293
  %v1419 = vpack.c.b16 %v1296, %v1295
  %v1420 = vpack.c.b16 %v1298, %v1297
  %v1421 = vpack.c.b16 %v1300, %v1299
  %v1422 = vpack.c.b16 %v1302, %v1301
  %v1423 = vpack.c.b16 %v1304, %v1303
  %v1424 = vpack.c.b16 %v1306, %v1305
  %v1425 = vpack.c.b16 %v1308, %v1307
  %v1426 = vpack.c.b16 %v1310, %v1309
  %v1427 = vpack.c.b16 %v1312, %v1311
  %v1428 = vpack.c.b16 %v1314, %v1313
  %v1429 = vpack.c.b16 %v1316, %v1315
  %v1430 = vpack.c.b16 %v1318, %v1317
  %v1431 = vpack.c.b16 %v1320, %v1319
  %v1432 = vpack.c.b16 %v1322, %v1321
  %v1433 = vpack.c.b16 %v1324, %v1323
  %v1434 = vpack.c.b16 %v1326, %v1325
  %vm1543 = vcmask 523264
  %v1545 = vsel %vm1543, %v692, 0
  %v1548 = vsel %vm1543, %v706, 0
  %v1551 = vsel %vm1543, %v720, 0
  %v1554 = vsel %vm1543, %v734, 0
  %v1557 = vsel %vm1543, %v748, 0
  %v1560 = vsel %vm1543, %v762, 0
  %v1563 = vsel %vm1543, %v776, 0
  %v1566 = vsel %vm1543, %v790, 0
  %1568 = vmatpush.bf16.msra.mxu0 %v1334
  %1569 = vmatpush.bf16.msra.mxu0 %v1333
  %1570 = vmatpush.bf16.msra.mxu0 %v1332
  %1571 = vmatpush.bf16.msra.mxu0 %v1331
  %1572 = vmatpush.bf16.msra.mxu0 %v1330
  %1573 = vmatpush.bf16.msra.mxu0 %v1329
  %1574 = vmatpush.bf16.msra.mxu0 %v1328
  %1575 = vmatpush.bf16.msra.mxu0 %v1327
  %1576 = vmatmul.bf16.gmra.mxu0 %v679
  %v1577 = vpop.f32.mrf.mxu0
  %v1578 = vadd.f32 0.0, %v1577
  %v1579 = vpop.f32.mrf.mxu0
  %v1580 = vadd.f32 0.0, %v1579
  %1581 = vmatmul.bf16.gmra.mxu0 %v693
  %v1582 = vpop.f32.mrf.mxu0
  %v1583 = vadd.f32 0.0, %v1582
  %v1584 = vpop.f32.mrf.mxu0
  %v1585 = vadd.f32 0.0, %v1584
  %1586 = vmatmul.bf16.gmra.mxu0 %v707
  %v1587 = vpop.f32.mrf.mxu0
  %v1588 = vadd.f32 0.0, %v1587
  %v1589 = vpop.f32.mrf.mxu0
  %v1590 = vadd.f32 0.0, %v1589
  %1591 = vmatmul.bf16.gmra.mxu0 %v721
  %v1592 = vpop.f32.mrf.mxu0
  %v1593 = vadd.f32 0.0, %v1592
  %v1594 = vpop.f32.mrf.mxu0
  %v1595 = vadd.f32 0.0, %v1594
  %1596 = vmatmul.bf16.gmra.mxu0 %v735
  %v1597 = vpop.f32.mrf.mxu0
  %v1598 = vadd.f32 0.0, %v1597
  %v1599 = vpop.f32.mrf.mxu0
  %v1600 = vadd.f32 0.0, %v1599
  %1601 = vmatmul.bf16.gmra.mxu0 %v749
  %v1602 = vpop.f32.mrf.mxu0
  %v1603 = vadd.f32 0.0, %v1602
  %v1604 = vpop.f32.mrf.mxu0
  %v1605 = vadd.f32 0.0, %v1604
  %1606 = vmatmul.bf16.gmra.mxu0 %v763
  %v1607 = vpop.f32.mrf.mxu0
  %v1608 = vadd.f32 0.0, %v1607
  %v1609 = vpop.f32.mrf.mxu0
  %v1610 = vadd.f32 0.0, %v1609
  %1611 = vmatmul.bf16.gmra.mxu0 %v777
  %v1612 = vpop.f32.mrf.mxu0
  %v1613 = vadd.f32 0.0, %v1612
  %v1614 = vpop.f32.mrf.mxu0
  %v1615 = vadd.f32 0.0, %v1614
  %1616 = vdwg.mxu0
  %1617 = vmatpush.bf16.msra.mxu0 %v1342
  %1618 = vmatpush.bf16.msra.mxu0 %v1341
  %1619 = vmatpush.bf16.msra.mxu0 %v1340
  %1620 = vmatpush.bf16.msra.mxu0 %v1339
  %1621 = vmatpush.bf16.msra.mxu0 %v1338
  %1622 = vmatpush.bf16.msra.mxu0 %v1337
  %1623 = vmatpush.bf16.msra.mxu0 %v1336
  %1624 = vmatpush.bf16.msra.mxu0 %v1335
  %1625 = vmatmul.bf16.gmra.mxu0 %v680
  %v1626 = vpop.f32.mrf.mxu0
  %v1627 = vadd.f32 %v1578, %v1626
  %v1628 = vpop.f32.mrf.mxu0
  %v1629 = vadd.f32 %v1580, %v1628
  %1630 = vmatmul.bf16.gmra.mxu0 %v694
  %v1631 = vpop.f32.mrf.mxu0
  %v1632 = vadd.f32 %v1583, %v1631
  %v1633 = vpop.f32.mrf.mxu0
  %v1634 = vadd.f32 %v1585, %v1633
  %1635 = vmatmul.bf16.gmra.mxu0 %v708
  %v1636 = vpop.f32.mrf.mxu0
  %v1637 = vadd.f32 %v1588, %v1636
  %v1638 = vpop.f32.mrf.mxu0
  %v1639 = vadd.f32 %v1590, %v1638
  %1640 = vmatmul.bf16.gmra.mxu0 %v722
  %v1641 = vpop.f32.mrf.mxu0
  %v1642 = vadd.f32 %v1593, %v1641
  %v1643 = vpop.f32.mrf.mxu0
  %v1644 = vadd.f32 %v1595, %v1643
  %1645 = vmatmul.bf16.gmra.mxu0 %v736
  %v1646 = vpop.f32.mrf.mxu0
  %v1647 = vadd.f32 %v1598, %v1646
  %v1648 = vpop.f32.mrf.mxu0
  %v1649 = vadd.f32 %v1600, %v1648
  %1650 = vmatmul.bf16.gmra.mxu0 %v750
  %v1651 = vpop.f32.mrf.mxu0
  %v1652 = vadd.f32 %v1603, %v1651
  %v1653 = vpop.f32.mrf.mxu0
  %v1654 = vadd.f32 %v1605, %v1653
  %1655 = vmatmul.bf16.gmra.mxu0 %v764
  %v1656 = vpop.f32.mrf.mxu0
  %v1657 = vadd.f32 %v1608, %v1656
  %v1658 = vpop.f32.mrf.mxu0
  %v1659 = vadd.f32 %v1610, %v1658
  %1660 = vmatmul.bf16.gmra.mxu0 %v778
  %v1661 = vpop.f32.mrf.mxu0
  %v1662 = vadd.f32 %v1613, %v1661
  %v1663 = vpop.f32.mrf.mxu0
  %v1664 = vadd.f32 %v1615, %v1663
  %1665 = vdwg.mxu0
  %1666 = vmatpush.bf16.msra.mxu0 %v1350
  %1667 = vmatpush.bf16.msra.mxu0 %v1349
  %1668 = vmatpush.bf16.msra.mxu0 %v1348
  %1669 = vmatpush.bf16.msra.mxu0 %v1347
  %1670 = vmatpush.bf16.msra.mxu0 %v1346
  %1671 = vmatpush.bf16.msra.mxu0 %v1345
  %1672 = vmatpush.bf16.msra.mxu0 %v1344
  %1673 = vmatpush.bf16.msra.mxu0 %v1343
  %1674 = vmatmul.bf16.gmra.mxu0 %v681
  %v1675 = vpop.f32.mrf.mxu0
  %v1676 = vadd.f32 %v1627, %v1675
  %v1677 = vpop.f32.mrf.mxu0
  %v1678 = vadd.f32 %v1629, %v1677
  %1679 = vmatmul.bf16.gmra.mxu0 %v695
  %v1680 = vpop.f32.mrf.mxu0
  %v1681 = vadd.f32 %v1632, %v1680
  %v1682 = vpop.f32.mrf.mxu0
  %v1683 = vadd.f32 %v1634, %v1682
  %1684 = vmatmul.bf16.gmra.mxu0 %v709
  %v1685 = vpop.f32.mrf.mxu0
  %v1686 = vadd.f32 %v1637, %v1685
  %v1687 = vpop.f32.mrf.mxu0
  %v1688 = vadd.f32 %v1639, %v1687
  %1689 = vmatmul.bf16.gmra.mxu0 %v723
  %v1690 = vpop.f32.mrf.mxu0
  %v1691 = vadd.f32 %v1642, %v1690
  %v1692 = vpop.f32.mrf.mxu0
  %v1693 = vadd.f32 %v1644, %v1692
  %1694 = vmatmul.bf16.gmra.mxu0 %v737
  %v1695 = vpop.f32.mrf.mxu0
  %v1696 = vadd.f32 %v1647, %v1695
  %v1697 = vpop.f32.mrf.mxu0
  %v1698 = vadd.f32 %v1649, %v1697
  %1699 = vmatmul.bf16.gmra.mxu0 %v751
  %v1700 = vpop.f32.mrf.mxu0
  %v1701 = vadd.f32 %v1652, %v1700
  %v1702 = vpop.f32.mrf.mxu0
  %v1703 = vadd.f32 %v1654, %v1702
  %1704 = vmatmul.bf16.gmra.mxu0 %v765
  %v1705 = vpop.f32.mrf.mxu0
  %v1706 = vadd.f32 %v1657, %v1705
  %v1707 = vpop.f32.mrf.mxu0
  %v1708 = vadd.f32 %v1659, %v1707
  %1709 = vmatmul.bf16.gmra.mxu0 %v779
  %v1710 = vpop.f32.mrf.mxu0
  %v1711 = vadd.f32 %v1662, %v1710
  %v1712 = vpop.f32.mrf.mxu0
  %v1713 = vadd.f32 %v1664, %v1712
  %1714 = vdwg.mxu0
  %1715 = vmatpush.bf16.msra.mxu0 %v1358
  %1716 = vmatpush.bf16.msra.mxu0 %v1357
  %1717 = vmatpush.bf16.msra.mxu0 %v1356
  %1718 = vmatpush.bf16.msra.mxu0 %v1355
  %1719 = vmatpush.bf16.msra.mxu0 %v1354
  %1720 = vmatpush.bf16.msra.mxu0 %v1353
  %1721 = vmatpush.bf16.msra.mxu0 %v1352
  %1722 = vmatpush.bf16.msra.mxu0 %v1351
  %1723 = vmatmul.bf16.gmra.mxu0 %v682
  %v1724 = vpop.f32.mrf.mxu0
  %v1725 = vadd.f32 %v1676, %v1724
  %v1726 = vpop.f32.mrf.mxu0
  %v1727 = vadd.f32 %v1678, %v1726
  %1728 = vmatmul.bf16.gmra.mxu0 %v696
  %v1729 = vpop.f32.mrf.mxu0
  %v1730 = vadd.f32 %v1681, %v1729
  %v1731 = vpop.f32.mrf.mxu0
  %v1732 = vadd.f32 %v1683, %v1731
  %1733 = vmatmul.bf16.gmra.mxu0 %v710
  %v1734 = vpop.f32.mrf.mxu0
  %v1735 = vadd.f32 %v1686, %v1734
  %v1736 = vpop.f32.mrf.mxu0
  %v1737 = vadd.f32 %v1688, %v1736
  %1738 = vmatmul.bf16.gmra.mxu0 %v724
  %v1739 = vpop.f32.mrf.mxu0
  %v1740 = vadd.f32 %v1691, %v1739
  %v1741 = vpop.f32.mrf.mxu0
  %v1742 = vadd.f32 %v1693, %v1741
  %1743 = vmatmul.bf16.gmra.mxu0 %v738
  %v1744 = vpop.f32.mrf.mxu0
  %v1745 = vadd.f32 %v1696, %v1744
  %v1746 = vpop.f32.mrf.mxu0
  %v1747 = vadd.f32 %v1698, %v1746
  %1748 = vmatmul.bf16.gmra.mxu0 %v752
  %v1749 = vpop.f32.mrf.mxu0
  %v1750 = vadd.f32 %v1701, %v1749
  %v1751 = vpop.f32.mrf.mxu0
  %v1752 = vadd.f32 %v1703, %v1751
  %1753 = vmatmul.bf16.gmra.mxu0 %v766
  %v1754 = vpop.f32.mrf.mxu0
  %v1755 = vadd.f32 %v1706, %v1754
  %v1756 = vpop.f32.mrf.mxu0
  %v1757 = vadd.f32 %v1708, %v1756
  %1758 = vmatmul.bf16.gmra.mxu0 %v780
  %v1759 = vpop.f32.mrf.mxu0
  %v1760 = vadd.f32 %v1711, %v1759
  %v1761 = vpop.f32.mrf.mxu0
  %v1762 = vadd.f32 %v1713, %v1761
  %1763 = vdwg.mxu0
  %1764 = vmatpush.bf16.msra.mxu0 %v1366
  %1765 = vmatpush.bf16.msra.mxu0 %v1365
  %1766 = vmatpush.bf16.msra.mxu0 %v1364
  %1767 = vmatpush.bf16.msra.mxu0 %v1363
  %1768 = vmatpush.bf16.msra.mxu0 %v1362
  %1769 = vmatpush.bf16.msra.mxu0 %v1361
  %1770 = vmatpush.bf16.msra.mxu0 %v1360
  %1771 = vmatpush.bf16.msra.mxu0 %v1359
  %1772 = vmatmul.bf16.gmra.mxu0 %v683
  %v1773 = vpop.f32.mrf.mxu0
  %v1774 = vadd.f32 %v1725, %v1773
  %v1775 = vpop.f32.mrf.mxu0
  %v1776 = vadd.f32 %v1727, %v1775
  %1777 = vmatmul.bf16.gmra.mxu0 %v697
  %v1778 = vpop.f32.mrf.mxu0
  %v1779 = vadd.f32 %v1730, %v1778
  %v1780 = vpop.f32.mrf.mxu0
  %v1781 = vadd.f32 %v1732, %v1780
  %1782 = vmatmul.bf16.gmra.mxu0 %v711
  %v1783 = vpop.f32.mrf.mxu0
  %v1784 = vadd.f32 %v1735, %v1783
  %v1785 = vpop.f32.mrf.mxu0
  %v1786 = vadd.f32 %v1737, %v1785
  %1787 = vmatmul.bf16.gmra.mxu0 %v725
  %v1788 = vpop.f32.mrf.mxu0
  %v1789 = vadd.f32 %v1740, %v1788
  %v1790 = vpop.f32.mrf.mxu0
  %v1791 = vadd.f32 %v1742, %v1790
  %1792 = vmatmul.bf16.gmra.mxu0 %v739
  %v1793 = vpop.f32.mrf.mxu0
  %v1794 = vadd.f32 %v1745, %v1793
  %v1795 = vpop.f32.mrf.mxu0
  %v1796 = vadd.f32 %v1747, %v1795
  %1797 = vmatmul.bf16.gmra.mxu0 %v753
  %v1798 = vpop.f32.mrf.mxu0
  %v1799 = vadd.f32 %v1750, %v1798
  %v1800 = vpop.f32.mrf.mxu0
  %v1801 = vadd.f32 %v1752, %v1800
  %1802 = vmatmul.bf16.gmra.mxu0 %v767
  %v1803 = vpop.f32.mrf.mxu0
  %v1804 = vadd.f32 %v1755, %v1803
  %v1805 = vpop.f32.mrf.mxu0
  %v1806 = vadd.f32 %v1757, %v1805
  %1807 = vmatmul.bf16.gmra.mxu0 %v781
  %v1808 = vpop.f32.mrf.mxu0
  %v1809 = vadd.f32 %v1760, %v1808
  %v1810 = vpop.f32.mrf.mxu0
  %v1811 = vadd.f32 %v1762, %v1810
  %1812 = vdwg.mxu0
  %1813 = vmatpush.bf16.msra.mxu0 %v1374
  %1814 = vmatpush.bf16.msra.mxu0 %v1373
  %1815 = vmatpush.bf16.msra.mxu0 %v1372
  %1816 = vmatpush.bf16.msra.mxu0 %v1371
  %1817 = vmatpush.bf16.msra.mxu0 %v1370
  %1818 = vmatpush.bf16.msra.mxu0 %v1369
  %1819 = vmatpush.bf16.msra.mxu0 %v1368
  %1820 = vmatpush.bf16.msra.mxu0 %v1367
  %1821 = vmatmul.bf16.gmra.mxu0 %v684
  %v1822 = vpop.f32.mrf.mxu0
  %v1823 = vadd.f32 %v1774, %v1822
  %v1824 = vpop.f32.mrf.mxu0
  %v1825 = vadd.f32 %v1776, %v1824
  %1826 = vmatmul.bf16.gmra.mxu0 %v698
  %v1827 = vpop.f32.mrf.mxu0
  %v1828 = vadd.f32 %v1779, %v1827
  %v1829 = vpop.f32.mrf.mxu0
  %v1830 = vadd.f32 %v1781, %v1829
  %1831 = vmatmul.bf16.gmra.mxu0 %v712
  %v1832 = vpop.f32.mrf.mxu0
  %v1833 = vadd.f32 %v1784, %v1832
  %v1834 = vpop.f32.mrf.mxu0
  %v1835 = vadd.f32 %v1786, %v1834
  %1836 = vmatmul.bf16.gmra.mxu0 %v726
  %v1837 = vpop.f32.mrf.mxu0
  %v1838 = vadd.f32 %v1789, %v1837
  %v1839 = vpop.f32.mrf.mxu0
  %v1840 = vadd.f32 %v1791, %v1839
  %1841 = vmatmul.bf16.gmra.mxu0 %v740
  %v1842 = vpop.f32.mrf.mxu0
  %v1843 = vadd.f32 %v1794, %v1842
  %v1844 = vpop.f32.mrf.mxu0
  %v1845 = vadd.f32 %v1796, %v1844
  %1846 = vmatmul.bf16.gmra.mxu0 %v754
  %v1847 = vpop.f32.mrf.mxu0
  %v1848 = vadd.f32 %v1799, %v1847
  %v1849 = vpop.f32.mrf.mxu0
  %v1850 = vadd.f32 %v1801, %v1849
  %1851 = vmatmul.bf16.gmra.mxu0 %v768
  %v1852 = vpop.f32.mrf.mxu0
  %v1853 = vadd.f32 %v1804, %v1852
  %v1854 = vpop.f32.mrf.mxu0
  %v1855 = vadd.f32 %v1806, %v1854
  %1856 = vmatmul.bf16.gmra.mxu0 %v782
  %v1857 = vpop.f32.mrf.mxu0
  %v1858 = vadd.f32 %v1809, %v1857
  %v1859 = vpop.f32.mrf.mxu0
  %v1860 = vadd.f32 %v1811, %v1859
  %1861 = vdwg.mxu0
  %1862 = vmatpush.bf16.msra.mxu0 %v1382
  %1863 = vmatpush.bf16.msra.mxu0 %v1381
  %1864 = vmatpush.bf16.msra.mxu0 %v1380
  %1865 = vmatpush.bf16.msra.mxu0 %v1379
  %1866 = vmatpush.bf16.msra.mxu0 %v1378
  %1867 = vmatpush.bf16.msra.mxu0 %v1377
  %1868 = vmatpush.bf16.msra.mxu0 %v1376
  %1869 = vmatpush.bf16.msra.mxu0 %v1375
  %1870 = vmatmul.bf16.gmra.mxu0 %v685
  %v1871 = vpop.f32.mrf.mxu0
  %v1872 = vadd.f32 %v1823, %v1871
  %v1873 = vpop.f32.mrf.mxu0
  %v1874 = vadd.f32 %v1825, %v1873
  %1875 = vmatmul.bf16.gmra.mxu0 %v699
  %v1876 = vpop.f32.mrf.mxu0
  %v1877 = vadd.f32 %v1828, %v1876
  %v1878 = vpop.f32.mrf.mxu0
  %v1879 = vadd.f32 %v1830, %v1878
  %1880 = vmatmul.bf16.gmra.mxu0 %v713
  %v1881 = vpop.f32.mrf.mxu0
  %v1882 = vadd.f32 %v1833, %v1881
  %v1883 = vpop.f32.mrf.mxu0
  %v1884 = vadd.f32 %v1835, %v1883
  %1885 = vmatmul.bf16.gmra.mxu0 %v727
  %v1886 = vpop.f32.mrf.mxu0
  %v1887 = vadd.f32 %v1838, %v1886
  %v1888 = vpop.f32.mrf.mxu0
  %v1889 = vadd.f32 %v1840, %v1888
  %1890 = vmatmul.bf16.gmra.mxu0 %v741
  %v1891 = vpop.f32.mrf.mxu0
  %v1892 = vadd.f32 %v1843, %v1891
  %v1893 = vpop.f32.mrf.mxu0
  %v1894 = vadd.f32 %v1845, %v1893
  %1895 = vmatmul.bf16.gmra.mxu0 %v755
  %v1896 = vpop.f32.mrf.mxu0
  %v1897 = vadd.f32 %v1848, %v1896
  %v1898 = vpop.f32.mrf.mxu0
  %v1899 = vadd.f32 %v1850, %v1898
  %1900 = vmatmul.bf16.gmra.mxu0 %v769
  %v1901 = vpop.f32.mrf.mxu0
  %v1902 = vadd.f32 %v1853, %v1901
  %v1903 = vpop.f32.mrf.mxu0
  %v1904 = vadd.f32 %v1855, %v1903
  %1905 = vmatmul.bf16.gmra.mxu0 %v783
  %v1906 = vpop.f32.mrf.mxu0
  %v1907 = vadd.f32 %v1858, %v1906
  %v1908 = vpop.f32.mrf.mxu0
  %v1909 = vadd.f32 %v1860, %v1908
  %1910 = vdwg.mxu0
  %1911 = vmatpush.bf16.msra.mxu0 %v1390
  %1912 = vmatpush.bf16.msra.mxu0 %v1389
  %1913 = vmatpush.bf16.msra.mxu0 %v1388
  %1914 = vmatpush.bf16.msra.mxu0 %v1387
  %1915 = vmatpush.bf16.msra.mxu0 %v1386
  %1916 = vmatpush.bf16.msra.mxu0 %v1385
  %1917 = vmatpush.bf16.msra.mxu0 %v1384
  %1918 = vmatpush.bf16.msra.mxu0 %v1383
  %1919 = vmatmul.bf16.gmra.mxu0 %v686
  %v1920 = vpop.f32.mrf.mxu0
  %v1921 = vadd.f32 %v1872, %v1920
  %v1922 = vpop.f32.mrf.mxu0
  %v1923 = vadd.f32 %v1874, %v1922
  %1924 = vmatmul.bf16.gmra.mxu0 %v700
  %v1925 = vpop.f32.mrf.mxu0
  %v1926 = vadd.f32 %v1877, %v1925
  %v1927 = vpop.f32.mrf.mxu0
  %v1928 = vadd.f32 %v1879, %v1927
  %1929 = vmatmul.bf16.gmra.mxu0 %v714
  %v1930 = vpop.f32.mrf.mxu0
  %v1931 = vadd.f32 %v1882, %v1930
  %v1932 = vpop.f32.mrf.mxu0
  %v1933 = vadd.f32 %v1884, %v1932
  %1934 = vmatmul.bf16.gmra.mxu0 %v728
  %v1935 = vpop.f32.mrf.mxu0
  %v1936 = vadd.f32 %v1887, %v1935
  %v1937 = vpop.f32.mrf.mxu0
  %v1938 = vadd.f32 %v1889, %v1937
  %1939 = vmatmul.bf16.gmra.mxu0 %v742
  %v1940 = vpop.f32.mrf.mxu0
  %v1941 = vadd.f32 %v1892, %v1940
  %v1942 = vpop.f32.mrf.mxu0
  %v1943 = vadd.f32 %v1894, %v1942
  %1944 = vmatmul.bf16.gmra.mxu0 %v756
  %v1945 = vpop.f32.mrf.mxu0
  %v1946 = vadd.f32 %v1897, %v1945
  %v1947 = vpop.f32.mrf.mxu0
  %v1948 = vadd.f32 %v1899, %v1947
  %1949 = vmatmul.bf16.gmra.mxu0 %v770
  %v1950 = vpop.f32.mrf.mxu0
  %v1951 = vadd.f32 %v1902, %v1950
  %v1952 = vpop.f32.mrf.mxu0
  %v1953 = vadd.f32 %v1904, %v1952
  %1954 = vmatmul.bf16.gmra.mxu0 %v784
  %v1955 = vpop.f32.mrf.mxu0
  %v1956 = vadd.f32 %v1907, %v1955
  %v1957 = vpop.f32.mrf.mxu0
  %v1958 = vadd.f32 %v1909, %v1957
  %1959 = vdwg.mxu0
  %1960 = vmatpush.bf16.msra.mxu0 %v1398
  %1961 = vmatpush.bf16.msra.mxu0 %v1397
  %1962 = vmatpush.bf16.msra.mxu0 %v1396
  %1963 = vmatpush.bf16.msra.mxu0 %v1395
  %1964 = vmatpush.bf16.msra.mxu0 %v1394
  %1965 = vmatpush.bf16.msra.mxu0 %v1393
  %1966 = vmatpush.bf16.msra.mxu0 %v1392
  %1967 = vmatpush.bf16.msra.mxu0 %v1391
  %1968 = vmatmul.bf16.gmra.mxu0 %v687
  %v1969 = vpop.f32.mrf.mxu0
  %v1970 = vadd.f32 %v1921, %v1969
  %v1971 = vpop.f32.mrf.mxu0
  %v1972 = vadd.f32 %v1923, %v1971
  %1973 = vmatmul.bf16.gmra.mxu0 %v701
  %v1974 = vpop.f32.mrf.mxu0
  %v1975 = vadd.f32 %v1926, %v1974
  %v1976 = vpop.f32.mrf.mxu0
  %v1977 = vadd.f32 %v1928, %v1976
  %1978 = vmatmul.bf16.gmra.mxu0 %v715
  %v1979 = vpop.f32.mrf.mxu0
  %v1980 = vadd.f32 %v1931, %v1979
  %v1981 = vpop.f32.mrf.mxu0
  %v1982 = vadd.f32 %v1933, %v1981
  %1983 = vmatmul.bf16.gmra.mxu0 %v729
  %v1984 = vpop.f32.mrf.mxu0
  %v1985 = vadd.f32 %v1936, %v1984
  %v1986 = vpop.f32.mrf.mxu0
  %v1987 = vadd.f32 %v1938, %v1986
  %1988 = vmatmul.bf16.gmra.mxu0 %v743
  %v1989 = vpop.f32.mrf.mxu0
  %v1990 = vadd.f32 %v1941, %v1989
  %v1991 = vpop.f32.mrf.mxu0
  %v1992 = vadd.f32 %v1943, %v1991
  %1993 = vmatmul.bf16.gmra.mxu0 %v757
  %v1994 = vpop.f32.mrf.mxu0
  %v1995 = vadd.f32 %v1946, %v1994
  %v1996 = vpop.f32.mrf.mxu0
  %v1997 = vadd.f32 %v1948, %v1996
  %1998 = vmatmul.bf16.gmra.mxu0 %v771
  %v1999 = vpop.f32.mrf.mxu0
  %v2000 = vadd.f32 %v1951, %v1999
  %v2001 = vpop.f32.mrf.mxu0
  %v2002 = vadd.f32 %v1953, %v2001
  %2003 = vmatmul.bf16.gmra.mxu0 %v785
  %v2004 = vpop.f32.mrf.mxu0
  %v2005 = vadd.f32 %v1956, %v2004
  %v2006 = vpop.f32.mrf.mxu0
  %v2007 = vadd.f32 %v1958, %v2006
  %2008 = vdwg.mxu0
  %2009 = vmatpush.bf16.msra.mxu0 %v1406
  %2010 = vmatpush.bf16.msra.mxu0 %v1405
  %2011 = vmatpush.bf16.msra.mxu0 %v1404
  %2012 = vmatpush.bf16.msra.mxu0 %v1403
  %2013 = vmatpush.bf16.msra.mxu0 %v1402
  %2014 = vmatpush.bf16.msra.mxu0 %v1401
  %2015 = vmatpush.bf16.msra.mxu0 %v1400
  %2016 = vmatpush.bf16.msra.mxu0 %v1399
  %2017 = vmatmul.bf16.gmra.mxu0 %v688
  %v2018 = vpop.f32.mrf.mxu0
  %v2019 = vadd.f32 %v1970, %v2018
  %v2020 = vpop.f32.mrf.mxu0
  %v2021 = vadd.f32 %v1972, %v2020
  %2022 = vmatmul.bf16.gmra.mxu0 %v702
  %v2023 = vpop.f32.mrf.mxu0
  %v2024 = vadd.f32 %v1975, %v2023
  %v2025 = vpop.f32.mrf.mxu0
  %v2026 = vadd.f32 %v1977, %v2025
  %2027 = vmatmul.bf16.gmra.mxu0 %v716
  %v2028 = vpop.f32.mrf.mxu0
  %v2029 = vadd.f32 %v1980, %v2028
  %v2030 = vpop.f32.mrf.mxu0
  %v2031 = vadd.f32 %v1982, %v2030
  %2032 = vmatmul.bf16.gmra.mxu0 %v730
  %v2033 = vpop.f32.mrf.mxu0
  %v2034 = vadd.f32 %v1985, %v2033
  %v2035 = vpop.f32.mrf.mxu0
  %v2036 = vadd.f32 %v1987, %v2035
  %2037 = vmatmul.bf16.gmra.mxu0 %v744
  %v2038 = vpop.f32.mrf.mxu0
  %v2039 = vadd.f32 %v1990, %v2038
  %v2040 = vpop.f32.mrf.mxu0
  %v2041 = vadd.f32 %v1992, %v2040
  %2042 = vmatmul.bf16.gmra.mxu0 %v758
  %v2043 = vpop.f32.mrf.mxu0
  %v2044 = vadd.f32 %v1995, %v2043
  %v2045 = vpop.f32.mrf.mxu0
  %v2046 = vadd.f32 %v1997, %v2045
  %2047 = vmatmul.bf16.gmra.mxu0 %v772
  %v2048 = vpop.f32.mrf.mxu0
  %v2049 = vadd.f32 %v2000, %v2048
  %v2050 = vpop.f32.mrf.mxu0
  %v2051 = vadd.f32 %v2002, %v2050
  %2052 = vmatmul.bf16.gmra.mxu0 %v786
  %v2053 = vpop.f32.mrf.mxu0
  %v2054 = vadd.f32 %v2005, %v2053
  %v2055 = vpop.f32.mrf.mxu0
  %v2056 = vadd.f32 %v2007, %v2055
  %2057 = vdwg.mxu0
  %2058 = vmatpush.bf16.msra.mxu0 %v1414
  %2059 = vmatpush.bf16.msra.mxu0 %v1413
  %2060 = vmatpush.bf16.msra.mxu0 %v1412
  %2061 = vmatpush.bf16.msra.mxu0 %v1411
  %2062 = vmatpush.bf16.msra.mxu0 %v1410
  %2063 = vmatpush.bf16.msra.mxu0 %v1409
  %2064 = vmatpush.bf16.msra.mxu0 %v1408
  %2065 = vmatpush.bf16.msra.mxu0 %v1407
  %2066 = vmatmul.bf16.gmra.mxu0 %v689
  %v2067 = vpop.f32.mrf.mxu0
  %v2068 = vadd.f32 %v2019, %v2067
  %v2069 = vpop.f32.mrf.mxu0
  %v2070 = vadd.f32 %v2021, %v2069
  %2071 = vmatmul.bf16.gmra.mxu0 %v703
  %v2072 = vpop.f32.mrf.mxu0
  %v2073 = vadd.f32 %v2024, %v2072
  %v2074 = vpop.f32.mrf.mxu0
  %v2075 = vadd.f32 %v2026, %v2074
  %2076 = vmatmul.bf16.gmra.mxu0 %v717
  %v2077 = vpop.f32.mrf.mxu0
  %v2078 = vadd.f32 %v2029, %v2077
  %v2079 = vpop.f32.mrf.mxu0
  %v2080 = vadd.f32 %v2031, %v2079
  %2081 = vmatmul.bf16.gmra.mxu0 %v731
  %v2082 = vpop.f32.mrf.mxu0
  %v2083 = vadd.f32 %v2034, %v2082
  %v2084 = vpop.f32.mrf.mxu0
  %v2085 = vadd.f32 %v2036, %v2084
  %2086 = vmatmul.bf16.gmra.mxu0 %v745
  %v2087 = vpop.f32.mrf.mxu0
  %v2088 = vadd.f32 %v2039, %v2087
  %v2089 = vpop.f32.mrf.mxu0
  %v2090 = vadd.f32 %v2041, %v2089
  %2091 = vmatmul.bf16.gmra.mxu0 %v759
  %v2092 = vpop.f32.mrf.mxu0
  %v2093 = vadd.f32 %v2044, %v2092
  %v2094 = vpop.f32.mrf.mxu0
  %v2095 = vadd.f32 %v2046, %v2094
  %2096 = vmatmul.bf16.gmra.mxu0 %v773
  %v2097 = vpop.f32.mrf.mxu0
  %v2098 = vadd.f32 %v2049, %v2097
  %v2099 = vpop.f32.mrf.mxu0
  %v2100 = vadd.f32 %v2051, %v2099
  %2101 = vmatmul.bf16.gmra.mxu0 %v787
  %v2102 = vpop.f32.mrf.mxu0
  %v2103 = vadd.f32 %v2054, %v2102
  %v2104 = vpop.f32.mrf.mxu0
  %v2105 = vadd.f32 %v2056, %v2104
  %2106 = vdwg.mxu0
  %2107 = vmatpush.bf16.msra.mxu0 %v1422
  %2108 = vmatpush.bf16.msra.mxu0 %v1421
  %2109 = vmatpush.bf16.msra.mxu0 %v1420
  %2110 = vmatpush.bf16.msra.mxu0 %v1419
  %2111 = vmatpush.bf16.msra.mxu0 %v1418
  %2112 = vmatpush.bf16.msra.mxu0 %v1417
  %2113 = vmatpush.bf16.msra.mxu0 %v1416
  %2114 = vmatpush.bf16.msra.mxu0 %v1415
  %2115 = vmatmul.bf16.gmra.mxu0 %v690
  %v2116 = vpop.f32.mrf.mxu0
  %v2117 = vadd.f32 %v2068, %v2116
  %v2118 = vpop.f32.mrf.mxu0
  %v2119 = vadd.f32 %v2070, %v2118
  %2120 = vmatmul.bf16.gmra.mxu0 %v704
  %v2121 = vpop.f32.mrf.mxu0
  %v2122 = vadd.f32 %v2073, %v2121
  %v2123 = vpop.f32.mrf.mxu0
  %v2124 = vadd.f32 %v2075, %v2123
  %2125 = vmatmul.bf16.gmra.mxu0 %v718
  %v2126 = vpop.f32.mrf.mxu0
  %v2127 = vadd.f32 %v2078, %v2126
  %v2128 = vpop.f32.mrf.mxu0
  %v2129 = vadd.f32 %v2080, %v2128
  %2130 = vmatmul.bf16.gmra.mxu0 %v732
  %v2131 = vpop.f32.mrf.mxu0
  %v2132 = vadd.f32 %v2083, %v2131
  %v2133 = vpop.f32.mrf.mxu0
  %v2134 = vadd.f32 %v2085, %v2133
  %2135 = vmatmul.bf16.gmra.mxu0 %v746
  %v2136 = vpop.f32.mrf.mxu0
  %v2137 = vadd.f32 %v2088, %v2136
  %v2138 = vpop.f32.mrf.mxu0
  %v2139 = vadd.f32 %v2090, %v2138
  %2140 = vmatmul.bf16.gmra.mxu0 %v760
  %v2141 = vpop.f32.mrf.mxu0
  %v2142 = vadd.f32 %v2093, %v2141
  %v2143 = vpop.f32.mrf.mxu0
  %v2144 = vadd.f32 %v2095, %v2143
  %2145 = vmatmul.bf16.gmra.mxu0 %v774
  %v2146 = vpop.f32.mrf.mxu0
  %v2147 = vadd.f32 %v2098, %v2146
  %v2148 = vpop.f32.mrf.mxu0
  %v2149 = vadd.f32 %v2100, %v2148
  %2150 = vmatmul.bf16.gmra.mxu0 %v788
  %v2151 = vpop.f32.mrf.mxu0
  %v2152 = vadd.f32 %v2103, %v2151
  %v2153 = vpop.f32.mrf.mxu0
  %v2154 = vadd.f32 %v2105, %v2153
  %2155 = vdwg.mxu0
  %2156 = vmatpush.bf16.msra.mxu0 %v1430
  %2157 = vmatpush.bf16.msra.mxu0 %v1429
  %2158 = vmatpush.bf16.msra.mxu0 %v1428
  %2159 = vmatpush.bf16.msra.mxu0 %v1427
  %2160 = vmatpush.bf16.msra.mxu0 %v1426
  %2161 = vmatpush.bf16.msra.mxu0 %v1425
  %2162 = vmatpush.bf16.msra.mxu0 %v1424
  %2163 = vmatpush.bf16.msra.mxu0 %v1423
  %2164 = vmatmul.bf16.gmra.mxu0 %v691
  %v2165 = vpop.f32.mrf.mxu0
  %v2166 = vadd.f32 %v2117, %v2165
  %v2167 = vpop.f32.mrf.mxu0
  %v2168 = vadd.f32 %v2119, %v2167
  %2169 = vmatmul.bf16.gmra.mxu0 %v705
  %v2170 = vpop.f32.mrf.mxu0
  %v2171 = vadd.f32 %v2122, %v2170
  %v2172 = vpop.f32.mrf.mxu0
  %v2173 = vadd.f32 %v2124, %v2172
  %2174 = vmatmul.bf16.gmra.mxu0 %v719
  %v2175 = vpop.f32.mrf.mxu0
  %v2176 = vadd.f32 %v2127, %v2175
  %v2177 = vpop.f32.mrf.mxu0
  %v2178 = vadd.f32 %v2129, %v2177
  %2179 = vmatmul.bf16.gmra.mxu0 %v733
  %v2180 = vpop.f32.mrf.mxu0
  %v2181 = vadd.f32 %v2132, %v2180
  %v2182 = vpop.f32.mrf.mxu0
  %v2183 = vadd.f32 %v2134, %v2182
  %2184 = vmatmul.bf16.gmra.mxu0 %v747
  %v2185 = vpop.f32.mrf.mxu0
  %v2186 = vadd.f32 %v2137, %v2185
  %v2187 = vpop.f32.mrf.mxu0
  %v2188 = vadd.f32 %v2139, %v2187
  %2189 = vmatmul.bf16.gmra.mxu0 %v761
  %v2190 = vpop.f32.mrf.mxu0
  %v2191 = vadd.f32 %v2142, %v2190
  %v2192 = vpop.f32.mrf.mxu0
  %v2193 = vadd.f32 %v2144, %v2192
  %2194 = vmatmul.bf16.gmra.mxu0 %v775
  %v2195 = vpop.f32.mrf.mxu0
  %v2196 = vadd.f32 %v2147, %v2195
  %v2197 = vpop.f32.mrf.mxu0
  %v2198 = vadd.f32 %v2149, %v2197
  %2199 = vmatmul.bf16.gmra.mxu0 %v789
  %v2200 = vpop.f32.mrf.mxu0
  %v2201 = vadd.f32 %v2152, %v2200
  %v2202 = vpop.f32.mrf.mxu0
  %v2203 = vadd.f32 %v2154, %v2202
  %2204 = vdwg.mxu0
  %2205 = vmatpush.bf16.msra.mxu0 0
  %2206 = vmatpush.bf16.msra.mxu0 0
  %2207 = vmatpush.bf16.msra.mxu0 0
  %2208 = vmatpush.bf16.msra.mxu0 0
  %2209 = vmatpush.bf16.msra.mxu0 %v1434
  %2210 = vmatpush.bf16.msra.mxu0 %v1433
  %2211 = vmatpush.bf16.msra.mxu0 %v1432
  %2212 = vmatpush.bf16.msra.mxu0 %v1431
  %2213 = vmatmul.bf16.gmra.mxu0 %v1545
  %v2214 = vpop.f32.mrf.mxu0
  %v2215 = vadd.f32 %v2166, %v2214
  %v2216 = vpop.f32.mrf.mxu0
  %v2217 = vadd.f32 %v2168, %v2216
  %2218 = vmatmul.bf16.gmra.mxu0 %v1548
  %v2219 = vpop.f32.mrf.mxu0
  %v2220 = vadd.f32 %v2171, %v2219
  %v2221 = vpop.f32.mrf.mxu0
  %v2222 = vadd.f32 %v2173, %v2221
  %2223 = vmatmul.bf16.gmra.mxu0 %v1551
  %v2224 = vpop.f32.mrf.mxu0
  %v2225 = vadd.f32 %v2176, %v2224
  %v2226 = vpop.f32.mrf.mxu0
  %v2227 = vadd.f32 %v2178, %v2226
  %2228 = vmatmul.bf16.gmra.mxu0 %v1554
  %v2229 = vpop.f32.mrf.mxu0
  %v2230 = vadd.f32 %v2181, %v2229
  %v2231 = vpop.f32.mrf.mxu0
  %v2232 = vadd.f32 %v2183, %v2231
  %2233 = vmatmul.bf16.gmra.mxu0 %v1557
  %v2234 = vpop.f32.mrf.mxu0
  %v2235 = vadd.f32 %v2186, %v2234
  %v2236 = vpop.f32.mrf.mxu0
  %v2237 = vadd.f32 %v2188, %v2236
  %2238 = vmatmul.bf16.gmra.mxu0 %v1560
  %v2239 = vpop.f32.mrf.mxu0
  %v2240 = vadd.f32 %v2191, %v2239
  %v2241 = vpop.f32.mrf.mxu0
  %v2242 = vadd.f32 %v2193, %v2241
  %2243 = vmatmul.bf16.gmra.mxu0 %v1563
  %v2244 = vpop.f32.mrf.mxu0
  %v2245 = vadd.f32 %v2196, %v2244
  %v2246 = vpop.f32.mrf.mxu0
  %v2247 = vadd.f32 %v2198, %v2246
  %2248 = vmatmul.bf16.gmra.mxu0 %v1566
  %v2249 = vpop.f32.mrf.mxu0
  %v2250 = vadd.f32 %v2201, %v2249
  %v2251 = vpop.f32.mrf.mxu0
  %v2252 = vadd.f32 %v2203, %v2251
  %2253 = vdwg.mxu0
  %v2254 = vpack.c.bf16 %v2215, %v2215
  %v2255 = vpack.c.bf16 %v2217, %v2217
  %v2256 = vpack.c.bf16 %v2220, %v2220
  %v2257 = vpack.c.bf16 %v2222, %v2222
  %v2258 = vpack.c.bf16 %v2225, %v2225
  %v2259 = vpack.c.bf16 %v2227, %v2227
  %v2260 = vpack.c.bf16 %v2230, %v2230
  %v2261 = vpack.c.bf16 %v2232, %v2232
  %v2262 = vpack.c.bf16 %v2235, %v2235
  %v2263 = vpack.c.bf16 %v2237, %v2237
  %v2264 = vpack.c.bf16 %v2240, %v2240
  %v2265 = vpack.c.bf16 %v2242, %v2242
  %v2266 = vpack.c.bf16 %v2245, %v2245
  %v2267 = vpack.c.bf16 %v2247, %v2247
  %v2268 = vpack.c.bf16 %v2250, %v2250
  %v2269 = vpack.c.bf16 %v2252, %v2252
  %vm2270 = vcmask 519168
  %2271 = vst.msk [vmem:[%s2] sm:$0xf] %vm2270, %v2254
  %2272 = vst.msk [vmem:[%s2 + $0x4] sm:$0xf] %vm2270, %v2255
  %2273 = vst.msk [vmem:[%s2 + $0x8] sm:$0xf] %vm2270, %v2256
  %2274 = vst.msk [vmem:[%s2 + $0xc] sm:$0xf] %vm2270, %v2257
  %2275 = vst.msk [vmem:[%s2 + $0x10] sm:$0xf] %vm2270, %v2258
  %2276 = vst.msk [vmem:[%s2 + $0x14] sm:$0xf] %vm2270, %v2259
  %2277 = vst.msk [vmem:[%s2 + $0x18] sm:$0xf] %vm2270, %v2260
  %2278 = vst.msk [vmem:[%s2 + $0x1c] sm:$0xf] %vm2270, %v2261
  %2279 = vst.msk [vmem:[%s2 + $0x20] sm:$0xf] %vm2270, %v2262
  %2280 = vst.msk [vmem:[%s2 + $0x24] sm:$0xf] %vm2270, %v2263
  %2281 = vst.msk [vmem:[%s2 + $0x28] sm:$0xf] %vm2270, %v2264
  %2282 = vst.msk [vmem:[%s2 + $0x2c] sm:$0xf] %vm2270, %v2265
  %2283 = vst.msk [vmem:[%s2 + $0x30] sm:$0xf] %vm2270, %v2266
  %2284 = vst.msk [vmem:[%s2 + $0x34] sm:$0xf] %vm2270, %v2267
  %2285 = vst.msk [vmem:[%s2 + $0x38] sm:$0xf] %vm2270, %v2268
  %2286 = vst.msk [vmem:[%s2 + $0x3c] sm:$0xf] %vm2270, %v2269
  %v2287 = vsel %vm1543, %v2215, 0.0
  %v2288 = vsel %vm1543, %v2217, 0.0
  %v2289 = vadd.f32 %v2287, %v2288
  %v2290 = vsel %vm1543, %v2220, 0.0
  %v2291 = vadd.f32 %v2289, %v2290
  %v2292 = vsel %vm1543, %v2222, 0.0
  %v2293 = vadd.f32 %v2291, %v2292
  %v2294 = vsel %vm1543, %v2225, 0.0
  %v2295 = vadd.f32 %v2293, %v2294
  %v2296 = vsel %vm1543, %v2227, 0.0
  %v2297 = vadd.f32 %v2295, %v2296
  %v2298 = vsel %vm1543, %v2230, 0.0
  %v2299 = vadd.f32 %v2297, %v2298
  %v2300 = vsel %vm1543, %v2232, 0.0
  %v2301 = vadd.f32 %v2299, %v2300
  %v2302 = vsel %vm1543, %v2235, 0.0
  %v2303 = vadd.f32 %v2301, %v2302
  %v2304 = vsel %vm1543, %v2237, 0.0
  %v2305 = vadd.f32 %v2303, %v2304
  %v2306 = vsel %vm1543, %v2240, 0.0
  %v2307 = vadd.f32 %v2305, %v2306
  %v2308 = vsel %vm1543, %v2242, 0.0
  %v2309 = vadd.f32 %v2307, %v2308
  %v2310 = vsel %vm1543, %v2245, 0.0
  %v2311 = vadd.f32 %v2309, %v2310
  %v2312 = vsel %vm1543, %v2247, 0.0
  %v2313 = vadd.f32 %v2311, %v2312
  %v2314 = vsel %vm1543, %v2250, 0.0
  %v2315 = vadd.f32 %v2313, %v2314
  %v2316 = vsel %vm1543, %v2252, 0.0
  %v2317 = vadd.f32 %v2315, %v2316
  %v2318 = vrot.slane %v2317, 4
  %v2319 = vadd.f32 %v2317, %v2318
  %v2320 = vrot.slane %v2319, 2
  %v2321 = vadd.f32 %v2319, %v2320
  %v2322 = vrot.slane %v2321, 1
  %v2323 = vadd.f32 %v2321, %v2322
  %vm2324 = vcmask 516096
  %2325 = vst.msk [vmem:[%s3] sm:$0x1] %vm2324, %v2323
  %v2326 = vmul.f32 %v2215, %v2215
  %v2327 = vmul.f32 %v2217, %v2217
  %v2328 = vmul.f32 %v2220, %v2220
  %v2329 = vmul.f32 %v2222, %v2222
  %v2330 = vmul.f32 %v2225, %v2225
  %v2331 = vmul.f32 %v2227, %v2227
  %v2332 = vmul.f32 %v2230, %v2230
  %v2333 = vmul.f32 %v2232, %v2232
  %v2334 = vmul.f32 %v2235, %v2235
  %v2335 = vmul.f32 %v2237, %v2237
  %v2336 = vmul.f32 %v2240, %v2240
  %v2337 = vmul.f32 %v2242, %v2242
  %v2338 = vmul.f32 %v2245, %v2245
  %v2339 = vmul.f32 %v2247, %v2247
  %v2340 = vmul.f32 %v2250, %v2250
  %v2341 = vmul.f32 %v2252, %v2252
  %v2342 = vsel %vm1543, %v2326, 0.0
  %v2343 = vsel %vm1543, %v2327, 0.0
  %v2344 = vadd.f32 %v2342, %v2343
  %v2345 = vsel %vm1543, %v2328, 0.0
  %v2346 = vadd.f32 %v2344, %v2345
  %v2347 = vsel %vm1543, %v2329, 0.0
  %v2348 = vadd.f32 %v2346, %v2347
  %v2349 = vsel %vm1543, %v2330, 0.0
  %v2350 = vadd.f32 %v2348, %v2349
  %v2351 = vsel %vm1543, %v2331, 0.0
  %v2352 = vadd.f32 %v2350, %v2351
  %v2353 = vsel %vm1543, %v2332, 0.0
  %v2354 = vadd.f32 %v2352, %v2353
  %v2355 = vsel %vm1543, %v2333, 0.0
  %v2356 = vadd.f32 %v2354, %v2355
  %v2357 = vsel %vm1543, %v2334, 0.0
  %v2358 = vadd.f32 %v2356, %v2357
  %v2359 = vsel %vm1543, %v2335, 0.0
  %v2360 = vadd.f32 %v2358, %v2359
  %v2361 = vsel %vm1543, %v2336, 0.0
  %v2362 = vadd.f32 %v2360, %v2361
  %v2363 = vsel %vm1543, %v2337, 0.0
  %v2364 = vadd.f32 %v2362, %v2363
  %v2365 = vsel %vm1543, %v2338, 0.0
  %v2366 = vadd.f32 %v2364, %v2365
  %v2367 = vsel %vm1543, %v2339, 0.0
  %v2368 = vadd.f32 %v2366, %v2367
  %v2369 = vsel %vm1543, %v2340, 0.0
  %v2370 = vadd.f32 %v2368, %v2369
  %v2371 = vsel %vm1543, %v2341, 0.0
  %v2372 = vadd.f32 %v2370, %v2371
  %v2373 = vrot.slane %v2372, 4
  %v2374 = vadd.f32 %v2372, %v2373
  %v2375 = vrot.slane %v2374, 2
  %v2376 = vadd.f32 %v2374, %v2375
  %v2377 = vrot.slane %v2376, 1
  %v2378 = vadd.f32 %v2376, %v2377
  %2379 = vst.msk [vmem:[%s4] sm:$0x1] %vm2324, %v2378
  // Predicated region
  $region10: #{psmnet_forward.90} parent=0 // pred_check
    _
  $region11: #{psmnet_forward.90} parent=0 // pred_check_branch
    %2381 = sbr.rel (0) target = $region13
  $region12: #{psmnet_forward.90} parent=0 // pred_region
    _
  $region13: #{psmnet_forward.90} parent=0 // pred_fallthru
    _
  // Predicated region
  $region14: #{psmnet_forward.90} parent=0 // pred_check
    _
  $region15: #{psmnet_forward.90} parent=0 // pred_check_branch
    %2383 = sbr.rel (0) target = $region17
  $region16: #{psmnet_forward.90} parent=0 // pred_region
    _
  $region17: #{psmnet_forward.90} parent=0 // pred_fallthru
    _
  // Predicated region
  $region18: #{psmnet_forward.90} parent=0 // pred_check
    _
  $region19: #{psmnet_forward.90} parent=0 // pred_check_branch
    %2385 = sbr.rel (0) target = $region21
  $region20: #{psmnet_forward.90} parent=0 // pred_region
    _
  $region21: #{psmnet_forward.90} parent=0 // pred_fallthru
    _
  // Predicated region
  $region22: #{psmnet_forward.90} parent=0 // pred_check
    _
  $region23: #{psmnet_forward.90} parent=0 // pred_check_branch
    %2387 = sbr.rel (0) target = $region25
  $region24: #{psmnet_forward.90} parent=0 // pred_region
    _
  $region25: #{psmnet_forward.90} parent=0 // pred_fallthru
    _
  // Predicated region
  $region26: #{psmnet_forward.90} parent=0 // pred_check
    _
  $region27: #{psmnet_forward.90} parent=0 // pred_check_branch
    %2389 = sbr.rel (0) target = $region29
  $region28: #{psmnet_forward.90} parent=0 // pred_region
    _
  $region29: #{psmnet_forward.90} parent=0 // pred_fallthru
    _
  // Predicated region
  $region30: #{psmnet_forward.90} parent=0 // pred_check
    _
  $region31: #{psmnet_forward.90} parent=0 // pred_check_branch
    %2391 = sbr.rel (0) target = $region33
  $region32: #{psmnet_forward.90} parent=0 // pred_region
    _
  $region33: #{psmnet_forward.90} parent=0 // pred_fallthru
    _

// kernel: psmnet_forward.97
$region0: #{psmnet_forward.97}
  #allocation0 [shape = 'u32[]', space=smem, size = 0x4, offset = 0x4, fixed_abs, tag = 'smem constant byte address 0x4 - core index']
  #allocation1 [shape = 'u32[72,128]{1,0:T(1,128)}', space=vmem, size = 0x9000, scoped, tag = 'internal scratch']
  %s0 = inlined_call_operand.vmem [shape: bf16[64,128], index: 0, kind: input, shape index: {}]
  %s1 = inlined_call_operand.vmem [shape: f32[1,128], index: 1, kind: input, shape index: {}]
  %s2 = inlined_call_operand.vmem [shape: f32[1,128], index: 2, kind: input, shape index: {}]
  %s3 = inlined_call_operand.vmem [shape: bf16[64,128], index: 3, kind: input, shape index: {}]
  %s4 = inlined_call_operand.vmem [shape: bf16[64,128], index: 4, kind: output, shape index: {}]
  %s5 = sld [smem:[#allocation0]]
  $region26: #{psmnet_forward.97} parent=0
    _
  %s7 = ssub.s32 1, %s5
  %s8 = scalar_select 0, %s7, %s5
  // Predicated region
  $region2: #{psmnet_forward.97} parent=0 // pred_check
    _
  $region3: #{psmnet_forward.97} parent=0 // pred_check_branch
    %10 = sbr.rel (0) target = $region5
  $region4: #{psmnet_forward.97} parent=0 // pred_region
    _
  $region5: #{psmnet_forward.97} parent=0 // pred_fallthru
    _
  // Predicated region
  $region6: #{psmnet_forward.97} parent=0 // pred_check
    _
  $region7: #{psmnet_forward.97} parent=0 // pred_check_branch
    %12 = sbr.rel (0) target = $region9
  $region8: #{psmnet_forward.97} parent=0 // pred_region
    _
  $region9: #{psmnet_forward.97} parent=0 // pred_fallthru
    _
  // Predicated region
  $region10: #{psmnet_forward.97} parent=0 // pred_check
    _
  $region11: #{psmnet_forward.97} parent=0 // pred_check_branch
    %14 = sbr.rel (0) target = $region13
  $region12: #{psmnet_forward.97} parent=0 // pred_region
    _
  $region13: #{psmnet_forward.97} parent=0 // pred_fallthru
    _
  // Predicated region
  $region14: #{psmnet_forward.97} parent=0 // pred_check
    _
  $region15: #{psmnet_forward.97} parent=0 // pred_check_branch
    %16 = sbr.rel (0) target = $region17
  $region16: #{psmnet_forward.97} parent=0 // pred_region
    _
  $region17: #{psmnet_forward.97} parent=0 // pred_fallthru
    _
  %v17 = vld [vmem:[%s0] sm:$0xf]
  %v18 = vld [vmem:[%s0 + $0x4] sm:$0xf]
  %v19 = vld [vmem:[%s0 + $0x8] sm:$0xf]
  %v20 = vld [vmem:[%s0 + $0xc] sm:$0xf]
  %v21 = vld [vmem:[%s0 + $0x10] sm:$0xf]
  %v22 = vld [vmem:[%s0 + $0x14] sm:$0xf]
  %v23 = vld [vmem:[%s0 + $0x18] sm:$0xf]
  %v24 = vld [vmem:[%s0 + $0x1c] sm:$0xf]
  %v25 = vunpack.c.l.bf16 %v17
  %v26 = vunpack.c.l.bf16 %v18
  %v27 = vunpack.c.l.bf16 %v19
  %v28 = vunpack.c.l.bf16 %v20
  %v29 = vunpack.c.l.bf16 %v21
  %v30 = vunpack.c.l.bf16 %v22
  %v31 = vunpack.c.l.bf16 %v23
  %v32 = vunpack.c.l.bf16 %v24
  %v33 = vld [vmem:[%s1] sm:$0x1]
  %v35 = vperm.slane %v33, 0
  %v37 = vmul.f32 %v25, %v35
  %v38 = vmul.f32 %v26, %v35
  %v39 = vmul.f32 %v27, %v35
  %v40 = vmul.f32 %v28, %v35
  %v41 = vmul.f32 %v29, %v35
  %v42 = vmul.f32 %v30, %v35
  %v43 = vmul.f32 %v31, %v35
  %v44 = vmul.f32 %v32, %v35
  %v45 = vld [vmem:[%s2] sm:$0x1]
  %v47 = vperm.slane %v45, 0
  %v49 = vadd.f32 %v37, %v47
  %v50 = vadd.f32 %v38, %v47
  %v51 = vadd.f32 %v39, %v47
  %v52 = vadd.f32 %v40, %v47
  %v53 = vadd.f32 %v41, %v47
  %v54 = vadd.f32 %v42, %v47
  %v55 = vadd.f32 %v43, %v47
  %v56 = vadd.f32 %v44, %v47
  %v57 = vld [vmem:[%s3] sm:$0xf]
  %v58 = vld [vmem:[%s3 + $0x4] sm:$0xf]
  %v59 = vld [vmem:[%s3 + $0x8] sm:$0xf]
  %v60 = vld [vmem:[%s3 + $0xc] sm:$0xf]
  %v61 = vld [vmem:[%s3 + $0x10] sm:$0xf]
  %v62 = vld [vmem:[%s3 + $0x14] sm:$0xf]
  %v63 = vld [vmem:[%s3 + $0x18] sm:$0xf]
  %v64 = vld [vmem:[%s3 + $0x1c] sm:$0xf]
  %v65 = vunpack.c.l.bf16 %v57
  %v66 = vunpack.c.l.bf16 %v58
  %v67 = vunpack.c.l.bf16 %v59
  %v68 = vunpack.c.l.bf16 %v60
  %v69 = vunpack.c.l.bf16 %v61
  %v70 = vunpack.c.l.bf16 %v62
  %v71 = vunpack.c.l.bf16 %v63
  %v72 = vunpack.c.l.bf16 %v64
  %v73 = vadd.f32 %v49, %v65
  %v74 = vadd.f32 %v50, %v66
  %v75 = vadd.f32 %v51, %v67
  %v76 = vadd.f32 %v52, %v68
  %v77 = vadd.f32 %v53, %v69
  %v78 = vadd.f32 %v54, %v70
  %v79 = vadd.f32 %v55, %v71
  %v80 = vadd.f32 %v56, %v72
  %v81 = vmax.f32 %v73, 0.0
  %v82 = vmax.f32 %v74, 0.0
  %v83 = vmax.f32 %v75, 0.0
  %v84 = vmax.f32 %v76, 0.0
  %v85 = vmax.f32 %v77, 0.0
  %v86 = vmax.f32 %v78, 0.0
  %v87 = vmax.f32 %v79, 0.0
  %v88 = vmax.f32 %v80, 0.0
  %v89 = vpack.c.bf16 %v81, %v81
  %v90 = vpack.c.bf16 %v82, %v82
  %v91 = vpack.c.bf16 %v83, %v83
  %v92 = vpack.c.bf16 %v84, %v84
  %v93 = vpack.c.bf16 %v85, %v85
  %v94 = vpack.c.bf16 %v86, %v86
  %v95 = vpack.c.bf16 %v87, %v87
  %v96 = vpack.c.bf16 %v88, %v88
  %97 = vst [vmem:[%s4] sm:$0xf] %v89
  %98 = vst [vmem:[%s4 + $0x4] sm:$0xf] %v90
  %99 = vst [vmem:[%s4 + $0x8] sm:$0xf] %v91
  %100 = vst [vmem:[%s4 + $0xc] sm:$0xf] %v92
  %101 = vst [vmem:[%s4 + $0x10] sm:$0xf] %v93
  %102 = vst [vmem:[%s4 + $0x14] sm:$0xf] %v94
  %103 = vst [vmem:[%s4 + $0x18] sm:$0xf] %v95
  %104 = vst [vmem:[%s4 + $0x1c] sm:$0xf] %v96
  // Predicated region
  $region18: #{psmnet_forward.97} parent=0 // pred_check
    _
  $region19: #{psmnet_forward.97} parent=0 // pred_check_branch
    %106 = sbr.rel (0) target = $region21
  $region20: #{psmnet_forward.97} parent=0 // pred_region
    _
  $region21: #{psmnet_forward.97} parent=0 // pred_fallthru
    _
  // Predicated region
  $region22: #{psmnet_forward.97} parent=0 // pred_check
    _
  $region23: #{psmnet_forward.97} parent=0 // pred_check_branch
    %108 = sbr.rel (0) target = $region25
  $region24: #{psmnet_forward.97} parent=0 // pred_region
    _
  $region25: #{psmnet_forward.97} parent=0 // pred_fallthru
    _

// kernel: psmnet_forward.126
$region0: #{psmnet_forward.126}
  #allocation0 [shape = 'u32[]', space=smem, size = 0x4, offset = 0x4, fixed_abs, tag = 'smem constant byte address 0x4 - core index']
  #allocation1 [shape = 'u32[72,128]{1,0:T(1,128)}', space=vmem, size = 0x9000, scoped, tag = 'internal scratch']
  %s0 = inlined_call_operand.vmem [shape: bf16[128,864], index: 0, kind: input, shape index: {}]
  %s1 = inlined_call_operand.vmem [shape: bf16[864,1], index: 1, kind: input, shape index: {}]
  %s2 = inlined_call_operand.vmem [shape: f32[128,1], index: 2, kind: output, shape index: {0}]
  %s3 = inlined_call_operand.hbm [shape: f32[1,1,1], index: 3, kind: output, shape index: {1}]
  %s4 = inlined_call_operand.hbm [shape: f32[1,1,1], index: 4, kind: output, shape index: {2}]
  %5 = xla_tuple %s2, %s3, %s4
  %s6 = sld [smem:[#allocation0]]
  $region34: #{psmnet_forward.126} parent=0
    _
  %s8 = ssub.s32 1, %s6
  %s9 = scalar_select 0, %s8, %s6
  $region1: #{psmnet_forward.126} parent=0
    #allocation2 [shape = 'u8[512]{0}', space=vmem, size = 0x400, scoped, tag = 'output window, operand 1, single buffered']
    #allocation3 [shape = 's32[1]{0}', space=sflag, size = 0x4, scoped, tag = 'scoped memory for psmnet_forward.126']
    #allocation4 [shape = 'u8[512]{0}', space=vmem, size = 0x400, scoped, tag = 'output window, operand 2, single buffered']
    #allocation5 [shape = 's32[1]{0}', space=sflag, size = 0x4, scoped, tag = 'scoped memory for psmnet_forward.126']
    %10 = vsyncpa [#allocation3], 0
    %11 = vsyncpa [#allocation5], 0
    // Predicated region
    $region2: #{psmnet_forward.126} parent=1 // pred_check
      _
    $region3: #{psmnet_forward.126} parent=1 // pred_check_branch
      %13 = sbr.rel (0) target = $region5
    $region4: #{psmnet_forward.126} parent=1 // pred_region
      _
    $region5: #{psmnet_forward.126} parent=1 // pred_fallthru
      _
    // Predicated region
    $region6: #{psmnet_forward.126} parent=1 // pred_check
      _
    $region7: #{psmnet_forward.126} parent=1 // pred_check_branch
      %15 = sbr.rel (0) target = $region9
    $region8: #{psmnet_forward.126} parent=1 // pred_region
      _
    $region9: #{psmnet_forward.126} parent=1 // pred_fallthru
      _
    %v17 = vld [vmem:[%s0] sm:$0xff]
    %v18 = vld [vmem:[%s0 + $0x8] sm:$0xff]
    %v19 = vld [vmem:[%s0 + $0x10] sm:$0xff]
    %v20 = vld [vmem:[%s0 + $0x18] sm:$0xf]
    %v21 = vld [vmem:[%s0 + $0x1c] sm:$0xff]
    %v22 = vld [vmem:[%s0 + $0x24] sm:$0xff]
    %v23 = vld [vmem:[%s0 + $0x2c] sm:$0xff]
    %v24 = vld [vmem:[%s0 + $0x34] sm:$0xf]
    %v25 = vld [vmem:[%s0 + $0x38] sm:$0xff]
    %v26 = vld [vmem:[%s0 + $0x40] sm:$0xff]
    %v27 = vld [vmem:[%s0 + $0x48] sm:$0xff]
    %v28 = vld [vmem:[%s0 + $0x50] sm:$0xf]
    %v29 = vld [vmem:[%s0 + $0x54] sm:$0xff]
    %v30 = vld [vmem:[%s0 + $0x5c] sm:$0xff]
    %v31 = vld [vmem:[%s0 + $0x64] sm:$0xff]
    %v32 = vld [vmem:[%s0 + $0x6c] sm:$0xf]
    %v33 = vld [vmem:[%s0 + $0x70] sm:$0xff]
    %v34 = vld [vmem:[%s0 + $0x78] sm:$0xff]
    %v35 = vld [vmem:[%s0 + $0x80] sm:$0xff]
    %v36 = vld [vmem:[%s0 + $0x88] sm:$0xf]
    %v37 = vld [vmem:[%s0 + $0x8c] sm:$0xff]
    %v38 = vld [vmem:[%s0 + $0x94] sm:$0xff]
    %v39 = vld [vmem:[%s0 + $0x9c] sm:$0xff]
    %v40 = vld [vmem:[%s0 + $0xa4] sm:$0xf]
    %v41 = vld [vmem:[%s0 + $0xa8] sm:$0xff]
    %v42 = vld [vmem:[%s0 + $0xb0] sm:$0xff]
    %v43 = vld [vmem:[%s0 + $0xb8] sm:$0xff]
    %v44 = vld [vmem:[%s0 + $0xc0] sm:$0xf]
    %v45 = vld [vmem:[%s0 + $0xc4] sm:$0xff]
    %v46 = vld [vmem:[%s0 + $0xcc] sm:$0xff]
    %v47 = vld [vmem:[%s0 + $0xd4] sm:$0xff]
    %v48 = vld [vmem:[%s0 + $0xdc] sm:$0xf]
    %v49 = vld [vmem:[%s0 + $0xe0] sm:$0xff]
    %v50 = vld [vmem:[%s0 + $0xe8] sm:$0xff]
    %v51 = vld [vmem:[%s0 + $0xf0] sm:$0xff]
    %v52 = vld [vmem:[%s0 + $0xf8] sm:$0xf]
    %v53 = vld [vmem:[%s0 + $0xfc] sm:$0xff]
    %v54 = vld [vmem:[%s0 + $0x104] sm:$0xff]
    %v55 = vld [vmem:[%s0 + $0x10c] sm:$0xff]
    %v56 = vld [vmem:[%s0 + $0x114] sm:$0xf]
    %v57 = vld [vmem:[%s0 + $0x118] sm:$0xff]
    %v58 = vld [vmem:[%s0 + $0x120] sm:$0xff]
    %v59 = vld [vmem:[%s0 + $0x128] sm:$0xff]
    %v60 = vld [vmem:[%s0 + $0x130] sm:$0xf]
    %v61 = vld [vmem:[%s0 + $0x134] sm:$0xff]
    %v62 = vld [vmem:[%s0 + $0x13c] sm:$0xff]
    %v63 = vld [vmem:[%s0 + $0x144] sm:$0xff]
    %v64 = vld [vmem:[%s0 + $0x14c] sm:$0xf]
    %v65 = vld [vmem:[%s0 + $0x150] sm:$0xff]
    %v66 = vld [vmem:[%s0 + $0x158] sm:$0xff]
    %v67 = vld [vmem:[%s0 + $0x160] sm:$0xff]
    %v68 = vld [vmem:[%s0 + $0x168] sm:$0xf]
    %v69 = vld [vmem:[%s0 + $0x16c] sm:$0xff]
    %v70 = vld [vmem:[%s0 + $0x174] sm:$0xff]
    %v71 = vld [vmem:[%s0 + $0x17c] sm:$0xff]
    %v72 = vld [vmem:[%s0 + $0x184] sm:$0xf]
    %v73 = vld [vmem:[%s0 + $0x188] sm:$0xff]
    %v74 = vld [vmem:[%s0 + $0x190] sm:$0xff]
    %v75 = vld [vmem:[%s0 + $0x198] sm:$0xff]
    %v76 = vld [vmem:[%s0 + $0x1a0] sm:$0xf]
    %v77 = vld [vmem:[%s0 + $0x1a4] sm:$0xff]
    %v78 = vld [vmem:[%s0 + $0x1ac] sm:$0xff]
    %v79 = vld [vmem:[%s0 + $0x1b4] sm:$0xff]
    %v80 = vld [vmem:[%s0 + $0x1bc] sm:$0xf]
    %v81 = vld [vmem:[%s1] sm:$0xf]
    %v82 = vld [vmem:[%s1 + $0x4] sm:$0xf]
    %v83 = vld [vmem:[%s1 + $0x8] sm:$0xf]
    %v84 = vld [vmem:[%s1 + $0xc] sm:$0xf]
    %v85 = vld [vmem:[%s1 + $0x10] sm:$0xf]
    %v86 = vld [vmem:[%s1 + $0x14] sm:$0xf]
    %v87 = vld [vmem:[%s1 + $0x18] sm:$0xf]
    %v88 = vld [vmem:[%s1 + $0x1c] sm:$0xf]
    %v89 = vld [vmem:[%s1 + $0x20] sm:$0xf]
    %v90 = vld [vmem:[%s1 + $0x24] sm:$0xf]
    %v91 = vld [vmem:[%s1 + $0x28] sm:$0xf]
    %v92 = vld [vmem:[%s1 + $0x2c] sm:$0xf]
    %v93 = vld [vmem:[%s1 + $0x30] sm:$0xf]
    %v94 = vld [vmem:[%s1 + $0x34] sm:$0xf]
    %v95 = vld [vmem:[%s1 + $0x38] sm:$0xf]
    %v96 = vld [vmem:[%s1 + $0x3c] sm:$0xf]
    %v97 = vld [vmem:[%s1 + $0x40] sm:$0xf]
    %v98 = vld [vmem:[%s1 + $0x44] sm:$0xf]
    %v99 = vld [vmem:[%s1 + $0x48] sm:$0xf]
    %v100 = vld [vmem:[%s1 + $0x4c] sm:$0xf]
    %v101 = vld [vmem:[%s1 + $0x50] sm:$0xf]
    %v102 = vld [vmem:[%s1 + $0x54] sm:$0xf]
    %v103 = vld [vmem:[%s1 + $0x58] sm:$0xf]
    %v104 = vld [vmem:[%s1 + $0x5c] sm:$0xf]
    %v105 = vld [vmem:[%s1 + $0x60] sm:$0xf]
    %v106 = vld [vmem:[%s1 + $0x64] sm:$0xf]
    %v107 = vld [vmem:[%s1 + $0x68] sm:$0xf]
    %v108 = vld [vmem:[%s1 + $0x6c] sm:$0xf]
    %v109 = vld [vmem:[%s1 + $0x70] sm:$0xf]
    %v110 = vld [vmem:[%s1 + $0x74] sm:$0xf]
    %v111 = vld [vmem:[%s1 + $0x78] sm:$0xf]
    %v112 = vld [vmem:[%s1 + $0x7c] sm:$0xf]
    %v113 = vld [vmem:[%s1 + $0x80] sm:$0xf]
    %v114 = vld [vmem:[%s1 + $0x84] sm:$0xf]
    %v115 = vld [vmem:[%s1 + $0x88] sm:$0xf]
    %v116 = vld [vmem:[%s1 + $0x8c] sm:$0xf]
    %v117 = vld [vmem:[%s1 + $0x90] sm:$0xf]
    %v118 = vld [vmem:[%s1 + $0x94] sm:$0xf]
    %v119 = vld [vmem:[%s1 + $0x98] sm:$0xf]
    %v120 = vld [vmem:[%s1 + $0x9c] sm:$0xf]
    %v121 = vld [vmem:[%s1 + $0xa0] sm:$0xf]
    %v122 = vld [vmem:[%s1 + $0xa4] sm:$0xf]
    %v123 = vld [vmem:[%s1 + $0xa8] sm:$0xf]
    %v124 = vld [vmem:[%s1 + $0xac] sm:$0xf]
    %v125 = vld [vmem:[%s1 + $0xb0] sm:$0xf]
    %v126 = vld [vmem:[%s1 + $0xb4] sm:$0xf]
    %v127 = vld [vmem:[%s1 + $0xb8] sm:$0xf]
    %v128 = vld [vmem:[%s1 + $0xbc] sm:$0xf]
    %v129 = vld [vmem:[%s1 + $0xc0] sm:$0xf]
    %v130 = vld [vmem:[%s1 + $0xc4] sm:$0xf]
    %v131 = vld [vmem:[%s1 + $0xc8] sm:$0xf]
    %v132 = vld [vmem:[%s1 + $0xcc] sm:$0xf]
    %v133 = vld [vmem:[%s1 + $0xd0] sm:$0xf]
    %v134 = vld [vmem:[%s1 + $0xd4] sm:$0xf]
    %v135 = vld [vmem:[%s1 + $0xd8] sm:$0xf]
    %v136 = vld [vmem:[%s1 + $0xdc] sm:$0xf]
    %v137 = vld [vmem:[%s1 + $0xe0] sm:$0xf]
    %v138 = vld [vmem:[%s1 + $0xe4] sm:$0xf]
    %v139 = vld [vmem:[%s1 + $0xe8] sm:$0xf]
    %v140 = vld [vmem:[%s1 + $0xec] sm:$0xf]
    %v141 = vld [vmem:[%s1 + $0xf0] sm:$0xf]
    %v142 = vld [vmem:[%s1 + $0xf4] sm:$0xf]
    %v143 = vld [vmem:[%s1 + $0xf8] sm:$0xf]
    %v144 = vld [vmem:[%s1 + $0xfc] sm:$0xf]
    %v145 = vld [vmem:[%s1 + $0x100] sm:$0xf]
    %v146 = vld [vmem:[%s1 + $0x104] sm:$0xf]
    %v147 = vld [vmem:[%s1 + $0x108] sm:$0xf]
    %v148 = vld [vmem:[%s1 + $0x10c] sm:$0xf]
    %v149 = vld [vmem:[%s1 + $0x110] sm:$0xf]
    %v150 = vld [vmem:[%s1 + $0x114] sm:$0xf]
    %v151 = vld [vmem:[%s1 + $0x118] sm:$0xf]
    %v152 = vld [vmem:[%s1 + $0x11c] sm:$0xf]
    %v153 = vld [vmem:[%s1 + $0x120] sm:$0xf]
    %v154 = vld [vmem:[%s1 + $0x124] sm:$0xf]
    %v155 = vld [vmem:[%s1 + $0x128] sm:$0xf]
    %v156 = vld [vmem:[%s1 + $0x12c] sm:$0xf]
    %v157 = vld [vmem:[%s1 + $0x130] sm:$0xf]
    %v158 = vld [vmem:[%s1 + $0x134] sm:$0xf]
    %v159 = vld [vmem:[%s1 + $0x138] sm:$0xf]
    %v160 = vld [vmem:[%s1 + $0x13c] sm:$0xf]
    %v161 = vld [vmem:[%s1 + $0x140] sm:$0xf]
    %v162 = vld [vmem:[%s1 + $0x144] sm:$0xf]
    %v163 = vld [vmem:[%s1 + $0x148] sm:$0xf]
    %v164 = vld [vmem:[%s1 + $0x14c] sm:$0xf]
    %v165 = vld [vmem:[%s1 + $0x150] sm:$0xf]
    %v166 = vld [vmem:[%s1 + $0x154] sm:$0xf]
    %v167 = vld [vmem:[%s1 + $0x158] sm:$0xf]
    %v168 = vld [vmem:[%s1 + $0x15c] sm:$0xf]
    %v169 = vld [vmem:[%s1 + $0x160] sm:$0xf]
    %v170 = vld [vmem:[%s1 + $0x164] sm:$0xf]
    %v171 = vld [vmem:[%s1 + $0x168] sm:$0xf]
    %v172 = vld [vmem:[%s1 + $0x16c] sm:$0xf]
    %v173 = vld [vmem:[%s1 + $0x170] sm:$0xf]
    %v174 = vld [vmem:[%s1 + $0x174] sm:$0xf]
    %v175 = vld [vmem:[%s1 + $0x178] sm:$0xf]
    %v176 = vld [vmem:[%s1 + $0x17c] sm:$0xf]
    %v177 = vld [vmem:[%s1 + $0x180] sm:$0xf]
    %v178 = vld [vmem:[%s1 + $0x184] sm:$0xf]
    %v179 = vld [vmem:[%s1 + $0x188] sm:$0xf]
    %v180 = vld [vmem:[%s1 + $0x18c] sm:$0xf]
    %v181 = vld [vmem:[%s1 + $0x190] sm:$0xf]
    %v182 = vld [vmem:[%s1 + $0x194] sm:$0xf]
    %v183 = vld [vmem:[%s1 + $0x198] sm:$0xf]
    %v184 = vld [vmem:[%s1 + $0x19c] sm:$0xf]
    %v185 = vld [vmem:[%s1 + $0x1a0] sm:$0xf]
    %v186 = vld [vmem:[%s1 + $0x1a4] sm:$0xf]
    %v187 = vld [vmem:[%s1 + $0x1a8] sm:$0xf]
    %v188 = vld [vmem:[%s1 + $0x1ac] sm:$0xf]
    %v253 = vunpack.c.l.b16 %v17
    %v254 = vunpack.c.h.b16 %v17
    %v255 = vunpack.c.l.b16 %v18
    %v256 = vunpack.c.h.b16 %v18
    %v257 = vunpack.c.l.b16 %v19
    %v258 = vunpack.c.h.b16 %v19
    %v259 = vunpack.c.l.b16 %v20
    %v260 = vunpack.c.l.b16 %v21
    %v261 = vunpack.c.h.b16 %v21
    %v262 = vunpack.c.l.b16 %v22
    %v263 = vunpack.c.h.b16 %v22
    %v264 = vunpack.c.l.b16 %v23
    %v265 = vunpack.c.h.b16 %v23
    %v266 = vunpack.c.l.b16 %v24
    %v267 = vunpack.c.l.b16 %v25
    %v268 = vunpack.c.h.b16 %v25
    %v269 = vunpack.c.l.b16 %v26
    %v270 = vunpack.c.h.b16 %v26
    %v271 = vunpack.c.l.b16 %v27
    %v272 = vunpack.c.h.b16 %v27
    %v273 = vunpack.c.l.b16 %v28
    %v274 = vunpack.c.l.b16 %v29
    %v275 = vunpack.c.h.b16 %v29
    %v276 = vunpack.c.l.b16 %v30
    %v277 = vunpack.c.h.b16 %v30
    %v278 = vunpack.c.l.b16 %v31
    %v279 = vunpack.c.h.b16 %v31
    %v280 = vunpack.c.l.b16 %v32
    %v281 = vunpack.c.l.b16 %v33
    %v282 = vunpack.c.h.b16 %v33
    %v283 = vunpack.c.l.b16 %v34
    %v284 = vunpack.c.h.b16 %v34
    %v285 = vunpack.c.l.b16 %v35
    %v286 = vunpack.c.h.b16 %v35
    %v287 = vunpack.c.l.b16 %v36
    %v288 = vunpack.c.l.b16 %v37
    %v289 = vunpack.c.h.b16 %v37
    %v290 = vunpack.c.l.b16 %v38
    %v291 = vunpack.c.h.b16 %v38
    %v292 = vunpack.c.l.b16 %v39
    %v293 = vunpack.c.h.b16 %v39
    %v294 = vunpack.c.l.b16 %v40
    %v295 = vunpack.c.l.b16 %v41
    %v296 = vunpack.c.h.b16 %v41
    %v297 = vunpack.c.l.b16 %v42
    %v298 = vunpack.c.h.b16 %v42
    %v299 = vunpack.c.l.b16 %v43
    %v300 = vunpack.c.h.b16 %v43
    %v301 = vunpack.c.l.b16 %v44
    %v302 = vunpack.c.l.b16 %v45
    %v303 = vunpack.c.h.b16 %v45
    %v304 = vunpack.c.l.b16 %v46
    %v305 = vunpack.c.h.b16 %v46
    %v306 = vunpack.c.l.b16 %v47
    %v307 = vunpack.c.h.b16 %v47
    %v308 = vunpack.c.l.b16 %v48
    %v309 = vunpack.c.l.b16 %v49
    %v310 = vunpack.c.h.b16 %v49
    %v311 = vunpack.c.l.b16 %v50
    %v312 = vunpack.c.h.b16 %v50
    %v313 = vunpack.c.l.b16 %v51
    %v314 = vunpack.c.h.b16 %v51
    %v315 = vunpack.c.l.b16 %v52
    %v316 = vunpack.c.l.b16 %v53
    %v317 = vunpack.c.h.b16 %v53
    %v318 = vunpack.c.l.b16 %v54
    %v319 = vunpack.c.h.b16 %v54
    %v320 = vunpack.c.l.b16 %v55
    %v321 = vunpack.c.h.b16 %v55
    %v322 = vunpack.c.l.b16 %v56
    %v323 = vunpack.c.l.b16 %v57
    %v324 = vunpack.c.h.b16 %v57
    %v325 = vunpack.c.l.b16 %v58
    %v326 = vunpack.c.h.b16 %v58
    %v327 = vunpack.c.l.b16 %v59
    %v328 = vunpack.c.h.b16 %v59
    %v329 = vunpack.c.l.b16 %v60
    %v330 = vunpack.c.l.b16 %v61
    %v331 = vunpack.c.h.b16 %v61
    %v332 = vunpack.c.l.b16 %v62
    %v333 = vunpack.c.h.b16 %v62
    %v334 = vunpack.c.l.b16 %v63
    %v335 = vunpack.c.h.b16 %v63
    %v336 = vunpack.c.l.b16 %v64
    %v337 = vunpack.c.l.b16 %v65
    %v338 = vunpack.c.h.b16 %v65
    %v339 = vunpack.c.l.b16 %v66
    %v340 = vunpack.c.h.b16 %v66
    %v341 = vunpack.c.l.b16 %v67
    %v342 = vunpack.c.h.b16 %v67
    %v343 = vunpack.c.l.b16 %v68
    %v344 = vunpack.c.l.b16 %v69
    %v345 = vunpack.c.h.b16 %v69
    %v346 = vunpack.c.l.b16 %v70
    %v347 = vunpack.c.h.b16 %v70
    %v348 = vunpack.c.l.b16 %v71
    %v349 = vunpack.c.h.b16 %v71
    %v350 = vunpack.c.l.b16 %v72
    %v351 = vunpack.c.l.b16 %v73
    %v352 = vunpack.c.h.b16 %v73
    %v353 = vunpack.c.l.b16 %v74
    %v354 = vunpack.c.h.b16 %v74
    %v355 = vunpack.c.l.b16 %v75
    %v356 = vunpack.c.h.b16 %v75
    %v357 = vunpack.c.l.b16 %v76
    %v358 = vunpack.c.l.b16 %v77
    %v359 = vunpack.c.h.b16 %v77
    %v360 = vunpack.c.l.b16 %v78
    %v361 = vunpack.c.h.b16 %v78
    %v362 = vunpack.c.l.b16 %v79
    %v363 = vunpack.c.h.b16 %v79
    %v364 = vunpack.c.l.b16 %v80
    %v365 = vpack.c.b16 %v260, %v253
    %v366 = vpack.c.b16 %v261, %v254
    %v367 = vpack.c.b16 %v262, %v255
    %v368 = vpack.c.b16 %v263, %v256
    %v369 = vpack.c.b16 %v264, %v257
    %v370 = vpack.c.b16 %v265, %v258
    %v371 = vpack.c.b16 %v266, %v259
    %v372 = vpack.c.b16 %v274, %v267
    %v373 = vpack.c.b16 %v275, %v268
    %v374 = vpack.c.b16 %v276, %v269
    %v375 = vpack.c.b16 %v277, %v270
    %v376 = vpack.c.b16 %v278, %v271
    %v377 = vpack.c.b16 %v279, %v272
    %v378 = vpack.c.b16 %v280, %v273
    %v379 = vpack.c.b16 %v288, %v281
    %v380 = vpack.c.b16 %v289, %v282
    %v381 = vpack.c.b16 %v290, %v283
    %v382 = vpack.c.b16 %v291, %v284
    %v383 = vpack.c.b16 %v292, %v285
    %v384 = vpack.c.b16 %v293, %v286
    %v385 = vpack.c.b16 %v294, %v287
    %v386 = vpack.c.b16 %v302, %v295
    %v387 = vpack.c.b16 %v303, %v296
    %v388 = vpack.c.b16 %v304, %v297
    %v389 = vpack.c.b16 %v305, %v298
    %v390 = vpack.c.b16 %v306, %v299
    %v391 = vpack.c.b16 %v307, %v300
    %v392 = vpack.c.b16 %v308, %v301
    %v393 = vpack.c.b16 %v316, %v309
    %v394 = vpack.c.b16 %v317, %v310
    %v395 = vpack.c.b16 %v318, %v311
    %v396 = vpack.c.b16 %v319, %v312
    %v397 = vpack.c.b16 %v320, %v313
    %v398 = vpack.c.b16 %v321, %v314
    %v399 = vpack.c.b16 %v322, %v315
    %v400 = vpack.c.b16 %v330, %v323
    %v401 = vpack.c.b16 %v331, %v324
    %v402 = vpack.c.b16 %v332, %v325
    %v403 = vpack.c.b16 %v333, %v326
    %v404 = vpack.c.b16 %v334, %v327
    %v405 = vpack.c.b16 %v335, %v328
    %v406 = vpack.c.b16 %v336, %v329
    %v407 = vpack.c.b16 %v344, %v337
    %v408 = vpack.c.b16 %v345, %v338
    %v409 = vpack.c.b16 %v346, %v339
    %v410 = vpack.c.b16 %v347, %v340
    %v411 = vpack.c.b16 %v348, %v341
    %v412 = vpack.c.b16 %v349, %v342
    %v413 = vpack.c.b16 %v350, %v343
    %v414 = vpack.c.b16 %v358, %v351
    %v415 = vpack.c.b16 %v359, %v352
    %v416 = vpack.c.b16 %v360, %v353
    %v417 = vpack.c.b16 %v361, %v354
    %v418 = vpack.c.b16 %v362, %v355
    %v419 = vpack.c.b16 %v363, %v356
    %v420 = vpack.c.b16 %v364, %v357
    %v577 = vunpack.c.l.b16 %v81
    %v578 = vunpack.c.l.b16 %v82
    %v579 = vunpack.c.l.b16 %v83
    %v580 = vunpack.c.l.b16 %v84
    %v581 = vunpack.c.l.b16 %v85
    %v582 = vunpack.c.l.b16 %v86
    %v583 = vunpack.c.l.b16 %v87
    %v584 = vunpack.c.l.b16 %v88
    %v585 = vunpack.c.l.b16 %v89
    %v586 = vunpack.c.l.b16 %v90
    %v587 = vunpack.c.l.b16 %v91
    %v588 = vunpack.c.l.b16 %v92
    %v589 = vunpack.c.l.b16 %v93
    %v590 = vunpack.c.l.b16 %v94
    %v591 = vunpack.c.l.b16 %v95
    %v592 = vunpack.c.l.b16 %v96
    %v593 = vunpack.c.l.b16 %v97
    %v594 = vunpack.c.l.b16 %v98
    %v595 = vunpack.c.l.b16 %v99
    %v596 = vunpack.c.l.b16 %v100
    %v597 = vunpack.c.l.b16 %v101
    %v598 = vunpack.c.l.b16 %v102
    %v599 = vunpack.c.l.b16 %v103
    %v600 = vunpack.c.l.b16 %v104
    %v601 = vunpack.c.l.b16 %v105
    %v602 = vunpack.c.l.b16 %v106
    %v603 = vunpack.c.l.b16 %v107
    %v604 = vunpack.c.l.b16 %v108
    %v605 = vunpack.c.l.b16 %v109
    %v606 = vunpack.c.l.b16 %v110
    %v607 = vunpack.c.l.b16 %v111
    %v608 = vunpack.c.l.b16 %v112
    %v609 = vunpack.c.l.b16 %v113
    %v610 = vunpack.c.l.b16 %v114
    %v611 = vunpack.c.l.b16 %v115
    %v612 = vunpack.c.l.b16 %v116
    %v613 = vunpack.c.l.b16 %v117
    %v614 = vunpack.c.l.b16 %v118
    %v615 = vunpack.c.l.b16 %v119
    %v616 = vunpack.c.l.b16 %v120
    %v617 = vunpack.c.l.b16 %v121
    %v618 = vunpack.c.l.b16 %v122
    %v619 = vunpack.c.l.b16 %v123
    %v620 = vunpack.c.l.b16 %v124
    %v621 = vunpack.c.l.b16 %v125
    %v622 = vunpack.c.l.b16 %v126
    %v623 = vunpack.c.l.b16 %v127
    %v624 = vunpack.c.l.b16 %v128
    %v625 = vunpack.c.l.b16 %v129
    %v626 = vunpack.c.l.b16 %v130
    %v627 = vunpack.c.l.b16 %v131
    %v628 = vunpack.c.l.b16 %v132
    %v629 = vunpack.c.l.b16 %v133
    %v630 = vunpack.c.l.b16 %v134
    %v631 = vunpack.c.l.b16 %v135
    %v632 = vunpack.c.l.b16 %v136
    %v633 = vunpack.c.l.b16 %v137
    %v634 = vunpack.c.l.b16 %v138
    %v635 = vunpack.c.l.b16 %v139
    %v636 = vunpack.c.l.b16 %v140
    %v637 = vunpack.c.l.b16 %v141
    %v638 = vunpack.c.l.b16 %v142
    %v639 = vunpack.c.l.b16 %v143
    %v640 = vunpack.c.l.b16 %v144
    %v641 = vunpack.c.l.b16 %v145
    %v642 = vunpack.c.l.b16 %v146
    %v643 = vunpack.c.l.b16 %v147
    %v644 = vunpack.c.l.b16 %v148
    %v645 = vunpack.c.l.b16 %v149
    %v646 = vunpack.c.l.b16 %v150
    %v647 = vunpack.c.l.b16 %v151
    %v648 = vunpack.c.l.b16 %v152
    %v649 = vunpack.c.l.b16 %v153
    %v650 = vunpack.c.l.b16 %v154
    %v651 = vunpack.c.l.b16 %v155
    %v652 = vunpack.c.l.b16 %v156
    %v653 = vunpack.c.l.b16 %v157
    %v654 = vunpack.c.l.b16 %v158
    %v655 = vunpack.c.l.b16 %v159
    %v656 = vunpack.c.l.b16 %v160
    %v657 = vunpack.c.l.b16 %v161
    %v658 = vunpack.c.l.b16 %v162
    %v659 = vunpack.c.l.b16 %v163
    %v660 = vunpack.c.l.b16 %v164
    %v661 = vunpack.c.l.b16 %v165
    %v662 = vunpack.c.l.b16 %v166
    %v663 = vunpack.c.l.b16 %v167
    %v664 = vunpack.c.l.b16 %v168
    %v665 = vunpack.c.l.b16 %v169
    %v666 = vunpack.c.l.b16 %v170
    %v667 = vunpack.c.l.b16 %v171
    %v668 = vunpack.c.l.b16 %v172
    %v669 = vunpack.c.l.b16 %v173
    %v670 = vunpack.c.l.b16 %v174
    %v671 = vunpack.c.l.b16 %v175
    %v672 = vunpack.c.l.b16 %v176
    %v673 = vunpack.c.l.b16 %v177
    %v674 = vunpack.c.l.b16 %v178
    %v675 = vunpack.c.l.b16 %v179
    %v676 = vunpack.c.l.b16 %v180
    %v677 = vunpack.c.l.b16 %v181
    %v678 = vunpack.c.l.b16 %v182
    %v679 = vunpack.c.l.b16 %v183
    %v680 = vunpack.c.l.b16 %v184
    %v681 = vunpack.c.l.b16 %v185
    %v682 = vunpack.c.l.b16 %v186
    %v683 = vunpack.c.l.b16 %v187
    %v684 = vunpack.c.l.b16 %v188
    %v685 = vpack.c.b16 %v578, %v577
    %v686 = vpack.c.b16 %v580, %v579
    %v687 = vpack.c.b16 %v582, %v581
    %v688 = vpack.c.b16 %v584, %v583
    %v689 = vpack.c.b16 %v586, %v585
    %v690 = vpack.c.b16 %v588, %v587
    %v691 = vpack.c.b16 %v590, %v589
    %v692 = vpack.c.b16 %v592, %v591
    %v693 = vpack.c.b16 %v594, %v593
    %v694 = vpack.c.b16 %v596, %v595
    %v695 = vpack.c.b16 %v598, %v597
    %v696 = vpack.c.b16 %v600, %v599
    %v697 = vpack.c.b16 %v602, %v601
    %v698 = vpack.c.b16 %v604, %v603
    %v699 = vpack.c.b16 %v606, %v605
    %v700 = vpack.c.b16 %v608, %v607
    %v701 = vpack.c.b16 %v610, %v609
    %v702 = vpack.c.b16 %v612, %v611
    %v703 = vpack.c.b16 %v614, %v613
    %v704 = vpack.c.b16 %v616, %v615
    %v705 = vpack.c.b16 %v618, %v617
    %v706 = vpack.c.b16 %v620, %v619
    %v707 = vpack.c.b16 %v622, %v621
    %v708 = vpack.c.b16 %v624, %v623
    %v709 = vpack.c.b16 %v626, %v625
    %v710 = vpack.c.b16 %v628, %v627
    %v711 = vpack.c.b16 %v630, %v629
    %v712 = vpack.c.b16 %v632, %v631
    %v713 = vpack.c.b16 %v634, %v633
    %v714 = vpack.c.b16 %v636, %v635
    %v715 = vpack.c.b16 %v638, %v637
    %v716 = vpack.c.b16 %v640, %v639
    %v717 = vpack.c.b16 %v642, %v641
    %v718 = vpack.c.b16 %v644, %v643
    %v719 = vpack.c.b16 %v646, %v645
    %v720 = vpack.c.b16 %v648, %v647
    %v721 = vpack.c.b16 %v650, %v649
    %v722 = vpack.c.b16 %v652, %v651
    %v723 = vpack.c.b16 %v654, %v653
    %v724 = vpack.c.b16 %v656, %v655
    %v725 = vpack.c.b16 %v658, %v657
    %v726 = vpack.c.b16 %v660, %v659
    %v727 = vpack.c.b16 %v662, %v661
    %v728 = vpack.c.b16 %v664, %v663
    %v729 = vpack.c.b16 %v666, %v665
    %v730 = vpack.c.b16 %v668, %v667
    %v731 = vpack.c.b16 %v670, %v669
    %v732 = vpack.c.b16 %v672, %v671
    %v733 = vpack.c.b16 %v674, %v673
    %v734 = vpack.c.b16 %v676, %v675
    %v735 = vpack.c.b16 %v678, %v677
    %v736 = vpack.c.b16 %v680, %v679
    %v737 = vpack.c.b16 %v682, %v681
    %v738 = vpack.c.b16 %v684, %v683
    %vm793 = vcmask 785408
    %v795 = vsel %vm793, %v371, 0
    %v798 = vsel %vm793, %v378, 0
    %v801 = vsel %vm793, %v385, 0
    %v804 = vsel %vm793, %v392, 0
    %v807 = vsel %vm793, %v399, 0
    %v810 = vsel %vm793, %v406, 0
    %v813 = vsel %vm793, %v413, 0
    %v816 = vsel %vm793, %v420, 0
    %818 = vmatpush.bf16.msra.mxu0 %v692
    %819 = vmatpush.bf16.msra.mxu0 %v691
    %820 = vmatpush.bf16.msra.mxu0 %v690
    %821 = vmatpush.bf16.msra.mxu0 %v689
    %822 = vmatpush.bf16.msra.mxu0 %v688
    %823 = vmatpush.bf16.msra.mxu0 %v687
    %824 = vmatpush.bf16.msra.mxu0 %v686
    %825 = vmatpush.bf16.msra.mxu0 %v685
    %826 = vmatmul.bf16.gmra.mxu0 %v365
    %v827 = vpop.f32.mrf.mxu0
    %v828 = vadd.f32 0.0, %v827
    %v829 = vpop.f32.mrf.mxu0
    %v830 = vadd.f32 0.0, %v829
    %831 = vmatmul.bf16.gmra.mxu0 %v372
    %v832 = vpop.f32.mrf.mxu0
    %v833 = vadd.f32 0.0, %v832
    %v834 = vpop.f32.mrf.mxu0
    %v835 = vadd.f32 0.0, %v834
    %836 = vmatmul.bf16.gmra.mxu0 %v379
    %v837 = vpop.f32.mrf.mxu0
    %v838 = vadd.f32 0.0, %v837
    %v839 = vpop.f32.mrf.mxu0
    %v840 = vadd.f32 0.0, %v839
    %841 = vmatmul.bf16.gmra.mxu0 %v386
    %v842 = vpop.f32.mrf.mxu0
    %v843 = vadd.f32 0.0, %v842
    %v844 = vpop.f32.mrf.mxu0
    %v845 = vadd.f32 0.0, %v844
    %846 = vmatmul.bf16.gmra.mxu0 %v393
    %v847 = vpop.f32.mrf.mxu0
    %v848 = vadd.f32 0.0, %v847
    %v849 = vpop.f32.mrf.mxu0
    %v850 = vadd.f32 0.0, %v849
    %851 = vmatmul.bf16.gmra.mxu0 %v400
    %v852 = vpop.f32.mrf.mxu0
    %v853 = vadd.f32 0.0, %v852
    %v854 = vpop.f32.mrf.mxu0
    %v855 = vadd.f32 0.0, %v854
    %856 = vmatmul.bf16.gmra.mxu0 %v407
    %v857 = vpop.f32.mrf.mxu0
    %v858 = vadd.f32 0.0, %v857
    %v859 = vpop.f32.mrf.mxu0
    %v860 = vadd.f32 0.0, %v859
    %861 = vmatmul.bf16.gmra.mxu0 %v414
    %v862 = vpop.f32.mrf.mxu0
    %v863 = vadd.f32 0.0, %v862
    %v864 = vpop.f32.mrf.mxu0
    %v865 = vadd.f32 0.0, %v864
    %866 = vdwg.mxu0
    %867 = vmatpush.bf16.msra.mxu0 %v700
    %868 = vmatpush.bf16.msra.mxu0 %v699
    %869 = vmatpush.bf16.msra.mxu0 %v698
    %870 = vmatpush.bf16.msra.mxu0 %v697
    %871 = vmatpush.bf16.msra.mxu0 %v696
    %872 = vmatpush.bf16.msra.mxu0 %v695
    %873 = vmatpush.bf16.msra.mxu0 %v694
    %874 = vmatpush.bf16.msra.mxu0 %v693
    %875 = vmatmul.bf16.gmra.mxu0 %v366
    %v876 = vpop.f32.mrf.mxu0
    %v877 = vadd.f32 %v828, %v876
    %v878 = vpop.f32.mrf.mxu0
    %v879 = vadd.f32 %v830, %v878
    %880 = vmatmul.bf16.gmra.mxu0 %v373
    %v881 = vpop.f32.mrf.mxu0
    %v882 = vadd.f32 %v833, %v881
    %v883 = vpop.f32.mrf.mxu0
    %v884 = vadd.f32 %v835, %v883
    %885 = vmatmul.bf16.gmra.mxu0 %v380
    %v886 = vpop.f32.mrf.mxu0
    %v887 = vadd.f32 %v838, %v886
    %v888 = vpop.f32.mrf.mxu0
    %v889 = vadd.f32 %v840, %v888
    %890 = vmatmul.bf16.gmra.mxu0 %v387
    %v891 = vpop.f32.mrf.mxu0
    %v892 = vadd.f32 %v843, %v891
    %v893 = vpop.f32.mrf.mxu0
    %v894 = vadd.f32 %v845, %v893
    %895 = vmatmul.bf16.gmra.mxu0 %v394
    %v896 = vpop.f32.mrf.mxu0
    %v897 = vadd.f32 %v848, %v896
    %v898 = vpop.f32.mrf.mxu0
    %v899 = vadd.f32 %v850, %v898
    %900 = vmatmul.bf16.gmra.mxu0 %v401
    %v901 = vpop.f32.mrf.mxu0
    %v902 = vadd.f32 %v853, %v901
    %v903 = vpop.f32.mrf.mxu0
    %v904 = vadd.f32 %v855, %v903
    %905 = vmatmul.bf16.gmra.mxu0 %v408
    %v906 = vpop.f32.mrf.mxu0
    %v907 = vadd.f32 %v858, %v906
    %v908 = vpop.f32.mrf.mxu0
    %v909 = vadd.f32 %v860, %v908
    %910 = vmatmul.bf16.gmra.mxu0 %v415
    %v911 = vpop.f32.mrf.mxu0
    %v912 = vadd.f32 %v863, %v911
    %v913 = vpop.f32.mrf.mxu0
    %v914 = vadd.f32 %v865, %v913
    %915 = vdwg.mxu0
    %916 = vmatpush.bf16.msra.mxu0 %v708
    %917 = vmatpush.bf16.msra.mxu0 %v707
    %918 = vmatpush.bf16.msra.mxu0 %v706
    %919 = vmatpush.bf16.msra.mxu0 %v705
    %920 = vmatpush.bf16.msra.mxu0 %v704
    %921 = vmatpush.bf16.msra.mxu0 %v703
    %922 = vmatpush.bf16.msra.mxu0 %v702
    %923 = vmatpush.bf16.msra.mxu0 %v701
    %924 = vmatmul.bf16.gmra.mxu0 %v367
    %v925 = vpop.f32.mrf.mxu0
    %v926 = vadd.f32 %v877, %v925
    %v927 = vpop.f32.mrf.mxu0
    %v928 = vadd.f32 %v879, %v927
    %929 = vmatmul.bf16.gmra.mxu0 %v374
    %v930 = vpop.f32.mrf.mxu0
    %v931 = vadd.f32 %v882, %v930
    %v932 = vpop.f32.mrf.mxu0
    %v933 = vadd.f32 %v884, %v932
    %934 = vmatmul.bf16.gmra.mxu0 %v381
    %v935 = vpop.f32.mrf.mxu0
    %v936 = vadd.f32 %v887, %v935
    %v937 = vpop.f32.mrf.mxu0
    %v938 = vadd.f32 %v889, %v937
    %939 = vmatmul.bf16.gmra.mxu0 %v388
    %v940 = vpop.f32.mrf.mxu0
    %v941 = vadd.f32 %v892, %v940
    %v942 = vpop.f32.mrf.mxu0
    %v943 = vadd.f32 %v894, %v942
    %944 = vmatmul.bf16.gmra.mxu0 %v395
    %v945 = vpop.f32.mrf.mxu0
    %v946 = vadd.f32 %v897, %v945
    %v947 = vpop.f32.mrf.mxu0
    %v948 = vadd.f32 %v899, %v947
    %949 = vmatmul.bf16.gmra.mxu0 %v402
    %v950 = vpop.f32.mrf.mxu0
    %v951 = vadd.f32 %v902, %v950
    %v952 = vpop.f32.mrf.mxu0
    %v953 = vadd.f32 %v904, %v952
    %954 = vmatmul.bf16.gmra.mxu0 %v409
    %v955 = vpop.f32.mrf.mxu0
    %v956 = vadd.f32 %v907, %v955
    %v957 = vpop.f32.mrf.mxu0
    %v958 = vadd.f32 %v909, %v957
    %959 = vmatmul.bf16.gmra.mxu0 %v416
    %v960 = vpop.f32.mrf.mxu0
    %v961 = vadd.f32 %v912, %v960
    %v962 = vpop.f32.mrf.mxu0
    %v963 = vadd.f32 %v914, %v962
    %964 = vdwg.mxu0
    %965 = vmatpush.bf16.msra.mxu0 %v716
    %966 = vmatpush.bf16.msra.mxu0 %v715
    %967 = vmatpush.bf16.msra.mxu0 %v714
    %968 = vmatpush.bf16.msra.mxu0 %v713
    %969 = vmatpush.bf16.msra.mxu0 %v712
    %970 = vmatpush.bf16.msra.mxu0 %v711
    %971 = vmatpush.bf16.msra.mxu0 %v710
    %972 = vmatpush.bf16.msra.mxu0 %v709
    %973 = vmatmul.bf16.gmra.mxu0 %v368
    %v974 = vpop.f32.mrf.mxu0
    %v975 = vadd.f32 %v926, %v974
    %v976 = vpop.f32.mrf.mxu0
    %v977 = vadd.f32 %v928, %v976
    %978 = vmatmul.bf16.gmra.mxu0 %v375
    %v979 = vpop.f32.mrf.mxu0
    %v980 = vadd.f32 %v931, %v979
    %v981 = vpop.f32.mrf.mxu0
    %v982 = vadd.f32 %v933, %v981
    %983 = vmatmul.bf16.gmra.mxu0 %v382
    %v984 = vpop.f32.mrf.mxu0
    %v985 = vadd.f32 %v936, %v984
    %v986 = vpop.f32.mrf.mxu0
    %v987 = vadd.f32 %v938, %v986
    %988 = vmatmul.bf16.gmra.mxu0 %v389
    %v989 = vpop.f32.mrf.mxu0
    %v990 = vadd.f32 %v941, %v989
    %v991 = vpop.f32.mrf.mxu0
    %v992 = vadd.f32 %v943, %v991
    %993 = vmatmul.bf16.gmra.mxu0 %v396
    %v994 = vpop.f32.mrf.mxu0
    %v995 = vadd.f32 %v946, %v994
    %v996 = vpop.f32.mrf.mxu0
    %v997 = vadd.f32 %v948, %v996
    %998 = vmatmul.bf16.gmra.mxu0 %v403
    %v999 = vpop.f32.mrf.mxu0
    %v1000 = vadd.f32 %v951, %v999
    %v1001 = vpop.f32.mrf.mxu0
    %v1002 = vadd.f32 %v953, %v1001
    %1003 = vmatmul.bf16.gmra.mxu0 %v410
    %v1004 = vpop.f32.mrf.mxu0
    %v1005 = vadd.f32 %v956, %v1004
    %v1006 = vpop.f32.mrf.mxu0
    %v1007 = vadd.f32 %v958, %v1006
    %1008 = vmatmul.bf16.gmra.mxu0 %v417
    %v1009 = vpop.f32.mrf.mxu0
    %v1010 = vadd.f32 %v961, %v1009
    %v1011 = vpop.f32.mrf.mxu0
    %v1012 = vadd.f32 %v963, %v1011
    %1013 = vdwg.mxu0
    %1014 = vmatpush.bf16.msra.mxu0 %v724
    %1015 = vmatpush.bf16.msra.mxu0 %v723
    %1016 = vmatpush.bf16.msra.mxu0 %v722
    %1017 = vmatpush.bf16.msra.mxu0 %v721
    %1018 = vmatpush.bf16.msra.mxu0 %v720
    %1019 = vmatpush.bf16.msra.mxu0 %v719
    %1020 = vmatpush.bf16.msra.mxu0 %v718
    %1021 = vmatpush.bf16.msra.mxu0 %v717
    %1022 = vmatmul.bf16.gmra.mxu0 %v369
    %v1023 = vpop.f32.mrf.mxu0
    %v1024 = vadd.f32 %v975, %v1023
    %v1025 = vpop.f32.mrf.mxu0
    %v1026 = vadd.f32 %v977, %v1025
    %1027 = vmatmul.bf16.gmra.mxu0 %v376
    %v1028 = vpop.f32.mrf.mxu0
    %v1029 = vadd.f32 %v980, %v1028
    %v1030 = vpop.f32.mrf.mxu0
    %v1031 = vadd.f32 %v982, %v1030
    %1032 = vmatmul.bf16.gmra.mxu0 %v383
    %v1033 = vpop.f32.mrf.mxu0
    %v1034 = vadd.f32 %v985, %v1033
    %v1035 = vpop.f32.mrf.mxu0
    %v1036 = vadd.f32 %v987, %v1035
    %1037 = vmatmul.bf16.gmra.mxu0 %v390
    %v1038 = vpop.f32.mrf.mxu0
    %v1039 = vadd.f32 %v990, %v1038
    %v1040 = vpop.f32.mrf.mxu0
    %v1041 = vadd.f32 %v992, %v1040
    %1042 = vmatmul.bf16.gmra.mxu0 %v397
    %v1043 = vpop.f32.mrf.mxu0
    %v1044 = vadd.f32 %v995, %v1043
    %v1045 = vpop.f32.mrf.mxu0
    %v1046 = vadd.f32 %v997, %v1045
    %1047 = vmatmul.bf16.gmra.mxu0 %v404
    %v1048 = vpop.f32.mrf.mxu0
    %v1049 = vadd.f32 %v1000, %v1048
    %v1050 = vpop.f32.mrf.mxu0
    %v1051 = vadd.f32 %v1002, %v1050
    %1052 = vmatmul.bf16.gmra.mxu0 %v411
    %v1053 = vpop.f32.mrf.mxu0
    %v1054 = vadd.f32 %v1005, %v1053
    %v1055 = vpop.f32.mrf.mxu0
    %v1056 = vadd.f32 %v1007, %v1055
    %1057 = vmatmul.bf16.gmra.mxu0 %v418
    %v1058 = vpop.f32.mrf.mxu0
    %v1059 = vadd.f32 %v1010, %v1058
    %v1060 = vpop.f32.mrf.mxu0
    %v1061 = vadd.f32 %v1012, %v1060
    %1062 = vdwg.mxu0
    %1063 = vmatpush.bf16.msra.mxu0 %v732
    %1064 = vmatpush.bf16.msra.mxu0 %v731
    %1065 = vmatpush.bf16.msra.mxu0 %v730
    %1066 = vmatpush.bf16.msra.mxu0 %v729
    %1067 = vmatpush.bf16.msra.mxu0 %v728
    %1068 = vmatpush.bf16.msra.mxu0 %v727
    %1069 = vmatpush.bf16.msra.mxu0 %v726
    %1070 = vmatpush.bf16.msra.mxu0 %v725
    %1071 = vmatmul.bf16.gmra.mxu0 %v370
    %v1072 = vpop.f32.mrf.mxu0
    %v1073 = vadd.f32 %v1024, %v1072
    %v1074 = vpop.f32.mrf.mxu0
    %v1075 = vadd.f32 %v1026, %v1074
    %1076 = vmatmul.bf16.gmra.mxu0 %v377
    %v1077 = vpop.f32.mrf.mxu0
    %v1078 = vadd.f32 %v1029, %v1077
    %v1079 = vpop.f32.mrf.mxu0
    %v1080 = vadd.f32 %v1031, %v1079
    %1081 = vmatmul.bf16.gmra.mxu0 %v384
    %v1082 = vpop.f32.mrf.mxu0
    %v1083 = vadd.f32 %v1034, %v1082
    %v1084 = vpop.f32.mrf.mxu0
    %v1085 = vadd.f32 %v1036, %v1084
    %1086 = vmatmul.bf16.gmra.mxu0 %v391
    %v1087 = vpop.f32.mrf.mxu0
    %v1088 = vadd.f32 %v1039, %v1087
    %v1089 = vpop.f32.mrf.mxu0
    %v1090 = vadd.f32 %v1041, %v1089
    %1091 = vmatmul.bf16.gmra.mxu0 %v398
    %v1092 = vpop.f32.mrf.mxu0
    %v1093 = vadd.f32 %v1044, %v1092
    %v1094 = vpop.f32.mrf.mxu0
    %v1095 = vadd.f32 %v1046, %v1094
    %1096 = vmatmul.bf16.gmra.mxu0 %v405
    %v1097 = vpop.f32.mrf.mxu0
    %v1098 = vadd.f32 %v1049, %v1097
    %v1099 = vpop.f32.mrf.mxu0
    %v1100 = vadd.f32 %v1051, %v1099
    %1101 = vmatmul.bf16.gmra.mxu0 %v412
    %v1102 = vpop.f32.mrf.mxu0
    %v1103 = vadd.f32 %v1054, %v1102
    %v1104 = vpop.f32.mrf.mxu0
    %v1105 = vadd.f32 %v1056, %v1104
    %1106 = vmatmul.bf16.gmra.mxu0 %v419
    %v1107 = vpop.f32.mrf.mxu0
    %v1108 = vadd.f32 %v1059, %v1107
    %v1109 = vpop.f32.mrf.mxu0
    %v1110 = vadd.f32 %v1061, %v1109
    %1111 = vdwg.mxu0
    %1112 = vmatpush.bf16.msra.mxu0 0
    %1113 = vmatpush.bf16.msra.mxu0 0
    %1114 = vmatpush.bf16.msra.mxu0 %v738
    %1115 = vmatpush.bf16.msra.mxu0 %v737
    %1116 = vmatpush.bf16.msra.mxu0 %v736
    %1117 = vmatpush.bf16.msra.mxu0 %v735
    %1118 = vmatpush.bf16.msra.mxu0 %v734
    %1119 = vmatpush.bf16.msra.mxu0 %v733
    %1120 = vmatmul.bf16.gmra.mxu0 %v795
    %v1121 = vpop.f32.mrf.mxu0
    %v1122 = vadd.f32 %v1073, %v1121
    %v1123 = vpop.f32.mrf.mxu0
    %v1124 = vadd.f32 %v1075, %v1123
    %1125 = vmatmul.bf16.gmra.mxu0 %v798
    %v1126 = vpop.f32.mrf.mxu0
    %v1127 = vadd.f32 %v1078, %v1126
    %v1128 = vpop.f32.mrf.mxu0
    %v1129 = vadd.f32 %v1080, %v1128
    %1130 = vmatmul.bf16.gmra.mxu0 %v801
    %v1131 = vpop.f32.mrf.mxu0
    %v1132 = vadd.f32 %v1083, %v1131
    %v1133 = vpop.f32.mrf.mxu0
    %v1134 = vadd.f32 %v1085, %v1133
    %1135 = vmatmul.bf16.gmra.mxu0 %v804
    %v1136 = vpop.f32.mrf.mxu0
    %v1137 = vadd.f32 %v1088, %v1136
    %v1138 = vpop.f32.mrf.mxu0
    %v1139 = vadd.f32 %v1090, %v1138
    %1140 = vmatmul.bf16.gmra.mxu0 %v807
    %v1141 = vpop.f32.mrf.mxu0
    %v1142 = vadd.f32 %v1093, %v1141
    %v1143 = vpop.f32.mrf.mxu0
    %v1144 = vadd.f32 %v1095, %v1143
    %1145 = vmatmul.bf16.gmra.mxu0 %v810
    %v1146 = vpop.f32.mrf.mxu0
    %v1147 = vadd.f32 %v1098, %v1146
    %v1148 = vpop.f32.mrf.mxu0
    %v1149 = vadd.f32 %v1100, %v1148
    %1150 = vmatmul.bf16.gmra.mxu0 %v813
    %v1151 = vpop.f32.mrf.mxu0
    %v1152 = vadd.f32 %v1103, %v1151
    %v1153 = vpop.f32.mrf.mxu0
    %v1154 = vadd.f32 %v1105, %v1153
    %1155 = vmatmul.bf16.gmra.mxu0 %v816
    %v1156 = vpop.f32.mrf.mxu0
    %v1157 = vadd.f32 %v1108, %v1156
    %v1158 = vpop.f32.mrf.mxu0
    %v1159 = vadd.f32 %v1110, %v1158
    %1160 = vdwg.mxu0
    %vm1161 = vcmask 7168
    %1162 = vst.msk [vmem:[%s2] sm:$0xff] %vm1161, %v1122
    %1163 = vst.msk [vmem:[%s2 + $0x8] sm:$0xff] %vm1161, %v1124
    %1164 = vst.msk [vmem:[%s2 + $0x10] sm:$0xff] %vm1161, %v1127
    %1165 = vst.msk [vmem:[%s2 + $0x18] sm:$0xff] %vm1161, %v1129
    %1166 = vst.msk [vmem:[%s2 + $0x20] sm:$0xff] %vm1161, %v1132
    %1167 = vst.msk [vmem:[%s2 + $0x28] sm:$0xff] %vm1161, %v1134
    %1168 = vst.msk [vmem:[%s2 + $0x30] sm:$0xff] %vm1161, %v1137
    %1169 = vst.msk [vmem:[%s2 + $0x38] sm:$0xff] %vm1161, %v1139
    %1170 = vst.msk [vmem:[%s2 + $0x40] sm:$0xff] %vm1161, %v1142
    %1171 = vst.msk [vmem:[%s2 + $0x48] sm:$0xff] %vm1161, %v1144
    %1172 = vst.msk [vmem:[%s2 + $0x50] sm:$0xff] %vm1161, %v1147
    %1173 = vst.msk [vmem:[%s2 + $0x58] sm:$0xff] %vm1161, %v1149
    %1174 = vst.msk [vmem:[%s2 + $0x60] sm:$0xff] %vm1161, %v1152
    %1175 = vst.msk [vmem:[%s2 + $0x68] sm:$0xff] %vm1161, %v1154
    %1176 = vst.msk [vmem:[%s2 + $0x70] sm:$0xff] %vm1161, %v1157
    %1177 = vst.msk [vmem:[%s2 + $0x78] sm:$0xff] %vm1161, %v1159
    %v1178 = vsel %vm1161, %v1122, 0.0
    %v1179 = vsel %vm1161, %v1124, 0.0
    %v1180 = vadd.f32 %v1178, %v1179
    %v1181 = vsel %vm1161, %v1127, 0.0
    %v1182 = vadd.f32 %v1180, %v1181
    %v1183 = vsel %vm1161, %v1129, 0.0
    %v1184 = vadd.f32 %v1182, %v1183
    %v1185 = vsel %vm1161, %v1132, 0.0
    %v1186 = vadd.f32 %v1184, %v1185
    %v1187 = vsel %vm1161, %v1134, 0.0
    %v1188 = vadd.f32 %v1186, %v1187
    %v1189 = vsel %vm1161, %v1137, 0.0
    %v1190 = vadd.f32 %v1188, %v1189
    %v1191 = vsel %vm1161, %v1139, 0.0
    %v1192 = vadd.f32 %v1190, %v1191
    %v1193 = vsel %vm1161, %v1142, 0.0
    %v1194 = vadd.f32 %v1192, %v1193
    %v1195 = vsel %vm1161, %v1144, 0.0
    %v1196 = vadd.f32 %v1194, %v1195
    %v1197 = vsel %vm1161, %v1147, 0.0
    %v1198 = vadd.f32 %v1196, %v1197
    %v1199 = vsel %vm1161, %v1149, 0.0
    %v1200 = vadd.f32 %v1198, %v1199
    %v1201 = vsel %vm1161, %v1152, 0.0
    %v1202 = vadd.f32 %v1200, %v1201
    %v1203 = vsel %vm1161, %v1154, 0.0
    %v1204 = vadd.f32 %v1202, %v1203
    %v1205 = vsel %vm1161, %v1157, 0.0
    %v1206 = vadd.f32 %v1204, %v1205
    %v1207 = vsel %vm1161, %v1159, 0.0
    %v1208 = vadd.f32 %v1206, %v1207
    %v1209 = vrot.slane %v1208, 4
    %v1210 = vadd.f32 %v1208, %v1209
    %v1211 = vrot.slane %v1210, 2
    %v1212 = vadd.f32 %v1210, %v1211
    %v1213 = vrot.slane %v1212, 1
    %v1214 = vadd.f32 %v1212, %v1213
    %vm1215 = vcmask 0
    %1216 = vst.msk [vmem:[#allocation2] sm:$0x1] %vm1215, %v1214
    %v1217 = vmul.f32 %v1122, %v1122
    %v1218 = vmul.f32 %v1124, %v1124
    %v1219 = vmul.f32 %v1127, %v1127
    %v1220 = vmul.f32 %v1129, %v1129
    %v1221 = vmul.f32 %v1132, %v1132
    %v1222 = vmul.f32 %v1134, %v1134
    %v1223 = vmul.f32 %v1137, %v1137
    %v1224 = vmul.f32 %v1139, %v1139
    %v1225 = vmul.f32 %v1142, %v1142
    %v1226 = vmul.f32 %v1144, %v1144
    %v1227 = vmul.f32 %v1147, %v1147
    %v1228 = vmul.f32 %v1149, %v1149
    %v1229 = vmul.f32 %v1152, %v1152
    %v1230 = vmul.f32 %v1154, %v1154
    %v1231 = vmul.f32 %v1157, %v1157
    %v1232 = vmul.f32 %v1159, %v1159
    %v1233 = vsel %vm1161, %v1217, 0.0
    %v1234 = vsel %vm1161, %v1218, 0.0
    %v1235 = vadd.f32 %v1233, %v1234
    %v1236 = vsel %vm1161, %v1219, 0.0
    %v1237 = vadd.f32 %v1235, %v1236
    %v1238 = vsel %vm1161, %v1220, 0.0
    %v1239 = vadd.f32 %v1237, %v1238
    %v1240 = vsel %vm1161, %v1221, 0.0
    %v1241 = vadd.f32 %v1239, %v1240
    %v1242 = vsel %vm1161, %v1222, 0.0
    %v1243 = vadd.f32 %v1241, %v1242
    %v1244 = vsel %vm1161, %v1223, 0.0
    %v1245 = vadd.f32 %v1243, %v1244
    %v1246 = vsel %vm1161, %v1224, 0.0
    %v1247 = vadd.f32 %v1245, %v1246
    %v1248 = vsel %vm1161, %v1225, 0.0
    %v1249 = vadd.f32 %v1247, %v1248
    %v1250 = vsel %vm1161, %v1226, 0.0
    %v1251 = vadd.f32 %v1249, %v1250
    %v1252 = vsel %vm1161, %v1227, 0.0
    %v1253 = vadd.f32 %v1251, %v1252
    %v1254 = vsel %vm1161, %v1228, 0.0
    %v1255 = vadd.f32 %v1253, %v1254
    %v1256 = vsel %vm1161, %v1229, 0.0
    %v1257 = vadd.f32 %v1255, %v1256
    %v1258 = vsel %vm1161, %v1230, 0.0
    %v1259 = vadd.f32 %v1257, %v1258
    %v1260 = vsel %vm1161, %v1231, 0.0
    %v1261 = vadd.f32 %v1259, %v1260
    %v1262 = vsel %vm1161, %v1232, 0.0
    %v1263 = vadd.f32 %v1261, %v1262
    %v1264 = vrot.slane %v1263, 4
    %v1265 = vadd.f32 %v1263, %v1264
    %v1266 = vrot.slane %v1265, 2
    %v1267 = vadd.f32 %v1265, %v1266
    %v1268 = vrot.slane %v1267, 1
    %v1269 = vadd.f32 %v1267, %v1268
    %1270 = vst.msk [vmem:[#allocation4] sm:$0x1] %vm1215, %v1269
    // Predicated region
    $region10: #{psmnet_forward.126} parent=1 // pred_check
      _
    $region11: #{psmnet_forward.126} parent=1 // pred_check_branch
      %1272 = sbr.rel (0) target = $region13
    $region12: #{psmnet_forward.126} parent=1 // pred_region
      _
    $region13: #{psmnet_forward.126} parent=1 // pred_fallthru
      _
    // Predicated region
    $region14: #{psmnet_forward.126} parent=1 // pred_check
      _
    $region15: #{psmnet_forward.126} parent=1 // pred_check_branch
      %1274 = sbr.rel (0) target = $region17
    $region16: #{psmnet_forward.126} parent=1 // pred_region
      %1276 = vsyncadd [#allocation3], 0
      %s1278 = sshll.u32 [#allocation2], 4
      %s1279 = int_to_ptr.vmem [resolvable:$true] %s1278
      %s1280 = sshll.u32 %s3, 4
      %s1281 = int_to_ptr.hbm [resolvable:$true] %s1280
      %1283 = dma.vmem_to_hbm [thread:$0]  %s1279, 16, %s1281, [#allocation3]
    $region17: #{psmnet_forward.126} parent=1 // pred_fallthru
      _
    // Predicated region
    $region18: #{psmnet_forward.126} parent=1 // pred_check
      _
    $region19: #{psmnet_forward.126} parent=1 // pred_check_branch
      %1285 = sbr.rel (0) target = $region21
    $region20: #{psmnet_forward.126} parent=1 // pred_region
      %1287 = vsyncadd [#allocation5], 0
      %s1289 = sshll.u32 [#allocation4], 4
      %s1290 = int_to_ptr.vmem [resolvable:$true] %s1289
      %s1291 = sshll.u32 %s4, 4
      %s1292 = int_to_ptr.hbm [resolvable:$true] %s1291
      %1294 = dma.vmem_to_hbm [thread:$0]  %s1290, 16, %s1292, [#allocation5]
    $region21: #{psmnet_forward.126} parent=1 // pred_fallthru
      _
    // Predicated region
    $region22: #{psmnet_forward.126} parent=1 // pred_check
      _
    $region23: #{psmnet_forward.126} parent=1 // pred_check_branch
      %1296 = sbr.rel (0) target = $region25
    $region24: #{psmnet_forward.126} parent=1 // pred_region
      _
    $region25: #{psmnet_forward.126} parent=1 // pred_fallthru
      _
    // Predicated region
    $region26: #{psmnet_forward.126} parent=1 // pred_check
      _
    $region27: #{psmnet_forward.126} parent=1 // pred_check_branch
      %1298 = sbr.rel (0) target = $region29
    $region28: #{psmnet_forward.126} parent=1 // pred_region
      %1300 = dma.done [#allocation3], 16
    $region29: #{psmnet_forward.126} parent=1 // pred_fallthru
      _
    // Predicated region
    $region30: #{psmnet_forward.126} parent=1 // pred_check
      _
    $region31: #{psmnet_forward.126} parent=1 // pred_check_branch
      %1302 = sbr.rel (0) target = $region33
    $region32: #{psmnet_forward.126} parent=1 // pred_region
      %1304 = dma.done [#allocation5], 16
    $region33: #{psmnet_forward.126} parent=1 // pred_fallthru
      _
    %1305 = vsyncpa [#allocation3], 1
    %1306 = vsyncpa [#allocation5], 1

// kernel: psmnet_forward.133
$region0: #{psmnet_forward.133}
  #allocation0 [shape = 'u32[]', space=smem, size = 0x4, offset = 0x4, fixed_abs, tag = 'smem constant byte address 0x4 - core index']
  #allocation1 [shape = 'u32[72,128]{1,0:T(1,128)}', space=vmem, size = 0x9000, scoped, tag = 'internal scratch']
  %s0 = inlined_call_operand.vmem [shape: f32[16,512], index: 0, kind: input, shape index: {}]
  %s1 = inlined_call_operand.vmem [shape: f32[1,512], index: 1, kind: output, shape index: {}]
  %s2 = sld [smem:[#allocation0]]
  $region14: #{psmnet_forward.133} parent=0
    _
  %s4 = ssub.s32 1, %s2
  %s5 = scalar_select 0, %s4, %s2
  // Predicated region
  $region2: #{psmnet_forward.133} parent=0 // pred_check
    _
  $region3: #{psmnet_forward.133} parent=0 // pred_check_branch
    %7 = sbr.rel (0) target = $region5
  $region4: #{psmnet_forward.133} parent=0 // pred_region
    _
  $region5: #{psmnet_forward.133} parent=0 // pred_fallthru
    _
  %v8 = vld [vmem:[%s0] sm:$0xff]
  %v9 = vld [vmem:[%s0 + $0x8] sm:$0xff]
  %v10 = vld [vmem:[%s0 + $0x10] sm:$0xff]
  %v11 = vld [vmem:[%s0 + $0x18] sm:$0xff]
  %v12 = vld [vmem:[%s0 + $0x20] sm:$0xff]
  %v13 = vld [vmem:[%s0 + $0x28] sm:$0xff]
  %v14 = vld [vmem:[%s0 + $0x30] sm:$0xff]
  %v15 = vld [vmem:[%s0 + $0x38] sm:$0xff]
  %v16 = vmax.f32 %v8, %v12
  %v17 = vrot.slane %v16, 4
  %v18 = vmax.f32 %v16, %v17
  %v19 = vrot.slane %v18, 2
  %v20 = vmax.f32 %v18, %v19
  %v21 = vrot.slane %v20, 1
  %v22 = vmax.f32 %v20, %v21
  %v23 = vmax.f32 %v9, %v13
  %v24 = vrot.slane %v23, 4
  %v25 = vmax.f32 %v23, %v24
  %v26 = vrot.slane %v25, 2
  %v27 = vmax.f32 %v25, %v26
  %v28 = vrot.slane %v27, 1
  %v29 = vmax.f32 %v27, %v28
  %v30 = vmax.f32 %v10, %v14
  %v31 = vrot.slane %v30, 4
  %v32 = vmax.f32 %v30, %v31
  %v33 = vrot.slane %v32, 2
  %v34 = vmax.f32 %v32, %v33
  %v35 = vrot.slane %v34, 1
  %v36 = vmax.f32 %v34, %v35
  %v37 = vmax.f32 %v11, %v15
  %v38 = vrot.slane %v37, 4
  %v39 = vmax.f32 %v37, %v38
  %v40 = vrot.slane %v39, 2
  %v41 = vmax.f32 %v39, %v40
  %v42 = vrot.slane %v41, 1
  %v43 = vmax.f32 %v41, %v42
  %v44 = vsub.f32 %v8, %v22
  %v45 = vsub.f32 %v9, %v29
  %v46 = vsub.f32 %v10, %v36
  %v47 = vsub.f32 %v11, %v43
  %v48 = vsub.f32 %v12, %v22
  %v49 = vsub.f32 %v13, %v29
  %v50 = vsub.f32 %v14, %v36
  %v51 = vsub.f32 %v15, %v43
  %v52 = vmul.f32 %v44, 1.442695
  %v53 = vpow.pop %v52
  %v54 = vmul.f32 %v45, 1.442695
  %v55 = vpow.pop %v54
  %v56 = vmul.f32 %v46, 1.442695
  %v57 = vpow.pop %v56
  %v58 = vmul.f32 %v47, 1.442695
  %v59 = vpow.pop %v58
  %v60 = vmul.f32 %v48, 1.442695
  %v61 = vpow.pop %v60
  %v62 = vmul.f32 %v49, 1.442695
  %v63 = vpow.pop %v62
  %v64 = vmul.f32 %v50, 1.442695
  %v65 = vpow.pop %v64
  %v66 = vmul.f32 %v51, 1.442695
  %v67 = vpow.pop %v66
  %v68 = vadd.f32 %v53, %v61
  %v69 = vrot.slane %v68, 4
  %v70 = vadd.f32 %v68, %v69
  %v71 = vrot.slane %v70, 2
  %v72 = vadd.f32 %v70, %v71
  %v73 = vrot.slane %v72, 1
  %v74 = vadd.f32 %v72, %v73
  %v75 = vadd.f32 %v55, %v63
  %v76 = vrot.slane %v75, 4
  %v77 = vadd.f32 %v75, %v76
  %v78 = vrot.slane %v77, 2
  %v79 = vadd.f32 %v77, %v78
  %v80 = vrot.slane %v79, 1
  %v81 = vadd.f32 %v79, %v80
  %v82 = vadd.f32 %v57, %v65
  %v83 = vrot.slane %v82, 4
  %v84 = vadd.f32 %v82, %v83
  %v85 = vrot.slane %v84, 2
  %v86 = vadd.f32 %v84, %v85
  %v87 = vrot.slane %v86, 1
  %v88 = vadd.f32 %v86, %v87
  %v89 = vadd.f32 %v59, %v67
  %v90 = vrot.slane %v89, 4
  %v91 = vadd.f32 %v89, %v90
  %v92 = vrot.slane %v91, 2
  %v93 = vadd.f32 %v91, %v92
  %v94 = vrot.slane %v93, 1
  %v95 = vadd.f32 %v93, %v94
  %v96 = vlaneseq
  %v97 = vshrl.u32 %v96, 7
  %v98 = vadd.s32 %v97, 8
  %v99 = vcvt.s32.f32 %v97
  %v100 = vcvt.s32.f32 %v98
  %v101 = vmul.f32 %v53, %v99
  %v102 = vmul.f32 %v55, %v99
  %v103 = vmul.f32 %v57, %v99
  %v104 = vmul.f32 %v59, %v99
  %v105 = vmul.f32 %v61, %v100
  %v106 = vmul.f32 %v63, %v100
  %v107 = vmul.f32 %v65, %v100
  %v108 = vmul.f32 %v67, %v100
  %v109 = vadd.f32 %v101, %v105
  %v110 = vrot.slane %v109, 4
  %v111 = vadd.f32 %v109, %v110
  %v112 = vrot.slane %v111, 2
  %v113 = vadd.f32 %v111, %v112
  %v114 = vrot.slane %v113, 1
  %v115 = vadd.f32 %v113, %v114
  %v116 = vadd.f32 %v102, %v106
  %v117 = vrot.slane %v116, 4
  %v118 = vadd.f32 %v116, %v117
  %v119 = vrot.slane %v118, 2
  %v120 = vadd.f32 %v118, %v119
  %v121 = vrot.slane %v120, 1
  %v122 = vadd.f32 %v120, %v121
  %v123 = vadd.f32 %v103, %v107
  %v124 = vrot.slane %v123, 4
  %v125 = vadd.f32 %v123, %v124
  %v126 = vrot.slane %v125, 2
  %v127 = vadd.f32 %v125, %v126
  %v128 = vrot.slane %v127, 1
  %v129 = vadd.f32 %v127, %v128
  %v130 = vadd.f32 %v104, %v108
  %v131 = vrot.slane %v130, 4
  %v132 = vadd.f32 %v130, %v131
  %v133 = vrot.slane %v132, 2
  %v134 = vadd.f32 %v132, %v133
  %v135 = vrot.slane %v134, 1
  %v136 = vadd.f32 %v134, %v135
  %v137 = vrcp.pop %v74
  %v138 = vrcp.pop %v81
  %v139 = vrcp.pop %v88
  %v140 = vrcp.pop %v95
  %v141 = vmul.f32 %v115, %v137
  %v142 = vmul.f32 %v122, %v138
  %v143 = vmul.f32 %v129, %v139
  %v144 = vmul.f32 %v136, %v140
  %v149 = vrot.slane %v142, 7
  %v150 = vrot.slane %v143, 6
  %v151 = vrot.slane %v144, 5
  %vm152 = vcmask 1040384
  %v153 = vsel %vm152, %v141, %v149
  %vm154 = vcmask 1042434
  %v155 = vsel %vm154, %v150, %v151
  %vm156 = vcmask 1041408
  %v157 = vsel %vm156, %v153, %v155
  %v159 = vlaneseq
  %vm160 = vcmp.ge.s32.totalorder %v159, 0
  %vm161 = vcmp.lt.s32.totalorder %v159, 512
  %vm162 = vmand %vm160, %vm161
  %163 = vst.msk [vmem:[%s1] sm:$0xf] %vm162, %v157
  // Predicated region
  $region6: #{psmnet_forward.133} parent=0 // pred_check
    _
  $region7: #{psmnet_forward.133} parent=0 // pred_check_branch
    %165 = sbr.rel (0) target = $region9
  $region8: #{psmnet_forward.133} parent=0 // pred_region
    _
  $region9: #{psmnet_forward.133} parent=0 // pred_fallthru
    _
  // Predicated region
  $region10: #{psmnet_forward.133} parent=0 // pred_check
    _
  $region11: #{psmnet_forward.133} parent=0 // pred_check_branch
    %167 = sbr.rel (0) target = $region13
  $region12: #{psmnet_forward.133} parent=0 // pred_region
    _
  $region13: #{psmnet_forward.133} parent=0 // pred_fallthru
    _

// kernel: squeeze.3
$region0: #{squeeze.3}
  %s0 = inlined_call_operand.vmem [shape: f32[512], index: 0, kind: input, shape index: {}]
  %s1 = inlined_call_operand.hbm [shape: f32[2,16,16], index: 1, kind: output, shape index: {}]
  $region1: #{squeeze.3} parent=0
    #allocation0 [shape = 'u8[16384]{0}', space=vmem, size = 0x4000, scoped, tag = 'operand span for operand 1']
    #allocation1 [shape = 's32[1]{0}', space=sflag, size = 0x4, scoped, tag = 'scoped memory for squeeze.3']
    #allocation2 [shape = 'u8[4096]{0}', space=vmem, size = 0x1000, scoped, tag = 'scoped mem for input reshape']
    %2 = vsyncpa [#allocation1], 0
    %s4 = ssub.s32 16, 1
    %v5 = vld [vmem:[%s0] sm:%s4]
    %6 = vst [vmem:[#allocation2] sm:%s4] %v5
    %v7 = vld [vmem:[#allocation2] sm:$0xf]
    %vm8 = vcmask 130048
    %9 = vst.msk [vmem:[#allocation0] ss:$8 sm:$0xf] %vm8, %v7
    %v10 = vld [vmem:[#allocation2] sm:$0xf]
    %11 = vrot.lane.b32.xlu0 %v10, 112
    %v12 = vpop.permute.xlu0 %11
    %vm13 = vcmask 130048
    %s14 = scalar_lea.vmem [#allocation0], 1
    %15 = vst.msk [vmem:[%s14] ss:$8 sm:$0xf] %vm13, %v12
    %v16 = vld [vmem:[#allocation2] sm:$0xf]
    %17 = vrot.lane.b32.xlu0 %v16, 96
    %v18 = vpop.permute.xlu0 %17
    %vm19 = vcmask 130048
    %s20 = scalar_lea.vmem [#allocation0], 2
    %21 = vst.msk [vmem:[%s20] ss:$8 sm:$0xf] %vm19, %v18
    %v22 = vld [vmem:[#allocation2] sm:$0xf]
    %23 = vrot.lane.b32.xlu0 %v22, 80
    %v24 = vpop.permute.xlu0 %23
    %vm25 = vcmask 130048
    %s26 = scalar_lea.vmem [#allocation0], 3
    %27 = vst.msk [vmem:[%s26] ss:$8 sm:$0xf] %vm25, %v24
    %v28 = vld [vmem:[#allocation2] sm:$0xf]
    %29 = vrot.lane.b32.xlu0 %v28, 64
    %v30 = vpop.permute.xlu0 %29
    %vm31 = vcmask 130048
    %s32 = scalar_lea.vmem [#allocation0], 4
    %33 = vst.msk [vmem:[%s32] ss:$8 sm:$0xf] %vm31, %v30
    %v34 = vld [vmem:[#allocation2] sm:$0xf]
    %35 = vrot.lane.b32.xlu0 %v34, 48
    %v36 = vpop.permute.xlu0 %35
    %vm37 = vcmask 130048
    %s38 = scalar_lea.vmem [#allocation0], 5
    %39 = vst.msk [vmem:[%s38] ss:$8 sm:$0xf] %vm37, %v36
    %v40 = vld [vmem:[#allocation2] sm:$0xf]
    %41 = vrot.lane.b32.xlu0 %v40, 32
    %v42 = vpop.permute.xlu0 %41
    %vm43 = vcmask 130048
    %s44 = scalar_lea.vmem [#allocation0], 6
    %45 = vst.msk [vmem:[%s44] ss:$8 sm:$0xf] %vm43, %v42
    %v46 = vld [vmem:[#allocation2] sm:$0xf]
    %47 = vrot.lane.b32.xlu0 %v46, 16
    %v48 = vpop.permute.xlu0 %47
    %vm49 = vcmask 130048
    %s50 = scalar_lea.vmem [#allocation0], 7
    %51 = vst.msk [vmem:[%s50] ss:$8 sm:$0xf] %vm49, %v48
    %53 = vsyncadd [#allocation1], 0
    %s55 = sshll.u32 [#allocation0], 4
    %s56 = int_to_ptr.vmem [resolvable:$true] %s55
    %s57 = sshll.u32 %s1, 4
    %s58 = int_to_ptr.hbm [resolvable:$true] %s57
    %60 = dma.vmem_to_hbm [thread:$0]  %s56, 512, %s58, [#allocation1]
    %62 = dma.done [#allocation1], 512
    %63 = vsyncpa [#allocation1], 1

</llo_original>
